<compile_context>
chip_gen: v6e
topology: v6e:2x2x1
jax: 0.10.0
libtpu: 0.0.40
codegen_flags: <defaults>
</compile_context>

<pallas_src>
import math
from functools import partial

import jax
import jax.numpy as jnp
from jax.experimental import pallas as pl
from jax.experimental.pallas import tpu as pltpu

DEFAULT_PREC = jax.lax.Precision.DEFAULT


def _layer_norm(x, gamma, beta, eps=1e-5):
    mu = jnp.mean(x, axis=-1, keepdims=True)
    xc = x - mu
    var = jnp.mean(xc * xc, axis=-1, keepdims=True)
    return xc * jax.lax.rsqrt(var + eps) * gamma + beta


def _kernel_softmax_lastdim(s):
    m = jnp.max(s, axis=-1, keepdims=True)
    e = jnp.exp(s - m)
    denom = jnp.sum(e, axis=-1, keepdims=True)
    return e * pl.reciprocal(denom, approx=True)


def _transformer_kernel(nhead,
                        x_ref, pe_ref, mask_ref,
                        wqkv_ref, bqkv_ref, wo_ref, bo_ref,
                        ln1g_ref, ln1b_ref,
                        w1_ref, b1_ref, w2_ref, b2_ref,
                        ln2g_ref, ln2b_ref,
                        o_ref,
                        q_scr, k_scr, v_scr):
    # x_ref:    (T, E)  token rows, T = S*B, lane-dense E = 256
    # pe_ref:   (T, E)  positional encodings already broadcast over batch
    # mask_ref: (T, T)  additive block-diagonal causal mask (0 / -1e30)
    # wqkv:  (L, 3E, E)  PyTorch (out, in) in_proj layout
    # bqkv:  (L, 3E, 1)  column bias for the feature-major projection
    # wo:    (L, E, E)   (out, in)
    # bo, ln{1,2}{g,b}, b2: (L, 1, E); w1: (L, E, F); b1: (L, 1, F); w2: (L, F, E)
    T, E = x_ref.shape
    H = nhead
    D = E // H
    L = wqkv_ref.shape[0]
    scale = 1.0 / math.sqrt(D)

    # positional encoding (dropout = identity in eval mode)
    x = x_ref[...] + pe_ref[...]               # (T, E)
    mask = mask_ref[...]                       # (T, T)

    for l in range(L):                         # static unroll (L = 2)
        # ---- multi-head self-attention (eval mode, no attn dropout) ----
        # Feature-major QKV projection: (3E, E) . (T, E)^T -> (3E, T).
        # One bf16 MXU stream; rows are then split with sublane-aligned slices.
        qkv_f = jax.lax.dot_general(
            wqkv_ref[l], x,
            dimension_numbers=(((1,), (1,)), ((), ())),
            precision=DEFAULT_PREC,
            preferred_element_type=jnp.float32) + bqkv_ref[l]      # (3E, T)

        # Head split: cheap row (sublane) slices at multiples of D=32.
        # q is stored token-major per head (one small 2-D transpose per head,
        # the single unavoidable relayout); k/v stay feature-major.
        for h in range(H):                     # static unroll (H = 8)
            q_scr[h] = (qkv_f[h * D:(h + 1) * D, :] * scale).T          # (T, D)
            k_scr[h] = qkv_f[E + h * D:E + (h + 1) * D, :]              # (D, T)
            v_scr[h] = qkv_f[2 * E + h * D:2 * E + (h + 1) * D, :]      # (D, T)
        q_all = q_scr[...]                     # (H, T, D)
        k_all = k_scr[...]                     # (H, D, T)
        v_all = v_scr[...]                     # (H, D, T)

        # All heads in one batched dot_general each.
        s = jnp.einsum('hqd,hdk->hqk', q_all, k_all,
                       precision=DEFAULT_PREC,
                       preferred_element_type=jnp.float32)         # (H, T, T)
        s = s + mask[None, :, :]               # block-diag causal additive mask
        p = _kernel_softmax_lastdim(s)         # (H, T, T)
        o_hdt = jnp.einsum('hdk,hqk->hdq', v_all, p,
                           precision=DEFAULT_PREC,
                           preferred_element_type=jnp.float32)     # (H, D, T)
        # Reassemble feature-major (E, T) with a sublane (row) concat.
        o_f = jnp.concatenate([o_hdt[h] for h in range(H)], axis=0)  # (E, T)

        attn_f = jax.lax.dot_general(
            wo_ref[l], o_f,
            dimension_numbers=(((1,), (0,)), ((), ())),
            precision=DEFAULT_PREC,
            preferred_element_type=jnp.float32)                    # (E, T)
        attn = attn_f.T + bo_ref[l]                                # (T, E)

        # residual + layernorm (post-norm, as in nn.TransformerEncoderLayer)
        x = _layer_norm(x + attn, ln1g_ref[l], ln1b_ref[l])

        # ---- feed-forward (relu) ----
        hmid = jnp.maximum(
            jnp.dot(x, w1_ref[l], precision=DEFAULT_PREC,
                    preferred_element_type=jnp.float32) + b1_ref[l], 0.0)
        ff = jnp.dot(hmid, w2_ref[l], precision=DEFAULT_PREC,
                     preferred_element_type=jnp.float32) + b2_ref[l]
        x = _layer_norm(x + ff, ln2g_ref[l], ln2b_ref[l])

    o_ref[...] = x


def make_positional_encoding(max_len, d_model):
    position = jnp.arange(max_len, dtype=jnp.float32)[:, None]
    div_term = jnp.exp(jnp.arange(0, d_model, 2, dtype=jnp.float32)
                       * (-math.log(10000.0) / d_model))
    pe = jnp.zeros((max_len, d_model), jnp.float32)
    pe = pe.at[:, 0::2].set(jnp.sin(position * div_term))
    pe = pe.at[:, 1::2].set(jnp.cos(position * div_term))
    return pe


def make_folded_causal_mask(S, B):
    """Additive mask on flattened tokens t = s*B + b: causal within a batch
    element, -inf across batch elements."""
    t = jnp.arange(S * B)
    s_idx = t // B
    b_idx = t % B
    ok = (b_idx[:, None] == b_idx[None, :]) & (s_idx[None, :] <= s_idx[:, None])
    return jnp.where(ok, 0.0, -1e30).astype(jnp.float32)


def transformer_forward(node_embed, pe_full, params, nhead):
    """node_embed: (S, B, E) seq-first, like the PyTorch module. Returns (S, B, E)."""
    S, B, E = node_embed.shape
    T = S * B
    H = nhead
    D = E // H

    x_flat = node_embed.reshape(T, E)                    # no wrapper transpose
    pe_rep = jnp.repeat(pe_full[:S], B, axis=0)          # (T, E)
    mask = make_folded_causal_mask(S, B)                 # (T, T)

    n_inputs = 3 + len(params)
    vmem = pl.BlockSpec(memory_space=pltpu.MemorySpace.VMEM)   # whole array, VMEM-resident
    out_flat = pl.pallas_call(
        partial(_transformer_kernel, nhead),
        out_shape=jax.ShapeDtypeStruct((T, E), jnp.float32),
        in_specs=[vmem] * n_inputs,
        out_specs=vmem,
        scratch_shapes=[
            pltpu.VMEM((H, T, D), jnp.float32),   # q, token-major per head
            pltpu.VMEM((H, D, T), jnp.float32),   # k, feature-major per head
            pltpu.VMEM((H, D, T), jnp.float32),   # v, feature-major per head
        ],
    )(x_flat, pe_rep, mask, *params)
    return out_flat.reshape(S, B, E)


def init_params(key, nlayers, d_model, nhead, dim_ff):
    E, F = d_model, dim_ff
    assert E % nhead == 0
    ks = jax.random.split(key, 6)

    def unif(k, shape, fan_in):
        b = 1.0 / math.sqrt(fan_in)
        return jax.random.uniform(k, shape, jnp.float32, -b, b)

    wqkv = unif(ks[0], (nlayers, 3 * E, E), E)             # (out, in)
    bqkv = jnp.zeros((nlayers, 3 * E, 1), jnp.float32)
    wo = unif(ks[1], (nlayers, E, E), E)                   # (out, in)
    bo = jnp.zeros((nlayers, 1, E), jnp.float32)
    ln1g = jnp.ones((nlayers, 1, E), jnp.float32)
    ln1b = jnp.zeros((nlayers, 1, E), jnp.float32)
    w1 = unif(ks[2], (nlayers, E, F), E)                   # (in, out)
    b1 = unif(ks[3], (nlayers, 1, F), E)
    w2 = unif(ks[4], (nlayers, F, E), F)                   # (in, out)
    b2 = unif(ks[5], (nlayers, 1, E), F)
    ln2g = jnp.ones((nlayers, 1, E), jnp.float32)
    ln2b = jnp.zeros((nlayers, 1, E), jnp.float32)
    return (wqkv, bqkv, wo, bo, ln1g, ln1b, w1, b1, w2, b2, ln2g, ln2b)


def reference_forward(node_embed, pe_full, params, nhead):
    """Pure-JAX (non-Pallas) f32 HIGHEST-precision reference of the eval forward."""
    S, B, E = node_embed.shape
    H, D = nhead, E // nhead
    scale = 1.0 / math.sqrt(D)
    HI = jax.lax.Precision.HIGHEST
    (wqkv, bqkv, wo, bo, ln1g, ln1b, w1, b1, w2, b2, ln2g, ln2b) = params

    causal = jnp.where(jnp.tril(jnp.ones((S, S), bool)), 0.0, -1e30).astype(jnp.float32)
    x = jnp.transpose(node_embed, (1, 0, 2)) + pe_full[:S][None]      # (B, S, E)
    for l in range(wqkv.shape[0]):
        qkv = jnp.einsum('bse,fe->bsf', x, wqkv[l], precision=HI) + bqkv[l][:, 0]
        q, k, v = jnp.split(qkv, 3, axis=-1)
        q = q.reshape(B, S, H, D)
        k = k.reshape(B, S, H, D)
        v = v.reshape(B, S, H, D)
        s = jnp.einsum('bshd,bthd->bhst', q, k, precision=HI) * scale + causal
        p = jax.nn.softmax(s, axis=-1)
        attn = jnp.einsum('bhst,bthd->bshd', p, v, precision=HI).reshape(B, S, E)
        attn = jnp.einsum('bse,fe->bsf', attn, wo[l], precision=HI) + bo[l][0]
        x = _layer_norm(x + attn, ln1g[l][0], ln1b[l][0])
        hmid = jnp.maximum(
            jnp.einsum('bse,ef->bsf', x, w1[l], precision=HI) + b1[l][0], 0.0)
        ff = jnp.einsum('bsf,fe->bse', hmid, w2[l], precision=HI) + b2[l][0]
        x = _layer_norm(x + ff, ln2g[l][0], ln2b[l][0])
    return jnp.transpose(x, (1, 0, 2))                                # (S, B, E)


if __name__ == "__main__":
    # Small shapes consistent with the module defaults:
    # max_len=10, ninp=256, nhead=8, nhid=256, nlayers=2; seq=8, batch=2.
    S, B = 8, 2
    d_model, nhead, dim_ff, nlayers, max_len = 256, 8, 256, 2, 10

    key = jax.random.PRNGKey(0)
    kx, kp = jax.random.split(key)
    node_embed = jax.random.normal(kx, (S, B, d_model), jnp.float32)
    params = init_params(kp, nlayers, d_model, nhead, dim_ff)
    pe_full = make_positional_encoding(max_len, d_model)

    out = transformer_forward(node_embed, pe_full, params, nhead)
    out = jax.block_until_ready(out)
    assert out.shape == (S, B, d_model)

    # sanity check vs plain-JAX f32 HIGHEST reference (kernel uses DEFAULT/bf16
    # MXU passes + approx reciprocal, hence the relaxed tolerance)
    ref = reference_forward(node_embed, pe_full, params, nhead)
    max_err = float(jnp.max(jnp.abs(out - ref)))
    assert jnp.allclose(out, ref, atol=2e-2, rtol=2e-2), \
        f"mismatch, max abs err {max_err}"

    print("KERNEL_OK")
</pallas_src>

<mosaic_0001>
module attributes {stable_mosaic.version = 11 : i64} {
  func.func @_transformer_kernel(%arg0: memref<16x256xf32, #tpu.memory_space<vmem>>, %arg1: memref<16x256xf32, #tpu.memory_space<vmem>>, %arg2: memref<16x16xf32, #tpu.memory_space<vmem>>, %arg3: memref<2x768x256xf32, #tpu.memory_space<vmem>>, %arg4: memref<2x768x1xf32, #tpu.memory_space<vmem>>, %arg5: memref<2x256x256xf32, #tpu.memory_space<vmem>>, %arg6: memref<2x1x256xf32, #tpu.memory_space<vmem>>, %arg7: memref<2x1x256xf32, #tpu.memory_space<vmem>>, %arg8: memref<2x1x256xf32, #tpu.memory_space<vmem>>, %arg9: memref<2x256x256xf32, #tpu.memory_space<vmem>>, %arg10: memref<2x1x256xf32, #tpu.memory_space<vmem>>, %arg11: memref<2x256x256xf32, #tpu.memory_space<vmem>>, %arg12: memref<2x1x256xf32, #tpu.memory_space<vmem>>, %arg13: memref<2x1x256xf32, #tpu.memory_space<vmem>>, %arg14: memref<2x1x256xf32, #tpu.memory_space<vmem>>, %arg15: memref<16x256xf32, #tpu.memory_space<vmem>>, %arg16: memref<8x16x32xf32, #tpu.memory_space<vmem>>, %arg17: memref<8x32x16xf32, #tpu.memory_space<vmem>>, %arg18: memref<8x32x16xf32, #tpu.memory_space<vmem>>) attributes {dimension_semantics = [], scalar_prefetch = 0 : i64, scratch_operands = 3 : i64, tpu.core_type = #tpu.core_type<tc>} {
    %c0 = arith.constant 0 : index
    %c0_0 = arith.constant 0 : index
    %0 = vector.load %arg0[%c0, %c0_0] : memref<16x256xf32, #tpu.memory_space<vmem>>, vector<16x256xf32>
    %c0_1 = arith.constant 0 : index
    %c0_2 = arith.constant 0 : index
    %1 = vector.load %arg1[%c0_1, %c0_2] : memref<16x256xf32, #tpu.memory_space<vmem>>, vector<16x256xf32>
    %2 = arith.addf %0, %1 : vector<16x256xf32>
    %c0_3 = arith.constant 0 : index
    %c0_4 = arith.constant 0 : index
    %3 = vector.load %arg2[%c0_3, %c0_4] : memref<16x16xf32, #tpu.memory_space<vmem>>, vector<16x16xf32>
    %c0_5 = arith.constant 0 : index
    %c0_6 = arith.constant 0 : index
    %c0_7 = arith.constant 0 : index
    %4 = vector.load %arg3[%c0_5, %c0_6, %c0_7] : memref<2x768x256xf32, #tpu.memory_space<vmem>>, vector<1x768x256xf32>
    %5 = vector.shape_cast %4 : vector<1x768x256xf32> to vector<768x256xf32>
    %cst = arith.constant dense<0.000000e+00> : vector<768x16xf32>
    %6 = tpu.matmul %5, %2, %cst {dimension_numbers = #tpu.dot_dimension_numbers<[1], [1], [0], [0], [0, 0, 1, 0], [], []>} : vector<768x256xf32>, vector<16x256xf32>, vector<768x16xf32> -> vector<768x16xf32>
    %c0_8 = arith.constant 0 : index
    %c0_9 = arith.constant 0 : index
    %c0_10 = arith.constant 0 : index
    %7 = vector.load %arg4[%c0_8, %c0_9, %c0_10] : memref<2x768x1xf32, #tpu.memory_space<vmem>>, vector<1x768x1xf32>
    %8 = vector.shape_cast %7 : vector<1x768x1xf32> to vector<768x1xf32>
    %9 = vector.broadcast %8 : vector<768x1xf32> to vector<768x16xf32>
    %10 = arith.addf %6, %9 : vector<768x16xf32>
    %11 = vector.extract_strided_slice %10 {offsets = [0, 0], sizes = [32, 16], strides = [1, 1]} : vector<768x16xf32> to vector<32x16xf32>
    %cst_11 = arith.constant 0.176776692 : f32
    %12 = vector.broadcast %cst_11 : f32 to vector<32x16xf32>
    %13 = arith.mulf %11, %12 : vector<32x16xf32>
    %14 = tpu.transpose %13, [1, 0] : vector<32x16xf32> -> vector<16x32xf32>
    %c0_12 = arith.constant 0 : index
    %c0_13 = arith.constant 0 : index
    %c0_14 = arith.constant 0 : index
    %15 = vector.load %arg16[%c0_12, %c0_13, %c0_14] : memref<8x16x32xf32, #tpu.memory_space<vmem>>, vector<1x16x32xf32>
    %16 = vector.shape_cast %15 : vector<1x16x32xf32> to vector<16x32xf32>
    %17 = vector.shape_cast %14 : vector<16x32xf32> to vector<1x16x32xf32>
    tpu.vector_store %arg16[%c0_12, %c0_13, %c0_14], %17 {strides = array<i32>} : memref<8x16x32xf32, #tpu.memory_space<vmem>>, vector<1x16x32xf32>,
    %18 = vector.extract_strided_slice %10 {offsets = [256, 0], sizes = [32, 16], strides = [1, 1]} : vector<768x16xf32> to vector<32x16xf32>
    %c0_15 = arith.constant 0 : index
    %c0_16 = arith.constant 0 : index
    %c0_17 = arith.constant 0 : index
    %19 = vector.load %arg17[%c0_15, %c0_16, %c0_17] : memref<8x32x16xf32, #tpu.memory_space<vmem>>, vector<1x32x16xf32>
    %20 = vector.shape_cast %19 : vector<1x32x16xf32> to vector<32x16xf32>
    %21 = vector.shape_cast %18 : vector<32x16xf32> to vector<1x32x16xf32>
    tpu.vector_store %arg17[%c0_15, %c0_16, %c0_17], %21 {strides = array<i32>} : memref<8x32x16xf32, #tpu.memory_space<vmem>>, vector<1x32x16xf32>,
    %22 = vector.extract_strided_slice %10 {offsets = [512, 0], sizes = [32, 16], strides = [1, 1]} : vector<768x16xf32> to vector<32x16xf32>
    %c0_18 = arith.constant 0 : index
    %c0_19 = arith.constant 0 : index
    %c0_20 = arith.constant 0 : index
    %23 = vector.load %arg18[%c0_18, %c0_19, %c0_20] : memref<8x32x16xf32, #tpu.memory_space<vmem>>, vector<1x32x16xf32>
    %24 = vector.shape_cast %23 : vector<1x32x16xf32> to vector<32x16xf32>
    %25 = vector.shape_cast %22 : vector<32x16xf32> to vector<1x32x16xf32>
    tpu.vector_store %arg18[%c0_18, %c0_19, %c0_20], %25 {strides = array<i32>} : memref<8x32x16xf32, #tpu.memory_space<vmem>>, vector<1x32x16xf32>,
    %26 = vector.extract_strided_slice %10 {offsets = [32, 0], sizes = [32, 16], strides = [1, 1]} : vector<768x16xf32> to vector<32x16xf32>
    %cst_21 = arith.constant 0.176776692 : f32
    %27 = vector.broadcast %cst_21 : f32 to vector<32x16xf32>
    %28 = arith.mulf %26, %27 : vector<32x16xf32>
    %29 = tpu.transpose %28, [1, 0] : vector<32x16xf32> -> vector<16x32xf32>
    %c1 = arith.constant 1 : index
    %c0_22 = arith.constant 0 : index
    %c0_23 = arith.constant 0 : index
    %30 = vector.load %arg16[%c1, %c0_22, %c0_23] : memref<8x16x32xf32, #tpu.memory_space<vmem>>, vector<1x16x32xf32>
    %31 = vector.shape_cast %30 : vector<1x16x32xf32> to vector<16x32xf32>
    %32 = vector.shape_cast %29 : vector<16x32xf32> to vector<1x16x32xf32>
    tpu.vector_store %arg16[%c1, %c0_22, %c0_23], %32 {strides = array<i32>} : memref<8x16x32xf32, #tpu.memory_space<vmem>>, vector<1x16x32xf32>,
    %33 = vector.extract_strided_slice %10 {offsets = [288, 0], sizes = [32, 16], strides = [1, 1]} : vector<768x16xf32> to vector<32x16xf32>
    %c1_24 = arith.constant 1 : index
    %c0_25 = arith.constant 0 : index
    %c0_26 = arith.constant 0 : index
    %34 = vector.load %arg17[%c1_24, %c0_25, %c0_26] : memref<8x32x16xf32, #tpu.memory_space<vmem>>, vector<1x32x16xf32>
    %35 = vector.shape_cast %34 : vector<1x32x16xf32> to vector<32x16xf32>
    %36 = vector.shape_cast %33 : vector<32x16xf32> to vector<1x32x16xf32>
    tpu.vector_store %arg17[%c1_24, %c0_25, %c0_26], %36 {strides = array<i32>} : memref<8x32x16xf32, #tpu.memory_space<vmem>>, vector<1x32x16xf32>,
    %37 = vector.extract_strided_slice %10 {offsets = [544, 0], sizes = [32, 16], strides = [1, 1]} : vector<768x16xf32> to vector<32x16xf32>
    %c1_27 = arith.constant 1 : index
    %c0_28 = arith.constant 0 : index
    %c0_29 = arith.constant 0 : index
    %38 = vector.load %arg18[%c1_27, %c0_28, %c0_29] : memref<8x32x16xf32, #tpu.memory_space<vmem>>, vector<1x32x16xf32>
    %39 = vector.shape_cast %38 : vector<1x32x16xf32> to vector<32x16xf32>
    %40 = vector.shape_cast %37 : vector<32x16xf32> to vector<1x32x16xf32>
    tpu.vector_store %arg18[%c1_27, %c0_28, %c0_29], %40 {strides = array<i32>} : memref<8x32x16xf32, #tpu.memory_space<vmem>>, vector<1x32x16xf32>,
    %41 = vector.extract_strided_slice %10 {offsets = [64, 0], sizes = [32, 16], strides = [1, 1]} : vector<768x16xf32> to vector<32x16xf32>
    %cst_30 = arith.constant 0.176776692 : f32
    %42 = vector.broadcast %cst_30 : f32 to vector<32x16xf32>
    %43 = arith.mulf %41, %42 : vector<32x16xf32>
    %44 = tpu.transpose %43, [1, 0] : vector<32x16xf32> -> vector<16x32xf32>
    %c2 = arith.constant 2 : index
    %c0_31 = arith.constant 0 : index
    %c0_32 = arith.constant 0 : index
    %45 = vector.load %arg16[%c2, %c0_31, %c0_32] : memref<8x16x32xf32, #tpu.memory_space<vmem>>, vector<1x16x32xf32>
    %46 = vector.shape_cast %45 : vector<1x16x32xf32> to vector<16x32xf32>
    %47 = vector.shape_cast %44 : vector<16x32xf32> to vector<1x16x32xf32>
    tpu.vector_store %arg16[%c2, %c0_31, %c0_32], %47 {strides = array<i32>} : memref<8x16x32xf32, #tpu.memory_space<vmem>>, vector<1x16x32xf32>,
    %48 = vector.extract_strided_slice %10 {offsets = [320, 0], sizes = [32, 16], strides = [1, 1]} : vector<768x16xf32> to vector<32x16xf32>
    %c2_33 = arith.constant 2 : index
    %c0_34 = arith.constant 0 : index
    %c0_35 = arith.constant 0 : index
    %49 = vector.load %arg17[%c2_33, %c0_34, %c0_35] : memref<8x32x16xf32, #tpu.memory_space<vmem>>, vector<1x32x16xf32>
    %50 = vector.shape_cast %49 : vector<1x32x16xf32> to vector<32x16xf32>
    %51 = vector.shape_cast %48 : vector<32x16xf32> to vector<1x32x16xf32>
    tpu.vector_store %arg17[%c2_33, %c0_34, %c0_35], %51 {strides = array<i32>} : memref<8x32x16xf32, #tpu.memory_space<vmem>>, vector<1x32x16xf32>,
    %52 = vector.extract_strided_slice %10 {offsets = [576, 0], sizes = [32, 16], strides = [1, 1]} : vector<768x16xf32> to vector<32x16xf32>
    %c2_36 = arith.constant 2 : index
    %c0_37 = arith.constant 0 : index
    %c0_38 = arith.constant 0 : index
    %53 = vector.load %arg18[%c2_36, %c0_37, %c0_38] : memref<8x32x16xf32, #tpu.memory_space<vmem>>, vector<1x32x16xf32>
    %54 = vector.shape_cast %53 : vector<1x32x16xf32> to vector<32x16xf32>
    %55 = vector.shape_cast %52 : vector<32x16xf32> to vector<1x32x16xf32>
    tpu.vector_store %arg18[%c2_36, %c0_37, %c0_38], %55 {strides = array<i32>} : memref<8x32x16xf32, #tpu.memory_space<vmem>>, vector<1x32x16xf32>,
    %56 = vector.extract_strided_slice %10 {offsets = [96, 0], sizes = [32, 16], strides = [1, 1]} : vector<768x16xf32> to vector<32x16xf32>
    %cst_39 = arith.constant 0.176776692 : f32
    %57 = vector.broadcast %cst_39 : f32 to vector<32x16xf32>
    %58 = arith.mulf %56, %57 : vector<32x16xf32>
    %59 = tpu.transpose %58, [1, 0] : vector<32x16xf32> -> vector<16x32xf32>
    %c3 = arith.constant 3 : index
    %c0_40 = arith.constant 0 : index
    %c0_41 = arith.constant 0 : index
    %60 = vector.load %arg16[%c3, %c0_40, %c0_41] : memref<8x16x32xf32, #tpu.memory_space<vmem>>, vector<1x16x32xf32>
    %61 = vector.shape_cast %60 : vector<1x16x32xf32> to vector<16x32xf32>
    %62 = vector.shape_cast %59 : vector<16x32xf32> to vector<1x16x32xf32>
    tpu.vector_store %arg16[%c3, %c0_40, %c0_41], %62 {strides = array<i32>} : memref<8x16x32xf32, #tpu.memory_space<vmem>>, vector<1x16x32xf32>,
    %63 = vector.extract_strided_slice %10 {offsets = [352, 0], sizes = [32, 16], strides = [1, 1]} : vector<768x16xf32> to vector<32x16xf32>
    %c3_42 = arith.constant 3 : index
    %c0_43 = arith.constant 0 : index
    %c0_44 = arith.constant 0 : index
    %64 = vector.load %arg17[%c3_42, %c0_43, %c0_44] : memref<8x32x16xf32, #tpu.memory_space<vmem>>, vector<1x32x16xf32>
    %65 = vector.shape_cast %64 : vector<1x32x16xf32> to vector<32x16xf32>
    %66 = vector.shape_cast %63 : vector<32x16xf32> to vector<1x32x16xf32>
    tpu.vector_store %arg17[%c3_42, %c0_43, %c0_44], %66 {strides = array<i32>} : memref<8x32x16xf32, #tpu.memory_space<vmem>>, vector<1x32x16xf32>,
    %67 = vector.extract_strided_slice %10 {offsets = [608, 0], sizes = [32, 16], strides = [1, 1]} : vector<768x16xf32> to vector<32x16xf32>
    %c3_45 = arith.constant 3 : index
    %c0_46 = arith.constant 0 : index
    %c0_47 = arith.constant 0 : index
    %68 = vector.load %arg18[%c3_45, %c0_46, %c0_47] : memref<8x32x16xf32, #tpu.memory_space<vmem>>, vector<1x32x16xf32>
    %69 = vector.shape_cast %68 : vector<1x32x16xf32> to vector<32x16xf32>
    %70 = vector.shape_cast %67 : vector<32x16xf32> to vector<1x32x16xf32>
    tpu.vector_store %arg18[%c3_45, %c0_46, %c0_47], %70 {strides = array<i32>} : memref<8x32x16xf32, #tpu.memory_space<vmem>>, vector<1x32x16xf32>,
    %71 = vector.extract_strided_slice %10 {offsets = [128, 0], sizes = [32, 16], strides = [1, 1]} : vector<768x16xf32> to vector<32x16xf32>
    %cst_48 = arith.constant 0.176776692 : f32
    %72 = vector.broadcast %cst_48 : f32 to vector<32x16xf32>
    %73 = arith.mulf %71, %72 : vector<32x16xf32>
    %74 = tpu.transpose %73, [1, 0] : vector<32x16xf32> -> vector<16x32xf32>
    %c4 = arith.constant 4 : index
    %c0_49 = arith.constant 0 : index
    %c0_50 = arith.constant 0 : index
    %75 = vector.load %arg16[%c4, %c0_49, %c0_50] : memref<8x16x32xf32, #tpu.memory_space<vmem>>, vector<1x16x32xf32>
    %76 = vector.shape_cast %75 : vector<1x16x32xf32> to vector<16x32xf32>
    %77 = vector.shape_cast %74 : vector<16x32xf32> to vector<1x16x32xf32>
    tpu.vector_store %arg16[%c4, %c0_49, %c0_50], %77 {strides = array<i32>} : memref<8x16x32xf32, #tpu.memory_space<vmem>>, vector<1x16x32xf32>,
    %78 = vector.extract_strided_slice %10 {offsets = [384, 0], sizes = [32, 16], strides = [1, 1]} : vector<768x16xf32> to vector<32x16xf32>
    %c4_51 = arith.constant 4 : index
    %c0_52 = arith.constant 0 : index
    %c0_53 = arith.constant 0 : index
    %79 = vector.load %arg17[%c4_51, %c0_52, %c0_53] : memref<8x32x16xf32, #tpu.memory_space<vmem>>, vector<1x32x16xf32>
    %80 = vector.shape_cast %79 : vector<1x32x16xf32> to vector<32x16xf32>
    %81 = vector.shape_cast %78 : vector<32x16xf32> to vector<1x32x16xf32>
    tpu.vector_store %arg17[%c4_51, %c0_52, %c0_53], %81 {strides = array<i32>} : memref<8x32x16xf32, #tpu.memory_space<vmem>>, vector<1x32x16xf32>,
    %82 = vector.extract_strided_slice %10 {offsets = [640, 0], sizes = [32, 16], strides = [1, 1]} : vector<768x16xf32> to vector<32x16xf32>
    %c4_54 = arith.constant 4 : index
    %c0_55 = arith.constant 0 : index
    %c0_56 = arith.constant 0 : index
    %83 = vector.load %arg18[%c4_54, %c0_55, %c0_56] : memref<8x32x16xf32, #tpu.memory_space<vmem>>, vector<1x32x16xf32>
    %84 = vector.shape_cast %83 : vector<1x32x16xf32> to vector<32x16xf32>
    %85 = vector.shape_cast %82 : vector<32x16xf32> to vector<1x32x16xf32>
    tpu.vector_store %arg18[%c4_54, %c0_55, %c0_56], %85 {strides = array<i32>} : memref<8x32x16xf32, #tpu.memory_space<vmem>>, vector<1x32x16xf32>,
    %86 = vector.extract_strided_slice %10 {offsets = [160, 0], sizes = [32, 16], strides = [1, 1]} : vector<768x16xf32> to vector<32x16xf32>
    %cst_57 = arith.constant 0.176776692 : f32
    %87 = vector.broadcast %cst_57 : f32 to vector<32x16xf32>
    %88 = arith.mulf %86, %87 : vector<32x16xf32>
    %89 = tpu.transpose %88, [1, 0] : vector<32x16xf32> -> vector<16x32xf32>
    %c5 = arith.constant 5 : index
    %c0_58 = arith.constant 0 : index
    %c0_59 = arith.constant 0 : index
    %90 = vector.load %arg16[%c5, %c0_58, %c0_59] : memref<8x16x32xf32, #tpu.memory_space<vmem>>, vector<1x16x32xf32>
    %91 = vector.shape_cast %90 : vector<1x16x32xf32> to vector<16x32xf32>
    %92 = vector.shape_cast %89 : vector<16x32xf32> to vector<1x16x32xf32>
    tpu.vector_store %arg16[%c5, %c0_58, %c0_59], %92 {strides = array<i32>} : memref<8x16x32xf32, #tpu.memory_space<vmem>>, vector<1x16x32xf32>,
    %93 = vector.extract_strided_slice %10 {offsets = [416, 0], sizes = [32, 16], strides = [1, 1]} : vector<768x16xf32> to vector<32x16xf32>
    %c5_60 = arith.constant 5 : index
    %c0_61 = arith.constant 0 : index
    %c0_62 = arith.constant 0 : index
    %94 = vector.load %arg17[%c5_60, %c0_61, %c0_62] : memref<8x32x16xf32, #tpu.memory_space<vmem>>, vector<1x32x16xf32>
    %95 = vector.shape_cast %94 : vector<1x32x16xf32> to vector<32x16xf32>
    %96 = vector.shape_cast %93 : vector<32x16xf32> to vector<1x32x16xf32>
    tpu.vector_store %arg17[%c5_60, %c0_61, %c0_62], %96 {strides = array<i32>} : memref<8x32x16xf32, #tpu.memory_space<vmem>>, vector<1x32x16xf32>,
    %97 = vector.extract_strided_slice %10 {offsets = [672, 0], sizes = [32, 16], strides = [1, 1]} : vector<768x16xf32> to vector<32x16xf32>
    %c5_63 = arith.constant 5 : index
    %c0_64 = arith.constant 0 : index
    %c0_65 = arith.constant 0 : index
    %98 = vector.load %arg18[%c5_63, %c0_64, %c0_65] : memref<8x32x16xf32, #tpu.memory_space<vmem>>, vector<1x32x16xf32>
    %99 = vector.shape_cast %98 : vector<1x32x16xf32> to vector<32x16xf32>
    %100 = vector.shape_cast %97 : vector<32x16xf32> to vector<1x32x16xf32>
    tpu.vector_store %arg18[%c5_63, %c0_64, %c0_65], %100 {strides = array<i32>} : memref<8x32x16xf32, #tpu.memory_space<vmem>>, vector<1x32x16xf32>,
    %101 = vector.extract_strided_slice %10 {offsets = [192, 0], sizes = [32, 16], strides = [1, 1]} : vector<768x16xf32> to vector<32x16xf32>
    %cst_66 = arith.constant 0.176776692 : f32
    %102 = vector.broadcast %cst_66 : f32 to vector<32x16xf32>
    %103 = arith.mulf %101, %102 : vector<32x16xf32>
    %104 = tpu.transpose %103, [1, 0] : vector<32x16xf32> -> vector<16x32xf32>
    %c6 = arith.constant 6 : index
    %c0_67 = arith.constant 0 : index
    %c0_68 = arith.constant 0 : index
    %105 = vector.load %arg16[%c6, %c0_67, %c0_68] : memref<8x16x32xf32, #tpu.memory_space<vmem>>, vector<1x16x32xf32>
    %106 = vector.shape_cast %105 : vector<1x16x32xf32> to vector<16x32xf32>
    %107 = vector.shape_cast %104 : vector<16x32xf32> to vector<1x16x32xf32>
    tpu.vector_store %arg16[%c6, %c0_67, %c0_68], %107 {strides = array<i32>} : memref<8x16x32xf32, #tpu.memory_space<vmem>>, vector<1x16x32xf32>,
    %108 = vector.extract_strided_slice %10 {offsets = [448, 0], sizes = [32, 16], strides = [1, 1]} : vector<768x16xf32> to vector<32x16xf32>
    %c6_69 = arith.constant 6 : index
    %c0_70 = arith.constant 0 : index
    %c0_71 = arith.constant 0 : index
    %109 = vector.load %arg17[%c6_69, %c0_70, %c0_71] : memref<8x32x16xf32, #tpu.memory_space<vmem>>, vector<1x32x16xf32>
    %110 = vector.shape_cast %109 : vector<1x32x16xf32> to vector<32x16xf32>
    %111 = vector.shape_cast %108 : vector<32x16xf32> to vector<1x32x16xf32>
    tpu.vector_store %arg17[%c6_69, %c0_70, %c0_71], %111 {strides = array<i32>} : memref<8x32x16xf32, #tpu.memory_space<vmem>>, vector<1x32x16xf32>,
    %112 = vector.extract_strided_slice %10 {offsets = [704, 0], sizes = [32, 16], strides = [1, 1]} : vector<768x16xf32> to vector<32x16xf32>
    %c6_72 = arith.constant 6 : index
    %c0_73 = arith.constant 0 : index
    %c0_74 = arith.constant 0 : index
    %113 = vector.load %arg18[%c6_72, %c0_73, %c0_74] : memref<8x32x16xf32, #tpu.memory_space<vmem>>, vector<1x32x16xf32>
    %114 = vector.shape_cast %113 : vector<1x32x16xf32> to vector<32x16xf32>
    %115 = vector.shape_cast %112 : vector<32x16xf32> to vector<1x32x16xf32>
    tpu.vector_store %arg18[%c6_72, %c0_73, %c0_74], %115 {strides = array<i32>} : memref<8x32x16xf32, #tpu.memory_space<vmem>>, vector<1x32x16xf32>,
    %116 = vector.extract_strided_slice %10 {offsets = [224, 0], sizes = [32, 16], strides = [1, 1]} : vector<768x16xf32> to vector<32x16xf32>
    %cst_75 = arith.constant 0.176776692 : f32
    %117 = vector.broadcast %cst_75 : f32 to vector<32x16xf32>
    %118 = arith.mulf %116, %117 : vector<32x16xf32>
    %119 = tpu.transpose %118, [1, 0] : vector<32x16xf32> -> vector<16x32xf32>
    %c7 = arith.constant 7 : index
    %c0_76 = arith.constant 0 : index
    %c0_77 = arith.constant 0 : index
    %120 = vector.load %arg16[%c7, %c0_76, %c0_77] : memref<8x16x32xf32, #tpu.memory_space<vmem>>, vector<1x16x32xf32>
    %121 = vector.shape_cast %120 : vector<1x16x32xf32> to vector<16x32xf32>
    %122 = vector.shape_cast %119 : vector<16x32xf32> to vector<1x16x32xf32>
    tpu.vector_store %arg16[%c7, %c0_76, %c0_77], %122 {strides = array<i32>} : memref<8x16x32xf32, #tpu.memory_space<vmem>>, vector<1x16x32xf32>,
    %123 = vector.extract_strided_slice %10 {offsets = [480, 0], sizes = [32, 16], strides = [1, 1]} : vector<768x16xf32> to vector<32x16xf32>
    %c7_78 = arith.constant 7 : index
    %c0_79 = arith.constant 0 : index
    %c0_80 = arith.constant 0 : index
    %124 = vector.load %arg17[%c7_78, %c0_79, %c0_80] : memref<8x32x16xf32, #tpu.memory_space<vmem>>, vector<1x32x16xf32>
    %125 = vector.shape_cast %124 : vector<1x32x16xf32> to vector<32x16xf32>
    %126 = vector.shape_cast %123 : vector<32x16xf32> to vector<1x32x16xf32>
    tpu.vector_store %arg17[%c7_78, %c0_79, %c0_80], %126 {strides = array<i32>} : memref<8x32x16xf32, #tpu.memory_space<vmem>>, vector<1x32x16xf32>,
    %127 = vector.extract_strided_slice %10 {offsets = [736, 0], sizes = [32, 16], strides = [1, 1]} : vector<768x16xf32> to vector<32x16xf32>
    %c7_81 = arith.constant 7 : index
    %c0_82 = arith.constant 0 : index
    %c0_83 = arith.constant 0 : index
    %128 = vector.load %arg18[%c7_81, %c0_82, %c0_83] : memref<8x32x16xf32, #tpu.memory_space<vmem>>, vector<1x32x16xf32>
    %129 = vector.shape_cast %128 : vector<1x32x16xf32> to vector<32x16xf32>
    %130 = vector.shape_cast %127 : vector<32x16xf32> to vector<1x32x16xf32>
    tpu.vector_store %arg18[%c7_81, %c0_82, %c0_83], %130 {strides = array<i32>} : memref<8x32x16xf32, #tpu.memory_space<vmem>>, vector<1x32x16xf32>,
    %c0_84 = arith.constant 0 : index
    %c0_85 = arith.constant 0 : index
    %c0_86 = arith.constant 0 : index
    %131 = vector.load %arg16[%c0_84, %c0_85, %c0_86] : memref<8x16x32xf32, #tpu.memory_space<vmem>>, vector<8x16x32xf32>
    %c0_87 = arith.constant 0 : index
    %c0_88 = arith.constant 0 : index
    %c0_89 = arith.constant 0 : index
    %132 = vector.load %arg17[%c0_87, %c0_88, %c0_89] : memref<8x32x16xf32, #tpu.memory_space<vmem>>, vector<8x32x16xf32>
    %c0_90 = arith.constant 0 : index
    %c0_91 = arith.constant 0 : index
    %c0_92 = arith.constant 0 : index
    %133 = vector.load %arg18[%c0_90, %c0_91, %c0_92] : memref<8x32x16xf32, #tpu.memory_space<vmem>>, vector<8x32x16xf32>
    "tpu.trace_start"() <{level = 10 : i32, message = "hqd,hdk->hqk"}> : () -> ()
    %cst_93 = arith.constant dense<0.000000e+00> : vector<8x16x16xf32>
    %134 = tpu.matmul %131, %132, %cst_93 {dimension_numbers = #tpu.dot_dimension_numbers<[2], [1], [1], [2], [0, 0, 0, 1, 1, 2], [0], [0]>} : vector<8x16x32xf32>, vector<8x32x16xf32>, vector<8x16x16xf32> -> vector<8x16x16xf32>
    "tpu.trace_stop"() : () -> ()
    %135 = vector.shape_cast %3 : vector<16x16xf32> to vector<1x16x16xf32>
    %136 = vector.broadcast %135 : vector<1x16x16xf32> to vector<8x16x16xf32>
    %137 = arith.addf %134, %136 : vector<8x16x16xf32>
    %cst_94 = arith.constant dense<0xFF800000> : vector<8x16xf32>
    %138 = vector.multi_reduction <maximumf>, %137, %cst_94 [2] : vector<8x16x16xf32> to vector<8x16xf32>
    %139 = vector.shape_cast %138 : vector<8x16xf32> to vector<8x16x1xf32>
    %140 = vector.broadcast %139 : vector<8x16x1xf32> to vector<8x16x16xf32>
    %141 = arith.subf %137, %140 : vector<8x16x16xf32>
    %142 = math.exp %141 : vector<8x16x16xf32>
    %cst_95 = arith.constant dense<0.000000e+00> : vector<8x16xf32>
    %143 = vector.multi_reduction <add>, %142, %cst_95 [2] : vector<8x16x16xf32> to vector<8x16xf32>
    %144 = vector.shape_cast %143 : vector<8x16xf32> to vector<8x16x1xf32>
    %145 = tpu.reciprocal %144 {approx = true} : vector<8x16x1xf32> -> vector<8x16x1xf32>
    %146 = vector.broadcast %145 : vector<8x16x1xf32> to vector<8x16x16xf32>
    %147 = arith.mulf %142, %146 : vector<8x16x16xf32>
    "tpu.trace_start"() <{level = 10 : i32, message = "hdk,hqk->hdq"}> : () -> ()
    %cst_96 = arith.constant dense<0.000000e+00> : vector<8x32x16xf32>
    %148 = tpu.matmul %133, %147, %cst_96 {dimension_numbers = #tpu.dot_dimension_numbers<[2], [2], [1], [1], [0, 0, 0, 1, 1, 1], [0], [0]>} : vector<8x32x16xf32>, vector<8x16x16xf32>, vector<8x32x16xf32> -> vector<8x32x16xf32>
    "tpu.trace_stop"() : () -> ()
    %149 = vector.extract_strided_slice %148 {offsets = [0, 0, 0], sizes = [1, 32, 16], strides = [1, 1, 1]} : vector<8x32x16xf32> to vector<1x32x16xf32>
    %150 = vector.shape_cast %149 : vector<1x32x16xf32> to vector<32x16xf32>
    %151 = vector.extract_strided_slice %148 {offsets = [1, 0, 0], sizes = [1, 32, 16], strides = [1, 1, 1]} : vector<8x32x16xf32> to vector<1x32x16xf32>
    %152 = vector.shape_cast %151 : vector<1x32x16xf32> to vector<32x16xf32>
    %153 = vector.extract_strided_slice %148 {offsets = [2, 0, 0], sizes = [1, 32, 16], strides = [1, 1, 1]} : vector<8x32x16xf32> to vector<1x32x16xf32>
    %154 = vector.shape_cast %153 : vector<1x32x16xf32> to vector<32x16xf32>
    %155 = vector.extract_strided_slice %148 {offsets = [3, 0, 0], sizes = [1, 32, 16], strides = [1, 1, 1]} : vector<8x32x16xf32> to vector<1x32x16xf32>
    %156 = vector.shape_cast %155 : vector<1x32x16xf32> to vector<32x16xf32>
    %157 = vector.extract_strided_slice %148 {offsets = [4, 0, 0], sizes = [1, 32, 16], strides = [1, 1, 1]} : vector<8x32x16xf32> to vector<1x32x16xf32>
    %158 = vector.shape_cast %157 : vector<1x32x16xf32> to vector<32x16xf32>
    %159 = vector.extract_strided_slice %148 {offsets = [5, 0, 0], sizes = [1, 32, 16], strides = [1, 1, 1]} : vector<8x32x16xf32> to vector<1x32x16xf32>
    %160 = vector.shape_cast %159 : vector<1x32x16xf32> to vector<32x16xf32>
    %161 = vector.extract_strided_slice %148 {offsets = [6, 0, 0], sizes = [1, 32, 16], strides = [1, 1, 1]} : vector<8x32x16xf32> to vector<1x32x16xf32>
    %162 = vector.shape_cast %161 : vector<1x32x16xf32> to vector<32x16xf32>
    %163 = vector.extract_strided_slice %148 {offsets = [7, 0, 0], sizes = [1, 32, 16], strides = [1, 1, 1]} : vector<8x32x16xf32> to vector<1x32x16xf32>
    %164 = vector.shape_cast %163 : vector<1x32x16xf32> to vector<32x16xf32>
    %165 = tpu.concatenate %150, %152, %154, %156, %158, %160, %162, %164 in 0 : vector<32x16xf32>, vector<32x16xf32>, vector<32x16xf32>, vector<32x16xf32>, vector<32x16xf32>, vector<32x16xf32>, vector<32x16xf32>, vector<32x16xf32> -> vector<256x16xf32>
    %c0_97 = arith.constant 0 : index
    %c0_98 = arith.constant 0 : index
    %c0_99 = arith.constant 0 : index
    %166 = vector.load %arg5[%c0_97, %c0_98, %c0_99] : memref<2x256x256xf32, #tpu.memory_space<vmem>>, vector<1x256x256xf32>
    %167 = vector.shape_cast %166 : vector<1x256x256xf32> to vector<256x256xf32>
    %cst_100 = arith.constant dense<0.000000e+00> : vector<256x16xf32>
    %168 = tpu.matmul %167, %165, %cst_100 {dimension_numbers = #tpu.dot_dimension_numbers<[1], [0], [0], [1], [0, 0, 1, 1], [], []>} : vector<256x256xf32>, vector<256x16xf32>, vector<256x16xf32> -> vector<256x16xf32>
    %169 = tpu.transpose %168, [1, 0] : vector<256x16xf32> -> vector<16x256xf32>
    %c0_101 = arith.constant 0 : index
    %c0_102 = arith.constant 0 : index
    %c0_103 = arith.constant 0 : index
    %170 = vector.load %arg6[%c0_101, %c0_102, %c0_103] : memref<2x1x256xf32, #tpu.memory_space<vmem>>, vector<1x1x256xf32>
    %171 = vector.shape_cast %170 : vector<1x1x256xf32> to vector<1x256xf32>
    %172 = vector.broadcast %171 : vector<1x256xf32> to vector<16x256xf32>
    %173 = arith.addf %169, %172 : vector<16x256xf32>
    %174 = arith.addf %2, %173 : vector<16x256xf32>
    %c0_104 = arith.constant 0 : index
    %c0_105 = arith.constant 0 : index
    %c0_106 = arith.constant 0 : index
    %175 = vector.load %arg7[%c0_104, %c0_105, %c0_106] : memref<2x1x256xf32, #tpu.memory_space<vmem>>, vector<1x1x256xf32>
    %176 = vector.shape_cast %175 : vector<1x1x256xf32> to vector<1x256xf32>
    %c0_107 = arith.constant 0 : index
    %c0_108 = arith.constant 0 : index
    %c0_109 = arith.constant 0 : index
    %177 = vector.load %arg8[%c0_107, %c0_108, %c0_109] : memref<2x1x256xf32, #tpu.memory_space<vmem>>, vector<1x1x256xf32>
    %178 = vector.shape_cast %177 : vector<1x1x256xf32> to vector<1x256xf32>
    %cst_110 = arith.constant dense<0.000000e+00> : vector<16xf32>
    %179 = vector.multi_reduction <add>, %174, %cst_110 [1] : vector<16x256xf32> to vector<16xf32>
    %180 = vector.shape_cast %179 : vector<16xf32> to vector<16x1xf32>
    %cst_111 = arith.constant 2.560000e+02 : f32
    %181 = vector.broadcast %cst_111 : f32 to vector<16x1xf32>
    %182 = arith.divf %180, %181 : vector<16x1xf32>
    %183 = vector.broadcast %182 : vector<16x1xf32> to vector<16x256xf32>
    %184 = arith.subf %174, %183 : vector<16x256xf32>
    %185 = arith.mulf %184, %184 : vector<16x256xf32>
    %cst_112 = arith.constant dense<0.000000e+00> : vector<16xf32>
    %186 = vector.multi_reduction <add>, %185, %cst_112 [1] : vector<16x256xf32> to vector<16xf32>
    %187 = vector.shape_cast %186 : vector<16xf32> to vector<16x1xf32>
    %cst_113 = arith.constant 2.560000e+02 : f32
    %188 = vector.broadcast %cst_113 : f32 to vector<16x1xf32>
    %189 = arith.divf %187, %188 : vector<16x1xf32>
    %cst_114 = arith.constant 9.99999974E-6 : f32
    %190 = vector.broadcast %cst_114 : f32 to vector<16x1xf32>
    %191 = arith.addf %189, %190 : vector<16x1xf32>
    %192 = math.rsqrt %191 : vector<16x1xf32>
    %193 = vector.broadcast %192 : vector<16x1xf32> to vector<16x256xf32>
    %194 = arith.mulf %184, %193 : vector<16x256xf32>
    %195 = vector.broadcast %176 : vector<1x256xf32> to vector<16x256xf32>
    %196 = arith.mulf %194, %195 : vector<16x256xf32>
    %197 = vector.broadcast %178 : vector<1x256xf32> to vector<16x256xf32>
    %198 = arith.addf %196, %197 : vector<16x256xf32>
    %c0_115 = arith.constant 0 : index
    %c0_116 = arith.constant 0 : index
    %c0_117 = arith.constant 0 : index
    %199 = vector.load %arg9[%c0_115, %c0_116, %c0_117] : memref<2x256x256xf32, #tpu.memory_space<vmem>>, vector<1x256x256xf32>
    %200 = vector.shape_cast %199 : vector<1x256x256xf32> to vector<256x256xf32>
    %cst_118 = arith.constant dense<0.000000e+00> : vector<16x256xf32>
    %201 = tpu.matmul %198, %200, %cst_118 {dimension_numbers = #tpu.dot_dimension_numbers<[1], [0], [0], [1], [0, 0, 1, 1], [], []>} : vector<16x256xf32>, vector<256x256xf32>, vector<16x256xf32> -> vector<16x256xf32>
    %c0_119 = arith.constant 0 : index
    %c0_120 = arith.constant 0 : index
    %c0_121 = arith.constant 0 : index
    %202 = vector.load %arg10[%c0_119, %c0_120, %c0_121] : memref<2x1x256xf32, #tpu.memory_space<vmem>>, vector<1x1x256xf32>
    %203 = vector.shape_cast %202 : vector<1x1x256xf32> to vector<1x256xf32>
    %204 = vector.broadcast %203 : vector<1x256xf32> to vector<16x256xf32>
    %205 = arith.addf %201, %204 : vector<16x256xf32>
    %cst_122 = arith.constant 0.000000e+00 : f32
    %206 = vector.broadcast %cst_122 : f32 to vector<16x256xf32>
    %207 = arith.maximumf %205, %206 : vector<16x256xf32>
    %c0_123 = arith.constant 0 : index
    %c0_124 = arith.constant 0 : index
    %c0_125 = arith.constant 0 : index
    %208 = vector.load %arg11[%c0_123, %c0_124, %c0_125] : memref<2x256x256xf32, #tpu.memory_space<vmem>>, vector<1x256x256xf32>
    %209 = vector.shape_cast %208 : vector<1x256x256xf32> to vector<256x256xf32>
    %cst_126 = arith.constant dense<0.000000e+00> : vector<16x256xf32>
    %210 = tpu.matmul %207, %209, %cst_126 {dimension_numbers = #tpu.dot_dimension_numbers<[1], [0], [0], [1], [0, 0, 1, 1], [], []>} : vector<16x256xf32>, vector<256x256xf32>, vector<16x256xf32> -> vector<16x256xf32>
    %c0_127 = arith.constant 0 : index
    %c0_128 = arith.constant 0 : index
    %c0_129 = arith.constant 0 : index
    %211 = vector.load %arg12[%c0_127, %c0_128, %c0_129] : memref<2x1x256xf32, #tpu.memory_space<vmem>>, vector<1x1x256xf32>
    %212 = vector.shape_cast %211 : vector<1x1x256xf32> to vector<1x256xf32>
    %213 = vector.broadcast %212 : vector<1x256xf32> to vector<16x256xf32>
    %214 = arith.addf %210, %213 : vector<16x256xf32>
    %215 = arith.addf %198, %214 : vector<16x256xf32>
    %c0_130 = arith.constant 0 : index
    %c0_131 = arith.constant 0 : index
    %c0_132 = arith.constant 0 : index
    %216 = vector.load %arg13[%c0_130, %c0_131, %c0_132] : memref<2x1x256xf32, #tpu.memory_space<vmem>>, vector<1x1x256xf32>
    %217 = vector.shape_cast %216 : vector<1x1x256xf32> to vector<1x256xf32>
    %c0_133 = arith.constant 0 : index
    %c0_134 = arith.constant 0 : index
    %c0_135 = arith.constant 0 : index
    %218 = vector.load %arg14[%c0_133, %c0_134, %c0_135] : memref<2x1x256xf32, #tpu.memory_space<vmem>>, vector<1x1x256xf32>
    %219 = vector.shape_cast %218 : vector<1x1x256xf32> to vector<1x256xf32>
    %cst_136 = arith.constant dense<0.000000e+00> : vector<16xf32>
    %220 = vector.multi_reduction <add>, %215, %cst_136 [1] : vector<16x256xf32> to vector<16xf32>
    %221 = vector.shape_cast %220 : vector<16xf32> to vector<16x1xf32>
    %cst_137 = arith.constant 2.560000e+02 : f32
    %222 = vector.broadcast %cst_137 : f32 to vector<16x1xf32>
    %223 = arith.divf %221, %222 : vector<16x1xf32>
    %224 = vector.broadcast %223 : vector<16x1xf32> to vector<16x256xf32>
    %225 = arith.subf %215, %224 : vector<16x256xf32>
    %226 = arith.mulf %225, %225 : vector<16x256xf32>
    %cst_138 = arith.constant dense<0.000000e+00> : vector<16xf32>
    %227 = vector.multi_reduction <add>, %226, %cst_138 [1] : vector<16x256xf32> to vector<16xf32>
    %228 = vector.shape_cast %227 : vector<16xf32> to vector<16x1xf32>
    %cst_139 = arith.constant 2.560000e+02 : f32
    %229 = vector.broadcast %cst_139 : f32 to vector<16x1xf32>
    %230 = arith.divf %228, %229 : vector<16x1xf32>
    %cst_140 = arith.constant 9.99999974E-6 : f32
    %231 = vector.broadcast %cst_140 : f32 to vector<16x1xf32>
    %232 = arith.addf %230, %231 : vector<16x1xf32>
    %233 = math.rsqrt %232 : vector<16x1xf32>
    %234 = vector.broadcast %233 : vector<16x1xf32> to vector<16x256xf32>
    %235 = arith.mulf %225, %234 : vector<16x256xf32>
    %236 = vector.broadcast %217 : vector<1x256xf32> to vector<16x256xf32>
    %237 = arith.mulf %235, %236 : vector<16x256xf32>
    %238 = vector.broadcast %219 : vector<1x256xf32> to vector<16x256xf32>
    %239 = arith.addf %237, %238 : vector<16x256xf32>
    %c1_141 = arith.constant 1 : index
    %c0_142 = arith.constant 0 : index
    %c0_143 = arith.constant 0 : index
    %240 = vector.load %arg3[%c1_141, %c0_142, %c0_143] : memref<2x768x256xf32, #tpu.memory_space<vmem>>, vector<1x768x256xf32>
    %241 = vector.shape_cast %240 : vector<1x768x256xf32> to vector<768x256xf32>
    %cst_144 = arith.constant dense<0.000000e+00> : vector<768x16xf32>
    %242 = tpu.matmul %241, %239, %cst_144 {dimension_numbers = #tpu.dot_dimension_numbers<[1], [1], [0], [0], [0, 0, 1, 0], [], []>} : vector<768x256xf32>, vector<16x256xf32>, vector<768x16xf32> -> vector<768x16xf32>
    %c1_145 = arith.constant 1 : index
    %c0_146 = arith.constant 0 : index
    %c0_147 = arith.constant 0 : index
    %243 = vector.load %arg4[%c1_145, %c0_146, %c0_147] : memref<2x768x1xf32, #tpu.memory_space<vmem>>, vector<1x768x1xf32>
    %244 = vector.shape_cast %243 : vector<1x768x1xf32> to vector<768x1xf32>
    %245 = vector.broadcast %244 : vector<768x1xf32> to vector<768x16xf32>
    %246 = arith.addf %242, %245 : vector<768x16xf32>
    %247 = vector.extract_strided_slice %246 {offsets = [0, 0], sizes = [32, 16], strides = [1, 1]} : vector<768x16xf32> to vector<32x16xf32>
    %cst_148 = arith.constant 0.176776692 : f32
    %248 = vector.broadcast %cst_148 : f32 to vector<32x16xf32>
    %249 = arith.mulf %247, %248 : vector<32x16xf32>
    %250 = tpu.transpose %249, [1, 0] : vector<32x16xf32> -> vector<16x32xf32>
    %c0_149 = arith.constant 0 : index
    %c0_150 = arith.constant 0 : index
    %c0_151 = arith.constant 0 : index
    %251 = vector.load %arg16[%c0_149, %c0_150, %c0_151] : memref<8x16x32xf32, #tpu.memory_space<vmem>>, vector<1x16x32xf32>
    %252 = vector.shape_cast %251 : vector<1x16x32xf32> to vector<16x32xf32>
    %253 = vector.shape_cast %250 : vector<16x32xf32> to vector<1x16x32xf32>
    tpu.vector_store %arg16[%c0_149, %c0_150, %c0_151], %253 {strides = array<i32>} : memref<8x16x32xf32, #tpu.memory_space<vmem>>, vector<1x16x32xf32>,
    %254 = vector.extract_strided_slice %246 {offsets = [256, 0], sizes = [32, 16], strides = [1, 1]} : vector<768x16xf32> to vector<32x16xf32>
    %c0_152 = arith.constant 0 : index
    %c0_153 = arith.constant 0 : index
    %c0_154 = arith.constant 0 : index
    %255 = vector.load %arg17[%c0_152, %c0_153, %c0_154] : memref<8x32x16xf32, #tpu.memory_space<vmem>>, vector<1x32x16xf32>
    %256 = vector.shape_cast %255 : vector<1x32x16xf32> to vector<32x16xf32>
    %257 = vector.shape_cast %254 : vector<32x16xf32> to vector<1x32x16xf32>
    tpu.vector_store %arg17[%c0_152, %c0_153, %c0_154], %257 {strides = array<i32>} : memref<8x32x16xf32, #tpu.memory_space<vmem>>, vector<1x32x16xf32>,
    %258 = vector.extract_strided_slice %246 {offsets = [512, 0], sizes = [32, 16], strides = [1, 1]} : vector<768x16xf32> to vector<32x16xf32>
    %c0_155 = arith.constant 0 : index
    %c0_156 = arith.constant 0 : index
    %c0_157 = arith.constant 0 : index
    %259 = vector.load %arg18[%c0_155, %c0_156, %c0_157] : memref<8x32x16xf32, #tpu.memory_space<vmem>>, vector<1x32x16xf32>
    %260 = vector.shape_cast %259 : vector<1x32x16xf32> to vector<32x16xf32>
    %261 = vector.shape_cast %258 : vector<32x16xf32> to vector<1x32x16xf32>
    tpu.vector_store %arg18[%c0_155, %c0_156, %c0_157], %261 {strides = array<i32>} : memref<8x32x16xf32, #tpu.memory_space<vmem>>, vector<1x32x16xf32>,
    %262 = vector.extract_strided_slice %246 {offsets = [32, 0], sizes = [32, 16], strides = [1, 1]} : vector<768x16xf32> to vector<32x16xf32>
    %cst_158 = arith.constant 0.176776692 : f32
    %263 = vector.broadcast %cst_158 : f32 to vector<32x16xf32>
    %264 = arith.mulf %262, %263 : vector<32x16xf32>
    %265 = tpu.transpose %264, [1, 0] : vector<32x16xf32> -> vector<16x32xf32>
    %c1_159 = arith.constant 1 : index
    %c0_160 = arith.constant 0 : index
    %c0_161 = arith.constant 0 : index
    %266 = vector.load %arg16[%c1_159, %c0_160, %c0_161] : memref<8x16x32xf32, #tpu.memory_space<vmem>>, vector<1x16x32xf32>
    %267 = vector.shape_cast %266 : vector<1x16x32xf32> to vector<16x32xf32>
    %268 = vector.shape_cast %265 : vector<16x32xf32> to vector<1x16x32xf32>
    tpu.vector_store %arg16[%c1_159, %c0_160, %c0_161], %268 {strides = array<i32>} : memref<8x16x32xf32, #tpu.memory_space<vmem>>, vector<1x16x32xf32>,
    %269 = vector.extract_strided_slice %246 {offsets = [288, 0], sizes = [32, 16], strides = [1, 1]} : vector<768x16xf32> to vector<32x16xf32>
    %c1_162 = arith.constant 1 : index
    %c0_163 = arith.constant 0 : index
    %c0_164 = arith.constant 0 : index
    %270 = vector.load %arg17[%c1_162, %c0_163, %c0_164] : memref<8x32x16xf32, #tpu.memory_space<vmem>>, vector<1x32x16xf32>
    %271 = vector.shape_cast %270 : vector<1x32x16xf32> to vector<32x16xf32>
    %272 = vector.shape_cast %269 : vector<32x16xf32> to vector<1x32x16xf32>
    tpu.vector_store %arg17[%c1_162, %c0_163, %c0_164], %272 {strides = array<i32>} : memref<8x32x16xf32, #tpu.memory_space<vmem>>, vector<1x32x16xf32>,
    %273 = vector.extract_strided_slice %246 {offsets = [544, 0], sizes = [32, 16], strides = [1, 1]} : vector<768x16xf32> to vector<32x16xf32>
    %c1_165 = arith.constant 1 : index
    %c0_166 = arith.constant 0 : index
    %c0_167 = arith.constant 0 : index
    %274 = vector.load %arg18[%c1_165, %c0_166, %c0_167] : memref<8x32x16xf32, #tpu.memory_space<vmem>>, vector<1x32x16xf32>
    %275 = vector.shape_cast %274 : vector<1x32x16xf32> to vector<32x16xf32>
    %276 = vector.shape_cast %273 : vector<32x16xf32> to vector<1x32x16xf32>
    tpu.vector_store %arg18[%c1_165, %c0_166, %c0_167], %276 {strides = array<i32>} : memref<8x32x16xf32, #tpu.memory_space<vmem>>, vector<1x32x16xf32>,
    %277 = vector.extract_strided_slice %246 {offsets = [64, 0], sizes = [32, 16], strides = [1, 1]} : vector<768x16xf32> to vector<32x16xf32>
    %cst_168 = arith.constant 0.176776692 : f32
    %278 = vector.broadcast %cst_168 : f32 to vector<32x16xf32>
    %279 = arith.mulf %277, %278 : vector<32x16xf32>
    %280 = tpu.transpose %279, [1, 0] : vector<32x16xf32> -> vector<16x32xf32>
    %c2_169 = arith.constant 2 : index
    %c0_170 = arith.constant 0 : index
    %c0_171 = arith.constant 0 : index
    %281 = vector.load %arg16[%c2_169, %c0_170, %c0_171] : memref<8x16x32xf32, #tpu.memory_space<vmem>>, vector<1x16x32xf32>
    %282 = vector.shape_cast %281 : vector<1x16x32xf32> to vector<16x32xf32>
    %283 = vector.shape_cast %280 : vector<16x32xf32> to vector<1x16x32xf32>
    tpu.vector_store %arg16[%c2_169, %c0_170, %c0_171], %283 {strides = array<i32>} : memref<8x16x32xf32, #tpu.memory_space<vmem>>, vector<1x16x32xf32>,
    %284 = vector.extract_strided_slice %246 {offsets = [320, 0], sizes = [32, 16], strides = [1, 1]} : vector<768x16xf32> to vector<32x16xf32>
    %c2_172 = arith.constant 2 : index
    %c0_173 = arith.constant 0 : index
    %c0_174 = arith.constant 0 : index
    %285 = vector.load %arg17[%c2_172, %c0_173, %c0_174] : memref<8x32x16xf32, #tpu.memory_space<vmem>>, vector<1x32x16xf32>
    %286 = vector.shape_cast %285 : vector<1x32x16xf32> to vector<32x16xf32>
    %287 = vector.shape_cast %284 : vector<32x16xf32> to vector<1x32x16xf32>
    tpu.vector_store %arg17[%c2_172, %c0_173, %c0_174], %287 {strides = array<i32>} : memref<8x32x16xf32, #tpu.memory_space<vmem>>, vector<1x32x16xf32>,
    %288 = vector.extract_strided_slice %246 {offsets = [576, 0], sizes = [32, 16], strides = [1, 1]} : vector<768x16xf32> to vector<32x16xf32>
    %c2_175 = arith.constant 2 : index
    %c0_176 = arith.constant 0 : index
    %c0_177 = arith.constant 0 : index
    %289 = vector.load %arg18[%c2_175, %c0_176, %c0_177] : memref<8x32x16xf32, #tpu.memory_space<vmem>>, vector<1x32x16xf32>
    %290 = vector.shape_cast %289 : vector<1x32x16xf32> to vector<32x16xf32>
    %291 = vector.shape_cast %288 : vector<32x16xf32> to vector<1x32x16xf32>
    tpu.vector_store %arg18[%c2_175, %c0_176, %c0_177], %291 {strides = array<i32>} : memref<8x32x16xf32, #tpu.memory_space<vmem>>, vector<1x32x16xf32>,
    %292 = vector.extract_strided_slice %246 {offsets = [96, 0], sizes = [32, 16], strides = [1, 1]} : vector<768x16xf32> to vector<32x16xf32>
    %cst_178 = arith.constant 0.176776692 : f32
    %293 = vector.broadcast %cst_178 : f32 to vector<32x16xf32>
    %294 = arith.mulf %292, %293 : vector<32x16xf32>
    %295 = tpu.transpose %294, [1, 0] : vector<32x16xf32> -> vector<16x32xf32>
    %c3_179 = arith.constant 3 : index
    %c0_180 = arith.constant 0 : index
    %c0_181 = arith.constant 0 : index
    %296 = vector.load %arg16[%c3_179, %c0_180, %c0_181] : memref<8x16x32xf32, #tpu.memory_space<vmem>>, vector<1x16x32xf32>
    %297 = vector.shape_cast %296 : vector<1x16x32xf32> to vector<16x32xf32>
    %298 = vector.shape_cast %295 : vector<16x32xf32> to vector<1x16x32xf32>
    tpu.vector_store %arg16[%c3_179, %c0_180, %c0_181], %298 {strides = array<i32>} : memref<8x16x32xf32, #tpu.memory_space<vmem>>, vector<1x16x32xf32>,
    %299 = vector.extract_strided_slice %246 {offsets = [352, 0], sizes = [32, 16], strides = [1, 1]} : vector<768x16xf32> to vector<32x16xf32>
    %c3_182 = arith.constant 3 : index
    %c0_183 = arith.constant 0 : index
    %c0_184 = arith.constant 0 : index
    %300 = vector.load %arg17[%c3_182, %c0_183, %c0_184] : memref<8x32x16xf32, #tpu.memory_space<vmem>>, vector<1x32x16xf32>
    %301 = vector.shape_cast %300 : vector<1x32x16xf32> to vector<32x16xf32>
    %302 = vector.shape_cast %299 : vector<32x16xf32> to vector<1x32x16xf32>
    tpu.vector_store %arg17[%c3_182, %c0_183, %c0_184], %302 {strides = array<i32>} : memref<8x32x16xf32, #tpu.memory_space<vmem>>, vector<1x32x16xf32>,
    %303 = vector.extract_strided_slice %246 {offsets = [608, 0], sizes = [32, 16], strides = [1, 1]} : vector<768x16xf32> to vector<32x16xf32>
    %c3_185 = arith.constant 3 : index
    %c0_186 = arith.constant 0 : index
    %c0_187 = arith.constant 0 : index
    %304 = vector.load %arg18[%c3_185, %c0_186, %c0_187] : memref<8x32x16xf32, #tpu.memory_space<vmem>>, vector<1x32x16xf32>
    %305 = vector.shape_cast %304 : vector<1x32x16xf32> to vector<32x16xf32>
    %306 = vector.shape_cast %303 : vector<32x16xf32> to vector<1x32x16xf32>
    tpu.vector_store %arg18[%c3_185, %c0_186, %c0_187], %306 {strides = array<i32>} : memref<8x32x16xf32, #tpu.memory_space<vmem>>, vector<1x32x16xf32>,
    %307 = vector.extract_strided_slice %246 {offsets = [128, 0], sizes = [32, 16], strides = [1, 1]} : vector<768x16xf32> to vector<32x16xf32>
    %cst_188 = arith.constant 0.176776692 : f32
    %308 = vector.broadcast %cst_188 : f32 to vector<32x16xf32>
    %309 = arith.mulf %307, %308 : vector<32x16xf32>
    %310 = tpu.transpose %309, [1, 0] : vector<32x16xf32> -> vector<16x32xf32>
    %c4_189 = arith.constant 4 : index
    %c0_190 = arith.constant 0 : index
    %c0_191 = arith.constant 0 : index
    %311 = vector.load %arg16[%c4_189, %c0_190, %c0_191] : memref<8x16x32xf32, #tpu.memory_space<vmem>>, vector<1x16x32xf32>
    %312 = vector.shape_cast %311 : vector<1x16x32xf32> to vector<16x32xf32>
    %313 = vector.shape_cast %310 : vector<16x32xf32> to vector<1x16x32xf32>
    tpu.vector_store %arg16[%c4_189, %c0_190, %c0_191], %313 {strides = array<i32>} : memref<8x16x32xf32, #tpu.memory_space<vmem>>, vector<1x16x32xf32>,
    %314 = vector.extract_strided_slice %246 {offsets = [384, 0], sizes = [32, 16], strides = [1, 1]} : vector<768x16xf32> to vector<32x16xf32>
    %c4_192 = arith.constant 4 : index
    %c0_193 = arith.constant 0 : index
    %c0_194 = arith.constant 0 : index
    %315 = vector.load %arg17[%c4_192, %c0_193, %c0_194] : memref<8x32x16xf32, #tpu.memory_space<vmem>>, vector<1x32x16xf32>
    %316 = vector.shape_cast %315 : vector<1x32x16xf32> to vector<32x16xf32>
    %317 = vector.shape_cast %314 : vector<32x16xf32> to vector<1x32x16xf32>
    tpu.vector_store %arg17[%c4_192, %c0_193, %c0_194], %317 {strides = array<i32>} : memref<8x32x16xf32, #tpu.memory_space<vmem>>, vector<1x32x16xf32>,
    %318 = vector.extract_strided_slice %246 {offsets = [640, 0], sizes = [32, 16], strides = [1, 1]} : vector<768x16xf32> to vector<32x16xf32>
    %c4_195 = arith.constant 4 : index
    %c0_196 = arith.constant 0 : index
    %c0_197 = arith.constant 0 : index
    %319 = vector.load %arg18[%c4_195, %c0_196, %c0_197] : memref<8x32x16xf32, #tpu.memory_space<vmem>>, vector<1x32x16xf32>
    %320 = vector.shape_cast %319 : vector<1x32x16xf32> to vector<32x16xf32>
    %321 = vector.shape_cast %318 : vector<32x16xf32> to vector<1x32x16xf32>
    tpu.vector_store %arg18[%c4_195, %c0_196, %c0_197], %321 {strides = array<i32>} : memref<8x32x16xf32, #tpu.memory_space<vmem>>, vector<1x32x16xf32>,
    %322 = vector.extract_strided_slice %246 {offsets = [160, 0], sizes = [32, 16], strides = [1, 1]} : vector<768x16xf32> to vector<32x16xf32>
    %cst_198 = arith.constant 0.176776692 : f32
    %323 = vector.broadcast %cst_198 : f32 to vector<32x16xf32>
    %324 = arith.mulf %322, %323 : vector<32x16xf32>
    %325 = tpu.transpose %324, [1, 0] : vector<32x16xf32> -> vector<16x32xf32>
    %c5_199 = arith.constant 5 : index
    %c0_200 = arith.constant 0 : index
    %c0_201 = arith.constant 0 : index
    %326 = vector.load %arg16[%c5_199, %c0_200, %c0_201] : memref<8x16x32xf32, #tpu.memory_space<vmem>>, vector<1x16x32xf32>
    %327 = vector.shape_cast %326 : vector<1x16x32xf32> to vector<16x32xf32>
    %328 = vector.shape_cast %325 : vector<16x32xf32> to vector<1x16x32xf32>
    tpu.vector_store %arg16[%c5_199, %c0_200, %c0_201], %328 {strides = array<i32>} : memref<8x16x32xf32, #tpu.memory_space<vmem>>, vector<1x16x32xf32>,
    %329 = vector.extract_strided_slice %246 {offsets = [416, 0], sizes = [32, 16], strides = [1, 1]} : vector<768x16xf32> to vector<32x16xf32>
    %c5_202 = arith.constant 5 : index
    %c0_203 = arith.constant 0 : index
    %c0_204 = arith.constant 0 : index
    %330 = vector.load %arg17[%c5_202, %c0_203, %c0_204] : memref<8x32x16xf32, #tpu.memory_space<vmem>>, vector<1x32x16xf32>
    %331 = vector.shape_cast %330 : vector<1x32x16xf32> to vector<32x16xf32>
    %332 = vector.shape_cast %329 : vector<32x16xf32> to vector<1x32x16xf32>
    tpu.vector_store %arg17[%c5_202, %c0_203, %c0_204], %332 {strides = array<i32>} : memref<8x32x16xf32, #tpu.memory_space<vmem>>, vector<1x32x16xf32>,
    %333 = vector.extract_strided_slice %246 {offsets = [672, 0], sizes = [32, 16], strides = [1, 1]} : vector<768x16xf32> to vector<32x16xf32>
    %c5_205 = arith.constant 5 : index
    %c0_206 = arith.constant 0 : index
    %c0_207 = arith.constant 0 : index
    %334 = vector.load %arg18[%c5_205, %c0_206, %c0_207] : memref<8x32x16xf32, #tpu.memory_space<vmem>>, vector<1x32x16xf32>
    %335 = vector.shape_cast %334 : vector<1x32x16xf32> to vector<32x16xf32>
    %336 = vector.shape_cast %333 : vector<32x16xf32> to vector<1x32x16xf32>
    tpu.vector_store %arg18[%c5_205, %c0_206, %c0_207], %336 {strides = array<i32>} : memref<8x32x16xf32, #tpu.memory_space<vmem>>, vector<1x32x16xf32>,
    %337 = vector.extract_strided_slice %246 {offsets = [192, 0], sizes = [32, 16], strides = [1, 1]} : vector<768x16xf32> to vector<32x16xf32>
    %cst_208 = arith.constant 0.176776692 : f32
    %338 = vector.broadcast %cst_208 : f32 to vector<32x16xf32>
    %339 = arith.mulf %337, %338 : vector<32x16xf32>
    %340 = tpu.transpose %339, [1, 0] : vector<32x16xf32> -> vector<16x32xf32>
    %c6_209 = arith.constant 6 : index
    %c0_210 = arith.constant 0 : index
    %c0_211 = arith.constant 0 : index
    %341 = vector.load %arg16[%c6_209, %c0_210, %c0_211] : memref<8x16x32xf32, #tpu.memory_space<vmem>>, vector<1x16x32xf32>
    %342 = vector.shape_cast %341 : vector<1x16x32xf32> to vector<16x32xf32>
    %343 = vector.shape_cast %340 : vector<16x32xf32> to vector<1x16x32xf32>
    tpu.vector_store %arg16[%c6_209, %c0_210, %c0_211], %343 {strides = array<i32>} : memref<8x16x32xf32, #tpu.memory_space<vmem>>, vector<1x16x32xf32>,
    %344 = vector.extract_strided_slice %246 {offsets = [448, 0], sizes = [32, 16], strides = [1, 1]} : vector<768x16xf32> to vector<32x16xf32>
    %c6_212 = arith.constant 6 : index
    %c0_213 = arith.constant 0 : index
    %c0_214 = arith.constant 0 : index
    %345 = vector.load %arg17[%c6_212, %c0_213, %c0_214] : memref<8x32x16xf32, #tpu.memory_space<vmem>>, vector<1x32x16xf32>
    %346 = vector.shape_cast %345 : vector<1x32x16xf32> to vector<32x16xf32>
    %347 = vector.shape_cast %344 : vector<32x16xf32> to vector<1x32x16xf32>
    tpu.vector_store %arg17[%c6_212, %c0_213, %c0_214], %347 {strides = array<i32>} : memref<8x32x16xf32, #tpu.memory_space<vmem>>, vector<1x32x16xf32>,
    %348 = vector.extract_strided_slice %246 {offsets = [704, 0], sizes = [32, 16], strides = [1, 1]} : vector<768x16xf32> to vector<32x16xf32>
    %c6_215 = arith.constant 6 : index
    %c0_216 = arith.constant 0 : index
    %c0_217 = arith.constant 0 : index
    %349 = vector.load %arg18[%c6_215, %c0_216, %c0_217] : memref<8x32x16xf32, #tpu.memory_space<vmem>>, vector<1x32x16xf32>
    %350 = vector.shape_cast %349 : vector<1x32x16xf32> to vector<32x16xf32>
    %351 = vector.shape_cast %348 : vector<32x16xf32> to vector<1x32x16xf32>
    tpu.vector_store %arg18[%c6_215, %c0_216, %c0_217], %351 {strides = array<i32>} : memref<8x32x16xf32, #tpu.memory_space<vmem>>, vector<1x32x16xf32>,
    %352 = vector.extract_strided_slice %246 {offsets = [224, 0], sizes = [32, 16], strides = [1, 1]} : vector<768x16xf32> to vector<32x16xf32>
    %cst_218 = arith.constant 0.176776692 : f32
    %353 = vector.broadcast %cst_218 : f32 to vector<32x16xf32>
    %354 = arith.mulf %352, %353 : vector<32x16xf32>
    %355 = tpu.transpose %354, [1, 0] : vector<32x16xf32> -> vector<16x32xf32>
    %c7_219 = arith.constant 7 : index
    %c0_220 = arith.constant 0 : index
    %c0_221 = arith.constant 0 : index
    %356 = vector.load %arg16[%c7_219, %c0_220, %c0_221] : memref<8x16x32xf32, #tpu.memory_space<vmem>>, vector<1x16x32xf32>
    %357 = vector.shape_cast %356 : vector<1x16x32xf32> to vector<16x32xf32>
    %358 = vector.shape_cast %355 : vector<16x32xf32> to vector<1x16x32xf32>
    tpu.vector_store %arg16[%c7_219, %c0_220, %c0_221], %358 {strides = array<i32>} : memref<8x16x32xf32, #tpu.memory_space<vmem>>, vector<1x16x32xf32>,
    %359 = vector.extract_strided_slice %246 {offsets = [480, 0], sizes = [32, 16], strides = [1, 1]} : vector<768x16xf32> to vector<32x16xf32>
    %c7_222 = arith.constant 7 : index
    %c0_223 = arith.constant 0 : index
    %c0_224 = arith.constant 0 : index
    %360 = vector.load %arg17[%c7_222, %c0_223, %c0_224] : memref<8x32x16xf32, #tpu.memory_space<vmem>>, vector<1x32x16xf32>
    %361 = vector.shape_cast %360 : vector<1x32x16xf32> to vector<32x16xf32>
    %362 = vector.shape_cast %359 : vector<32x16xf32> to vector<1x32x16xf32>
    tpu.vector_store %arg17[%c7_222, %c0_223, %c0_224], %362 {strides = array<i32>} : memref<8x32x16xf32, #tpu.memory_space<vmem>>, vector<1x32x16xf32>,
    %363 = vector.extract_strided_slice %246 {offsets = [736, 0], sizes = [32, 16], strides = [1, 1]} : vector<768x16xf32> to vector<32x16xf32>
    %c7_225 = arith.constant 7 : index
    %c0_226 = arith.constant 0 : index
    %c0_227 = arith.constant 0 : index
    %364 = vector.load %arg18[%c7_225, %c0_226, %c0_227] : memref<8x32x16xf32, #tpu.memory_space<vmem>>, vector<1x32x16xf32>
    %365 = vector.shape_cast %364 : vector<1x32x16xf32> to vector<32x16xf32>
    %366 = vector.shape_cast %363 : vector<32x16xf32> to vector<1x32x16xf32>
    tpu.vector_store %arg18[%c7_225, %c0_226, %c0_227], %366 {strides = array<i32>} : memref<8x32x16xf32, #tpu.memory_space<vmem>>, vector<1x32x16xf32>,
    %c0_228 = arith.constant 0 : index
    %c0_229 = arith.constant 0 : index
    %c0_230 = arith.constant 0 : index
    %367 = vector.load %arg16[%c0_228, %c0_229, %c0_230] : memref<8x16x32xf32, #tpu.memory_space<vmem>>, vector<8x16x32xf32>
    %c0_231 = arith.constant 0 : index
    %c0_232 = arith.constant 0 : index
    %c0_233 = arith.constant 0 : index
    %368 = vector.load %arg17[%c0_231, %c0_232, %c0_233] : memref<8x32x16xf32, #tpu.memory_space<vmem>>, vector<8x32x16xf32>
    %c0_234 = arith.constant 0 : index
    %c0_235 = arith.constant 0 : index
    %c0_236 = arith.constant 0 : index
    %369 = vector.load %arg18[%c0_234, %c0_235, %c0_236] : memref<8x32x16xf32, #tpu.memory_space<vmem>>, vector<8x32x16xf32>
    "tpu.trace_start"() <{level = 10 : i32, message = "hqd,hdk->hqk"}> : () -> ()
    %cst_237 = arith.constant dense<0.000000e+00> : vector<8x16x16xf32>
    %370 = tpu.matmul %367, %368, %cst_237 {dimension_numbers = #tpu.dot_dimension_numbers<[2], [1], [1], [2], [0, 0, 0, 1, 1, 2], [0], [0]>} : vector<8x16x32xf32>, vector<8x32x16xf32>, vector<8x16x16xf32> -> vector<8x16x16xf32>
    "tpu.trace_stop"() : () -> ()
    %371 = vector.shape_cast %3 : vector<16x16xf32> to vector<1x16x16xf32>
    %372 = vector.broadcast %371 : vector<1x16x16xf32> to vector<8x16x16xf32>
    %373 = arith.addf %370, %372 : vector<8x16x16xf32>
    %cst_238 = arith.constant dense<0xFF800000> : vector<8x16xf32>
    %374 = vector.multi_reduction <maximumf>, %373, %cst_238 [2] : vector<8x16x16xf32> to vector<8x16xf32>
    %375 = vector.shape_cast %374 : vector<8x16xf32> to vector<8x16x1xf32>
    %376 = vector.broadcast %375 : vector<8x16x1xf32> to vector<8x16x16xf32>
    %377 = arith.subf %373, %376 : vector<8x16x16xf32>
    %378 = math.exp %377 : vector<8x16x16xf32>
    %cst_239 = arith.constant dense<0.000000e+00> : vector<8x16xf32>
    %379 = vector.multi_reduction <add>, %378, %cst_239 [2] : vector<8x16x16xf32> to vector<8x16xf32>
    %380 = vector.shape_cast %379 : vector<8x16xf32> to vector<8x16x1xf32>
    %381 = tpu.reciprocal %380 {approx = true} : vector<8x16x1xf32> -> vector<8x16x1xf32>
    %382 = vector.broadcast %381 : vector<8x16x1xf32> to vector<8x16x16xf32>
    %383 = arith.mulf %378, %382 : vector<8x16x16xf32>
    "tpu.trace_start"() <{level = 10 : i32, message = "hdk,hqk->hdq"}> : () -> ()
    %cst_240 = arith.constant dense<0.000000e+00> : vector<8x32x16xf32>
    %384 = tpu.matmul %369, %383, %cst_240 {dimension_numbers = #tpu.dot_dimension_numbers<[2], [2], [1], [1], [0, 0, 0, 1, 1, 1], [0], [0]>} : vector<8x32x16xf32>, vector<8x16x16xf32>, vector<8x32x16xf32> -> vector<8x32x16xf32>
    "tpu.trace_stop"() : () -> ()
    %385 = vector.extract_strided_slice %384 {offsets = [0, 0, 0], sizes = [1, 32, 16], strides = [1, 1, 1]} : vector<8x32x16xf32> to vector<1x32x16xf32>
    %386 = vector.shape_cast %385 : vector<1x32x16xf32> to vector<32x16xf32>
    %387 = vector.extract_strided_slice %384 {offsets = [1, 0, 0], sizes = [1, 32, 16], strides = [1, 1, 1]} : vector<8x32x16xf32> to vector<1x32x16xf32>
    %388 = vector.shape_cast %387 : vector<1x32x16xf32> to vector<32x16xf32>
    %389 = vector.extract_strided_slice %384 {offsets = [2, 0, 0], sizes = [1, 32, 16], strides = [1, 1, 1]} : vector<8x32x16xf32> to vector<1x32x16xf32>
    %390 = vector.shape_cast %389 : vector<1x32x16xf32> to vector<32x16xf32>
    %391 = vector.extract_strided_slice %384 {offsets = [3, 0, 0], sizes = [1, 32, 16], strides = [1, 1, 1]} : vector<8x32x16xf32> to vector<1x32x16xf32>
    %392 = vector.shape_cast %391 : vector<1x32x16xf32> to vector<32x16xf32>
    %393 = vector.extract_strided_slice %384 {offsets = [4, 0, 0], sizes = [1, 32, 16], strides = [1, 1, 1]} : vector<8x32x16xf32> to vector<1x32x16xf32>
    %394 = vector.shape_cast %393 : vector<1x32x16xf32> to vector<32x16xf32>
    %395 = vector.extract_strided_slice %384 {offsets = [5, 0, 0], sizes = [1, 32, 16], strides = [1, 1, 1]} : vector<8x32x16xf32> to vector<1x32x16xf32>
    %396 = vector.shape_cast %395 : vector<1x32x16xf32> to vector<32x16xf32>
    %397 = vector.extract_strided_slice %384 {offsets = [6, 0, 0], sizes = [1, 32, 16], strides = [1, 1, 1]} : vector<8x32x16xf32> to vector<1x32x16xf32>
    %398 = vector.shape_cast %397 : vector<1x32x16xf32> to vector<32x16xf32>
    %399 = vector.extract_strided_slice %384 {offsets = [7, 0, 0], sizes = [1, 32, 16], strides = [1, 1, 1]} : vector<8x32x16xf32> to vector<1x32x16xf32>
    %400 = vector.shape_cast %399 : vector<1x32x16xf32> to vector<32x16xf32>
    %401 = tpu.concatenate %386, %388, %390, %392, %394, %396, %398, %400 in 0 : vector<32x16xf32>, vector<32x16xf32>, vector<32x16xf32>, vector<32x16xf32>, vector<32x16xf32>, vector<32x16xf32>, vector<32x16xf32>, vector<32x16xf32> -> vector<256x16xf32>
    %c1_241 = arith.constant 1 : index
    %c0_242 = arith.constant 0 : index
    %c0_243 = arith.constant 0 : index
    %402 = vector.load %arg5[%c1_241, %c0_242, %c0_243] : memref<2x256x256xf32, #tpu.memory_space<vmem>>, vector<1x256x256xf32>
    %403 = vector.shape_cast %402 : vector<1x256x256xf32> to vector<256x256xf32>
    %cst_244 = arith.constant dense<0.000000e+00> : vector<256x16xf32>
    %404 = tpu.matmul %403, %401, %cst_244 {dimension_numbers = #tpu.dot_dimension_numbers<[1], [0], [0], [1], [0, 0, 1, 1], [], []>} : vector<256x256xf32>, vector<256x16xf32>, vector<256x16xf32> -> vector<256x16xf32>
    %405 = tpu.transpose %404, [1, 0] : vector<256x16xf32> -> vector<16x256xf32>
    %c1_245 = arith.constant 1 : index
    %c0_246 = arith.constant 0 : index
    %c0_247 = arith.constant 0 : index
    %406 = vector.load %arg6[%c1_245, %c0_246, %c0_247] : memref<2x1x256xf32, #tpu.memory_space<vmem>>, vector<1x1x256xf32>
    %407 = vector.shape_cast %406 : vector<1x1x256xf32> to vector<1x256xf32>
    %408 = vector.broadcast %407 : vector<1x256xf32> to vector<16x256xf32>
    %409 = arith.addf %405, %408 : vector<16x256xf32>
    %410 = arith.addf %239, %409 : vector<16x256xf32>
    %c1_248 = arith.constant 1 : index
    %c0_249 = arith.constant 0 : index
    %c0_250 = arith.constant 0 : index
    %411 = vector.load %arg7[%c1_248, %c0_249, %c0_250] : memref<2x1x256xf32, #tpu.memory_space<vmem>>, vector<1x1x256xf32>
    %412 = vector.shape_cast %411 : vector<1x1x256xf32> to vector<1x256xf32>
    %c1_251 = arith.constant 1 : index
    %c0_252 = arith.constant 0 : index
    %c0_253 = arith.constant 0 : index
    %413 = vector.load %arg8[%c1_251, %c0_252, %c0_253] : memref<2x1x256xf32, #tpu.memory_space<vmem>>, vector<1x1x256xf32>
    %414 = vector.shape_cast %413 : vector<1x1x256xf32> to vector<1x256xf32>
    %cst_254 = arith.constant dense<0.000000e+00> : vector<16xf32>
    %415 = vector.multi_reduction <add>, %410, %cst_254 [1] : vector<16x256xf32> to vector<16xf32>
    %416 = vector.shape_cast %415 : vector<16xf32> to vector<16x1xf32>
    %cst_255 = arith.constant 2.560000e+02 : f32
    %417 = vector.broadcast %cst_255 : f32 to vector<16x1xf32>
    %418 = arith.divf %416, %417 : vector<16x1xf32>
    %419 = vector.broadcast %418 : vector<16x1xf32> to vector<16x256xf32>
    %420 = arith.subf %410, %419 : vector<16x256xf32>
    %421 = arith.mulf %420, %420 : vector<16x256xf32>
    %cst_256 = arith.constant dense<0.000000e+00> : vector<16xf32>
    %422 = vector.multi_reduction <add>, %421, %cst_256 [1] : vector<16x256xf32> to vector<16xf32>
    %423 = vector.shape_cast %422 : vector<16xf32> to vector<16x1xf32>
    %cst_257 = arith.constant 2.560000e+02 : f32
    %424 = vector.broadcast %cst_257 : f32 to vector<16x1xf32>
    %425 = arith.divf %423, %424 : vector<16x1xf32>
    %cst_258 = arith.constant 9.99999974E-6 : f32
    %426 = vector.broadcast %cst_258 : f32 to vector<16x1xf32>
    %427 = arith.addf %425, %426 : vector<16x1xf32>
    %428 = math.rsqrt %427 : vector<16x1xf32>
    %429 = vector.broadcast %428 : vector<16x1xf32> to vector<16x256xf32>
    %430 = arith.mulf %420, %429 : vector<16x256xf32>
    %431 = vector.broadcast %412 : vector<1x256xf32> to vector<16x256xf32>
    %432 = arith.mulf %430, %431 : vector<16x256xf32>
    %433 = vector.broadcast %414 : vector<1x256xf32> to vector<16x256xf32>
    %434 = arith.addf %432, %433 : vector<16x256xf32>
    %c1_259 = arith.constant 1 : index
    %c0_260 = arith.constant 0 : index
    %c0_261 = arith.constant 0 : index
    %435 = vector.load %arg9[%c1_259, %c0_260, %c0_261] : memref<2x256x256xf32, #tpu.memory_space<vmem>>, vector<1x256x256xf32>
    %436 = vector.shape_cast %435 : vector<1x256x256xf32> to vector<256x256xf32>
    %cst_262 = arith.constant dense<0.000000e+00> : vector<16x256xf32>
    %437 = tpu.matmul %434, %436, %cst_262 {dimension_numbers = #tpu.dot_dimension_numbers<[1], [0], [0], [1], [0, 0, 1, 1], [], []>} : vector<16x256xf32>, vector<256x256xf32>, vector<16x256xf32> -> vector<16x256xf32>
    %c1_263 = arith.constant 1 : index
    %c0_264 = arith.constant 0 : index
    %c0_265 = arith.constant 0 : index
    %438 = vector.load %arg10[%c1_263, %c0_264, %c0_265] : memref<2x1x256xf32, #tpu.memory_space<vmem>>, vector<1x1x256xf32>
    %439 = vector.shape_cast %438 : vector<1x1x256xf32> to vector<1x256xf32>
    %440 = vector.broadcast %439 : vector<1x256xf32> to vector<16x256xf32>
    %441 = arith.addf %437, %440 : vector<16x256xf32>
    %cst_266 = arith.constant 0.000000e+00 : f32
    %442 = vector.broadcast %cst_266 : f32 to vector<16x256xf32>
    %443 = arith.maximumf %441, %442 : vector<16x256xf32>
    %c1_267 = arith.constant 1 : index
    %c0_268 = arith.constant 0 : index
    %c0_269 = arith.constant 0 : index
    %444 = vector.load %arg11[%c1_267, %c0_268, %c0_269] : memref<2x256x256xf32, #tpu.memory_space<vmem>>, vector<1x256x256xf32>
    %445 = vector.shape_cast %444 : vector<1x256x256xf32> to vector<256x256xf32>
    %cst_270 = arith.constant dense<0.000000e+00> : vector<16x256xf32>
    %446 = tpu.matmul %443, %445, %cst_270 {dimension_numbers = #tpu.dot_dimension_numbers<[1], [0], [0], [1], [0, 0, 1, 1], [], []>} : vector<16x256xf32>, vector<256x256xf32>, vector<16x256xf32> -> vector<16x256xf32>
    %c1_271 = arith.constant 1 : index
    %c0_272 = arith.constant 0 : index
    %c0_273 = arith.constant 0 : index
    %447 = vector.load %arg12[%c1_271, %c0_272, %c0_273] : memref<2x1x256xf32, #tpu.memory_space<vmem>>, vector<1x1x256xf32>
    %448 = vector.shape_cast %447 : vector<1x1x256xf32> to vector<1x256xf32>
    %449 = vector.broadcast %448 : vector<1x256xf32> to vector<16x256xf32>
    %450 = arith.addf %446, %449 : vector<16x256xf32>
    %451 = arith.addf %434, %450 : vector<16x256xf32>
    %c1_274 = arith.constant 1 : index
    %c0_275 = arith.constant 0 : index
    %c0_276 = arith.constant 0 : index
    %452 = vector.load %arg13[%c1_274, %c0_275, %c0_276] : memref<2x1x256xf32, #tpu.memory_space<vmem>>, vector<1x1x256xf32>
    %453 = vector.shape_cast %452 : vector<1x1x256xf32> to vector<1x256xf32>
    %c1_277 = arith.constant 1 : index
    %c0_278 = arith.constant 0 : index
    %c0_279 = arith.constant 0 : index
    %454 = vector.load %arg14[%c1_277, %c0_278, %c0_279] : memref<2x1x256xf32, #tpu.memory_space<vmem>>, vector<1x1x256xf32>
    %455 = vector.shape_cast %454 : vector<1x1x256xf32> to vector<1x256xf32>
    %cst_280 = arith.constant dense<0.000000e+00> : vector<16xf32>
    %456 = vector.multi_reduction <add>, %451, %cst_280 [1] : vector<16x256xf32> to vector<16xf32>
    %457 = vector.shape_cast %456 : vector<16xf32> to vector<16x1xf32>
    %cst_281 = arith.constant 2.560000e+02 : f32
    %458 = vector.broadcast %cst_281 : f32 to vector<16x1xf32>
    %459 = arith.divf %457, %458 : vector<16x1xf32>
    %460 = vector.broadcast %459 : vector<16x1xf32> to vector<16x256xf32>
    %461 = arith.subf %451, %460 : vector<16x256xf32>
    %462 = arith.mulf %461, %461 : vector<16x256xf32>
    %cst_282 = arith.constant dense<0.000000e+00> : vector<16xf32>
    %463 = vector.multi_reduction <add>, %462, %cst_282 [1] : vector<16x256xf32> to vector<16xf32>
    %464 = vector.shape_cast %463 : vector<16xf32> to vector<16x1xf32>
    %cst_283 = arith.constant 2.560000e+02 : f32
    %465 = vector.broadcast %cst_283 : f32 to vector<16x1xf32>
    %466 = arith.divf %464, %465 : vector<16x1xf32>
    %cst_284 = arith.constant 9.99999974E-6 : f32
    %467 = vector.broadcast %cst_284 : f32 to vector<16x1xf32>
    %468 = arith.addf %466, %467 : vector<16x1xf32>
    %469 = math.rsqrt %468 : vector<16x1xf32>
    %470 = vector.broadcast %469 : vector<16x1xf32> to vector<16x256xf32>
    %471 = arith.mulf %461, %470 : vector<16x256xf32>
    %472 = vector.broadcast %453 : vector<1x256xf32> to vector<16x256xf32>
    %473 = arith.mulf %471, %472 : vector<16x256xf32>
    %474 = vector.broadcast %455 : vector<1x256xf32> to vector<16x256xf32>
    %475 = arith.addf %473, %474 : vector<16x256xf32>
    %c0_285 = arith.constant 0 : index
    %c0_286 = arith.constant 0 : index
    %476 = vector.load %arg15[%c0_285, %c0_286] : memref<16x256xf32, #tpu.memory_space<vmem>>, vector<16x256xf32>
    tpu.vector_store %arg15[%c0_285, %c0_286], %475 {strides = array<i32>} : memref<16x256xf32, #tpu.memory_space<vmem>>, vector<16x256xf32>,
    return
  }
}

</mosaic_0001>

<llo_original>
// kernel: tpu_custom_call.1
$region0: #{tpu_custom_call.1}
  #allocation0 [shape = 'u32[]', space=smem, size = 0x4, offset = 0x4, fixed_abs, tag = 'smem constant byte address 0x4 - core index']
  #allocation1 [shape = 'u32[144,128]{1,0:T(1,128)}', space=vmem, size = 0x12000, scoped, tag = 'internal scratch']
  #allocation2 [shape = 'f32[8,16,32]{2,1,0:T(8,128)}', space=vmem, size = 0x10000, scoped, tag = 'scratch operand']
  #allocation3 [shape = 'f32[8,32,16]{2,1,0:T(8,128)}', space=vmem, size = 0x20000, scoped, tag = 'scratch operand']
  #allocation4 [shape = 'f32[8,32,16]{2,1,0:T(8,128)}', space=vmem, size = 0x20000, scoped, tag = 'scratch operand']
  %s0 = inlined_call_operand.hbm [shape: f32[16,256], index: 0, kind: input, shape index: {}]
  %s1 = inlined_call_operand.hbm [shape: f32[16,256], index: 1, kind: input, shape index: {}]
  %s2 = inlined_call_operand.hbm [shape: f32[16,16], index: 2, kind: input, shape index: {}]
  %s3 = inlined_call_operand.hbm [shape: f32[2,768,256], index: 3, kind: input, shape index: {}]
  %s4 = inlined_call_operand.vmem [shape: f32[2,768,1], index: 4, kind: input, shape index: {}]
  %s5 = inlined_call_operand.hbm [shape: f32[2,256,256], index: 5, kind: input, shape index: {}]
  %s6 = inlined_call_operand.hbm [shape: f32[2,1,256], index: 6, kind: input, shape index: {}]
  %s7 = inlined_call_operand.hbm [shape: f32[2,1,256], index: 7, kind: input, shape index: {}]
  %s8 = inlined_call_operand.hbm [shape: f32[2,1,256], index: 8, kind: input, shape index: {}]
  %s9 = inlined_call_operand.hbm [shape: f32[2,256,256], index: 9, kind: input, shape index: {}]
  %s10 = inlined_call_operand.hbm [shape: f32[2,1,256], index: 10, kind: input, shape index: {}]
  %s11 = inlined_call_operand.hbm [shape: f32[2,256,256], index: 11, kind: input, shape index: {}]
  %s12 = inlined_call_operand.hbm [shape: f32[2,1,256], index: 12, kind: input, shape index: {}]
  %s13 = inlined_call_operand.hbm [shape: f32[2,1,256], index: 13, kind: input, shape index: {}]
  %s14 = inlined_call_operand.hbm [shape: f32[2,1,256], index: 14, kind: input, shape index: {}]
  %s15 = inlined_call_operand.hbm [shape: f32[16,256], index: 15, kind: output, shape index: {}]
  %s16 = sld [smem:[#allocation0]]
  $region126: #{tpu_custom_call.1} parent=0
    _
  %s18 = ssub.s32 1, %s16
  %s19 = scalar_select 0, %s18, %s16
  $region1: #{tpu_custom_call.1} parent=0
    #allocation5 [shape = 'u8[16384]{0}', space=vmem, size = 0x4000, scoped, tag = 'input window, operand 0, single buffered']
    #allocation6 [shape = 's32[1]{0}', space=sflag, size = 0x4, scoped, tag = 'scoped memory for tpu_custom_call.1']
    #allocation7 [shape = 's32[1]{0}', space=sflag, size = 0x4, scoped, tag = 'scoped memory for tpu_custom_call.1']
    #allocation8 [shape = 'u8[16384]{0}', space=vmem, size = 0x4000, scoped, tag = 'input window, operand 1, single buffered']
    #allocation9 [shape = 's32[1]{0}', space=sflag, size = 0x4, scoped, tag = 'scoped memory for tpu_custom_call.1']
    #allocation10 [shape = 'u8[8192]{0}', space=vmem, size = 0x2000, scoped, tag = 'input window, operand 2, single buffered']
    #allocation11 [shape = 'u8[1572864]{0}', space=vmem, size = 0x180000, scoped, tag = 'input window, operand 3, single buffered']
    #allocation12 [shape = 's32[1]{0}', space=sflag, size = 0x4, scoped, tag = 'scoped memory for tpu_custom_call.1']
    #allocation13 [shape = 'u8[524288]{0}', space=vmem, size = 0x80000, scoped, tag = 'input window, operand 5, single buffered']
    #allocation14 [shape = 'u8[2048]{0}', space=vmem, size = 0x800, scoped, tag = 'input window, operand 6, single buffered']
    #allocation15 [shape = 's32[1]{0}', space=sflag, size = 0x4, scoped, tag = 'scoped memory for tpu_custom_call.1']
    #allocation16 [shape = 'u8[2048]{0}', space=vmem, size = 0x800, scoped, tag = 'input window, operand 7, single buffered']
    #allocation17 [shape = 'u8[2048]{0}', space=vmem, size = 0x800, scoped, tag = 'input window, operand 8, single buffered']
    #allocation18 [shape = 's32[1]{0}', space=sflag, size = 0x4, scoped, tag = 'scoped memory for tpu_custom_call.1']
    #allocation19 [shape = 'u8[524288]{0}', space=vmem, size = 0x80000, scoped, tag = 'input window, operand 9, single buffered']
    #allocation20 [shape = 'u8[2048]{0}', space=vmem, size = 0x800, scoped, tag = 'input window, operand 10, single buffered']
    #allocation21 [shape = 's32[1]{0}', space=sflag, size = 0x4, scoped, tag = 'scoped memory for tpu_custom_call.1']
    #allocation22 [shape = 'u8[524288]{0}', space=vmem, size = 0x80000, scoped, tag = 'input window, operand 11, single buffered']
    #allocation23 [shape = 'u8[2048]{0}', space=vmem, size = 0x800, scoped, tag = 'input window, operand 12, single buffered']
    #allocation24 [shape = 's32[1]{0}', space=sflag, size = 0x4, scoped, tag = 'scoped memory for tpu_custom_call.1']
    #allocation25 [shape = 'u8[2048]{0}', space=vmem, size = 0x800, scoped, tag = 'input window, operand 13, single buffered']
    #allocation26 [shape = 'u8[2048]{0}', space=vmem, size = 0x800, scoped, tag = 'input window, operand 14, single buffered']
    #allocation27 [shape = 's32[1]{0}', space=sflag, size = 0x4, scoped, tag = 'scoped memory for tpu_custom_call.1']
    #allocation28 [shape = 'u8[16384]{0}', space=vmem, size = 0x4000, scoped, tag = 'output window, operand 0, single buffered']
    %20 = vsyncpa [#allocation6], 0
    %21 = vsyncpa [#allocation9], 0
    %22 = vsyncpa [#allocation12], 0
    %23 = vsyncpa [#allocation15], 0
    %24 = vsyncpa [#allocation18], 0
    %25 = vsyncpa [#allocation21], 0
    %26 = vsyncpa [#allocation24], 0
    %27 = vsyncpa [#allocation27], 0
    %28 = vsyncpa [#allocation7], 0
    // Predicated region
    $region2: #{tpu_custom_call.1} parent=1 // pred_check
      _
    $region3: #{tpu_custom_call.1} parent=1 // pred_check_branch
      %30 = sbr.rel (0) target = $region5
    $region4: #{tpu_custom_call.1} parent=1 // pred_region
      %s32 = ssub.s32 512, 512
      %33 = vsyncadd [#allocation6], %s32
      %s34 = sshll.u32 [#allocation5], 4
      %s35 = int_to_ptr.vmem [resolvable:$true] %s34
      %40 = dma.hbm_to_vmem [thread:$0]  %s0, 512, %s35, [#allocation6], 256, 256, 16
    $region5: #{tpu_custom_call.1} parent=1 // pred_fallthru
      _
    // Predicated region
    $region6: #{tpu_custom_call.1} parent=1 // pred_check
      _
    $region7: #{tpu_custom_call.1} parent=1 // pred_check_branch
      %42 = sbr.rel (0) target = $region9
    $region8: #{tpu_custom_call.1} parent=1 // pred_region
      %s44 = ssub.s32 512, 512
      %45 = vsyncadd [#allocation9], %s44
      %s46 = sshll.u32 [#allocation8], 4
      %s47 = int_to_ptr.vmem [resolvable:$true] %s46
      %52 = dma.hbm_to_vmem [thread:$0]  %s1, 512, %s47, [#allocation9], 256, 256, 16
    $region9: #{tpu_custom_call.1} parent=1 // pred_fallthru
      _
    // Predicated region
    $region10: #{tpu_custom_call.1} parent=1 // pred_check
      _
    $region11: #{tpu_custom_call.1} parent=1 // pred_check_branch
      %54 = sbr.rel (0) target = $region13
    $region12: #{tpu_custom_call.1} parent=1 // pred_region
      %s56 = ssub.s32 256, 256
      %57 = vsyncadd [#allocation9], %s56
      %s58 = sshll.u32 [#allocation10], 4
      %s59 = int_to_ptr.vmem [resolvable:$true] %s58
      %64 = dma.hbm_to_vmem [thread:$0]  %s2, 256, %s59, [#allocation9], 128, 128, 8
    $region13: #{tpu_custom_call.1} parent=1 // pred_fallthru
      _
    // Predicated region
    $region14: #{tpu_custom_call.1} parent=1 // pred_check
      _
    $region15: #{tpu_custom_call.1} parent=1 // pred_check_branch
      %66 = sbr.rel (0) target = $region17
    $region16: #{tpu_custom_call.1} parent=1 // pred_region
      %s68 = ssub.s32 49152, 49152
      %69 = vsyncadd [#allocation12], %s68
      %s70 = sshll.u32 [#allocation11], 4
      %s71 = int_to_ptr.vmem [resolvable:$true] %s70
      %76 = dma.hbm_to_vmem [thread:$0]  %s3, 49152, %s71, [#allocation12], 256, 256, 16
    $region17: #{tpu_custom_call.1} parent=1 // pred_fallthru
      _
    // Predicated region
    $region18: #{tpu_custom_call.1} parent=1 // pred_check
      _
    $region19: #{tpu_custom_call.1} parent=1 // pred_check_branch
      %78 = sbr.rel (0) target = $region21
    $region20: #{tpu_custom_call.1} parent=1 // pred_region
      _
    $region21: #{tpu_custom_call.1} parent=1 // pred_fallthru
      _
    // Predicated region
    $region22: #{tpu_custom_call.1} parent=1 // pred_check
      _
    $region23: #{tpu_custom_call.1} parent=1 // pred_check_branch
      %80 = sbr.rel (0) target = $region25
    $region24: #{tpu_custom_call.1} parent=1 // pred_region
      %s82 = ssub.s32 16384, 16384
      %83 = vsyncadd [#allocation12], %s82
      %s84 = sshll.u32 [#allocation13], 4
      %s85 = int_to_ptr.vmem [resolvable:$true] %s84
      %90 = dma.hbm_to_vmem [thread:$0]  %s5, 16384, %s85, [#allocation12], 256, 256, 16
    $region25: #{tpu_custom_call.1} parent=1 // pred_fallthru
      _
    // Predicated region
    $region26: #{tpu_custom_call.1} parent=1 // pred_check
      _
    $region27: #{tpu_custom_call.1} parent=1 // pred_check_branch
      %92 = sbr.rel (0) target = $region29
    $region28: #{tpu_custom_call.1} parent=1 // pred_region
      %s94 = ssub.s32 64, 64
      %95 = vsyncadd [#allocation15], %s94
      %s96 = sshll.u32 [#allocation14], 4
      %s97 = int_to_ptr.vmem [resolvable:$true] %s96
      %102 = dma.hbm_to_vmem [thread:$0]  %s6, 64, %s97, [#allocation15], 32, 32, 2
    $region29: #{tpu_custom_call.1} parent=1 // pred_fallthru
      _
    // Predicated region
    $region30: #{tpu_custom_call.1} parent=1 // pred_check
      _
    $region31: #{tpu_custom_call.1} parent=1 // pred_check_branch
      %104 = sbr.rel (0) target = $region33
    $region32: #{tpu_custom_call.1} parent=1 // pred_region
      %s106 = ssub.s32 64, 64
      %107 = vsyncadd [#allocation15], %s106
      %s108 = sshll.u32 [#allocation16], 4
      %s109 = int_to_ptr.vmem [resolvable:$true] %s108
      %114 = dma.hbm_to_vmem [thread:$0]  %s7, 64, %s109, [#allocation15], 32, 32, 2
    $region33: #{tpu_custom_call.1} parent=1 // pred_fallthru
      _
    // Predicated region
    $region34: #{tpu_custom_call.1} parent=1 // pred_check
      _
    $region35: #{tpu_custom_call.1} parent=1 // pred_check_branch
      %116 = sbr.rel (0) target = $region37
    $region36: #{tpu_custom_call.1} parent=1 // pred_region
      %s118 = ssub.s32 64, 64
      %119 = vsyncadd [#allocation18], %s118
      %s120 = sshll.u32 [#allocation17], 4
      %s121 = int_to_ptr.vmem [resolvable:$true] %s120
      %126 = dma.hbm_to_vmem [thread:$0]  %s8, 64, %s121, [#allocation18], 32, 32, 2
    $region37: #{tpu_custom_call.1} parent=1 // pred_fallthru
      _
    // Predicated region
    $region38: #{tpu_custom_call.1} parent=1 // pred_check
      _
    $region39: #{tpu_custom_call.1} parent=1 // pred_check_branch
      %128 = sbr.rel (0) target = $region41
    $region40: #{tpu_custom_call.1} parent=1 // pred_region
      %s130 = ssub.s32 16384, 16384
      %131 = vsyncadd [#allocation18], %s130
      %s132 = sshll.u32 [#allocation19], 4
      %s133 = int_to_ptr.vmem [resolvable:$true] %s132
      %138 = dma.hbm_to_vmem [thread:$0]  %s9, 16384, %s133, [#allocation18], 256, 256, 16
    $region41: #{tpu_custom_call.1} parent=1 // pred_fallthru
      _
    // Predicated region
    $region42: #{tpu_custom_call.1} parent=1 // pred_check
      _
    $region43: #{tpu_custom_call.1} parent=1 // pred_check_branch
      %140 = sbr.rel (0) target = $region45
    $region44: #{tpu_custom_call.1} parent=1 // pred_region
      %s142 = ssub.s32 64, 64
      %143 = vsyncadd [#allocation21], %s142
      %s144 = sshll.u32 [#allocation20], 4
      %s145 = int_to_ptr.vmem [resolvable:$true] %s144
      %150 = dma.hbm_to_vmem [thread:$0]  %s10, 64, %s145, [#allocation21], 32, 32, 2
    $region45: #{tpu_custom_call.1} parent=1 // pred_fallthru
      _
    // Predicated region
    $region46: #{tpu_custom_call.1} parent=1 // pred_check
      _
    $region47: #{tpu_custom_call.1} parent=1 // pred_check_branch
      %152 = sbr.rel (0) target = $region49
    $region48: #{tpu_custom_call.1} parent=1 // pred_region
      %s154 = ssub.s32 16384, 16384
      %155 = vsyncadd [#allocation21], %s154
      %s156 = sshll.u32 [#allocation22], 4
      %s157 = int_to_ptr.vmem [resolvable:$true] %s156
      %162 = dma.hbm_to_vmem [thread:$0]  %s11, 16384, %s157, [#allocation21], 256, 256, 16
    $region49: #{tpu_custom_call.1} parent=1 // pred_fallthru
      _
    // Predicated region
    $region50: #{tpu_custom_call.1} parent=1 // pred_check
      _
    $region51: #{tpu_custom_call.1} parent=1 // pred_check_branch
      %164 = sbr.rel (0) target = $region53
    $region52: #{tpu_custom_call.1} parent=1 // pred_region
      %s166 = ssub.s32 64, 64
      %167 = vsyncadd [#allocation24], %s166
      %s168 = sshll.u32 [#allocation23], 4
      %s169 = int_to_ptr.vmem [resolvable:$true] %s168
      %174 = dma.hbm_to_vmem [thread:$0]  %s12, 64, %s169, [#allocation24], 32, 32, 2
    $region53: #{tpu_custom_call.1} parent=1 // pred_fallthru
      _
    // Predicated region
    $region54: #{tpu_custom_call.1} parent=1 // pred_check
      _
    $region55: #{tpu_custom_call.1} parent=1 // pred_check_branch
      %176 = sbr.rel (0) target = $region57
    $region56: #{tpu_custom_call.1} parent=1 // pred_region
      %s178 = ssub.s32 64, 64
      %179 = vsyncadd [#allocation24], %s178
      %s180 = sshll.u32 [#allocation25], 4
      %s181 = int_to_ptr.vmem [resolvable:$true] %s180
      %186 = dma.hbm_to_vmem [thread:$0]  %s13, 64, %s181, [#allocation24], 32, 32, 2
    $region57: #{tpu_custom_call.1} parent=1 // pred_fallthru
      _
    // Predicated region
    $region58: #{tpu_custom_call.1} parent=1 // pred_check
      _
    $region59: #{tpu_custom_call.1} parent=1 // pred_check_branch
      %188 = sbr.rel (0) target = $region61
    $region60: #{tpu_custom_call.1} parent=1 // pred_region
      %s190 = ssub.s32 64, 64
      %191 = vsyncadd [#allocation27], %s190
      %s192 = sshll.u32 [#allocation26], 4
      %s193 = int_to_ptr.vmem [resolvable:$true] %s192
      %198 = dma.hbm_to_vmem [thread:$0]  %s14, 64, %s193, [#allocation27], 32, 32, 2
    $region61: #{tpu_custom_call.1} parent=1 // pred_fallthru
      _
    // Predicated region
    $region62: #{tpu_custom_call.1} parent=1 // pred_check
      _
    $region63: #{tpu_custom_call.1} parent=1 // pred_check_branch
      %200 = sbr.rel (0) target = $region65
    $region64: #{tpu_custom_call.1} parent=1 // pred_region
      %201 = dma.done [#allocation6], 512
    $region65: #{tpu_custom_call.1} parent=1 // pred_fallthru
      _
    // Predicated region
    $region66: #{tpu_custom_call.1} parent=1 // pred_check
      _
    $region67: #{tpu_custom_call.1} parent=1 // pred_check_branch
      %203 = sbr.rel (0) target = $region69
    $region68: #{tpu_custom_call.1} parent=1 // pred_region
      %204 = dma.done [#allocation9], 512
    $region69: #{tpu_custom_call.1} parent=1 // pred_fallthru
      _
    // Predicated region
    $region70: #{tpu_custom_call.1} parent=1 // pred_check
      _
    $region71: #{tpu_custom_call.1} parent=1 // pred_check_branch
      %206 = sbr.rel (0) target = $region73
    $region72: #{tpu_custom_call.1} parent=1 // pred_region
      %207 = dma.done [#allocation9], 256
    $region73: #{tpu_custom_call.1} parent=1 // pred_fallthru
      _
    // Predicated region
    $region74: #{tpu_custom_call.1} parent=1 // pred_check
      _
    $region75: #{tpu_custom_call.1} parent=1 // pred_check_branch
      %209 = sbr.rel (0) target = $region77
    $region76: #{tpu_custom_call.1} parent=1 // pred_region
      %210 = dma.done [#allocation12], 49152
    $region77: #{tpu_custom_call.1} parent=1 // pred_fallthru
      _
    // Predicated region
    $region78: #{tpu_custom_call.1} parent=1 // pred_check
      _
    $region79: #{tpu_custom_call.1} parent=1 // pred_check_branch
      %212 = sbr.rel (0) target = $region81
    $region80: #{tpu_custom_call.1} parent=1 // pred_region
      %213 = dma.done [#allocation12], 16384
    $region81: #{tpu_custom_call.1} parent=1 // pred_fallthru
      _
    // Predicated region
    $region82: #{tpu_custom_call.1} parent=1 // pred_check
      _
    $region83: #{tpu_custom_call.1} parent=1 // pred_check_branch
      %215 = sbr.rel (0) target = $region85
    $region84: #{tpu_custom_call.1} parent=1 // pred_region
      %216 = dma.done [#allocation15], 64
    $region85: #{tpu_custom_call.1} parent=1 // pred_fallthru
      _
    // Predicated region
    $region86: #{tpu_custom_call.1} parent=1 // pred_check
      _
    $region87: #{tpu_custom_call.1} parent=1 // pred_check_branch
      %218 = sbr.rel (0) target = $region89
    $region88: #{tpu_custom_call.1} parent=1 // pred_region
      %219 = dma.done [#allocation15], 64
    $region89: #{tpu_custom_call.1} parent=1 // pred_fallthru
      _
    // Predicated region
    $region90: #{tpu_custom_call.1} parent=1 // pred_check
      _
    $region91: #{tpu_custom_call.1} parent=1 // pred_check_branch
      %221 = sbr.rel (0) target = $region93
    $region92: #{tpu_custom_call.1} parent=1 // pred_region
      %222 = dma.done [#allocation18], 64
    $region93: #{tpu_custom_call.1} parent=1 // pred_fallthru
      _
    // Predicated region
    $region94: #{tpu_custom_call.1} parent=1 // pred_check
      _
    $region95: #{tpu_custom_call.1} parent=1 // pred_check_branch
      %224 = sbr.rel (0) target = $region97
    $region96: #{tpu_custom_call.1} parent=1 // pred_region
      %225 = dma.done [#allocation18], 16384
    $region97: #{tpu_custom_call.1} parent=1 // pred_fallthru
      _
    // Predicated region
    $region98: #{tpu_custom_call.1} parent=1 // pred_check
      _
    $region99: #{tpu_custom_call.1} parent=1 // pred_check_branch
      %227 = sbr.rel (0) target = $region101
    $region100: #{tpu_custom_call.1} parent=1 // pred_region
      %228 = dma.done [#allocation21], 64
    $region101: #{tpu_custom_call.1} parent=1 // pred_fallthru
      _
    // Predicated region
    $region102: #{tpu_custom_call.1} parent=1 // pred_check
      _
    $region103: #{tpu_custom_call.1} parent=1 // pred_check_branch
      %230 = sbr.rel (0) target = $region105
    $region104: #{tpu_custom_call.1} parent=1 // pred_region
      %231 = dma.done [#allocation21], 16384
    $region105: #{tpu_custom_call.1} parent=1 // pred_fallthru
      _
    // Predicated region
    $region106: #{tpu_custom_call.1} parent=1 // pred_check
      _
    $region107: #{tpu_custom_call.1} parent=1 // pred_check_branch
      %233 = sbr.rel (0) target = $region109
    $region108: #{tpu_custom_call.1} parent=1 // pred_region
      %234 = dma.done [#allocation24], 64
    $region109: #{tpu_custom_call.1} parent=1 // pred_fallthru
      _
    // Predicated region
    $region110: #{tpu_custom_call.1} parent=1 // pred_check
      _
    $region111: #{tpu_custom_call.1} parent=1 // pred_check_branch
      %236 = sbr.rel (0) target = $region113
    $region112: #{tpu_custom_call.1} parent=1 // pred_region
      %237 = dma.done [#allocation24], 64
    $region113: #{tpu_custom_call.1} parent=1 // pred_fallthru
      _
    // Predicated region
    $region114: #{tpu_custom_call.1} parent=1 // pred_check
      _
    $region115: #{tpu_custom_call.1} parent=1 // pred_check_branch
      %239 = sbr.rel (0) target = $region117
    $region116: #{tpu_custom_call.1} parent=1 // pred_region
      %240 = dma.done [#allocation27], 64
    $region117: #{tpu_custom_call.1} parent=1 // pred_fallthru
      _
    %v241 = vld [vmem:[#allocation5] sm:$0xff]
    %v242 = vld [vmem:[#allocation5 + $0x8] sm:$0xff]
    %v243 = vld [vmem:[#allocation5 + $0x10] sm:$0xff]
    %v244 = vld [vmem:[#allocation5 + $0x18] sm:$0xff]
    %v245 = vld [vmem:[#allocation8] sm:$0xff]
    %v246 = vld [vmem:[#allocation8 + $0x8] sm:$0xff]
    %v247 = vld [vmem:[#allocation8 + $0x10] sm:$0xff]
    %v248 = vld [vmem:[#allocation8 + $0x18] sm:$0xff]
    %v249 = vadd.f32 %v241, %v245
    %v250 = vadd.f32 %v242, %v246
    %v251 = vadd.f32 %v243, %v247
    %v252 = vadd.f32 %v244, %v248
    %v253 = vld [vmem:[#allocation10] sm:$0xff]
    %v254 = vld [vmem:[#allocation10 + $0x8] sm:$0xff]
    %v255 = vld [vmem:[#allocation11] sm:$0xff]
    %v256 = vld [vmem:[#allocation11 + $0x8] sm:$0xff]
    %v257 = vld [vmem:[#allocation11 + $0x10] sm:$0xff]
    %v258 = vld [vmem:[#allocation11 + $0x18] sm:$0xff]
    %v259 = vld [vmem:[#allocation11 + $0x20] sm:$0xff]
    %v260 = vld [vmem:[#allocation11 + $0x28] sm:$0xff]
    %v261 = vld [vmem:[#allocation11 + $0x30] sm:$0xff]
    %v262 = vld [vmem:[#allocation11 + $0x38] sm:$0xff]
    %v263 = vld [vmem:[#allocation11 + $0x40] sm:$0xff]
    %v264 = vld [vmem:[#allocation11 + $0x48] sm:$0xff]
    %v265 = vld [vmem:[#allocation11 + $0x50] sm:$0xff]
    %v266 = vld [vmem:[#allocation11 + $0x58] sm:$0xff]
    %v267 = vld [vmem:[#allocation11 + $0x60] sm:$0xff]
    %v268 = vld [vmem:[#allocation11 + $0x68] sm:$0xff]
    %v269 = vld [vmem:[#allocation11 + $0x70] sm:$0xff]
    %v270 = vld [vmem:[#allocation11 + $0x78] sm:$0xff]
    %v271 = vld [vmem:[#allocation11 + $0x80] sm:$0xff]
    %v272 = vld [vmem:[#allocation11 + $0x88] sm:$0xff]
    %v273 = vld [vmem:[#allocation11 + $0x90] sm:$0xff]
    %v274 = vld [vmem:[#allocation11 + $0x98] sm:$0xff]
    %v275 = vld [vmem:[#allocation11 + $0xa0] sm:$0xff]
    %v276 = vld [vmem:[#allocation11 + $0xa8] sm:$0xff]
    %v277 = vld [vmem:[#allocation11 + $0xb0] sm:$0xff]
    %v278 = vld [vmem:[#allocation11 + $0xb8] sm:$0xff]
    %v279 = vld [vmem:[#allocation11 + $0xc0] sm:$0xff]
    %v280 = vld [vmem:[#allocation11 + $0xc8] sm:$0xff]
    %v281 = vld [vmem:[#allocation11 + $0xd0] sm:$0xff]
    %v282 = vld [vmem:[#allocation11 + $0xd8] sm:$0xff]
    %v283 = vld [vmem:[#allocation11 + $0xe0] sm:$0xff]
    %v284 = vld [vmem:[#allocation11 + $0xe8] sm:$0xff]
    %v285 = vld [vmem:[#allocation11 + $0xf0] sm:$0xff]
    %v286 = vld [vmem:[#allocation11 + $0xf8] sm:$0xff]
    %v287 = vld [vmem:[#allocation11 + $0x100] sm:$0xff]
    %v288 = vld [vmem:[#allocation11 + $0x108] sm:$0xff]
    %v289 = vld [vmem:[#allocation11 + $0x110] sm:$0xff]
    %v290 = vld [vmem:[#allocation11 + $0x118] sm:$0xff]
    %v291 = vld [vmem:[#allocation11 + $0x120] sm:$0xff]
    %v292 = vld [vmem:[#allocation11 + $0x128] sm:$0xff]
    %v293 = vld [vmem:[#allocation11 + $0x130] sm:$0xff]
    %v294 = vld [vmem:[#allocation11 + $0x138] sm:$0xff]
    %v295 = vld [vmem:[#allocation11 + $0x140] sm:$0xff]
    %v296 = vld [vmem:[#allocation11 + $0x148] sm:$0xff]
    %v297 = vld [vmem:[#allocation11 + $0x150] sm:$0xff]
    %v298 = vld [vmem:[#allocation11 + $0x158] sm:$0xff]
    %v299 = vld [vmem:[#allocation11 + $0x160] sm:$0xff]
    %v300 = vld [vmem:[#allocation11 + $0x168] sm:$0xff]
    %v301 = vld [vmem:[#allocation11 + $0x170] sm:$0xff]
    %v302 = vld [vmem:[#allocation11 + $0x178] sm:$0xff]
    %v303 = vld [vmem:[#allocation11 + $0x180] sm:$0xff]
    %v304 = vld [vmem:[#allocation11 + $0x188] sm:$0xff]
    %v305 = vld [vmem:[#allocation11 + $0x190] sm:$0xff]
    %v306 = vld [vmem:[#allocation11 + $0x198] sm:$0xff]
    %v307 = vld [vmem:[#allocation11 + $0x1a0] sm:$0xff]
    %v308 = vld [vmem:[#allocation11 + $0x1a8] sm:$0xff]
    %v309 = vld [vmem:[#allocation11 + $0x1b0] sm:$0xff]
    %v310 = vld [vmem:[#allocation11 + $0x1b8] sm:$0xff]
    %v311 = vld [vmem:[#allocation11 + $0x1c0] sm:$0xff]
    %v312 = vld [vmem:[#allocation11 + $0x1c8] sm:$0xff]
    %v313 = vld [vmem:[#allocation11 + $0x1d0] sm:$0xff]
    %v314 = vld [vmem:[#allocation11 + $0x1d8] sm:$0xff]
    %v315 = vld [vmem:[#allocation11 + $0x1e0] sm:$0xff]
    %v316 = vld [vmem:[#allocation11 + $0x1e8] sm:$0xff]
    %v317 = vld [vmem:[#allocation11 + $0x1f0] sm:$0xff]
    %v318 = vld [vmem:[#allocation11 + $0x1f8] sm:$0xff]
    %v319 = vld [vmem:[#allocation11 + $0x200] sm:$0xff]
    %v320 = vld [vmem:[#allocation11 + $0x208] sm:$0xff]
    %v321 = vld [vmem:[#allocation11 + $0x210] sm:$0xff]
    %v322 = vld [vmem:[#allocation11 + $0x218] sm:$0xff]
    %v323 = vld [vmem:[#allocation11 + $0x220] sm:$0xff]
    %v324 = vld [vmem:[#allocation11 + $0x228] sm:$0xff]
    %v325 = vld [vmem:[#allocation11 + $0x230] sm:$0xff]
    %v326 = vld [vmem:[#allocation11 + $0x238] sm:$0xff]
    %v327 = vld [vmem:[#allocation11 + $0x240] sm:$0xff]
    %v328 = vld [vmem:[#allocation11 + $0x248] sm:$0xff]
    %v329 = vld [vmem:[#allocation11 + $0x250] sm:$0xff]
    %v330 = vld [vmem:[#allocation11 + $0x258] sm:$0xff]
    %v331 = vld [vmem:[#allocation11 + $0x260] sm:$0xff]
    %v332 = vld [vmem:[#allocation11 + $0x268] sm:$0xff]
    %v333 = vld [vmem:[#allocation11 + $0x270] sm:$0xff]
    %v334 = vld [vmem:[#allocation11 + $0x278] sm:$0xff]
    %v335 = vld [vmem:[#allocation11 + $0x280] sm:$0xff]
    %v336 = vld [vmem:[#allocation11 + $0x288] sm:$0xff]
    %v337 = vld [vmem:[#allocation11 + $0x290] sm:$0xff]
    %v338 = vld [vmem:[#allocation11 + $0x298] sm:$0xff]
    %v339 = vld [vmem:[#allocation11 + $0x2a0] sm:$0xff]
    %v340 = vld [vmem:[#allocation11 + $0x2a8] sm:$0xff]
    %v341 = vld [vmem:[#allocation11 + $0x2b0] sm:$0xff]
    %v342 = vld [vmem:[#allocation11 + $0x2b8] sm:$0xff]
    %v343 = vld [vmem:[#allocation11 + $0x2c0] sm:$0xff]
    %v344 = vld [vmem:[#allocation11 + $0x2c8] sm:$0xff]
    %v345 = vld [vmem:[#allocation11 + $0x2d0] sm:$0xff]
    %v346 = vld [vmem:[#allocation11 + $0x2d8] sm:$0xff]
    %v347 = vld [vmem:[#allocation11 + $0x2e0] sm:$0xff]
    %v348 = vld [vmem:[#allocation11 + $0x2e8] sm:$0xff]
    %v349 = vld [vmem:[#allocation11 + $0x2f0] sm:$0xff]
    %v350 = vld [vmem:[#allocation11 + $0x2f8] sm:$0xff]
    %v351 = vld [vmem:[#allocation11 + $0x300] sm:$0xff]
    %v352 = vld [vmem:[#allocation11 + $0x308] sm:$0xff]
    %v353 = vld [vmem:[#allocation11 + $0x310] sm:$0xff]
    %v354 = vld [vmem:[#allocation11 + $0x318] sm:$0xff]
    %v355 = vld [vmem:[#allocation11 + $0x320] sm:$0xff]
    %v356 = vld [vmem:[#allocation11 + $0x328] sm:$0xff]
    %v357 = vld [vmem:[#allocation11 + $0x330] sm:$0xff]
    %v358 = vld [vmem:[#allocation11 + $0x338] sm:$0xff]
    %v359 = vld [vmem:[#allocation11 + $0x340] sm:$0xff]
    %v360 = vld [vmem:[#allocation11 + $0x348] sm:$0xff]
    %v361 = vld [vmem:[#allocation11 + $0x350] sm:$0xff]
    %v362 = vld [vmem:[#allocation11 + $0x358] sm:$0xff]
    %v363 = vld [vmem:[#allocation11 + $0x360] sm:$0xff]
    %v364 = vld [vmem:[#allocation11 + $0x368] sm:$0xff]
    %v365 = vld [vmem:[#allocation11 + $0x370] sm:$0xff]
    %v366 = vld [vmem:[#allocation11 + $0x378] sm:$0xff]
    %v367 = vld [vmem:[#allocation11 + $0x380] sm:$0xff]
    %v368 = vld [vmem:[#allocation11 + $0x388] sm:$0xff]
    %v369 = vld [vmem:[#allocation11 + $0x390] sm:$0xff]
    %v370 = vld [vmem:[#allocation11 + $0x398] sm:$0xff]
    %v371 = vld [vmem:[#allocation11 + $0x3a0] sm:$0xff]
    %v372 = vld [vmem:[#allocation11 + $0x3a8] sm:$0xff]
    %v373 = vld [vmem:[#allocation11 + $0x3b0] sm:$0xff]
    %v374 = vld [vmem:[#allocation11 + $0x3b8] sm:$0xff]
    %v375 = vld [vmem:[#allocation11 + $0x3c0] sm:$0xff]
    %v376 = vld [vmem:[#allocation11 + $0x3c8] sm:$0xff]
    %v377 = vld [vmem:[#allocation11 + $0x3d0] sm:$0xff]
    %v378 = vld [vmem:[#allocation11 + $0x3d8] sm:$0xff]
    %v379 = vld [vmem:[#allocation11 + $0x3e0] sm:$0xff]
    %v380 = vld [vmem:[#allocation11 + $0x3e8] sm:$0xff]
    %v381 = vld [vmem:[#allocation11 + $0x3f0] sm:$0xff]
    %v382 = vld [vmem:[#allocation11 + $0x3f8] sm:$0xff]
    %v383 = vld [vmem:[#allocation11 + $0x400] sm:$0xff]
    %v384 = vld [vmem:[#allocation11 + $0x408] sm:$0xff]
    %v385 = vld [vmem:[#allocation11 + $0x410] sm:$0xff]
    %v386 = vld [vmem:[#allocation11 + $0x418] sm:$0xff]
    %v387 = vld [vmem:[#allocation11 + $0x420] sm:$0xff]
    %v388 = vld [vmem:[#allocation11 + $0x428] sm:$0xff]
    %v389 = vld [vmem:[#allocation11 + $0x430] sm:$0xff]
    %v390 = vld [vmem:[#allocation11 + $0x438] sm:$0xff]
    %v391 = vld [vmem:[#allocation11 + $0x440] sm:$0xff]
    %v392 = vld [vmem:[#allocation11 + $0x448] sm:$0xff]
    %v393 = vld [vmem:[#allocation11 + $0x450] sm:$0xff]
    %v394 = vld [vmem:[#allocation11 + $0x458] sm:$0xff]
    %v395 = vld [vmem:[#allocation11 + $0x460] sm:$0xff]
    %v396 = vld [vmem:[#allocation11 + $0x468] sm:$0xff]
    %v397 = vld [vmem:[#allocation11 + $0x470] sm:$0xff]
    %v398 = vld [vmem:[#allocation11 + $0x478] sm:$0xff]
    %v399 = vld [vmem:[#allocation11 + $0x480] sm:$0xff]
    %v400 = vld [vmem:[#allocation11 + $0x488] sm:$0xff]
    %v401 = vld [vmem:[#allocation11 + $0x490] sm:$0xff]
    %v402 = vld [vmem:[#allocation11 + $0x498] sm:$0xff]
    %v403 = vld [vmem:[#allocation11 + $0x4a0] sm:$0xff]
    %v404 = vld [vmem:[#allocation11 + $0x4a8] sm:$0xff]
    %v405 = vld [vmem:[#allocation11 + $0x4b0] sm:$0xff]
    %v406 = vld [vmem:[#allocation11 + $0x4b8] sm:$0xff]
    %v407 = vld [vmem:[#allocation11 + $0x4c0] sm:$0xff]
    %v408 = vld [vmem:[#allocation11 + $0x4c8] sm:$0xff]
    %v409 = vld [vmem:[#allocation11 + $0x4d0] sm:$0xff]
    %v410 = vld [vmem:[#allocation11 + $0x4d8] sm:$0xff]
    %v411 = vld [vmem:[#allocation11 + $0x4e0] sm:$0xff]
    %v412 = vld [vmem:[#allocation11 + $0x4e8] sm:$0xff]
    %v413 = vld [vmem:[#allocation11 + $0x4f0] sm:$0xff]
    %v414 = vld [vmem:[#allocation11 + $0x4f8] sm:$0xff]
    %v415 = vld [vmem:[#allocation11 + $0x500] sm:$0xff]
    %v416 = vld [vmem:[#allocation11 + $0x508] sm:$0xff]
    %v417 = vld [vmem:[#allocation11 + $0x510] sm:$0xff]
    %v418 = vld [vmem:[#allocation11 + $0x518] sm:$0xff]
    %v419 = vld [vmem:[#allocation11 + $0x520] sm:$0xff]
    %v420 = vld [vmem:[#allocation11 + $0x528] sm:$0xff]
    %v421 = vld [vmem:[#allocation11 + $0x530] sm:$0xff]
    %v422 = vld [vmem:[#allocation11 + $0x538] sm:$0xff]
    %v423 = vld [vmem:[#allocation11 + $0x540] sm:$0xff]
    %v424 = vld [vmem:[#allocation11 + $0x548] sm:$0xff]
    %v425 = vld [vmem:[#allocation11 + $0x550] sm:$0xff]
    %v426 = vld [vmem:[#allocation11 + $0x558] sm:$0xff]
    %v427 = vld [vmem:[#allocation11 + $0x560] sm:$0xff]
    %v428 = vld [vmem:[#allocation11 + $0x568] sm:$0xff]
    %v429 = vld [vmem:[#allocation11 + $0x570] sm:$0xff]
    %v430 = vld [vmem:[#allocation11 + $0x578] sm:$0xff]
    %v431 = vld [vmem:[#allocation11 + $0x580] sm:$0xff]
    %v432 = vld [vmem:[#allocation11 + $0x588] sm:$0xff]
    %v433 = vld [vmem:[#allocation11 + $0x590] sm:$0xff]
    %v434 = vld [vmem:[#allocation11 + $0x598] sm:$0xff]
    %v435 = vld [vmem:[#allocation11 + $0x5a0] sm:$0xff]
    %v436 = vld [vmem:[#allocation11 + $0x5a8] sm:$0xff]
    %v437 = vld [vmem:[#allocation11 + $0x5b0] sm:$0xff]
    %v438 = vld [vmem:[#allocation11 + $0x5b8] sm:$0xff]
    %v439 = vld [vmem:[#allocation11 + $0x5c0] sm:$0xff]
    %v440 = vld [vmem:[#allocation11 + $0x5c8] sm:$0xff]
    %v441 = vld [vmem:[#allocation11 + $0x5d0] sm:$0xff]
    %v442 = vld [vmem:[#allocation11 + $0x5d8] sm:$0xff]
    %v443 = vld [vmem:[#allocation11 + $0x5e0] sm:$0xff]
    %v444 = vld [vmem:[#allocation11 + $0x5e8] sm:$0xff]
    %v445 = vld [vmem:[#allocation11 + $0x5f0] sm:$0xff]
    %v446 = vld [vmem:[#allocation11 + $0x5f8] sm:$0xff]
    %v447 = vld [vmem:[%s4] sm:$0xff]
    %v448 = vld [vmem:[%s4 + $0x8] sm:$0xff]
    %v449 = vld [vmem:[%s4 + $0x10] sm:$0xff]
    %v450 = vld [vmem:[%s4 + $0x18] sm:$0xff]
    %v451 = vld [vmem:[%s4 + $0x20] sm:$0xff]
    %v452 = vld [vmem:[%s4 + $0x28] sm:$0xff]
    %v453 = vld [vmem:[%s4 + $0x30] sm:$0xff]
    %v454 = vld [vmem:[%s4 + $0x38] sm:$0xff]
    %v455 = vld [vmem:[%s4 + $0x40] sm:$0xff]
    %v456 = vld [vmem:[%s4 + $0x48] sm:$0xff]
    %v457 = vld [vmem:[%s4 + $0x50] sm:$0xff]
    %v458 = vld [vmem:[%s4 + $0x58] sm:$0xff]
    %v459 = vld [vmem:[%s4 + $0x60] sm:$0xff]
    %v460 = vld [vmem:[%s4 + $0x68] sm:$0xff]
    %v461 = vld [vmem:[%s4 + $0x70] sm:$0xff]
    %v462 = vld [vmem:[%s4 + $0x78] sm:$0xff]
    %v463 = vld [vmem:[%s4 + $0x80] sm:$0xff]
    %v464 = vld [vmem:[%s4 + $0x88] sm:$0xff]
    %v465 = vld [vmem:[%s4 + $0x90] sm:$0xff]
    %v466 = vld [vmem:[%s4 + $0x98] sm:$0xff]
    %v467 = vld [vmem:[%s4 + $0xa0] sm:$0xff]
    %v468 = vld [vmem:[%s4 + $0xa8] sm:$0xff]
    %v469 = vld [vmem:[%s4 + $0xb0] sm:$0xff]
    %v470 = vld [vmem:[%s4 + $0xb8] sm:$0xff]
    %v471 = vld [vmem:[%s4 + $0xc0] sm:$0xff]
    %v472 = vld [vmem:[%s4 + $0xc8] sm:$0xff]
    %v473 = vld [vmem:[%s4 + $0xd0] sm:$0xff]
    %v474 = vld [vmem:[%s4 + $0xd8] sm:$0xff]
    %v475 = vld [vmem:[%s4 + $0xe0] sm:$0xff]
    %v476 = vld [vmem:[%s4 + $0xe8] sm:$0xff]
    %v477 = vld [vmem:[%s4 + $0xf0] sm:$0xff]
    %v478 = vld [vmem:[%s4 + $0xf8] sm:$0xff]
    %v479 = vld [vmem:[%s4 + $0x100] sm:$0xff]
    %v480 = vld [vmem:[%s4 + $0x108] sm:$0xff]
    %v481 = vld [vmem:[%s4 + $0x110] sm:$0xff]
    %v482 = vld [vmem:[%s4 + $0x118] sm:$0xff]
    %v483 = vld [vmem:[%s4 + $0x120] sm:$0xff]
    %v484 = vld [vmem:[%s4 + $0x128] sm:$0xff]
    %v485 = vld [vmem:[%s4 + $0x130] sm:$0xff]
    %v486 = vld [vmem:[%s4 + $0x138] sm:$0xff]
    %v487 = vld [vmem:[%s4 + $0x140] sm:$0xff]
    %v488 = vld [vmem:[%s4 + $0x148] sm:$0xff]
    %v489 = vld [vmem:[%s4 + $0x150] sm:$0xff]
    %v490 = vld [vmem:[%s4 + $0x158] sm:$0xff]
    %v491 = vld [vmem:[%s4 + $0x160] sm:$0xff]
    %v492 = vld [vmem:[%s4 + $0x168] sm:$0xff]
    %v493 = vld [vmem:[%s4 + $0x170] sm:$0xff]
    %v494 = vld [vmem:[%s4 + $0x178] sm:$0xff]
    %v495 = vld [vmem:[%s4 + $0x180] sm:$0xff]
    %v496 = vld [vmem:[%s4 + $0x188] sm:$0xff]
    %v497 = vld [vmem:[%s4 + $0x190] sm:$0xff]
    %v498 = vld [vmem:[%s4 + $0x198] sm:$0xff]
    %v499 = vld [vmem:[%s4 + $0x1a0] sm:$0xff]
    %v500 = vld [vmem:[%s4 + $0x1a8] sm:$0xff]
    %v501 = vld [vmem:[%s4 + $0x1b0] sm:$0xff]
    %v502 = vld [vmem:[%s4 + $0x1b8] sm:$0xff]
    %v503 = vld [vmem:[%s4 + $0x1c0] sm:$0xff]
    %v504 = vld [vmem:[%s4 + $0x1c8] sm:$0xff]
    %v505 = vld [vmem:[%s4 + $0x1d0] sm:$0xff]
    %v506 = vld [vmem:[%s4 + $0x1d8] sm:$0xff]
    %v507 = vld [vmem:[%s4 + $0x1e0] sm:$0xff]
    %v508 = vld [vmem:[%s4 + $0x1e8] sm:$0xff]
    %v509 = vld [vmem:[%s4 + $0x1f0] sm:$0xff]
    %v510 = vld [vmem:[%s4 + $0x1f8] sm:$0xff]
    %v511 = vld [vmem:[%s4 + $0x200] sm:$0xff]
    %v512 = vld [vmem:[%s4 + $0x208] sm:$0xff]
    %v513 = vld [vmem:[%s4 + $0x210] sm:$0xff]
    %v514 = vld [vmem:[%s4 + $0x218] sm:$0xff]
    %v515 = vld [vmem:[%s4 + $0x220] sm:$0xff]
    %v516 = vld [vmem:[%s4 + $0x228] sm:$0xff]
    %v517 = vld [vmem:[%s4 + $0x230] sm:$0xff]
    %v518 = vld [vmem:[%s4 + $0x238] sm:$0xff]
    %v519 = vld [vmem:[%s4 + $0x240] sm:$0xff]
    %v520 = vld [vmem:[%s4 + $0x248] sm:$0xff]
    %v521 = vld [vmem:[%s4 + $0x250] sm:$0xff]
    %v522 = vld [vmem:[%s4 + $0x258] sm:$0xff]
    %v523 = vld [vmem:[%s4 + $0x260] sm:$0xff]
    %v524 = vld [vmem:[%s4 + $0x268] sm:$0xff]
    %v525 = vld [vmem:[%s4 + $0x270] sm:$0xff]
    %v526 = vld [vmem:[%s4 + $0x278] sm:$0xff]
    %v527 = vld [vmem:[%s4 + $0x280] sm:$0xff]
    %v528 = vld [vmem:[%s4 + $0x288] sm:$0xff]
    %v529 = vld [vmem:[%s4 + $0x290] sm:$0xff]
    %v530 = vld [vmem:[%s4 + $0x298] sm:$0xff]
    %v531 = vld [vmem:[%s4 + $0x2a0] sm:$0xff]
    %v532 = vld [vmem:[%s4 + $0x2a8] sm:$0xff]
    %v533 = vld [vmem:[%s4 + $0x2b0] sm:$0xff]
    %v534 = vld [vmem:[%s4 + $0x2b8] sm:$0xff]
    %v535 = vld [vmem:[%s4 + $0x2c0] sm:$0xff]
    %v536 = vld [vmem:[%s4 + $0x2c8] sm:$0xff]
    %v537 = vld [vmem:[%s4 + $0x2d0] sm:$0xff]
    %v538 = vld [vmem:[%s4 + $0x2d8] sm:$0xff]
    %v539 = vld [vmem:[%s4 + $0x2e0] sm:$0xff]
    %v540 = vld [vmem:[%s4 + $0x2e8] sm:$0xff]
    %v541 = vld [vmem:[%s4 + $0x2f0] sm:$0xff]
    %v542 = vld [vmem:[%s4 + $0x2f8] sm:$0xff]
    %544 = vset.pattern.permute.xlu0 0
    %545 = vperm.xlu0 %544, %v447
    %v546 = vpop.permute.xlu0 %545
    %549 = vset.pattern.permute.xlu0 0
    %550 = vperm.xlu0 %549, %v448
    %v551 = vpop.permute.xlu0 %550
    %554 = vset.pattern.permute.xlu0 0
    %555 = vperm.xlu0 %554, %v449
    %v556 = vpop.permute.xlu0 %555
    %559 = vset.pattern.permute.xlu0 0
    %560 = vperm.xlu0 %559, %v450
    %v561 = vpop.permute.xlu0 %560
    %564 = vset.pattern.permute.xlu0 0
    %565 = vperm.xlu0 %564, %v451
    %v566 = vpop.permute.xlu0 %565
    %569 = vset.pattern.permute.xlu0 0
    %570 = vperm.xlu0 %569, %v452
    %v571 = vpop.permute.xlu0 %570
    %574 = vset.pattern.permute.xlu0 0
    %575 = vperm.xlu0 %574, %v453
    %v576 = vpop.permute.xlu0 %575
    %579 = vset.pattern.permute.xlu0 0
    %580 = vperm.xlu0 %579, %v454
    %v581 = vpop.permute.xlu0 %580
    %584 = vset.pattern.permute.xlu0 0
    %585 = vperm.xlu0 %584, %v455
    %v586 = vpop.permute.xlu0 %585
    %589 = vset.pattern.permute.xlu0 0
    %590 = vperm.xlu0 %589, %v456
    %v591 = vpop.permute.xlu0 %590
    %594 = vset.pattern.permute.xlu0 0
    %595 = vperm.xlu0 %594, %v457
    %v596 = vpop.permute.xlu0 %595
    %599 = vset.pattern.permute.xlu0 0
    %600 = vperm.xlu0 %599, %v458
    %v601 = vpop.permute.xlu0 %600
    %604 = vset.pattern.permute.xlu0 0
    %605 = vperm.xlu0 %604, %v459
    %v606 = vpop.permute.xlu0 %605
    %609 = vset.pattern.permute.xlu0 0
    %610 = vperm.xlu0 %609, %v460
    %v611 = vpop.permute.xlu0 %610
    %614 = vset.pattern.permute.xlu0 0
    %615 = vperm.xlu0 %614, %v461
    %v616 = vpop.permute.xlu0 %615
    %619 = vset.pattern.permute.xlu0 0
    %620 = vperm.xlu0 %619, %v462
    %v621 = vpop.permute.xlu0 %620
    %624 = vset.pattern.permute.xlu0 0
    %625 = vperm.xlu0 %624, %v463
    %v626 = vpop.permute.xlu0 %625
    %629 = vset.pattern.permute.xlu0 0
    %630 = vperm.xlu0 %629, %v464
    %v631 = vpop.permute.xlu0 %630
    %634 = vset.pattern.permute.xlu0 0
    %635 = vperm.xlu0 %634, %v465
    %v636 = vpop.permute.xlu0 %635
    %639 = vset.pattern.permute.xlu0 0
    %640 = vperm.xlu0 %639, %v466
    %v641 = vpop.permute.xlu0 %640
    %644 = vset.pattern.permute.xlu0 0
    %645 = vperm.xlu0 %644, %v467
    %v646 = vpop.permute.xlu0 %645
    %649 = vset.pattern.permute.xlu0 0
    %650 = vperm.xlu0 %649, %v468
    %v651 = vpop.permute.xlu0 %650
    %654 = vset.pattern.permute.xlu0 0
    %655 = vperm.xlu0 %654, %v469
    %v656 = vpop.permute.xlu0 %655
    %659 = vset.pattern.permute.xlu0 0
    %660 = vperm.xlu0 %659, %v470
    %v661 = vpop.permute.xlu0 %660
    %664 = vset.pattern.permute.xlu0 0
    %665 = vperm.xlu0 %664, %v471
    %v666 = vpop.permute.xlu0 %665
    %669 = vset.pattern.permute.xlu0 0
    %670 = vperm.xlu0 %669, %v472
    %v671 = vpop.permute.xlu0 %670
    %674 = vset.pattern.permute.xlu0 0
    %675 = vperm.xlu0 %674, %v473
    %v676 = vpop.permute.xlu0 %675
    %679 = vset.pattern.permute.xlu0 0
    %680 = vperm.xlu0 %679, %v474
    %v681 = vpop.permute.xlu0 %680
    %684 = vset.pattern.permute.xlu0 0
    %685 = vperm.xlu0 %684, %v475
    %v686 = vpop.permute.xlu0 %685
    %689 = vset.pattern.permute.xlu0 0
    %690 = vperm.xlu0 %689, %v476
    %v691 = vpop.permute.xlu0 %690
    %694 = vset.pattern.permute.xlu0 0
    %695 = vperm.xlu0 %694, %v477
    %v696 = vpop.permute.xlu0 %695
    %699 = vset.pattern.permute.xlu0 0
    %700 = vperm.xlu0 %699, %v478
    %v701 = vpop.permute.xlu0 %700
    %704 = vset.pattern.permute.xlu0 0
    %705 = vperm.xlu0 %704, %v479
    %v706 = vpop.permute.xlu0 %705
    %709 = vset.pattern.permute.xlu0 0
    %710 = vperm.xlu0 %709, %v480
    %v711 = vpop.permute.xlu0 %710
    %714 = vset.pattern.permute.xlu0 0
    %715 = vperm.xlu0 %714, %v481
    %v716 = vpop.permute.xlu0 %715
    %719 = vset.pattern.permute.xlu0 0
    %720 = vperm.xlu0 %719, %v482
    %v721 = vpop.permute.xlu0 %720
    %724 = vset.pattern.permute.xlu0 0
    %725 = vperm.xlu0 %724, %v483
    %v726 = vpop.permute.xlu0 %725
    %729 = vset.pattern.permute.xlu0 0
    %730 = vperm.xlu0 %729, %v484
    %v731 = vpop.permute.xlu0 %730
    %734 = vset.pattern.permute.xlu0 0
    %735 = vperm.xlu0 %734, %v485
    %v736 = vpop.permute.xlu0 %735
    %739 = vset.pattern.permute.xlu0 0
    %740 = vperm.xlu0 %739, %v486
    %v741 = vpop.permute.xlu0 %740
    %744 = vset.pattern.permute.xlu0 0
    %745 = vperm.xlu0 %744, %v487
    %v746 = vpop.permute.xlu0 %745
    %749 = vset.pattern.permute.xlu0 0
    %750 = vperm.xlu0 %749, %v488
    %v751 = vpop.permute.xlu0 %750
    %754 = vset.pattern.permute.xlu0 0
    %755 = vperm.xlu0 %754, %v489
    %v756 = vpop.permute.xlu0 %755
    %759 = vset.pattern.permute.xlu0 0
    %760 = vperm.xlu0 %759, %v490
    %v761 = vpop.permute.xlu0 %760
    %764 = vset.pattern.permute.xlu0 0
    %765 = vperm.xlu0 %764, %v491
    %v766 = vpop.permute.xlu0 %765
    %769 = vset.pattern.permute.xlu0 0
    %770 = vperm.xlu0 %769, %v492
    %v771 = vpop.permute.xlu0 %770
    %774 = vset.pattern.permute.xlu0 0
    %775 = vperm.xlu0 %774, %v493
    %v776 = vpop.permute.xlu0 %775
    %779 = vset.pattern.permute.xlu0 0
    %780 = vperm.xlu0 %779, %v494
    %v781 = vpop.permute.xlu0 %780
    %784 = vset.pattern.permute.xlu0 0
    %785 = vperm.xlu0 %784, %v495
    %v786 = vpop.permute.xlu0 %785
    %789 = vset.pattern.permute.xlu0 0
    %790 = vperm.xlu0 %789, %v496
    %v791 = vpop.permute.xlu0 %790
    %794 = vset.pattern.permute.xlu0 0
    %795 = vperm.xlu0 %794, %v497
    %v796 = vpop.permute.xlu0 %795
    %799 = vset.pattern.permute.xlu0 0
    %800 = vperm.xlu0 %799, %v498
    %v801 = vpop.permute.xlu0 %800
    %804 = vset.pattern.permute.xlu0 0
    %805 = vperm.xlu0 %804, %v499
    %v806 = vpop.permute.xlu0 %805
    %809 = vset.pattern.permute.xlu0 0
    %810 = vperm.xlu0 %809, %v500
    %v811 = vpop.permute.xlu0 %810
    %814 = vset.pattern.permute.xlu0 0
    %815 = vperm.xlu0 %814, %v501
    %v816 = vpop.permute.xlu0 %815
    %819 = vset.pattern.permute.xlu0 0
    %820 = vperm.xlu0 %819, %v502
    %v821 = vpop.permute.xlu0 %820
    %824 = vset.pattern.permute.xlu0 0
    %825 = vperm.xlu0 %824, %v503
    %v826 = vpop.permute.xlu0 %825
    %829 = vset.pattern.permute.xlu0 0
    %830 = vperm.xlu0 %829, %v504
    %v831 = vpop.permute.xlu0 %830
    %834 = vset.pattern.permute.xlu0 0
    %835 = vperm.xlu0 %834, %v505
    %v836 = vpop.permute.xlu0 %835
    %839 = vset.pattern.permute.xlu0 0
    %840 = vperm.xlu0 %839, %v506
    %v841 = vpop.permute.xlu0 %840
    %844 = vset.pattern.permute.xlu0 0
    %845 = vperm.xlu0 %844, %v507
    %v846 = vpop.permute.xlu0 %845
    %849 = vset.pattern.permute.xlu0 0
    %850 = vperm.xlu0 %849, %v508
    %v851 = vpop.permute.xlu0 %850
    %854 = vset.pattern.permute.xlu0 0
    %855 = vperm.xlu0 %854, %v509
    %v856 = vpop.permute.xlu0 %855
    %859 = vset.pattern.permute.xlu0 0
    %860 = vperm.xlu0 %859, %v510
    %v861 = vpop.permute.xlu0 %860
    %864 = vset.pattern.permute.xlu0 0
    %865 = vperm.xlu0 %864, %v511
    %v866 = vpop.permute.xlu0 %865
    %869 = vset.pattern.permute.xlu0 0
    %870 = vperm.xlu0 %869, %v512
    %v871 = vpop.permute.xlu0 %870
    %874 = vset.pattern.permute.xlu0 0
    %875 = vperm.xlu0 %874, %v513
    %v876 = vpop.permute.xlu0 %875
    %879 = vset.pattern.permute.xlu0 0
    %880 = vperm.xlu0 %879, %v514
    %v881 = vpop.permute.xlu0 %880
    %884 = vset.pattern.permute.xlu0 0
    %885 = vperm.xlu0 %884, %v515
    %v886 = vpop.permute.xlu0 %885
    %889 = vset.pattern.permute.xlu0 0
    %890 = vperm.xlu0 %889, %v516
    %v891 = vpop.permute.xlu0 %890
    %894 = vset.pattern.permute.xlu0 0
    %895 = vperm.xlu0 %894, %v517
    %v896 = vpop.permute.xlu0 %895
    %899 = vset.pattern.permute.xlu0 0
    %900 = vperm.xlu0 %899, %v518
    %v901 = vpop.permute.xlu0 %900
    %904 = vset.pattern.permute.xlu0 0
    %905 = vperm.xlu0 %904, %v519
    %v906 = vpop.permute.xlu0 %905
    %909 = vset.pattern.permute.xlu0 0
    %910 = vperm.xlu0 %909, %v520
    %v911 = vpop.permute.xlu0 %910
    %914 = vset.pattern.permute.xlu0 0
    %915 = vperm.xlu0 %914, %v521
    %v916 = vpop.permute.xlu0 %915
    %919 = vset.pattern.permute.xlu0 0
    %920 = vperm.xlu0 %919, %v522
    %v921 = vpop.permute.xlu0 %920
    %924 = vset.pattern.permute.xlu0 0
    %925 = vperm.xlu0 %924, %v523
    %v926 = vpop.permute.xlu0 %925
    %929 = vset.pattern.permute.xlu0 0
    %930 = vperm.xlu0 %929, %v524
    %v931 = vpop.permute.xlu0 %930
    %934 = vset.pattern.permute.xlu0 0
    %935 = vperm.xlu0 %934, %v525
    %v936 = vpop.permute.xlu0 %935
    %939 = vset.pattern.permute.xlu0 0
    %940 = vperm.xlu0 %939, %v526
    %v941 = vpop.permute.xlu0 %940
    %944 = vset.pattern.permute.xlu0 0
    %945 = vperm.xlu0 %944, %v527
    %v946 = vpop.permute.xlu0 %945
    %949 = vset.pattern.permute.xlu0 0
    %950 = vperm.xlu0 %949, %v528
    %v951 = vpop.permute.xlu0 %950
    %954 = vset.pattern.permute.xlu0 0
    %955 = vperm.xlu0 %954, %v529
    %v956 = vpop.permute.xlu0 %955
    %959 = vset.pattern.permute.xlu0 0
    %960 = vperm.xlu0 %959, %v530
    %v961 = vpop.permute.xlu0 %960
    %964 = vset.pattern.permute.xlu0 0
    %965 = vperm.xlu0 %964, %v531
    %v966 = vpop.permute.xlu0 %965
    %969 = vset.pattern.permute.xlu0 0
    %970 = vperm.xlu0 %969, %v532
    %v971 = vpop.permute.xlu0 %970
    %974 = vset.pattern.permute.xlu0 0
    %975 = vperm.xlu0 %974, %v533
    %v976 = vpop.permute.xlu0 %975
    %979 = vset.pattern.permute.xlu0 0
    %980 = vperm.xlu0 %979, %v534
    %v981 = vpop.permute.xlu0 %980
    %984 = vset.pattern.permute.xlu0 0
    %985 = vperm.xlu0 %984, %v535
    %v986 = vpop.permute.xlu0 %985
    %989 = vset.pattern.permute.xlu0 0
    %990 = vperm.xlu0 %989, %v536
    %v991 = vpop.permute.xlu0 %990
    %994 = vset.pattern.permute.xlu0 0
    %995 = vperm.xlu0 %994, %v537
    %v996 = vpop.permute.xlu0 %995
    %999 = vset.pattern.permute.xlu0 0
    %1000 = vperm.xlu0 %999, %v538
    %v1001 = vpop.permute.xlu0 %1000
    %1004 = vset.pattern.permute.xlu0 0
    %1005 = vperm.xlu0 %1004, %v539
    %v1006 = vpop.permute.xlu0 %1005
    %1009 = vset.pattern.permute.xlu0 0
    %1010 = vperm.xlu0 %1009, %v540
    %v1011 = vpop.permute.xlu0 %1010
    %1014 = vset.pattern.permute.xlu0 0
    %1015 = vperm.xlu0 %1014, %v541
    %v1016 = vpop.permute.xlu0 %1015
    %1019 = vset.pattern.permute.xlu0 0
    %1020 = vperm.xlu0 %1019, %v542
    %v1021 = vpop.permute.xlu0 %1020
    %1023 = vmatprep.subr.mxu0 0.0
    %1024 = vmatpush1.xpose.msra.mxu0 0.0
    %1025 = vmatprep.subr.mxu0 0.0
    %1026 = vmatpush1.xpose.msra.mxu0 0.0
    %1027 = vmatprep.subr.mxu0 0.0
    %1028 = vmatpush1.xpose.msra.mxu0 0.0
    %1029 = vmatprep.subr.mxu0 0.0
    %1030 = vmatpush1.xpose.msra.mxu0 0.0
    %1031 = vmatprep.subr.mxu0 0.0
    %1032 = vmatpush1.xpose.msra.mxu0 0.0
    %1033 = vmatprep.subr.mxu0 0.0
    %1034 = vmatpush1.xpose.msra.mxu0 0.0
    %1035 = vmatprep.subr.mxu0 0.0
    %1036 = vmatpush1.xpose.msra.mxu0 0.0
    %1037 = vmatprep.subr.mxu0 0.0
    %1038 = vmatpush1.xpose.msra.mxu0 0.0
    %1039 = vmatprep.subr.mxu0 0.0
    %1040 = vmatpush1.xpose.msra.mxu0 0.0
    %1041 = vmatprep.subr.mxu0 0.0
    %1042 = vmatpush1.xpose.msra.mxu0 0.0
    %1043 = vmatprep.subr.mxu0 0.0
    %1044 = vmatpush1.xpose.msra.mxu0 0.0
    %1045 = vmatprep.subr.mxu0 0.0
    %1046 = vmatpush1.xpose.msra.mxu0 0.0
    %1047 = vmatprep.subr.mxu0 0.0
    %1048 = vmatpush1.xpose.msra.mxu0 0.0
    %1049 = vmatprep.subr.mxu0 0.0
    %1050 = vmatpush1.xpose.msra.mxu0 0.0
    %1051 = vmatprep.subr.mxu0 %v252
    %1052 = vmatpush1.xpose.msra.mxu0 %v251
    %1053 = vmatprep.subr.mxu0 %v250
    %1054 = vmatpush1.xpose.msra.mxu0 %v249
    %1055 = vmatprep.subr.mxu0 0.0
    %1056 = vmatpush2.xpose.msra.mxu0 0.0
    %1057 = vmatprep.subr.mxu0 0.0
    %1058 = vmatpush2.xpose.msra.mxu0 0.0
    %1059 = vmatprep.subr.mxu0 0.0
    %1060 = vmatpush2.xpose.msra.mxu0 0.0
    %1061 = vmatprep.subr.mxu0 0.0
    %1062 = vmatpush2.xpose.msra.mxu0 0.0
    %1063 = vmatprep.subr.mxu0 0.0
    %1064 = vmatpush2.xpose.msra.mxu0 0.0
    %1065 = vmatprep.subr.mxu0 0.0
    %1066 = vmatpush2.xpose.msra.mxu0 0.0
    %1067 = vmatprep.subr.mxu0 0.0
    %1068 = vmatpush2.xpose.msra.mxu0 0.0
    %1069 = vmatprep.subr.mxu0 0.0
    %1070 = vmatpush2.xpose.msra.mxu0 0.0
    %1071 = vmatprep.subr.mxu0 0.0
    %1072 = vmatpush2.xpose.msra.mxu0 0.0
    %1073 = vmatprep.subr.mxu0 0.0
    %1074 = vmatpush2.xpose.msra.mxu0 0.0
    %1075 = vmatprep.subr.mxu0 0.0
    %1076 = vmatpush2.xpose.msra.mxu0 0.0
    %1077 = vmatprep.subr.mxu0 0.0
    %1078 = vmatpush2.xpose.msra.mxu0 0.0
    %1079 = vmatprep.subr.mxu0 0.0
    %1080 = vmatpush2.xpose.msra.mxu0 0.0
    %1081 = vmatprep.subr.mxu0 0.0
    %1082 = vmatpush2.xpose.msra.mxu0 0.0
    %1083 = vmatprep.subr.mxu0 0.0
    %1084 = vmatpush2.xpose.msra.mxu0 0.0
    %1085 = vmatprep.subr.mxu0 0.0
    %1086 = vmatpush2.xpose.msra.mxu0 0.0
    %1087 = vmatprep.mubr.f32.mxu0 %v256
    %1088 = vmatmul.mubr.f32.gmra.mxu0 %v255
    %v1089 = vpop.f32.mrf.mxu0
    %v1090 = vadd.f32 %v546, %v1089
    %v1091 = vpop.f32.mrf.mxu0
    %1092 = vmatprep.mubr.f32.mxu0 %v258
    %1093 = vmatmul.mubr.f32.gmra.mxu0 %v257
    %v1094 = vpop.f32.mrf.mxu0
    %v1095 = vadd.f32 %v551, %v1094
    %v1096 = vpop.f32.mrf.mxu0
    %1097 = vmatprep.mubr.f32.mxu0 %v260
    %1098 = vmatmul.mubr.f32.gmra.mxu0 %v259
    %v1099 = vpop.f32.mrf.mxu0
    %v1100 = vadd.f32 %v556, %v1099
    %v1101 = vpop.f32.mrf.mxu0
    %1102 = vmatprep.mubr.f32.mxu0 %v262
    %1103 = vmatmul.mubr.f32.gmra.mxu0 %v261
    %v1104 = vpop.f32.mrf.mxu0
    %v1105 = vadd.f32 %v561, %v1104
    %v1106 = vpop.f32.mrf.mxu0
    %1107 = vmatprep.mubr.f32.mxu0 %v264
    %1108 = vmatmul.mubr.f32.gmra.mxu0 %v263
    %v1109 = vpop.f32.mrf.mxu0
    %v1110 = vadd.f32 %v566, %v1109
    %v1111 = vpop.f32.mrf.mxu0
    %1112 = vmatprep.mubr.f32.mxu0 %v266
    %1113 = vmatmul.mubr.f32.gmra.mxu0 %v265
    %v1114 = vpop.f32.mrf.mxu0
    %v1115 = vadd.f32 %v571, %v1114
    %v1116 = vpop.f32.mrf.mxu0
    %1117 = vmatprep.mubr.f32.mxu0 %v268
    %1118 = vmatmul.mubr.f32.gmra.mxu0 %v267
    %v1119 = vpop.f32.mrf.mxu0
    %v1120 = vadd.f32 %v576, %v1119
    %v1121 = vpop.f32.mrf.mxu0
    %1122 = vmatprep.mubr.f32.mxu0 %v270
    %1123 = vmatmul.mubr.f32.gmra.mxu0 %v269
    %v1124 = vpop.f32.mrf.mxu0
    %v1125 = vadd.f32 %v581, %v1124
    %v1126 = vpop.f32.mrf.mxu0
    %1127 = vmatprep.mubr.f32.mxu0 %v272
    %1128 = vmatmul.mubr.f32.gmra.mxu0 %v271
    %v1129 = vpop.f32.mrf.mxu0
    %v1130 = vadd.f32 %v586, %v1129
    %v1131 = vpop.f32.mrf.mxu0
    %1132 = vmatprep.mubr.f32.mxu0 %v274
    %1133 = vmatmul.mubr.f32.gmra.mxu0 %v273
    %v1134 = vpop.f32.mrf.mxu0
    %v1135 = vadd.f32 %v591, %v1134
    %v1136 = vpop.f32.mrf.mxu0
    %1137 = vmatprep.mubr.f32.mxu0 %v276
    %1138 = vmatmul.mubr.f32.gmra.mxu0 %v275
    %v1139 = vpop.f32.mrf.mxu0
    %v1140 = vadd.f32 %v596, %v1139
    %v1141 = vpop.f32.mrf.mxu0
    %1142 = vmatprep.mubr.f32.mxu0 %v278
    %1143 = vmatmul.mubr.f32.gmra.mxu0 %v277
    %v1144 = vpop.f32.mrf.mxu0
    %v1145 = vadd.f32 %v601, %v1144
    %v1146 = vpop.f32.mrf.mxu0
    %1147 = vmatprep.mubr.f32.mxu0 %v280
    %1148 = vmatmul.mubr.f32.gmra.mxu0 %v279
    %v1149 = vpop.f32.mrf.mxu0
    %v1150 = vadd.f32 %v606, %v1149
    %v1151 = vpop.f32.mrf.mxu0
    %1152 = vmatprep.mubr.f32.mxu0 %v282
    %1153 = vmatmul.mubr.f32.gmra.mxu0 %v281
    %v1154 = vpop.f32.mrf.mxu0
    %v1155 = vadd.f32 %v611, %v1154
    %v1156 = vpop.f32.mrf.mxu0
    %1157 = vmatprep.mubr.f32.mxu0 %v284
    %1158 = vmatmul.mubr.f32.gmra.mxu0 %v283
    %v1159 = vpop.f32.mrf.mxu0
    %v1160 = vadd.f32 %v616, %v1159
    %v1161 = vpop.f32.mrf.mxu0
    %1162 = vmatprep.mubr.f32.mxu0 %v286
    %1163 = vmatmul.mubr.f32.gmra.mxu0 %v285
    %v1164 = vpop.f32.mrf.mxu0
    %v1165 = vadd.f32 %v621, %v1164
    %v1166 = vpop.f32.mrf.mxu0
    %1167 = vmatprep.mubr.f32.mxu0 %v288
    %1168 = vmatmul.mubr.f32.gmra.mxu0 %v287
    %v1169 = vpop.f32.mrf.mxu0
    %v1170 = vadd.f32 %v626, %v1169
    %v1171 = vpop.f32.mrf.mxu0
    %1172 = vmatprep.mubr.f32.mxu0 %v290
    %1173 = vmatmul.mubr.f32.gmra.mxu0 %v289
    %v1174 = vpop.f32.mrf.mxu0
    %v1175 = vadd.f32 %v631, %v1174
    %v1176 = vpop.f32.mrf.mxu0
    %1177 = vmatprep.mubr.f32.mxu0 %v292
    %1178 = vmatmul.mubr.f32.gmra.mxu0 %v291
    %v1179 = vpop.f32.mrf.mxu0
    %v1180 = vadd.f32 %v636, %v1179
    %v1181 = vpop.f32.mrf.mxu0
    %1182 = vmatprep.mubr.f32.mxu0 %v294
    %1183 = vmatmul.mubr.f32.gmra.mxu0 %v293
    %v1184 = vpop.f32.mrf.mxu0
    %v1185 = vadd.f32 %v641, %v1184
    %v1186 = vpop.f32.mrf.mxu0
    %1187 = vmatprep.mubr.f32.mxu0 %v296
    %1188 = vmatmul.mubr.f32.gmra.mxu0 %v295
    %v1189 = vpop.f32.mrf.mxu0
    %v1190 = vadd.f32 %v646, %v1189
    %v1191 = vpop.f32.mrf.mxu0
    %1192 = vmatprep.mubr.f32.mxu0 %v298
    %1193 = vmatmul.mubr.f32.gmra.mxu0 %v297
    %v1194 = vpop.f32.mrf.mxu0
    %v1195 = vadd.f32 %v651, %v1194
    %v1196 = vpop.f32.mrf.mxu0
    %1197 = vmatprep.mubr.f32.mxu0 %v300
    %1198 = vmatmul.mubr.f32.gmra.mxu0 %v299
    %v1199 = vpop.f32.mrf.mxu0
    %v1200 = vadd.f32 %v656, %v1199
    %v1201 = vpop.f32.mrf.mxu0
    %1202 = vmatprep.mubr.f32.mxu0 %v302
    %1203 = vmatmul.mubr.f32.gmra.mxu0 %v301
    %v1204 = vpop.f32.mrf.mxu0
    %v1205 = vadd.f32 %v661, %v1204
    %v1206 = vpop.f32.mrf.mxu0
    %1207 = vmatprep.mubr.f32.mxu0 %v304
    %1208 = vmatmul.mubr.f32.gmra.mxu0 %v303
    %v1209 = vpop.f32.mrf.mxu0
    %v1210 = vadd.f32 %v666, %v1209
    %v1211 = vpop.f32.mrf.mxu0
    %1212 = vmatprep.mubr.f32.mxu0 %v306
    %1213 = vmatmul.mubr.f32.gmra.mxu0 %v305
    %v1214 = vpop.f32.mrf.mxu0
    %v1215 = vadd.f32 %v671, %v1214
    %v1216 = vpop.f32.mrf.mxu0
    %1217 = vmatprep.mubr.f32.mxu0 %v308
    %1218 = vmatmul.mubr.f32.gmra.mxu0 %v307
    %v1219 = vpop.f32.mrf.mxu0
    %v1220 = vadd.f32 %v676, %v1219
    %v1221 = vpop.f32.mrf.mxu0
    %1222 = vmatprep.mubr.f32.mxu0 %v310
    %1223 = vmatmul.mubr.f32.gmra.mxu0 %v309
    %v1224 = vpop.f32.mrf.mxu0
    %v1225 = vadd.f32 %v681, %v1224
    %v1226 = vpop.f32.mrf.mxu0
    %1227 = vmatprep.mubr.f32.mxu0 %v312
    %1228 = vmatmul.mubr.f32.gmra.mxu0 %v311
    %v1229 = vpop.f32.mrf.mxu0
    %v1230 = vadd.f32 %v686, %v1229
    %v1231 = vpop.f32.mrf.mxu0
    %1232 = vmatprep.mubr.f32.mxu0 %v314
    %1233 = vmatmul.mubr.f32.gmra.mxu0 %v313
    %v1234 = vpop.f32.mrf.mxu0
    %v1235 = vadd.f32 %v691, %v1234
    %v1236 = vpop.f32.mrf.mxu0
    %1237 = vmatprep.mubr.f32.mxu0 %v316
    %1238 = vmatmul.mubr.f32.gmra.mxu0 %v315
    %v1239 = vpop.f32.mrf.mxu0
    %v1240 = vadd.f32 %v696, %v1239
    %v1241 = vpop.f32.mrf.mxu0
    %1242 = vmatprep.mubr.f32.mxu0 %v318
    %1243 = vmatmul.mubr.f32.gmra.mxu0 %v317
    %v1244 = vpop.f32.mrf.mxu0
    %v1245 = vadd.f32 %v701, %v1244
    %v1246 = vpop.f32.mrf.mxu0
    %1247 = vmatprep.mubr.f32.mxu0 %v320
    %1248 = vmatmul.mubr.f32.gmra.mxu0 %v319
    %v1249 = vpop.f32.mrf.mxu0
    %v1250 = vadd.f32 %v706, %v1249
    %v1251 = vpop.f32.mrf.mxu0
    %1252 = vmatprep.mubr.f32.mxu0 %v322
    %1253 = vmatmul.mubr.f32.gmra.mxu0 %v321
    %v1254 = vpop.f32.mrf.mxu0
    %v1255 = vadd.f32 %v711, %v1254
    %v1256 = vpop.f32.mrf.mxu0
    %1257 = vmatprep.mubr.f32.mxu0 %v324
    %1258 = vmatmul.mubr.f32.gmra.mxu0 %v323
    %v1259 = vpop.f32.mrf.mxu0
    %v1260 = vadd.f32 %v716, %v1259
    %v1261 = vpop.f32.mrf.mxu0
    %1262 = vmatprep.mubr.f32.mxu0 %v326
    %1263 = vmatmul.mubr.f32.gmra.mxu0 %v325
    %v1264 = vpop.f32.mrf.mxu0
    %v1265 = vadd.f32 %v721, %v1264
    %v1266 = vpop.f32.mrf.mxu0
    %1267 = vmatprep.mubr.f32.mxu0 %v328
    %1268 = vmatmul.mubr.f32.gmra.mxu0 %v327
    %v1269 = vpop.f32.mrf.mxu0
    %v1270 = vadd.f32 %v726, %v1269
    %v1271 = vpop.f32.mrf.mxu0
    %1272 = vmatprep.mubr.f32.mxu0 %v330
    %1273 = vmatmul.mubr.f32.gmra.mxu0 %v329
    %v1274 = vpop.f32.mrf.mxu0
    %v1275 = vadd.f32 %v731, %v1274
    %v1276 = vpop.f32.mrf.mxu0
    %1277 = vmatprep.mubr.f32.mxu0 %v332
    %1278 = vmatmul.mubr.f32.gmra.mxu0 %v331
    %v1279 = vpop.f32.mrf.mxu0
    %v1280 = vadd.f32 %v736, %v1279
    %v1281 = vpop.f32.mrf.mxu0
    %1282 = vmatprep.mubr.f32.mxu0 %v334
    %1283 = vmatmul.mubr.f32.gmra.mxu0 %v333
    %v1284 = vpop.f32.mrf.mxu0
    %v1285 = vadd.f32 %v741, %v1284
    %v1286 = vpop.f32.mrf.mxu0
    %1287 = vmatprep.mubr.f32.mxu0 %v336
    %1288 = vmatmul.mubr.f32.gmra.mxu0 %v335
    %v1289 = vpop.f32.mrf.mxu0
    %v1290 = vadd.f32 %v746, %v1289
    %v1291 = vpop.f32.mrf.mxu0
    %1292 = vmatprep.mubr.f32.mxu0 %v338
    %1293 = vmatmul.mubr.f32.gmra.mxu0 %v337
    %v1294 = vpop.f32.mrf.mxu0
    %v1295 = vadd.f32 %v751, %v1294
    %v1296 = vpop.f32.mrf.mxu0
    %1297 = vmatprep.mubr.f32.mxu0 %v340
    %1298 = vmatmul.mubr.f32.gmra.mxu0 %v339
    %v1299 = vpop.f32.mrf.mxu0
    %v1300 = vadd.f32 %v756, %v1299
    %v1301 = vpop.f32.mrf.mxu0
    %1302 = vmatprep.mubr.f32.mxu0 %v342
    %1303 = vmatmul.mubr.f32.gmra.mxu0 %v341
    %v1304 = vpop.f32.mrf.mxu0
    %v1305 = vadd.f32 %v761, %v1304
    %v1306 = vpop.f32.mrf.mxu0
    %1307 = vmatprep.mubr.f32.mxu0 %v344
    %1308 = vmatmul.mubr.f32.gmra.mxu0 %v343
    %v1309 = vpop.f32.mrf.mxu0
    %v1310 = vadd.f32 %v766, %v1309
    %v1311 = vpop.f32.mrf.mxu0
    %1312 = vmatprep.mubr.f32.mxu0 %v346
    %1313 = vmatmul.mubr.f32.gmra.mxu0 %v345
    %v1314 = vpop.f32.mrf.mxu0
    %v1315 = vadd.f32 %v771, %v1314
    %v1316 = vpop.f32.mrf.mxu0
    %1317 = vmatprep.mubr.f32.mxu0 %v348
    %1318 = vmatmul.mubr.f32.gmra.mxu0 %v347
    %v1319 = vpop.f32.mrf.mxu0
    %v1320 = vadd.f32 %v776, %v1319
    %v1321 = vpop.f32.mrf.mxu0
    %1322 = vmatprep.mubr.f32.mxu0 %v350
    %1323 = vmatmul.mubr.f32.gmra.mxu0 %v349
    %v1324 = vpop.f32.mrf.mxu0
    %v1325 = vadd.f32 %v781, %v1324
    %v1326 = vpop.f32.mrf.mxu0
    %1327 = vmatprep.mubr.f32.mxu0 %v352
    %1328 = vmatmul.mubr.f32.gmra.mxu0 %v351
    %v1329 = vpop.f32.mrf.mxu0
    %v1330 = vadd.f32 %v786, %v1329
    %v1331 = vpop.f32.mrf.mxu0
    %1332 = vmatprep.mubr.f32.mxu0 %v354
    %1333 = vmatmul.mubr.f32.gmra.mxu0 %v353
    %v1334 = vpop.f32.mrf.mxu0
    %v1335 = vadd.f32 %v791, %v1334
    %v1336 = vpop.f32.mrf.mxu0
    %1337 = vmatprep.mubr.f32.mxu0 %v356
    %1338 = vmatmul.mubr.f32.gmra.mxu0 %v355
    %v1339 = vpop.f32.mrf.mxu0
    %v1340 = vadd.f32 %v796, %v1339
    %v1341 = vpop.f32.mrf.mxu0
    %1342 = vmatprep.mubr.f32.mxu0 %v358
    %1343 = vmatmul.mubr.f32.gmra.mxu0 %v357
    %v1344 = vpop.f32.mrf.mxu0
    %v1345 = vadd.f32 %v801, %v1344
    %v1346 = vpop.f32.mrf.mxu0
    %1347 = vmatprep.mubr.f32.mxu0 %v360
    %1348 = vmatmul.mubr.f32.gmra.mxu0 %v359
    %v1349 = vpop.f32.mrf.mxu0
    %v1350 = vadd.f32 %v806, %v1349
    %v1351 = vpop.f32.mrf.mxu0
    %1352 = vmatprep.mubr.f32.mxu0 %v362
    %1353 = vmatmul.mubr.f32.gmra.mxu0 %v361
    %v1354 = vpop.f32.mrf.mxu0
    %v1355 = vadd.f32 %v811, %v1354
    %v1356 = vpop.f32.mrf.mxu0
    %1357 = vmatprep.mubr.f32.mxu0 %v364
    %1358 = vmatmul.mubr.f32.gmra.mxu0 %v363
    %v1359 = vpop.f32.mrf.mxu0
    %v1360 = vadd.f32 %v816, %v1359
    %v1361 = vpop.f32.mrf.mxu0
    %1362 = vmatprep.mubr.f32.mxu0 %v366
    %1363 = vmatmul.mubr.f32.gmra.mxu0 %v365
    %v1364 = vpop.f32.mrf.mxu0
    %v1365 = vadd.f32 %v821, %v1364
    %v1366 = vpop.f32.mrf.mxu0
    %1367 = vmatprep.mubr.f32.mxu0 %v368
    %1368 = vmatmul.mubr.f32.gmra.mxu0 %v367
    %v1369 = vpop.f32.mrf.mxu0
    %v1370 = vadd.f32 %v826, %v1369
    %v1371 = vpop.f32.mrf.mxu0
    %1372 = vmatprep.mubr.f32.mxu0 %v370
    %1373 = vmatmul.mubr.f32.gmra.mxu0 %v369
    %v1374 = vpop.f32.mrf.mxu0
    %v1375 = vadd.f32 %v831, %v1374
    %v1376 = vpop.f32.mrf.mxu0
    %1377 = vmatprep.mubr.f32.mxu0 %v372
    %1378 = vmatmul.mubr.f32.gmra.mxu0 %v371
    %v1379 = vpop.f32.mrf.mxu0
    %v1380 = vadd.f32 %v836, %v1379
    %v1381 = vpop.f32.mrf.mxu0
    %1382 = vmatprep.mubr.f32.mxu0 %v374
    %1383 = vmatmul.mubr.f32.gmra.mxu0 %v373
    %v1384 = vpop.f32.mrf.mxu0
    %v1385 = vadd.f32 %v841, %v1384
    %v1386 = vpop.f32.mrf.mxu0
    %1387 = vmatprep.mubr.f32.mxu0 %v376
    %1388 = vmatmul.mubr.f32.gmra.mxu0 %v375
    %v1389 = vpop.f32.mrf.mxu0
    %v1390 = vadd.f32 %v846, %v1389
    %v1391 = vpop.f32.mrf.mxu0
    %1392 = vmatprep.mubr.f32.mxu0 %v378
    %1393 = vmatmul.mubr.f32.gmra.mxu0 %v377
    %v1394 = vpop.f32.mrf.mxu0
    %v1395 = vadd.f32 %v851, %v1394
    %v1396 = vpop.f32.mrf.mxu0
    %1397 = vmatprep.mubr.f32.mxu0 %v380
    %1398 = vmatmul.mubr.f32.gmra.mxu0 %v379
    %v1399 = vpop.f32.mrf.mxu0
    %v1400 = vadd.f32 %v856, %v1399
    %v1401 = vpop.f32.mrf.mxu0
    %1402 = vmatprep.mubr.f32.mxu0 %v382
    %1403 = vmatmul.mubr.f32.gmra.mxu0 %v381
    %v1404 = vpop.f32.mrf.mxu0
    %v1405 = vadd.f32 %v861, %v1404
    %v1406 = vpop.f32.mrf.mxu0
    %1407 = vmatprep.mubr.f32.mxu0 %v384
    %1408 = vmatmul.mubr.f32.gmra.mxu0 %v383
    %v1409 = vpop.f32.mrf.mxu0
    %v1410 = vadd.f32 %v866, %v1409
    %v1411 = vpop.f32.mrf.mxu0
    %1412 = vmatprep.mubr.f32.mxu0 %v386
    %1413 = vmatmul.mubr.f32.gmra.mxu0 %v385
    %v1414 = vpop.f32.mrf.mxu0
    %v1415 = vadd.f32 %v871, %v1414
    %v1416 = vpop.f32.mrf.mxu0
    %1417 = vmatprep.mubr.f32.mxu0 %v388
    %1418 = vmatmul.mubr.f32.gmra.mxu0 %v387
    %v1419 = vpop.f32.mrf.mxu0
    %v1420 = vadd.f32 %v876, %v1419
    %v1421 = vpop.f32.mrf.mxu0
    %1422 = vmatprep.mubr.f32.mxu0 %v390
    %1423 = vmatmul.mubr.f32.gmra.mxu0 %v389
    %v1424 = vpop.f32.mrf.mxu0
    %v1425 = vadd.f32 %v881, %v1424
    %v1426 = vpop.f32.mrf.mxu0
    %1427 = vmatprep.mubr.f32.mxu0 %v392
    %1428 = vmatmul.mubr.f32.gmra.mxu0 %v391
    %v1429 = vpop.f32.mrf.mxu0
    %v1430 = vadd.f32 %v886, %v1429
    %v1431 = vpop.f32.mrf.mxu0
    %1432 = vmatprep.mubr.f32.mxu0 %v394
    %1433 = vmatmul.mubr.f32.gmra.mxu0 %v393
    %v1434 = vpop.f32.mrf.mxu0
    %v1435 = vadd.f32 %v891, %v1434
    %v1436 = vpop.f32.mrf.mxu0
    %1437 = vmatprep.mubr.f32.mxu0 %v396
    %1438 = vmatmul.mubr.f32.gmra.mxu0 %v395
    %v1439 = vpop.f32.mrf.mxu0
    %v1440 = vadd.f32 %v896, %v1439
    %v1441 = vpop.f32.mrf.mxu0
    %1442 = vmatprep.mubr.f32.mxu0 %v398
    %1443 = vmatmul.mubr.f32.gmra.mxu0 %v397
    %v1444 = vpop.f32.mrf.mxu0
    %v1445 = vadd.f32 %v901, %v1444
    %v1446 = vpop.f32.mrf.mxu0
    %1447 = vmatprep.mubr.f32.mxu0 %v400
    %1448 = vmatmul.mubr.f32.gmra.mxu0 %v399
    %v1449 = vpop.f32.mrf.mxu0
    %v1450 = vadd.f32 %v906, %v1449
    %v1451 = vpop.f32.mrf.mxu0
    %1452 = vmatprep.mubr.f32.mxu0 %v402
    %1453 = vmatmul.mubr.f32.gmra.mxu0 %v401
    %v1454 = vpop.f32.mrf.mxu0
    %v1455 = vadd.f32 %v911, %v1454
    %v1456 = vpop.f32.mrf.mxu0
    %1457 = vmatprep.mubr.f32.mxu0 %v404
    %1458 = vmatmul.mubr.f32.gmra.mxu0 %v403
    %v1459 = vpop.f32.mrf.mxu0
    %v1460 = vadd.f32 %v916, %v1459
    %v1461 = vpop.f32.mrf.mxu0
    %1462 = vmatprep.mubr.f32.mxu0 %v406
    %1463 = vmatmul.mubr.f32.gmra.mxu0 %v405
    %v1464 = vpop.f32.mrf.mxu0
    %v1465 = vadd.f32 %v921, %v1464
    %v1466 = vpop.f32.mrf.mxu0
    %1467 = vmatprep.mubr.f32.mxu0 %v408
    %1468 = vmatmul.mubr.f32.gmra.mxu0 %v407
    %v1469 = vpop.f32.mrf.mxu0
    %v1470 = vadd.f32 %v926, %v1469
    %v1471 = vpop.f32.mrf.mxu0
    %1472 = vmatprep.mubr.f32.mxu0 %v410
    %1473 = vmatmul.mubr.f32.gmra.mxu0 %v409
    %v1474 = vpop.f32.mrf.mxu0
    %v1475 = vadd.f32 %v931, %v1474
    %v1476 = vpop.f32.mrf.mxu0
    %1477 = vmatprep.mubr.f32.mxu0 %v412
    %1478 = vmatmul.mubr.f32.gmra.mxu0 %v411
    %v1479 = vpop.f32.mrf.mxu0
    %v1480 = vadd.f32 %v936, %v1479
    %v1481 = vpop.f32.mrf.mxu0
    %1482 = vmatprep.mubr.f32.mxu0 %v414
    %1483 = vmatmul.mubr.f32.gmra.mxu0 %v413
    %v1484 = vpop.f32.mrf.mxu0
    %v1485 = vadd.f32 %v941, %v1484
    %v1486 = vpop.f32.mrf.mxu0
    %1487 = vmatprep.mubr.f32.mxu0 %v416
    %1488 = vmatmul.mubr.f32.gmra.mxu0 %v415
    %v1489 = vpop.f32.mrf.mxu0
    %v1490 = vadd.f32 %v946, %v1489
    %v1491 = vpop.f32.mrf.mxu0
    %1492 = vmatprep.mubr.f32.mxu0 %v418
    %1493 = vmatmul.mubr.f32.gmra.mxu0 %v417
    %v1494 = vpop.f32.mrf.mxu0
    %v1495 = vadd.f32 %v951, %v1494
    %v1496 = vpop.f32.mrf.mxu0
    %1497 = vmatprep.mubr.f32.mxu0 %v420
    %1498 = vmatmul.mubr.f32.gmra.mxu0 %v419
    %v1499 = vpop.f32.mrf.mxu0
    %v1500 = vadd.f32 %v956, %v1499
    %v1501 = vpop.f32.mrf.mxu0
    %1502 = vmatprep.mubr.f32.mxu0 %v422
    %1503 = vmatmul.mubr.f32.gmra.mxu0 %v421
    %v1504 = vpop.f32.mrf.mxu0
    %v1505 = vadd.f32 %v961, %v1504
    %v1506 = vpop.f32.mrf.mxu0
    %1507 = vmatprep.mubr.f32.mxu0 %v424
    %1508 = vmatmul.mubr.f32.gmra.mxu0 %v423
    %v1509 = vpop.f32.mrf.mxu0
    %v1510 = vadd.f32 %v966, %v1509
    %v1511 = vpop.f32.mrf.mxu0
    %1512 = vmatprep.mubr.f32.mxu0 %v426
    %1513 = vmatmul.mubr.f32.gmra.mxu0 %v425
    %v1514 = vpop.f32.mrf.mxu0
    %v1515 = vadd.f32 %v971, %v1514
    %v1516 = vpop.f32.mrf.mxu0
    %1517 = vmatprep.mubr.f32.mxu0 %v428
    %1518 = vmatmul.mubr.f32.gmra.mxu0 %v427
    %v1519 = vpop.f32.mrf.mxu0
    %v1520 = vadd.f32 %v976, %v1519
    %v1521 = vpop.f32.mrf.mxu0
    %1522 = vmatprep.mubr.f32.mxu0 %v430
    %1523 = vmatmul.mubr.f32.gmra.mxu0 %v429
    %v1524 = vpop.f32.mrf.mxu0
    %v1525 = vadd.f32 %v981, %v1524
    %v1526 = vpop.f32.mrf.mxu0
    %1527 = vmatprep.mubr.f32.mxu0 %v432
    %1528 = vmatmul.mubr.f32.gmra.mxu0 %v431
    %v1529 = vpop.f32.mrf.mxu0
    %v1530 = vadd.f32 %v986, %v1529
    %v1531 = vpop.f32.mrf.mxu0
    %1532 = vmatprep.mubr.f32.mxu0 %v434
    %1533 = vmatmul.mubr.f32.gmra.mxu0 %v433
    %v1534 = vpop.f32.mrf.mxu0
    %v1535 = vadd.f32 %v991, %v1534
    %v1536 = vpop.f32.mrf.mxu0
    %1537 = vmatprep.mubr.f32.mxu0 %v436
    %1538 = vmatmul.mubr.f32.gmra.mxu0 %v435
    %v1539 = vpop.f32.mrf.mxu0
    %v1540 = vadd.f32 %v996, %v1539
    %v1541 = vpop.f32.mrf.mxu0
    %1542 = vmatprep.mubr.f32.mxu0 %v438
    %1543 = vmatmul.mubr.f32.gmra.mxu0 %v437
    %v1544 = vpop.f32.mrf.mxu0
    %v1545 = vadd.f32 %v1001, %v1544
    %v1546 = vpop.f32.mrf.mxu0
    %1547 = vmatprep.mubr.f32.mxu0 %v440
    %1548 = vmatmul.mubr.f32.gmra.mxu0 %v439
    %v1549 = vpop.f32.mrf.mxu0
    %v1550 = vadd.f32 %v1006, %v1549
    %v1551 = vpop.f32.mrf.mxu0
    %1552 = vmatprep.mubr.f32.mxu0 %v442
    %1553 = vmatmul.mubr.f32.gmra.mxu0 %v441
    %v1554 = vpop.f32.mrf.mxu0
    %v1555 = vadd.f32 %v1011, %v1554
    %v1556 = vpop.f32.mrf.mxu0
    %1557 = vmatprep.mubr.f32.mxu0 %v444
    %1558 = vmatmul.mubr.f32.gmra.mxu0 %v443
    %v1559 = vpop.f32.mrf.mxu0
    %v1560 = vadd.f32 %v1016, %v1559
    %v1561 = vpop.f32.mrf.mxu0
    %1562 = vmatprep.mubr.f32.mxu0 %v446
    %1563 = vmatmul.mubr.f32.gmra.mxu0 %v445
    %v1564 = vpop.f32.mrf.mxu0
    %v1565 = vadd.f32 %v1021, %v1564
    %v1566 = vpop.f32.mrf.mxu0
    %1567 = vdwg.mxu0
    %v1568 = vmul.f32 %v1090, 0.17677669
    %v1569 = vmul.f32 %v1095, 0.17677669
    %v1570 = vmul.f32 %v1100, 0.17677669
    %v1571 = vmul.f32 %v1105, 0.17677669
    %1572 = vxpose.xlu0.b32.start [1/16] %v1568, 128
    %1573 = vxpose.xlu0.b32.cont [2/16] %v1569, 128
    %1574 = vxpose.xlu0.b32.cont [3/16] %v1570, 128
    %1575 = vxpose.xlu0.b32.cont [4/16] %v1571, 128
    %1576 = vxpose.xlu0.b32.cont [5/16] 0.0, 128
    %1577 = vxpose.xlu0.b32.cont [6/16] 0.0, 128
    %1578 = vxpose.xlu0.b32.cont [7/16] 0.0, 128
    %1579 = vxpose.xlu0.b32.cont [8/16] 0.0, 128
    %1580 = vxpose.xlu0.b32.cont [9/16] 0.0, 128
    %1581 = vxpose.xlu0.b32.cont [10/16] 0.0, 128
    %1582 = vxpose.xlu0.b32.cont [11/16] 0.0, 128
    %1583 = vxpose.xlu0.b32.cont [12/16] 0.0, 128
    %1584 = vxpose.xlu0.b32.cont [13/16] 0.0, 128
    %1585 = vxpose.xlu0.b32.cont [14/16] 0.0, 128
    %1586 = vxpose.xlu0.b32.cont [15/16] 0.0, 128
    %1587 = vxpose.xlu0.b32.end [16/16] 0.0, 128
    %v1588 = vpop.trf.xlu0
    %v1589 = vpop.trf.xlu0
    %v1590 = vpop.trf.xlu0
    %v1591 = vpop.trf.xlu0
    %v1592 = vpop.trf.xlu0
    %v1593 = vpop.trf.xlu0
    %v1594 = vpop.trf.xlu0
    %v1595 = vpop.trf.xlu0
    %v1596 = vpop.trf.xlu0
    %v1597 = vpop.trf.xlu0
    %v1598 = vpop.trf.xlu0
    %v1599 = vpop.trf.xlu0
    %v1600 = vpop.trf.xlu0
    %v1601 = vpop.trf.xlu0
    %v1602 = vpop.trf.xlu0
    %v1603 = vpop.trf.xlu0
    %vm1604 = vcmask 261120
    %1605 = vst.msk [vmem:[#allocation2] sm:$0xff] %vm1604, %v1588
    %1606 = vst.msk [vmem:[#allocation2 + $0x8] sm:$0xff] %vm1604, %v1589
    %vm1607 = vcmask 130048
    %1608 = vst.msk [vmem:[#allocation3] sm:$0xff] %vm1607, %v1250
    %1609 = vst.msk [vmem:[#allocation3 + $0x8] sm:$0xff] %vm1607, %v1255
    %1610 = vst.msk [vmem:[#allocation3 + $0x10] sm:$0xff] %vm1607, %v1260
    %1611 = vst.msk [vmem:[#allocation3 + $0x18] sm:$0xff] %vm1607, %v1265
    %1612 = vst.msk [vmem:[#allocation4] sm:$0xff] %vm1607, %v1410
    %1613 = vst.msk [vmem:[#allocation4 + $0x8] sm:$0xff] %vm1607, %v1415
    %1614 = vst.msk [vmem:[#allocation4 + $0x10] sm:$0xff] %vm1607, %v1420
    %1615 = vst.msk [vmem:[#allocation4 + $0x18] sm:$0xff] %vm1607, %v1425
    %v1616 = vmul.f32 %v1110, 0.17677669
    %v1617 = vmul.f32 %v1115, 0.17677669
    %v1618 = vmul.f32 %v1120, 0.17677669
    %v1619 = vmul.f32 %v1125, 0.17677669
    %1620 = vxpose.xlu0.b32.start [1/16] %v1616, 128
    %1621 = vxpose.xlu0.b32.cont [2/16] %v1617, 128
    %1622 = vxpose.xlu0.b32.cont [3/16] %v1618, 128
    %1623 = vxpose.xlu0.b32.cont [4/16] %v1619, 128
    %1624 = vxpose.xlu0.b32.cont [5/16] 0.0, 128
    %1625 = vxpose.xlu0.b32.cont [6/16] 0.0, 128
    %1626 = vxpose.xlu0.b32.cont [7/16] 0.0, 128
    %1627 = vxpose.xlu0.b32.cont [8/16] 0.0, 128
    %1628 = vxpose.xlu0.b32.cont [9/16] 0.0, 128
    %1629 = vxpose.xlu0.b32.cont [10/16] 0.0, 128
    %1630 = vxpose.xlu0.b32.cont [11/16] 0.0, 128
    %1631 = vxpose.xlu0.b32.cont [12/16] 0.0, 128
    %1632 = vxpose.xlu0.b32.cont [13/16] 0.0, 128
    %1633 = vxpose.xlu0.b32.cont [14/16] 0.0, 128
    %1634 = vxpose.xlu0.b32.cont [15/16] 0.0, 128
    %1635 = vxpose.xlu0.b32.end [16/16] 0.0, 128
    %v1636 = vpop.trf.xlu0
    %v1637 = vpop.trf.xlu0
    %v1638 = vpop.trf.xlu0
    %v1639 = vpop.trf.xlu0
    %v1640 = vpop.trf.xlu0
    %v1641 = vpop.trf.xlu0
    %v1642 = vpop.trf.xlu0
    %v1643 = vpop.trf.xlu0
    %v1644 = vpop.trf.xlu0
    %v1645 = vpop.trf.xlu0
    %v1646 = vpop.trf.xlu0
    %v1647 = vpop.trf.xlu0
    %v1648 = vpop.trf.xlu0
    %v1649 = vpop.trf.xlu0
    %v1650 = vpop.trf.xlu0
    %v1651 = vpop.trf.xlu0
    %s1652 = scalar_lea.vmem [#allocation2], 16
    %1653 = vst.msk [vmem:[%s1652] sm:$0xff] %vm1604, %v1636
    %1654 = vst.msk [vmem:[%s1652 + $0x8] sm:$0xff] %vm1604, %v1637
    %s1655 = scalar_lea.vmem [#allocation3], 32
    %1656 = vst.msk [vmem:[%s1655] sm:$0xff] %vm1607, %v1270
    %1657 = vst.msk [vmem:[%s1655 + $0x8] sm:$0xff] %vm1607, %v1275
    %1658 = vst.msk [vmem:[%s1655 + $0x10] sm:$0xff] %vm1607, %v1280
    %1659 = vst.msk [vmem:[%s1655 + $0x18] sm:$0xff] %vm1607, %v1285
    %s1660 = scalar_lea.vmem [#allocation4], 32
    %1661 = vst.msk [vmem:[%s1660] sm:$0xff] %vm1607, %v1430
    %1662 = vst.msk [vmem:[%s1660 + $0x8] sm:$0xff] %vm1607, %v1435
    %1663 = vst.msk [vmem:[%s1660 + $0x10] sm:$0xff] %vm1607, %v1440
    %1664 = vst.msk [vmem:[%s1660 + $0x18] sm:$0xff] %vm1607, %v1445
    %v1665 = vmul.f32 %v1130, 0.17677669
    %v1666 = vmul.f32 %v1135, 0.17677669
    %v1667 = vmul.f32 %v1140, 0.17677669
    %v1668 = vmul.f32 %v1145, 0.17677669
    %1669 = vxpose.xlu0.b32.start [1/16] %v1665, 128
    %1670 = vxpose.xlu0.b32.cont [2/16] %v1666, 128
    %1671 = vxpose.xlu0.b32.cont [3/16] %v1667, 128
    %1672 = vxpose.xlu0.b32.cont [4/16] %v1668, 128
    %1673 = vxpose.xlu0.b32.cont [5/16] 0.0, 128
    %1674 = vxpose.xlu0.b32.cont [6/16] 0.0, 128
    %1675 = vxpose.xlu0.b32.cont [7/16] 0.0, 128
    %1676 = vxpose.xlu0.b32.cont [8/16] 0.0, 128
    %1677 = vxpose.xlu0.b32.cont [9/16] 0.0, 128
    %1678 = vxpose.xlu0.b32.cont [10/16] 0.0, 128
    %1679 = vxpose.xlu0.b32.cont [11/16] 0.0, 128
    %1680 = vxpose.xlu0.b32.cont [12/16] 0.0, 128
    %1681 = vxpose.xlu0.b32.cont [13/16] 0.0, 128
    %1682 = vxpose.xlu0.b32.cont [14/16] 0.0, 128
    %1683 = vxpose.xlu0.b32.cont [15/16] 0.0, 128
    %1684 = vxpose.xlu0.b32.end [16/16] 0.0, 128
    %v1685 = vpop.trf.xlu0
    %v1686 = vpop.trf.xlu0
    %v1687 = vpop.trf.xlu0
    %v1688 = vpop.trf.xlu0
    %v1689 = vpop.trf.xlu0
    %v1690 = vpop.trf.xlu0
    %v1691 = vpop.trf.xlu0
    %v1692 = vpop.trf.xlu0
    %v1693 = vpop.trf.xlu0
    %v1694 = vpop.trf.xlu0
    %v1695 = vpop.trf.xlu0
    %v1696 = vpop.trf.xlu0
    %v1697 = vpop.trf.xlu0
    %v1698 = vpop.trf.xlu0
    %v1699 = vpop.trf.xlu0
    %v1700 = vpop.trf.xlu0
    %s1701 = scalar_lea.vmem [#allocation2], 32
    %1702 = vst.msk [vmem:[%s1701] sm:$0xff] %vm1604, %v1685
    %1703 = vst.msk [vmem:[%s1701 + $0x8] sm:$0xff] %vm1604, %v1686
    %s1704 = scalar_lea.vmem [#allocation3], 64
    %1705 = vst.msk [vmem:[%s1704] sm:$0xff] %vm1607, %v1290
    %1706 = vst.msk [vmem:[%s1704 + $0x8] sm:$0xff] %vm1607, %v1295
    %1707 = vst.msk [vmem:[%s1704 + $0x10] sm:$0xff] %vm1607, %v1300
    %1708 = vst.msk [vmem:[%s1704 + $0x18] sm:$0xff] %vm1607, %v1305
    %s1709 = scalar_lea.vmem [#allocation4], 64
    %1710 = vst.msk [vmem:[%s1709] sm:$0xff] %vm1607, %v1450
    %1711 = vst.msk [vmem:[%s1709 + $0x8] sm:$0xff] %vm1607, %v1455
    %1712 = vst.msk [vmem:[%s1709 + $0x10] sm:$0xff] %vm1607, %v1460
    %1713 = vst.msk [vmem:[%s1709 + $0x18] sm:$0xff] %vm1607, %v1465
    %v1714 = vmul.f32 %v1150, 0.17677669
    %v1715 = vmul.f32 %v1155, 0.17677669
    %v1716 = vmul.f32 %v1160, 0.17677669
    %v1717 = vmul.f32 %v1165, 0.17677669
    %1718 = vxpose.xlu0.b32.start [1/16] %v1714, 128
    %1719 = vxpose.xlu0.b32.cont [2/16] %v1715, 128
    %1720 = vxpose.xlu0.b32.cont [3/16] %v1716, 128
    %1721 = vxpose.xlu0.b32.cont [4/16] %v1717, 128
    %1722 = vxpose.xlu0.b32.cont [5/16] 0.0, 128
    %1723 = vxpose.xlu0.b32.cont [6/16] 0.0, 128
    %1724 = vxpose.xlu0.b32.cont [7/16] 0.0, 128
    %1725 = vxpose.xlu0.b32.cont [8/16] 0.0, 128
    %1726 = vxpose.xlu0.b32.cont [9/16] 0.0, 128
    %1727 = vxpose.xlu0.b32.cont [10/16] 0.0, 128
    %1728 = vxpose.xlu0.b32.cont [11/16] 0.0, 128
    %1729 = vxpose.xlu0.b32.cont [12/16] 0.0, 128
    %1730 = vxpose.xlu0.b32.cont [13/16] 0.0, 128
    %1731 = vxpose.xlu0.b32.cont [14/16] 0.0, 128
    %1732 = vxpose.xlu0.b32.cont [15/16] 0.0, 128
    %1733 = vxpose.xlu0.b32.end [16/16] 0.0, 128
    %v1734 = vpop.trf.xlu0
    %v1735 = vpop.trf.xlu0
    %v1736 = vpop.trf.xlu0
    %v1737 = vpop.trf.xlu0
    %v1738 = vpop.trf.xlu0
    %v1739 = vpop.trf.xlu0
    %v1740 = vpop.trf.xlu0
    %v1741 = vpop.trf.xlu0
    %v1742 = vpop.trf.xlu0
    %v1743 = vpop.trf.xlu0
    %v1744 = vpop.trf.xlu0
    %v1745 = vpop.trf.xlu0
    %v1746 = vpop.trf.xlu0
    %v1747 = vpop.trf.xlu0
    %v1748 = vpop.trf.xlu0
    %v1749 = vpop.trf.xlu0
    %s1750 = scalar_lea.vmem [#allocation2], 48
    %1751 = vst.msk [vmem:[%s1750] sm:$0xff] %vm1604, %v1734
    %1752 = vst.msk [vmem:[%s1750 + $0x8] sm:$0xff] %vm1604, %v1735
    %s1753 = scalar_lea.vmem [#allocation3], 96
    %1754 = vst.msk [vmem:[%s1753] sm:$0xff] %vm1607, %v1310
    %1755 = vst.msk [vmem:[%s1753 + $0x8] sm:$0xff] %vm1607, %v1315
    %1756 = vst.msk [vmem:[%s1753 + $0x10] sm:$0xff] %vm1607, %v1320
    %1757 = vst.msk [vmem:[%s1753 + $0x18] sm:$0xff] %vm1607, %v1325
    %s1758 = scalar_lea.vmem [#allocation4], 96
    %1759 = vst.msk [vmem:[%s1758] sm:$0xff] %vm1607, %v1470
    %1760 = vst.msk [vmem:[%s1758 + $0x8] sm:$0xff] %vm1607, %v1475
    %1761 = vst.msk [vmem:[%s1758 + $0x10] sm:$0xff] %vm1607, %v1480
    %1762 = vst.msk [vmem:[%s1758 + $0x18] sm:$0xff] %vm1607, %v1485
    %v1763 = vmul.f32 %v1170, 0.17677669
    %v1764 = vmul.f32 %v1175, 0.17677669
    %v1765 = vmul.f32 %v1180, 0.17677669
    %v1766 = vmul.f32 %v1185, 0.17677669
    %1767 = vxpose.xlu0.b32.start [1/16] %v1763, 128
    %1768 = vxpose.xlu0.b32.cont [2/16] %v1764, 128
    %1769 = vxpose.xlu0.b32.cont [3/16] %v1765, 128
    %1770 = vxpose.xlu0.b32.cont [4/16] %v1766, 128
    %1771 = vxpose.xlu0.b32.cont [5/16] 0.0, 128
    %1772 = vxpose.xlu0.b32.cont [6/16] 0.0, 128
    %1773 = vxpose.xlu0.b32.cont [7/16] 0.0, 128
    %1774 = vxpose.xlu0.b32.cont [8/16] 0.0, 128
    %1775 = vxpose.xlu0.b32.cont [9/16] 0.0, 128
    %1776 = vxpose.xlu0.b32.cont [10/16] 0.0, 128
    %1777 = vxpose.xlu0.b32.cont [11/16] 0.0, 128
    %1778 = vxpose.xlu0.b32.cont [12/16] 0.0, 128
    %1779 = vxpose.xlu0.b32.cont [13/16] 0.0, 128
    %1780 = vxpose.xlu0.b32.cont [14/16] 0.0, 128
    %1781 = vxpose.xlu0.b32.cont [15/16] 0.0, 128
    %1782 = vxpose.xlu0.b32.end [16/16] 0.0, 128
    %v1783 = vpop.trf.xlu0
    %v1784 = vpop.trf.xlu0
    %v1785 = vpop.trf.xlu0
    %v1786 = vpop.trf.xlu0
    %v1787 = vpop.trf.xlu0
    %v1788 = vpop.trf.xlu0
    %v1789 = vpop.trf.xlu0
    %v1790 = vpop.trf.xlu0
    %v1791 = vpop.trf.xlu0
    %v1792 = vpop.trf.xlu0
    %v1793 = vpop.trf.xlu0
    %v1794 = vpop.trf.xlu0
    %v1795 = vpop.trf.xlu0
    %v1796 = vpop.trf.xlu0
    %v1797 = vpop.trf.xlu0
    %v1798 = vpop.trf.xlu0
    %s1799 = scalar_lea.vmem [#allocation2], 64
    %1800 = vst.msk [vmem:[%s1799] sm:$0xff] %vm1604, %v1783
    %1801 = vst.msk [vmem:[%s1799 + $0x8] sm:$0xff] %vm1604, %v1784
    %s1802 = scalar_lea.vmem [#allocation3], 128
    %1803 = vst.msk [vmem:[%s1802] sm:$0xff] %vm1607, %v1330
    %1804 = vst.msk [vmem:[%s1802 + $0x8] sm:$0xff] %vm1607, %v1335
    %1805 = vst.msk [vmem:[%s1802 + $0x10] sm:$0xff] %vm1607, %v1340
    %1806 = vst.msk [vmem:[%s1802 + $0x18] sm:$0xff] %vm1607, %v1345
    %s1807 = scalar_lea.vmem [#allocation4], 128
    %1808 = vst.msk [vmem:[%s1807] sm:$0xff] %vm1607, %v1490
    %1809 = vst.msk [vmem:[%s1807 + $0x8] sm:$0xff] %vm1607, %v1495
    %1810 = vst.msk [vmem:[%s1807 + $0x10] sm:$0xff] %vm1607, %v1500
    %1811 = vst.msk [vmem:[%s1807 + $0x18] sm:$0xff] %vm1607, %v1505
    %v1812 = vmul.f32 %v1190, 0.17677669
    %v1813 = vmul.f32 %v1195, 0.17677669
    %v1814 = vmul.f32 %v1200, 0.17677669
    %v1815 = vmul.f32 %v1205, 0.17677669
    %1816 = vxpose.xlu0.b32.start [1/16] %v1812, 128
    %1817 = vxpose.xlu0.b32.cont [2/16] %v1813, 128
    %1818 = vxpose.xlu0.b32.cont [3/16] %v1814, 128
    %1819 = vxpose.xlu0.b32.cont [4/16] %v1815, 128
    %1820 = vxpose.xlu0.b32.cont [5/16] 0.0, 128
    %1821 = vxpose.xlu0.b32.cont [6/16] 0.0, 128
    %1822 = vxpose.xlu0.b32.cont [7/16] 0.0, 128
    %1823 = vxpose.xlu0.b32.cont [8/16] 0.0, 128
    %1824 = vxpose.xlu0.b32.cont [9/16] 0.0, 128
    %1825 = vxpose.xlu0.b32.cont [10/16] 0.0, 128
    %1826 = vxpose.xlu0.b32.cont [11/16] 0.0, 128
    %1827 = vxpose.xlu0.b32.cont [12/16] 0.0, 128
    %1828 = vxpose.xlu0.b32.cont [13/16] 0.0, 128
    %1829 = vxpose.xlu0.b32.cont [14/16] 0.0, 128
    %1830 = vxpose.xlu0.b32.cont [15/16] 0.0, 128
    %1831 = vxpose.xlu0.b32.end [16/16] 0.0, 128
    %v1832 = vpop.trf.xlu0
    %v1833 = vpop.trf.xlu0
    %v1834 = vpop.trf.xlu0
    %v1835 = vpop.trf.xlu0
    %v1836 = vpop.trf.xlu0
    %v1837 = vpop.trf.xlu0
    %v1838 = vpop.trf.xlu0
    %v1839 = vpop.trf.xlu0
    %v1840 = vpop.trf.xlu0
    %v1841 = vpop.trf.xlu0
    %v1842 = vpop.trf.xlu0
    %v1843 = vpop.trf.xlu0
    %v1844 = vpop.trf.xlu0
    %v1845 = vpop.trf.xlu0
    %v1846 = vpop.trf.xlu0
    %v1847 = vpop.trf.xlu0
    %s1848 = scalar_lea.vmem [#allocation2], 80
    %1849 = vst.msk [vmem:[%s1848] sm:$0xff] %vm1604, %v1832
    %1850 = vst.msk [vmem:[%s1848 + $0x8] sm:$0xff] %vm1604, %v1833
    %s1851 = scalar_lea.vmem [#allocation3], 160
    %1852 = vst.msk [vmem:[%s1851] sm:$0xff] %vm1607, %v1350
    %1853 = vst.msk [vmem:[%s1851 + $0x8] sm:$0xff] %vm1607, %v1355
    %1854 = vst.msk [vmem:[%s1851 + $0x10] sm:$0xff] %vm1607, %v1360
    %1855 = vst.msk [vmem:[%s1851 + $0x18] sm:$0xff] %vm1607, %v1365
    %s1856 = scalar_lea.vmem [#allocation4], 160
    %1857 = vst.msk [vmem:[%s1856] sm:$0xff] %vm1607, %v1510
    %1858 = vst.msk [vmem:[%s1856 + $0x8] sm:$0xff] %vm1607, %v1515
    %1859 = vst.msk [vmem:[%s1856 + $0x10] sm:$0xff] %vm1607, %v1520
    %1860 = vst.msk [vmem:[%s1856 + $0x18] sm:$0xff] %vm1607, %v1525
    %v1861 = vmul.f32 %v1210, 0.17677669
    %v1862 = vmul.f32 %v1215, 0.17677669
    %v1863 = vmul.f32 %v1220, 0.17677669
    %v1864 = vmul.f32 %v1225, 0.17677669
    %1865 = vxpose.xlu0.b32.start [1/16] %v1861, 128
    %1866 = vxpose.xlu0.b32.cont [2/16] %v1862, 128
    %1867 = vxpose.xlu0.b32.cont [3/16] %v1863, 128
    %1868 = vxpose.xlu0.b32.cont [4/16] %v1864, 128
    %1869 = vxpose.xlu0.b32.cont [5/16] 0.0, 128
    %1870 = vxpose.xlu0.b32.cont [6/16] 0.0, 128
    %1871 = vxpose.xlu0.b32.cont [7/16] 0.0, 128
    %1872 = vxpose.xlu0.b32.cont [8/16] 0.0, 128
    %1873 = vxpose.xlu0.b32.cont [9/16] 0.0, 128
    %1874 = vxpose.xlu0.b32.cont [10/16] 0.0, 128
    %1875 = vxpose.xlu0.b32.cont [11/16] 0.0, 128
    %1876 = vxpose.xlu0.b32.cont [12/16] 0.0, 128
    %1877 = vxpose.xlu0.b32.cont [13/16] 0.0, 128
    %1878 = vxpose.xlu0.b32.cont [14/16] 0.0, 128
    %1879 = vxpose.xlu0.b32.cont [15/16] 0.0, 128
    %1880 = vxpose.xlu0.b32.end [16/16] 0.0, 128
    %v1881 = vpop.trf.xlu0
    %v1882 = vpop.trf.xlu0
    %v1883 = vpop.trf.xlu0
    %v1884 = vpop.trf.xlu0
    %v1885 = vpop.trf.xlu0
    %v1886 = vpop.trf.xlu0
    %v1887 = vpop.trf.xlu0
    %v1888 = vpop.trf.xlu0
    %v1889 = vpop.trf.xlu0
    %v1890 = vpop.trf.xlu0
    %v1891 = vpop.trf.xlu0
    %v1892 = vpop.trf.xlu0
    %v1893 = vpop.trf.xlu0
    %v1894 = vpop.trf.xlu0
    %v1895 = vpop.trf.xlu0
    %v1896 = vpop.trf.xlu0
    %s1897 = scalar_lea.vmem [#allocation2], 96
    %1898 = vst.msk [vmem:[%s1897] sm:$0xff] %vm1604, %v1881
    %1899 = vst.msk [vmem:[%s1897 + $0x8] sm:$0xff] %vm1604, %v1882
    %s1900 = scalar_lea.vmem [#allocation3], 192
    %1901 = vst.msk [vmem:[%s1900] sm:$0xff] %vm1607, %v1370
    %1902 = vst.msk [vmem:[%s1900 + $0x8] sm:$0xff] %vm1607, %v1375
    %1903 = vst.msk [vmem:[%s1900 + $0x10] sm:$0xff] %vm1607, %v1380
    %1904 = vst.msk [vmem:[%s1900 + $0x18] sm:$0xff] %vm1607, %v1385
    %s1905 = scalar_lea.vmem [#allocation4], 192
    %1906 = vst.msk [vmem:[%s1905] sm:$0xff] %vm1607, %v1530
    %1907 = vst.msk [vmem:[%s1905 + $0x8] sm:$0xff] %vm1607, %v1535
    %1908 = vst.msk [vmem:[%s1905 + $0x10] sm:$0xff] %vm1607, %v1540
    %1909 = vst.msk [vmem:[%s1905 + $0x18] sm:$0xff] %vm1607, %v1545
    %v1910 = vmul.f32 %v1230, 0.17677669
    %v1911 = vmul.f32 %v1235, 0.17677669
    %v1912 = vmul.f32 %v1240, 0.17677669
    %v1913 = vmul.f32 %v1245, 0.17677669
    %1914 = vxpose.xlu0.b32.start [1/16] %v1910, 128
    %1915 = vxpose.xlu0.b32.cont [2/16] %v1911, 128
    %1916 = vxpose.xlu0.b32.cont [3/16] %v1912, 128
    %1917 = vxpose.xlu0.b32.cont [4/16] %v1913, 128
    %1918 = vxpose.xlu0.b32.cont [5/16] 0.0, 128
    %1919 = vxpose.xlu0.b32.cont [6/16] 0.0, 128
    %1920 = vxpose.xlu0.b32.cont [7/16] 0.0, 128
    %1921 = vxpose.xlu0.b32.cont [8/16] 0.0, 128
    %1922 = vxpose.xlu0.b32.cont [9/16] 0.0, 128
    %1923 = vxpose.xlu0.b32.cont [10/16] 0.0, 128
    %1924 = vxpose.xlu0.b32.cont [11/16] 0.0, 128
    %1925 = vxpose.xlu0.b32.cont [12/16] 0.0, 128
    %1926 = vxpose.xlu0.b32.cont [13/16] 0.0, 128
    %1927 = vxpose.xlu0.b32.cont [14/16] 0.0, 128
    %1928 = vxpose.xlu0.b32.cont [15/16] 0.0, 128
    %1929 = vxpose.xlu0.b32.end [16/16] 0.0, 128
    %v1930 = vpop.trf.xlu0
    %v1931 = vpop.trf.xlu0
    %v1932 = vpop.trf.xlu0
    %v1933 = vpop.trf.xlu0
    %v1934 = vpop.trf.xlu0
    %v1935 = vpop.trf.xlu0
    %v1936 = vpop.trf.xlu0
    %v1937 = vpop.trf.xlu0
    %v1938 = vpop.trf.xlu0
    %v1939 = vpop.trf.xlu0
    %v1940 = vpop.trf.xlu0
    %v1941 = vpop.trf.xlu0
    %v1942 = vpop.trf.xlu0
    %v1943 = vpop.trf.xlu0
    %v1944 = vpop.trf.xlu0
    %v1945 = vpop.trf.xlu0
    %s1946 = scalar_lea.vmem [#allocation2], 112
    %1947 = vst.msk [vmem:[%s1946] sm:$0xff] %vm1604, %v1930
    %1948 = vst.msk [vmem:[%s1946 + $0x8] sm:$0xff] %vm1604, %v1931
    %s1949 = scalar_lea.vmem [#allocation3], 224
    %1950 = vst.msk [vmem:[%s1949] sm:$0xff] %vm1607, %v1390
    %1951 = vst.msk [vmem:[%s1949 + $0x8] sm:$0xff] %vm1607, %v1395
    %1952 = vst.msk [vmem:[%s1949 + $0x10] sm:$0xff] %vm1607, %v1400
    %1953 = vst.msk [vmem:[%s1949 + $0x18] sm:$0xff] %vm1607, %v1405
    %s1954 = scalar_lea.vmem [#allocation4], 224
    %1955 = vst.msk [vmem:[%s1954] sm:$0xff] %vm1607, %v1550
    %1956 = vst.msk [vmem:[%s1954 + $0x8] sm:$0xff] %vm1607, %v1555
    %1957 = vst.msk [vmem:[%s1954 + $0x10] sm:$0xff] %vm1607, %v1560
    %1958 = vst.msk [vmem:[%s1954 + $0x18] sm:$0xff] %vm1607, %v1565
    %v1959 = vld [vmem:[#allocation2] sm:$0xff]
    %v1960 = vld [vmem:[#allocation2 + $0x8] sm:$0xff]
    %v1961 = vld [vmem:[#allocation2 + $0x10] sm:$0xff]
    %v1962 = vld [vmem:[#allocation2 + $0x18] sm:$0xff]
    %v1963 = vld [vmem:[#allocation2 + $0x20] sm:$0xff]
    %v1964 = vld [vmem:[#allocation2 + $0x28] sm:$0xff]
    %v1965 = vld [vmem:[#allocation2 + $0x30] sm:$0xff]
    %v1966 = vld [vmem:[#allocation2 + $0x38] sm:$0xff]
    %v1967 = vld [vmem:[#allocation2 + $0x40] sm:$0xff]
    %v1968 = vld [vmem:[#allocation2 + $0x48] sm:$0xff]
    %v1969 = vld [vmem:[#allocation2 + $0x50] sm:$0xff]
    %v1970 = vld [vmem:[#allocation2 + $0x58] sm:$0xff]
    %v1971 = vld [vmem:[#allocation2 + $0x60] sm:$0xff]
    %v1972 = vld [vmem:[#allocation2 + $0x68] sm:$0xff]
    %v1973 = vld [vmem:[#allocation2 + $0x70] sm:$0xff]
    %v1974 = vld [vmem:[#allocation2 + $0x78] sm:$0xff]
    %v1975 = vld [vmem:[#allocation3] sm:$0xff]
    %v1976 = vld [vmem:[#allocation3 + $0x8] sm:$0xff]
    %v1977 = vld [vmem:[#allocation3 + $0x10] sm:$0xff]
    %v1978 = vld [vmem:[#allocation3 + $0x18] sm:$0xff]
    %v1979 = vld [vmem:[#allocation3 + $0x20] sm:$0xff]
    %v1980 = vld [vmem:[#allocation3 + $0x28] sm:$0xff]
    %v1981 = vld [vmem:[#allocation3 + $0x30] sm:$0xff]
    %v1982 = vld [vmem:[#allocation3 + $0x38] sm:$0xff]
    %v1983 = vld [vmem:[#allocation3 + $0x40] sm:$0xff]
    %v1984 = vld [vmem:[#allocation3 + $0x48] sm:$0xff]
    %v1985 = vld [vmem:[#allocation3 + $0x50] sm:$0xff]
    %v1986 = vld [vmem:[#allocation3 + $0x58] sm:$0xff]
    %v1987 = vld [vmem:[#allocation3 + $0x60] sm:$0xff]
    %v1988 = vld [vmem:[#allocation3 + $0x68] sm:$0xff]
    %v1989 = vld [vmem:[#allocation3 + $0x70] sm:$0xff]
    %v1990 = vld [vmem:[#allocation3 + $0x78] sm:$0xff]
    %v1991 = vld [vmem:[#allocation3 + $0x80] sm:$0xff]
    %v1992 = vld [vmem:[#allocation3 + $0x88] sm:$0xff]
    %v1993 = vld [vmem:[#allocation3 + $0x90] sm:$0xff]
    %v1994 = vld [vmem:[#allocation3 + $0x98] sm:$0xff]
    %v1995 = vld [vmem:[#allocation3 + $0xa0] sm:$0xff]
    %v1996 = vld [vmem:[#allocation3 + $0xa8] sm:$0xff]
    %v1997 = vld [vmem:[#allocation3 + $0xb0] sm:$0xff]
    %v1998 = vld [vmem:[#allocation3 + $0xb8] sm:$0xff]
    %v1999 = vld [vmem:[#allocation3 + $0xc0] sm:$0xff]
    %v2000 = vld [vmem:[#allocation3 + $0xc8] sm:$0xff]
    %v2001 = vld [vmem:[#allocation3 + $0xd0] sm:$0xff]
    %v2002 = vld [vmem:[#allocation3 + $0xd8] sm:$0xff]
    %v2003 = vld [vmem:[#allocation3 + $0xe0] sm:$0xff]
    %v2004 = vld [vmem:[#allocation3 + $0xe8] sm:$0xff]
    %v2005 = vld [vmem:[#allocation3 + $0xf0] sm:$0xff]
    %v2006 = vld [vmem:[#allocation3 + $0xf8] sm:$0xff]
    %v2007 = vld [vmem:[#allocation4] sm:$0xff]
    %v2008 = vld [vmem:[#allocation4 + $0x8] sm:$0xff]
    %v2009 = vld [vmem:[#allocation4 + $0x10] sm:$0xff]
    %v2010 = vld [vmem:[#allocation4 + $0x18] sm:$0xff]
    %v2011 = vld [vmem:[#allocation4 + $0x20] sm:$0xff]
    %v2012 = vld [vmem:[#allocation4 + $0x28] sm:$0xff]
    %v2013 = vld [vmem:[#allocation4 + $0x30] sm:$0xff]
    %v2014 = vld [vmem:[#allocation4 + $0x38] sm:$0xff]
    %v2015 = vld [vmem:[#allocation4 + $0x40] sm:$0xff]
    %v2016 = vld [vmem:[#allocation4 + $0x48] sm:$0xff]
    %v2017 = vld [vmem:[#allocation4 + $0x50] sm:$0xff]
    %v2018 = vld [vmem:[#allocation4 + $0x58] sm:$0xff]
    %v2019 = vld [vmem:[#allocation4 + $0x60] sm:$0xff]
    %v2020 = vld [vmem:[#allocation4 + $0x68] sm:$0xff]
    %v2021 = vld [vmem:[#allocation4 + $0x70] sm:$0xff]
    %v2022 = vld [vmem:[#allocation4 + $0x78] sm:$0xff]
    %v2023 = vld [vmem:[#allocation4 + $0x80] sm:$0xff]
    %v2024 = vld [vmem:[#allocation4 + $0x88] sm:$0xff]
    %v2025 = vld [vmem:[#allocation4 + $0x90] sm:$0xff]
    %v2026 = vld [vmem:[#allocation4 + $0x98] sm:$0xff]
    %v2027 = vld [vmem:[#allocation4 + $0xa0] sm:$0xff]
    %v2028 = vld [vmem:[#allocation4 + $0xa8] sm:$0xff]
    %v2029 = vld [vmem:[#allocation4 + $0xb0] sm:$0xff]
    %v2030 = vld [vmem:[#allocation4 + $0xb8] sm:$0xff]
    %v2031 = vld [vmem:[#allocation4 + $0xc0] sm:$0xff]
    %v2032 = vld [vmem:[#allocation4 + $0xc8] sm:$0xff]
    %v2033 = vld [vmem:[#allocation4 + $0xd0] sm:$0xff]
    %v2034 = vld [vmem:[#allocation4 + $0xd8] sm:$0xff]
    %v2035 = vld [vmem:[#allocation4 + $0xe0] sm:$0xff]
    %v2036 = vld [vmem:[#allocation4 + $0xe8] sm:$0xff]
    %v2037 = vld [vmem:[#allocation4 + $0xf0] sm:$0xff]
    %v2038 = vld [vmem:[#allocation4 + $0xf8] sm:$0xff]
    %v2040 = vsel %vm1604, %v1959, 0
    %v2043 = vsel %vm1604, %v1960, 0
    %2045 = vmatprep.subr.mxu0 0.0
    %2046 = vmatpush1.msra.mxu0 0.0
    %2047 = vmatprep.subr.mxu0 0.0
    %2048 = vmatpush1.msra.mxu0 0.0
    %2049 = vmatprep.subr.mxu0 0.0
    %2050 = vmatpush1.msra.mxu0 0.0
    %2051 = vmatprep.subr.mxu0 0.0
    %2052 = vmatpush1.msra.mxu0 0.0
    %2053 = vmatprep.subr.mxu0 0.0
    %2054 = vmatpush1.msra.mxu0 0.0
    %2055 = vmatprep.subr.mxu0 0.0
    %2056 = vmatpush1.msra.mxu0 0.0
    %2057 = vmatprep.subr.mxu0 0.0
    %2058 = vmatpush1.msra.mxu0 0.0
    %2059 = vmatprep.subr.mxu0 0.0
    %2060 = vmatpush1.msra.mxu0 0.0
    %2061 = vmatprep.subr.mxu0 0.0
    %2062 = vmatpush1.msra.mxu0 0.0
    %2063 = vmatprep.subr.mxu0 0.0
    %2064 = vmatpush1.msra.mxu0 0.0
    %2065 = vmatprep.subr.mxu0 0.0
    %2066 = vmatpush1.msra.mxu0 0.0
    %2067 = vmatprep.subr.mxu0 0.0
    %2068 = vmatpush1.msra.mxu0 0.0
    %2069 = vmatprep.subr.mxu0 0.0
    %2070 = vmatpush1.msra.mxu0 %v1978
    %2071 = vmatprep.subr.mxu0 0.0
    %2072 = vmatpush1.msra.mxu0 %v1977
    %2073 = vmatprep.subr.mxu0 0.0
    %2074 = vmatpush1.msra.mxu0 %v1976
    %2075 = vmatprep.subr.mxu0 0.0
    %2076 = vmatpush1.msra.mxu0 %v1975
    %2077 = vmatprep.subr.mxu0 0.0
    %2078 = vmatpush2.msra.mxu0 0.0
    %2079 = vmatprep.subr.mxu0 0.0
    %2080 = vmatpush2.msra.mxu0 0.0
    %2081 = vmatprep.subr.mxu0 0.0
    %2082 = vmatpush2.msra.mxu0 0.0
    %2083 = vmatprep.subr.mxu0 0.0
    %2084 = vmatpush2.msra.mxu0 0.0
    %2085 = vmatprep.subr.mxu0 0.0
    %2086 = vmatpush2.msra.mxu0 0.0
    %2087 = vmatprep.subr.mxu0 0.0
    %2088 = vmatpush2.msra.mxu0 0.0
    %2089 = vmatprep.subr.mxu0 0.0
    %2090 = vmatpush2.msra.mxu0 0.0
    %2091 = vmatprep.subr.mxu0 0.0
    %2092 = vmatpush2.msra.mxu0 0.0
    %2093 = vmatprep.subr.mxu0 0.0
    %2094 = vmatpush2.msra.mxu0 0.0
    %2095 = vmatprep.subr.mxu0 0.0
    %2096 = vmatpush2.msra.mxu0 0.0
    %2097 = vmatprep.subr.mxu0 0.0
    %2098 = vmatpush2.msra.mxu0 0.0
    %2099 = vmatprep.subr.mxu0 0.0
    %2100 = vmatpush2.msra.mxu0 0.0
    %2101 = vmatprep.subr.mxu0 0.0
    %2102 = vmatpush2.msra.mxu0 0.0
    %2103 = vmatprep.subr.mxu0 0.0
    %2104 = vmatpush2.msra.mxu0 0.0
    %2105 = vmatprep.subr.mxu0 0.0
    %2106 = vmatpush2.msra.mxu0 0.0
    %2107 = vmatprep.subr.mxu0 0.0
    %2108 = vmatpush2.msra.mxu0 0.0
    %2109 = vmatprep.mubr.f32.mxu0 0.0
    %2110 = vmatmul.mubr.f32.gmra.mxu0 %v2040
    %v2111 = vpop.f32.mrf.mxu0
    %v2112 = vadd.f32 %v253, %v2111
    %v2113 = vpop.f32.mrf.mxu0
    %2114 = vmatprep.mubr.f32.mxu0 0.0
    %2115 = vmatmul.mubr.f32.gmra.mxu0 %v2043
    %v2116 = vpop.f32.mrf.mxu0
    %v2117 = vadd.f32 %v254, %v2116
    %v2118 = vpop.f32.mrf.mxu0
    %2119 = vdwg.mxu0
    %v2121 = vsel %vm1604, %v1961, 0
    %v2124 = vsel %vm1604, %v1962, 0
    %2126 = vmatprep.subr.mxu0 0.0
    %2127 = vmatpush1.msra.mxu0 0.0
    %2128 = vmatprep.subr.mxu0 0.0
    %2129 = vmatpush1.msra.mxu0 0.0
    %2130 = vmatprep.subr.mxu0 0.0
    %2131 = vmatpush1.msra.mxu0 0.0
    %2132 = vmatprep.subr.mxu0 0.0
    %2133 = vmatpush1.msra.mxu0 0.0
    %2134 = vmatprep.subr.mxu0 0.0
    %2135 = vmatpush1.msra.mxu0 0.0
    %2136 = vmatprep.subr.mxu0 0.0
    %2137 = vmatpush1.msra.mxu0 0.0
    %2138 = vmatprep.subr.mxu0 0.0
    %2139 = vmatpush1.msra.mxu0 0.0
    %2140 = vmatprep.subr.mxu0 0.0
    %2141 = vmatpush1.msra.mxu0 0.0
    %2142 = vmatprep.subr.mxu0 0.0
    %2143 = vmatpush1.msra.mxu0 0.0
    %2144 = vmatprep.subr.mxu0 0.0
    %2145 = vmatpush1.msra.mxu0 0.0
    %2146 = vmatprep.subr.mxu0 0.0
    %2147 = vmatpush1.msra.mxu0 0.0
    %2148 = vmatprep.subr.mxu0 0.0
    %2149 = vmatpush1.msra.mxu0 0.0
    %2150 = vmatprep.subr.mxu0 0.0
    %2151 = vmatpush1.msra.mxu0 %v1982
    %2152 = vmatprep.subr.mxu0 0.0
    %2153 = vmatpush1.msra.mxu0 %v1981
    %2154 = vmatprep.subr.mxu0 0.0
    %2155 = vmatpush1.msra.mxu0 %v1980
    %2156 = vmatprep.subr.mxu0 0.0
    %2157 = vmatpush1.msra.mxu0 %v1979
    %2158 = vmatprep.subr.mxu0 0.0
    %2159 = vmatpush2.msra.mxu0 0.0
    %2160 = vmatprep.subr.mxu0 0.0
    %2161 = vmatpush2.msra.mxu0 0.0
    %2162 = vmatprep.subr.mxu0 0.0
    %2163 = vmatpush2.msra.mxu0 0.0
    %2164 = vmatprep.subr.mxu0 0.0
    %2165 = vmatpush2.msra.mxu0 0.0
    %2166 = vmatprep.subr.mxu0 0.0
    %2167 = vmatpush2.msra.mxu0 0.0
    %2168 = vmatprep.subr.mxu0 0.0
    %2169 = vmatpush2.msra.mxu0 0.0
    %2170 = vmatprep.subr.mxu0 0.0
    %2171 = vmatpush2.msra.mxu0 0.0
    %2172 = vmatprep.subr.mxu0 0.0
    %2173 = vmatpush2.msra.mxu0 0.0
    %2174 = vmatprep.subr.mxu0 0.0
    %2175 = vmatpush2.msra.mxu0 0.0
    %2176 = vmatprep.subr.mxu0 0.0
    %2177 = vmatpush2.msra.mxu0 0.0
    %2178 = vmatprep.subr.mxu0 0.0
    %2179 = vmatpush2.msra.mxu0 0.0
    %2180 = vmatprep.subr.mxu0 0.0
    %2181 = vmatpush2.msra.mxu0 0.0
    %2182 = vmatprep.subr.mxu0 0.0
    %2183 = vmatpush2.msra.mxu0 0.0
    %2184 = vmatprep.subr.mxu0 0.0
    %2185 = vmatpush2.msra.mxu0 0.0
    %2186 = vmatprep.subr.mxu0 0.0
    %2187 = vmatpush2.msra.mxu0 0.0
    %2188 = vmatprep.subr.mxu0 0.0
    %2189 = vmatpush2.msra.mxu0 0.0
    %2190 = vmatprep.mubr.f32.mxu0 0.0
    %2191 = vmatmul.mubr.f32.gmra.mxu0 %v2121
    %v2192 = vpop.f32.mrf.mxu0
    %v2193 = vadd.f32 %v253, %v2192
    %v2194 = vpop.f32.mrf.mxu0
    %2195 = vmatprep.mubr.f32.mxu0 0.0
    %2196 = vmatmul.mubr.f32.gmra.mxu0 %v2124
    %v2197 = vpop.f32.mrf.mxu0
    %v2198 = vadd.f32 %v254, %v2197
    %v2199 = vpop.f32.mrf.mxu0
    %2200 = vdwg.mxu0
    %v2202 = vsel %vm1604, %v1963, 0
    %v2205 = vsel %vm1604, %v1964, 0
    %2207 = vmatprep.subr.mxu0 0.0
    %2208 = vmatpush1.msra.mxu0 0.0
    %2209 = vmatprep.subr.mxu0 0.0
    %2210 = vmatpush1.msra.mxu0 0.0
    %2211 = vmatprep.subr.mxu0 0.0
    %2212 = vmatpush1.msra.mxu0 0.0
    %2213 = vmatprep.subr.mxu0 0.0
    %2214 = vmatpush1.msra.mxu0 0.0
    %2215 = vmatprep.subr.mxu0 0.0
    %2216 = vmatpush1.msra.mxu0 0.0
    %2217 = vmatprep.subr.mxu0 0.0
    %2218 = vmatpush1.msra.mxu0 0.0
    %2219 = vmatprep.subr.mxu0 0.0
    %2220 = vmatpush1.msra.mxu0 0.0
    %2221 = vmatprep.subr.mxu0 0.0
    %2222 = vmatpush1.msra.mxu0 0.0
    %2223 = vmatprep.subr.mxu0 0.0
    %2224 = vmatpush1.msra.mxu0 0.0
    %2225 = vmatprep.subr.mxu0 0.0
    %2226 = vmatpush1.msra.mxu0 0.0
    %2227 = vmatprep.subr.mxu0 0.0
    %2228 = vmatpush1.msra.mxu0 0.0
    %2229 = vmatprep.subr.mxu0 0.0
    %2230 = vmatpush1.msra.mxu0 0.0
    %2231 = vmatprep.subr.mxu0 0.0
    %2232 = vmatpush1.msra.mxu0 %v1986
    %2233 = vmatprep.subr.mxu0 0.0
    %2234 = vmatpush1.msra.mxu0 %v1985
    %2235 = vmatprep.subr.mxu0 0.0
    %2236 = vmatpush1.msra.mxu0 %v1984
    %2237 = vmatprep.subr.mxu0 0.0
    %2238 = vmatpush1.msra.mxu0 %v1983
    %2239 = vmatprep.subr.mxu0 0.0
    %2240 = vmatpush2.msra.mxu0 0.0
    %2241 = vmatprep.subr.mxu0 0.0
    %2242 = vmatpush2.msra.mxu0 0.0
    %2243 = vmatprep.subr.mxu0 0.0
    %2244 = vmatpush2.msra.mxu0 0.0
    %2245 = vmatprep.subr.mxu0 0.0
    %2246 = vmatpush2.msra.mxu0 0.0
    %2247 = vmatprep.subr.mxu0 0.0
    %2248 = vmatpush2.msra.mxu0 0.0
    %2249 = vmatprep.subr.mxu0 0.0
    %2250 = vmatpush2.msra.mxu0 0.0
    %2251 = vmatprep.subr.mxu0 0.0
    %2252 = vmatpush2.msra.mxu0 0.0
    %2253 = vmatprep.subr.mxu0 0.0
    %2254 = vmatpush2.msra.mxu0 0.0
    %2255 = vmatprep.subr.mxu0 0.0
    %2256 = vmatpush2.msra.mxu0 0.0
    %2257 = vmatprep.subr.mxu0 0.0
    %2258 = vmatpush2.msra.mxu0 0.0
    %2259 = vmatprep.subr.mxu0 0.0
    %2260 = vmatpush2.msra.mxu0 0.0
    %2261 = vmatprep.subr.mxu0 0.0
    %2262 = vmatpush2.msra.mxu0 0.0
    %2263 = vmatprep.subr.mxu0 0.0
    %2264 = vmatpush2.msra.mxu0 0.0
    %2265 = vmatprep.subr.mxu0 0.0
    %2266 = vmatpush2.msra.mxu0 0.0
    %2267 = vmatprep.subr.mxu0 0.0
    %2268 = vmatpush2.msra.mxu0 0.0
    %2269 = vmatprep.subr.mxu0 0.0
    %2270 = vmatpush2.msra.mxu0 0.0
    %2271 = vmatprep.mubr.f32.mxu0 0.0
    %2272 = vmatmul.mubr.f32.gmra.mxu0 %v2202
    %v2273 = vpop.f32.mrf.mxu0
    %v2274 = vadd.f32 %v253, %v2273
    %v2275 = vpop.f32.mrf.mxu0
    %2276 = vmatprep.mubr.f32.mxu0 0.0
    %2277 = vmatmul.mubr.f32.gmra.mxu0 %v2205
    %v2278 = vpop.f32.mrf.mxu0
    %v2279 = vadd.f32 %v254, %v2278
    %v2280 = vpop.f32.mrf.mxu0
    %2281 = vdwg.mxu0
    %v2283 = vsel %vm1604, %v1965, 0
    %v2286 = vsel %vm1604, %v1966, 0
    %2288 = vmatprep.subr.mxu0 0.0
    %2289 = vmatpush1.msra.mxu0 0.0
    %2290 = vmatprep.subr.mxu0 0.0
    %2291 = vmatpush1.msra.mxu0 0.0
    %2292 = vmatprep.subr.mxu0 0.0
    %2293 = vmatpush1.msra.mxu0 0.0
    %2294 = vmatprep.subr.mxu0 0.0
    %2295 = vmatpush1.msra.mxu0 0.0
    %2296 = vmatprep.subr.mxu0 0.0
    %2297 = vmatpush1.msra.mxu0 0.0
    %2298 = vmatprep.subr.mxu0 0.0
    %2299 = vmatpush1.msra.mxu0 0.0
    %2300 = vmatprep.subr.mxu0 0.0
    %2301 = vmatpush1.msra.mxu0 0.0
    %2302 = vmatprep.subr.mxu0 0.0
    %2303 = vmatpush1.msra.mxu0 0.0
    %2304 = vmatprep.subr.mxu0 0.0
    %2305 = vmatpush1.msra.mxu0 0.0
    %2306 = vmatprep.subr.mxu0 0.0
    %2307 = vmatpush1.msra.mxu0 0.0
    %2308 = vmatprep.subr.mxu0 0.0
    %2309 = vmatpush1.msra.mxu0 0.0
    %2310 = vmatprep.subr.mxu0 0.0
    %2311 = vmatpush1.msra.mxu0 0.0
    %2312 = vmatprep.subr.mxu0 0.0
    %2313 = vmatpush1.msra.mxu0 %v1990
    %2314 = vmatprep.subr.mxu0 0.0
    %2315 = vmatpush1.msra.mxu0 %v1989
    %2316 = vmatprep.subr.mxu0 0.0
    %2317 = vmatpush1.msra.mxu0 %v1988
    %2318 = vmatprep.subr.mxu0 0.0
    %2319 = vmatpush1.msra.mxu0 %v1987
    %2320 = vmatprep.subr.mxu0 0.0
    %2321 = vmatpush2.msra.mxu0 0.0
    %2322 = vmatprep.subr.mxu0 0.0
    %2323 = vmatpush2.msra.mxu0 0.0
    %2324 = vmatprep.subr.mxu0 0.0
    %2325 = vmatpush2.msra.mxu0 0.0
    %2326 = vmatprep.subr.mxu0 0.0
    %2327 = vmatpush2.msra.mxu0 0.0
    %2328 = vmatprep.subr.mxu0 0.0
    %2329 = vmatpush2.msra.mxu0 0.0
    %2330 = vmatprep.subr.mxu0 0.0
    %2331 = vmatpush2.msra.mxu0 0.0
    %2332 = vmatprep.subr.mxu0 0.0
    %2333 = vmatpush2.msra.mxu0 0.0
    %2334 = vmatprep.subr.mxu0 0.0
    %2335 = vmatpush2.msra.mxu0 0.0
    %2336 = vmatprep.subr.mxu0 0.0
    %2337 = vmatpush2.msra.mxu0 0.0
    %2338 = vmatprep.subr.mxu0 0.0
    %2339 = vmatpush2.msra.mxu0 0.0
    %2340 = vmatprep.subr.mxu0 0.0
    %2341 = vmatpush2.msra.mxu0 0.0
    %2342 = vmatprep.subr.mxu0 0.0
    %2343 = vmatpush2.msra.mxu0 0.0
    %2344 = vmatprep.subr.mxu0 0.0
    %2345 = vmatpush2.msra.mxu0 0.0
    %2346 = vmatprep.subr.mxu0 0.0
    %2347 = vmatpush2.msra.mxu0 0.0
    %2348 = vmatprep.subr.mxu0 0.0
    %2349 = vmatpush2.msra.mxu0 0.0
    %2350 = vmatprep.subr.mxu0 0.0
    %2351 = vmatpush2.msra.mxu0 0.0
    %2352 = vmatprep.mubr.f32.mxu0 0.0
    %2353 = vmatmul.mubr.f32.gmra.mxu0 %v2283
    %v2354 = vpop.f32.mrf.mxu0
    %v2355 = vadd.f32 %v253, %v2354
    %v2356 = vpop.f32.mrf.mxu0
    %2357 = vmatprep.mubr.f32.mxu0 0.0
    %2358 = vmatmul.mubr.f32.gmra.mxu0 %v2286
    %v2359 = vpop.f32.mrf.mxu0
    %v2360 = vadd.f32 %v254, %v2359
    %v2361 = vpop.f32.mrf.mxu0
    %2362 = vdwg.mxu0
    %v2364 = vsel %vm1604, %v1967, 0
    %v2367 = vsel %vm1604, %v1968, 0
    %2369 = vmatprep.subr.mxu0 0.0
    %2370 = vmatpush1.msra.mxu0 0.0
    %2371 = vmatprep.subr.mxu0 0.0
    %2372 = vmatpush1.msra.mxu0 0.0
    %2373 = vmatprep.subr.mxu0 0.0
    %2374 = vmatpush1.msra.mxu0 0.0
    %2375 = vmatprep.subr.mxu0 0.0
    %2376 = vmatpush1.msra.mxu0 0.0
    %2377 = vmatprep.subr.mxu0 0.0
    %2378 = vmatpush1.msra.mxu0 0.0
    %2379 = vmatprep.subr.mxu0 0.0
    %2380 = vmatpush1.msra.mxu0 0.0
    %2381 = vmatprep.subr.mxu0 0.0
    %2382 = vmatpush1.msra.mxu0 0.0
    %2383 = vmatprep.subr.mxu0 0.0
    %2384 = vmatpush1.msra.mxu0 0.0
    %2385 = vmatprep.subr.mxu0 0.0
    %2386 = vmatpush1.msra.mxu0 0.0
    %2387 = vmatprep.subr.mxu0 0.0
    %2388 = vmatpush1.msra.mxu0 0.0
    %2389 = vmatprep.subr.mxu0 0.0
    %2390 = vmatpush1.msra.mxu0 0.0
    %2391 = vmatprep.subr.mxu0 0.0
    %2392 = vmatpush1.msra.mxu0 0.0
    %2393 = vmatprep.subr.mxu0 0.0
    %2394 = vmatpush1.msra.mxu0 %v1994
    %2395 = vmatprep.subr.mxu0 0.0
    %2396 = vmatpush1.msra.mxu0 %v1993
    %2397 = vmatprep.subr.mxu0 0.0
    %2398 = vmatpush1.msra.mxu0 %v1992
    %2399 = vmatprep.subr.mxu0 0.0
    %2400 = vmatpush1.msra.mxu0 %v1991
    %2401 = vmatprep.subr.mxu0 0.0
    %2402 = vmatpush2.msra.mxu0 0.0
    %2403 = vmatprep.subr.mxu0 0.0
    %2404 = vmatpush2.msra.mxu0 0.0
    %2405 = vmatprep.subr.mxu0 0.0
    %2406 = vmatpush2.msra.mxu0 0.0
    %2407 = vmatprep.subr.mxu0 0.0
    %2408 = vmatpush2.msra.mxu0 0.0
    %2409 = vmatprep.subr.mxu0 0.0
    %2410 = vmatpush2.msra.mxu0 0.0
    %2411 = vmatprep.subr.mxu0 0.0
    %2412 = vmatpush2.msra.mxu0 0.0
    %2413 = vmatprep.subr.mxu0 0.0
    %2414 = vmatpush2.msra.mxu0 0.0
    %2415 = vmatprep.subr.mxu0 0.0
    %2416 = vmatpush2.msra.mxu0 0.0
    %2417 = vmatprep.subr.mxu0 0.0
    %2418 = vmatpush2.msra.mxu0 0.0
    %2419 = vmatprep.subr.mxu0 0.0
    %2420 = vmatpush2.msra.mxu0 0.0
    %2421 = vmatprep.subr.mxu0 0.0
    %2422 = vmatpush2.msra.mxu0 0.0
    %2423 = vmatprep.subr.mxu0 0.0
    %2424 = vmatpush2.msra.mxu0 0.0
    %2425 = vmatprep.subr.mxu0 0.0
    %2426 = vmatpush2.msra.mxu0 0.0
    %2427 = vmatprep.subr.mxu0 0.0
    %2428 = vmatpush2.msra.mxu0 0.0
    %2429 = vmatprep.subr.mxu0 0.0
    %2430 = vmatpush2.msra.mxu0 0.0
    %2431 = vmatprep.subr.mxu0 0.0
    %2432 = vmatpush2.msra.mxu0 0.0
    %2433 = vmatprep.mubr.f32.mxu0 0.0
    %2434 = vmatmul.mubr.f32.gmra.mxu0 %v2364
    %v2435 = vpop.f32.mrf.mxu0
    %v2436 = vadd.f32 %v253, %v2435
    %v2437 = vpop.f32.mrf.mxu0
    %2438 = vmatprep.mubr.f32.mxu0 0.0
    %2439 = vmatmul.mubr.f32.gmra.mxu0 %v2367
    %v2440 = vpop.f32.mrf.mxu0
    %v2441 = vadd.f32 %v254, %v2440
    %v2442 = vpop.f32.mrf.mxu0
    %2443 = vdwg.mxu0
    %v2445 = vsel %vm1604, %v1969, 0
    %v2448 = vsel %vm1604, %v1970, 0
    %2450 = vmatprep.subr.mxu0 0.0
    %2451 = vmatpush1.msra.mxu0 0.0
    %2452 = vmatprep.subr.mxu0 0.0
    %2453 = vmatpush1.msra.mxu0 0.0
    %2454 = vmatprep.subr.mxu0 0.0
    %2455 = vmatpush1.msra.mxu0 0.0
    %2456 = vmatprep.subr.mxu0 0.0
    %2457 = vmatpush1.msra.mxu0 0.0
    %2458 = vmatprep.subr.mxu0 0.0
    %2459 = vmatpush1.msra.mxu0 0.0
    %2460 = vmatprep.subr.mxu0 0.0
    %2461 = vmatpush1.msra.mxu0 0.0
    %2462 = vmatprep.subr.mxu0 0.0
    %2463 = vmatpush1.msra.mxu0 0.0
    %2464 = vmatprep.subr.mxu0 0.0
    %2465 = vmatpush1.msra.mxu0 0.0
    %2466 = vmatprep.subr.mxu0 0.0
    %2467 = vmatpush1.msra.mxu0 0.0
    %2468 = vmatprep.subr.mxu0 0.0
    %2469 = vmatpush1.msra.mxu0 0.0
    %2470 = vmatprep.subr.mxu0 0.0
    %2471 = vmatpush1.msra.mxu0 0.0
    %2472 = vmatprep.subr.mxu0 0.0
    %2473 = vmatpush1.msra.mxu0 0.0
    %2474 = vmatprep.subr.mxu0 0.0
    %2475 = vmatpush1.msra.mxu0 %v1998
    %2476 = vmatprep.subr.mxu0 0.0
    %2477 = vmatpush1.msra.mxu0 %v1997
    %2478 = vmatprep.subr.mxu0 0.0
    %2479 = vmatpush1.msra.mxu0 %v1996
    %2480 = vmatprep.subr.mxu0 0.0
    %2481 = vmatpush1.msra.mxu0 %v1995
    %2482 = vmatprep.subr.mxu0 0.0
    %2483 = vmatpush2.msra.mxu0 0.0
    %2484 = vmatprep.subr.mxu0 0.0
    %2485 = vmatpush2.msra.mxu0 0.0
    %2486 = vmatprep.subr.mxu0 0.0
    %2487 = vmatpush2.msra.mxu0 0.0
    %2488 = vmatprep.subr.mxu0 0.0
    %2489 = vmatpush2.msra.mxu0 0.0
    %2490 = vmatprep.subr.mxu0 0.0
    %2491 = vmatpush2.msra.mxu0 0.0
    %2492 = vmatprep.subr.mxu0 0.0
    %2493 = vmatpush2.msra.mxu0 0.0
    %2494 = vmatprep.subr.mxu0 0.0
    %2495 = vmatpush2.msra.mxu0 0.0
    %2496 = vmatprep.subr.mxu0 0.0
    %2497 = vmatpush2.msra.mxu0 0.0
    %2498 = vmatprep.subr.mxu0 0.0
    %2499 = vmatpush2.msra.mxu0 0.0
    %2500 = vmatprep.subr.mxu0 0.0
    %2501 = vmatpush2.msra.mxu0 0.0
    %2502 = vmatprep.subr.mxu0 0.0
    %2503 = vmatpush2.msra.mxu0 0.0
    %2504 = vmatprep.subr.mxu0 0.0
    %2505 = vmatpush2.msra.mxu0 0.0
    %2506 = vmatprep.subr.mxu0 0.0
    %2507 = vmatpush2.msra.mxu0 0.0
    %2508 = vmatprep.subr.mxu0 0.0
    %2509 = vmatpush2.msra.mxu0 0.0
    %2510 = vmatprep.subr.mxu0 0.0
    %2511 = vmatpush2.msra.mxu0 0.0
    %2512 = vmatprep.subr.mxu0 0.0
    %2513 = vmatpush2.msra.mxu0 0.0
    %2514 = vmatprep.mubr.f32.mxu0 0.0
    %2515 = vmatmul.mubr.f32.gmra.mxu0 %v2445
    %v2516 = vpop.f32.mrf.mxu0
    %v2517 = vadd.f32 %v253, %v2516
    %v2518 = vpop.f32.mrf.mxu0
    %2519 = vmatprep.mubr.f32.mxu0 0.0
    %2520 = vmatmul.mubr.f32.gmra.mxu0 %v2448
    %v2521 = vpop.f32.mrf.mxu0
    %v2522 = vadd.f32 %v254, %v2521
    %v2523 = vpop.f32.mrf.mxu0
    %2524 = vdwg.mxu0
    %v2526 = vsel %vm1604, %v1971, 0
    %v2529 = vsel %vm1604, %v1972, 0
    %2531 = vmatprep.subr.mxu0 0.0
    %2532 = vmatpush1.msra.mxu0 0.0
    %2533 = vmatprep.subr.mxu0 0.0
    %2534 = vmatpush1.msra.mxu0 0.0
    %2535 = vmatprep.subr.mxu0 0.0
    %2536 = vmatpush1.msra.mxu0 0.0
    %2537 = vmatprep.subr.mxu0 0.0
    %2538 = vmatpush1.msra.mxu0 0.0
    %2539 = vmatprep.subr.mxu0 0.0
    %2540 = vmatpush1.msra.mxu0 0.0
    %2541 = vmatprep.subr.mxu0 0.0
    %2542 = vmatpush1.msra.mxu0 0.0
    %2543 = vmatprep.subr.mxu0 0.0
    %2544 = vmatpush1.msra.mxu0 0.0
    %2545 = vmatprep.subr.mxu0 0.0
    %2546 = vmatpush1.msra.mxu0 0.0
    %2547 = vmatprep.subr.mxu0 0.0
    %2548 = vmatpush1.msra.mxu0 0.0
    %2549 = vmatprep.subr.mxu0 0.0
    %2550 = vmatpush1.msra.mxu0 0.0
    %2551 = vmatprep.subr.mxu0 0.0
    %2552 = vmatpush1.msra.mxu0 0.0
    %2553 = vmatprep.subr.mxu0 0.0
    %2554 = vmatpush1.msra.mxu0 0.0
    %2555 = vmatprep.subr.mxu0 0.0
    %2556 = vmatpush1.msra.mxu0 %v2002
    %2557 = vmatprep.subr.mxu0 0.0
    %2558 = vmatpush1.msra.mxu0 %v2001
    %2559 = vmatprep.subr.mxu0 0.0
    %2560 = vmatpush1.msra.mxu0 %v2000
    %2561 = vmatprep.subr.mxu0 0.0
    %2562 = vmatpush1.msra.mxu0 %v1999
    %2563 = vmatprep.subr.mxu0 0.0
    %2564 = vmatpush2.msra.mxu0 0.0
    %2565 = vmatprep.subr.mxu0 0.0
    %2566 = vmatpush2.msra.mxu0 0.0
    %2567 = vmatprep.subr.mxu0 0.0
    %2568 = vmatpush2.msra.mxu0 0.0
    %2569 = vmatprep.subr.mxu0 0.0
    %2570 = vmatpush2.msra.mxu0 0.0
    %2571 = vmatprep.subr.mxu0 0.0
    %2572 = vmatpush2.msra.mxu0 0.0
    %2573 = vmatprep.subr.mxu0 0.0
    %2574 = vmatpush2.msra.mxu0 0.0
    %2575 = vmatprep.subr.mxu0 0.0
    %2576 = vmatpush2.msra.mxu0 0.0
    %2577 = vmatprep.subr.mxu0 0.0
    %2578 = vmatpush2.msra.mxu0 0.0
    %2579 = vmatprep.subr.mxu0 0.0
    %2580 = vmatpush2.msra.mxu0 0.0
    %2581 = vmatprep.subr.mxu0 0.0
    %2582 = vmatpush2.msra.mxu0 0.0
    %2583 = vmatprep.subr.mxu0 0.0
    %2584 = vmatpush2.msra.mxu0 0.0
    %2585 = vmatprep.subr.mxu0 0.0
    %2586 = vmatpush2.msra.mxu0 0.0
    %2587 = vmatprep.subr.mxu0 0.0
    %2588 = vmatpush2.msra.mxu0 0.0
    %2589 = vmatprep.subr.mxu0 0.0
    %2590 = vmatpush2.msra.mxu0 0.0
    %2591 = vmatprep.subr.mxu0 0.0
    %2592 = vmatpush2.msra.mxu0 0.0
    %2593 = vmatprep.subr.mxu0 0.0
    %2594 = vmatpush2.msra.mxu0 0.0
    %2595 = vmatprep.mubr.f32.mxu0 0.0
    %2596 = vmatmul.mubr.f32.gmra.mxu0 %v2526
    %v2597 = vpop.f32.mrf.mxu0
    %v2598 = vadd.f32 %v253, %v2597
    %v2599 = vpop.f32.mrf.mxu0
    %2600 = vmatprep.mubr.f32.mxu0 0.0
    %2601 = vmatmul.mubr.f32.gmra.mxu0 %v2529
    %v2602 = vpop.f32.mrf.mxu0
    %v2603 = vadd.f32 %v254, %v2602
    %v2604 = vpop.f32.mrf.mxu0
    %2605 = vdwg.mxu0
    %v2607 = vsel %vm1604, %v1973, 0
    %v2610 = vsel %vm1604, %v1974, 0
    %2612 = vmatprep.subr.mxu0 0.0
    %2613 = vmatpush1.msra.mxu0 0.0
    %2614 = vmatprep.subr.mxu0 0.0
    %2615 = vmatpush1.msra.mxu0 0.0
    %2616 = vmatprep.subr.mxu0 0.0
    %2617 = vmatpush1.msra.mxu0 0.0
    %2618 = vmatprep.subr.mxu0 0.0
    %2619 = vmatpush1.msra.mxu0 0.0
    %2620 = vmatprep.subr.mxu0 0.0
    %2621 = vmatpush1.msra.mxu0 0.0
    %2622 = vmatprep.subr.mxu0 0.0
    %2623 = vmatpush1.msra.mxu0 0.0
    %2624 = vmatprep.subr.mxu0 0.0
    %2625 = vmatpush1.msra.mxu0 0.0
    %2626 = vmatprep.subr.mxu0 0.0
    %2627 = vmatpush1.msra.mxu0 0.0
    %2628 = vmatprep.subr.mxu0 0.0
    %2629 = vmatpush1.msra.mxu0 0.0
    %2630 = vmatprep.subr.mxu0 0.0
    %2631 = vmatpush1.msra.mxu0 0.0
    %2632 = vmatprep.subr.mxu0 0.0
    %2633 = vmatpush1.msra.mxu0 0.0
    %2634 = vmatprep.subr.mxu0 0.0
    %2635 = vmatpush1.msra.mxu0 0.0
    %2636 = vmatprep.subr.mxu0 0.0
    %2637 = vmatpush1.msra.mxu0 %v2006
    %2638 = vmatprep.subr.mxu0 0.0
    %2639 = vmatpush1.msra.mxu0 %v2005
    %2640 = vmatprep.subr.mxu0 0.0
    %2641 = vmatpush1.msra.mxu0 %v2004
    %2642 = vmatprep.subr.mxu0 0.0
    %2643 = vmatpush1.msra.mxu0 %v2003
    %2644 = vmatprep.subr.mxu0 0.0
    %2645 = vmatpush2.msra.mxu0 0.0
    %2646 = vmatprep.subr.mxu0 0.0
    %2647 = vmatpush2.msra.mxu0 0.0
    %2648 = vmatprep.subr.mxu0 0.0
    %2649 = vmatpush2.msra.mxu0 0.0
    %2650 = vmatprep.subr.mxu0 0.0
    %2651 = vmatpush2.msra.mxu0 0.0
    %2652 = vmatprep.subr.mxu0 0.0
    %2653 = vmatpush2.msra.mxu0 0.0
    %2654 = vmatprep.subr.mxu0 0.0
    %2655 = vmatpush2.msra.mxu0 0.0
    %2656 = vmatprep.subr.mxu0 0.0
    %2657 = vmatpush2.msra.mxu0 0.0
    %2658 = vmatprep.subr.mxu0 0.0
    %2659 = vmatpush2.msra.mxu0 0.0
    %2660 = vmatprep.subr.mxu0 0.0
    %2661 = vmatpush2.msra.mxu0 0.0
    %2662 = vmatprep.subr.mxu0 0.0
    %2663 = vmatpush2.msra.mxu0 0.0
    %2664 = vmatprep.subr.mxu0 0.0
    %2665 = vmatpush2.msra.mxu0 0.0
    %2666 = vmatprep.subr.mxu0 0.0
    %2667 = vmatpush2.msra.mxu0 0.0
    %2668 = vmatprep.subr.mxu0 0.0
    %2669 = vmatpush2.msra.mxu0 0.0
    %2670 = vmatprep.subr.mxu0 0.0
    %2671 = vmatpush2.msra.mxu0 0.0
    %2672 = vmatprep.subr.mxu0 0.0
    %2673 = vmatpush2.msra.mxu0 0.0
    %2674 = vmatprep.subr.mxu0 0.0
    %2675 = vmatpush2.msra.mxu0 0.0
    %2676 = vmatprep.mubr.f32.mxu0 0.0
    %2677 = vmatmul.mubr.f32.gmra.mxu0 %v2607
    %v2678 = vpop.f32.mrf.mxu0
    %v2679 = vadd.f32 %v253, %v2678
    %v2680 = vpop.f32.mrf.mxu0
    %2681 = vmatprep.mubr.f32.mxu0 0.0
    %2682 = vmatmul.mubr.f32.gmra.mxu0 %v2610
    %v2683 = vpop.f32.mrf.mxu0
    %v2684 = vadd.f32 %v254, %v2683
    %v2685 = vpop.f32.mrf.mxu0
    %2686 = vdwg.mxu0
    %v2687 = vsel %vm1607, %v2112, -inf
    %2688 = vmax.xlane.f32.xlu0 %v2687
    %v2689 = vpop.xlane.xlu0 %2688
    %v2690 = vsel %vm1607, %v2117, -inf
    %2691 = vmax.xlane.f32.xlu0 %v2690
    %v2692 = vpop.xlane.xlu0 %2691
    %v2693 = vsel %vm1607, %v2193, -inf
    %2694 = vmax.xlane.f32.xlu0 %v2693
    %v2695 = vpop.xlane.xlu0 %2694
    %v2696 = vsel %vm1607, %v2198, -inf
    %2697 = vmax.xlane.f32.xlu0 %v2696
    %v2698 = vpop.xlane.xlu0 %2697
    %v2699 = vsel %vm1607, %v2274, -inf
    %2700 = vmax.xlane.f32.xlu0 %v2699
    %v2701 = vpop.xlane.xlu0 %2700
    %v2702 = vsel %vm1607, %v2279, -inf
    %2703 = vmax.xlane.f32.xlu0 %v2702
    %v2704 = vpop.xlane.xlu0 %2703
    %v2705 = vsel %vm1607, %v2355, -inf
    %2706 = vmax.xlane.f32.xlu0 %v2705
    %v2707 = vpop.xlane.xlu0 %2706
    %v2708 = vsel %vm1607, %v2360, -inf
    %2709 = vmax.xlane.f32.xlu0 %v2708
    %v2710 = vpop.xlane.xlu0 %2709
    %v2711 = vsel %vm1607, %v2436, -inf
    %2712 = vmax.xlane.f32.xlu0 %v2711
    %v2713 = vpop.xlane.xlu0 %2712
    %v2714 = vsel %vm1607, %v2441, -inf
    %2715 = vmax.xlane.f32.xlu0 %v2714
    %v2716 = vpop.xlane.xlu0 %2715
    %v2717 = vsel %vm1607, %v2517, -inf
    %2718 = vmax.xlane.f32.xlu0 %v2717
    %v2719 = vpop.xlane.xlu0 %2718
    %v2720 = vsel %vm1607, %v2522, -inf
    %2721 = vmax.xlane.f32.xlu0 %v2720
    %v2722 = vpop.xlane.xlu0 %2721
    %v2723 = vsel %vm1607, %v2598, -inf
    %2724 = vmax.xlane.f32.xlu0 %v2723
    %v2725 = vpop.xlane.xlu0 %2724
    %v2726 = vsel %vm1607, %v2603, -inf
    %2727 = vmax.xlane.f32.xlu0 %v2726
    %v2728 = vpop.xlane.xlu0 %2727
    %v2729 = vsel %vm1607, %v2679, -inf
    %2730 = vmax.xlane.f32.xlu0 %v2729
    %v2731 = vpop.xlane.xlu0 %2730
    %v2732 = vsel %vm1607, %v2684, -inf
    %2733 = vmax.xlane.f32.xlu0 %v2732
    %v2734 = vpop.xlane.xlu0 %2733
    %v2735 = vsub.f32 %v2112, %v2689
    %v2736 = vsub.f32 %v2117, %v2692
    %v2737 = vsub.f32 %v2193, %v2695
    %v2738 = vsub.f32 %v2198, %v2698
    %v2739 = vsub.f32 %v2274, %v2701
    %v2740 = vsub.f32 %v2279, %v2704
    %v2741 = vsub.f32 %v2355, %v2707
    %v2742 = vsub.f32 %v2360, %v2710
    %v2743 = vsub.f32 %v2436, %v2713
    %v2744 = vsub.f32 %v2441, %v2716
    %v2745 = vsub.f32 %v2517, %v2719
    %v2746 = vsub.f32 %v2522, %v2722
    %v2747 = vsub.f32 %v2598, %v2725
    %v2748 = vsub.f32 %v2603, %v2728
    %v2749 = vsub.f32 %v2679, %v2731
    %v2750 = vsub.f32 %v2684, %v2734
    %v2751 = vmul.f32 %v2735, 1.442695
    %v2752 = vpow.pop %v2751
    %v2753 = vmul.f32 %v2736, 1.442695
    %v2754 = vpow.pop %v2753
    %v2755 = vmul.f32 %v2737, 1.442695
    %v2756 = vpow.pop %v2755
    %v2757 = vmul.f32 %v2738, 1.442695
    %v2758 = vpow.pop %v2757
    %v2759 = vmul.f32 %v2739, 1.442695
    %v2760 = vpow.pop %v2759
    %v2761 = vmul.f32 %v2740, 1.442695
    %v2762 = vpow.pop %v2761
    %v2763 = vmul.f32 %v2741, 1.442695
    %v2764 = vpow.pop %v2763
    %v2765 = vmul.f32 %v2742, 1.442695
    %v2766 = vpow.pop %v2765
    %v2767 = vmul.f32 %v2743, 1.442695
    %v2768 = vpow.pop %v2767
    %v2769 = vmul.f32 %v2744, 1.442695
    %v2770 = vpow.pop %v2769
    %v2771 = vmul.f32 %v2745, 1.442695
    %v2772 = vpow.pop %v2771
    %v2773 = vmul.f32 %v2746, 1.442695
    %v2774 = vpow.pop %v2773
    %v2775 = vmul.f32 %v2747, 1.442695
    %v2776 = vpow.pop %v2775
    %v2777 = vmul.f32 %v2748, 1.442695
    %v2778 = vpow.pop %v2777
    %v2779 = vmul.f32 %v2749, 1.442695
    %v2780 = vpow.pop %v2779
    %v2781 = vmul.f32 %v2750, 1.442695
    %v2782 = vpow.pop %v2781
    %v2783 = vsel %vm1607, %v2752, 0.0
    %2784 = vadd.xlane.f32.xlu0 %v2783
    %v2785 = vpop.xlane.xlu0 %2784
    %v2786 = vsel %vm1607, %v2754, 0.0
    %2787 = vadd.xlane.f32.xlu0 %v2786
    %v2788 = vpop.xlane.xlu0 %2787
    %v2789 = vsel %vm1607, %v2756, 0.0
    %2790 = vadd.xlane.f32.xlu0 %v2789
    %v2791 = vpop.xlane.xlu0 %2790
    %v2792 = vsel %vm1607, %v2758, 0.0
    %2793 = vadd.xlane.f32.xlu0 %v2792
    %v2794 = vpop.xlane.xlu0 %2793
    %v2795 = vsel %vm1607, %v2760, 0.0
    %2796 = vadd.xlane.f32.xlu0 %v2795
    %v2797 = vpop.xlane.xlu0 %2796
    %v2798 = vsel %vm1607, %v2762, 0.0
    %2799 = vadd.xlane.f32.xlu0 %v2798
    %v2800 = vpop.xlane.xlu0 %2799
    %v2801 = vsel %vm1607, %v2764, 0.0
    %2802 = vadd.xlane.f32.xlu0 %v2801
    %v2803 = vpop.xlane.xlu0 %2802
    %v2804 = vsel %vm1607, %v2766, 0.0
    %2805 = vadd.xlane.f32.xlu0 %v2804
    %v2806 = vpop.xlane.xlu0 %2805
    %v2807 = vsel %vm1607, %v2768, 0.0
    %2808 = vadd.xlane.f32.xlu0 %v2807
    %v2809 = vpop.xlane.xlu0 %2808
    %v2810 = vsel %vm1607, %v2770, 0.0
    %2811 = vadd.xlane.f32.xlu0 %v2810
    %v2812 = vpop.xlane.xlu0 %2811
    %v2813 = vsel %vm1607, %v2772, 0.0
    %2814 = vadd.xlane.f32.xlu0 %v2813
    %v2815 = vpop.xlane.xlu0 %2814
    %v2816 = vsel %vm1607, %v2774, 0.0
    %2817 = vadd.xlane.f32.xlu0 %v2816
    %v2818 = vpop.xlane.xlu0 %2817
    %v2819 = vsel %vm1607, %v2776, 0.0
    %2820 = vadd.xlane.f32.xlu0 %v2819
    %v2821 = vpop.xlane.xlu0 %2820
    %v2822 = vsel %vm1607, %v2778, 0.0
    %2823 = vadd.xlane.f32.xlu0 %v2822
    %v2824 = vpop.xlane.xlu0 %2823
    %v2825 = vsel %vm1607, %v2780, 0.0
    %2826 = vadd.xlane.f32.xlu0 %v2825
    %v2827 = vpop.xlane.xlu0 %2826
    %v2828 = vsel %vm1607, %v2782, 0.0
    %2829 = vadd.xlane.f32.xlu0 %v2828
    %v2830 = vpop.xlane.xlu0 %2829
    %v2831 = vrcp.pop %v2785
    %v2832 = vrcp.pop %v2788
    %v2833 = vrcp.pop %v2791
    %v2834 = vrcp.pop %v2794
    %v2835 = vrcp.pop %v2797
    %v2836 = vrcp.pop %v2800
    %v2837 = vrcp.pop %v2803
    %v2838 = vrcp.pop %v2806
    %v2839 = vrcp.pop %v2809
    %v2840 = vrcp.pop %v2812
    %v2841 = vrcp.pop %v2815
    %v2842 = vrcp.pop %v2818
    %v2843 = vrcp.pop %v2821
    %v2844 = vrcp.pop %v2824
    %v2845 = vrcp.pop %v2827
    %v2846 = vrcp.pop %v2830
    %v2847 = vmul.f32 %v2752, %v2831
    %v2848 = vmul.f32 %v2754, %v2832
    %v2849 = vmul.f32 %v2756, %v2833
    %v2850 = vmul.f32 %v2758, %v2834
    %v2851 = vmul.f32 %v2760, %v2835
    %v2852 = vmul.f32 %v2762, %v2836
    %v2853 = vmul.f32 %v2764, %v2837
    %v2854 = vmul.f32 %v2766, %v2838
    %v2855 = vmul.f32 %v2768, %v2839
    %v2856 = vmul.f32 %v2770, %v2840
    %v2857 = vmul.f32 %v2772, %v2841
    %v2858 = vmul.f32 %v2774, %v2842
    %v2859 = vmul.f32 %v2776, %v2843
    %v2860 = vmul.f32 %v2778, %v2844
    %v2861 = vmul.f32 %v2780, %v2845
    %v2862 = vmul.f32 %v2782, %v2846
    %v2864 = vsel %vm1607, %v2007, 0
    %v2867 = vsel %vm1607, %v2008, 0
    %v2870 = vsel %vm1607, %v2009, 0
    %v2873 = vsel %vm1607, %v2010, 0
    %v2876 = vsel %vm1607, %v2847, 0
    %v2879 = vsel %vm1607, %v2848, 0
    %2881 = vmatprep.subr.mxu0 0.0
    %2882 = vmatpush1.xpose.msra.mxu0 0.0
    %2883 = vmatprep.subr.mxu0 0.0
    %2884 = vmatpush1.xpose.msra.mxu0 0.0
    %2885 = vmatprep.subr.mxu0 0.0
    %2886 = vmatpush1.xpose.msra.mxu0 0.0
    %2887 = vmatprep.subr.mxu0 0.0
    %2888 = vmatpush1.xpose.msra.mxu0 0.0
    %2889 = vmatprep.subr.mxu0 0.0
    %2890 = vmatpush1.xpose.msra.mxu0 0.0
    %2891 = vmatprep.subr.mxu0 0.0
    %2892 = vmatpush1.xpose.msra.mxu0 0.0
    %2893 = vmatprep.subr.mxu0 0.0
    %2894 = vmatpush1.xpose.msra.mxu0 0.0
    %2895 = vmatprep.subr.mxu0 0.0
    %2896 = vmatpush1.xpose.msra.mxu0 0.0
    %2897 = vmatprep.subr.mxu0 0.0
    %2898 = vmatpush1.xpose.msra.mxu0 0.0
    %2899 = vmatprep.subr.mxu0 0.0
    %2900 = vmatpush1.xpose.msra.mxu0 0.0
    %2901 = vmatprep.subr.mxu0 0.0
    %2902 = vmatpush1.xpose.msra.mxu0 0.0
    %2903 = vmatprep.subr.mxu0 0.0
    %2904 = vmatpush1.xpose.msra.mxu0 0.0
    %2905 = vmatprep.subr.mxu0 0.0
    %2906 = vmatpush1.xpose.msra.mxu0 0.0
    %2907 = vmatprep.subr.mxu0 0.0
    %2908 = vmatpush1.xpose.msra.mxu0 0.0
    %2909 = vmatprep.subr.mxu0 0.0
    %2910 = vmatpush1.xpose.msra.mxu0 %v2879
    %2911 = vmatprep.subr.mxu0 0.0
    %2912 = vmatpush1.xpose.msra.mxu0 %v2876
    %2913 = vmatprep.subr.mxu0 0.0
    %2914 = vmatpush2.xpose.msra.mxu0 0.0
    %2915 = vmatprep.subr.mxu0 0.0
    %2916 = vmatpush2.xpose.msra.mxu0 0.0
    %2917 = vmatprep.subr.mxu0 0.0
    %2918 = vmatpush2.xpose.msra.mxu0 0.0
    %2919 = vmatprep.subr.mxu0 0.0
    %2920 = vmatpush2.xpose.msra.mxu0 0.0
    %2921 = vmatprep.subr.mxu0 0.0
    %2922 = vmatpush2.xpose.msra.mxu0 0.0
    %2923 = vmatprep.subr.mxu0 0.0
    %2924 = vmatpush2.xpose.msra.mxu0 0.0
    %2925 = vmatprep.subr.mxu0 0.0
    %2926 = vmatpush2.xpose.msra.mxu0 0.0
    %2927 = vmatprep.subr.mxu0 0.0
    %2928 = vmatpush2.xpose.msra.mxu0 0.0
    %2929 = vmatprep.subr.mxu0 0.0
    %2930 = vmatpush2.xpose.msra.mxu0 0.0
    %2931 = vmatprep.subr.mxu0 0.0
    %2932 = vmatpush2.xpose.msra.mxu0 0.0
    %2933 = vmatprep.subr.mxu0 0.0
    %2934 = vmatpush2.xpose.msra.mxu0 0.0
    %2935 = vmatprep.subr.mxu0 0.0
    %2936 = vmatpush2.xpose.msra.mxu0 0.0
    %2937 = vmatprep.subr.mxu0 0.0
    %2938 = vmatpush2.xpose.msra.mxu0 0.0
    %2939 = vmatprep.subr.mxu0 0.0
    %2940 = vmatpush2.xpose.msra.mxu0 0.0
    %2941 = vmatprep.subr.mxu0 0.0
    %2942 = vmatpush2.xpose.msra.mxu0 0.0
    %2943 = vmatprep.subr.mxu0 0.0
    %2944 = vmatpush2.xpose.msra.mxu0 0.0
    %2945 = vmatprep.mubr.f32.mxu0 0.0
    %2946 = vmatmul.mubr.f32.gmra.mxu0 %v2864
    %v2947 = vpop.f32.mrf.mxu0
    %v2948 = vadd.f32 0.0, %v2947
    %v2949 = vpop.f32.mrf.mxu0
    %2950 = vmatprep.mubr.f32.mxu0 0.0
    %2951 = vmatmul.mubr.f32.gmra.mxu0 %v2867
    %v2952 = vpop.f32.mrf.mxu0
    %v2953 = vadd.f32 0.0, %v2952
    %v2954 = vpop.f32.mrf.mxu0
    %2955 = vmatprep.mubr.f32.mxu0 0.0
    %2956 = vmatmul.mubr.f32.gmra.mxu0 %v2870
    %v2957 = vpop.f32.mrf.mxu0
    %v2958 = vadd.f32 0.0, %v2957
    %v2959 = vpop.f32.mrf.mxu0
    %2960 = vmatprep.mubr.f32.mxu0 0.0
    %2961 = vmatmul.mubr.f32.gmra.mxu0 %v2873
    %v2962 = vpop.f32.mrf.mxu0
    %v2963 = vadd.f32 0.0, %v2962
    %v2964 = vpop.f32.mrf.mxu0
    %2965 = vdwg.mxu0
    %v2967 = vsel %vm1607, %v2011, 0
    %v2970 = vsel %vm1607, %v2012, 0
    %v2973 = vsel %vm1607, %v2013, 0
    %v2976 = vsel %vm1607, %v2014, 0
    %v2979 = vsel %vm1607, %v2849, 0
    %v2982 = vsel %vm1607, %v2850, 0
    %2984 = vmatprep.subr.mxu0 0.0
    %2985 = vmatpush1.xpose.msra.mxu0 0.0
    %2986 = vmatprep.subr.mxu0 0.0
    %2987 = vmatpush1.xpose.msra.mxu0 0.0
    %2988 = vmatprep.subr.mxu0 0.0
    %2989 = vmatpush1.xpose.msra.mxu0 0.0
    %2990 = vmatprep.subr.mxu0 0.0
    %2991 = vmatpush1.xpose.msra.mxu0 0.0
    %2992 = vmatprep.subr.mxu0 0.0
    %2993 = vmatpush1.xpose.msra.mxu0 0.0
    %2994 = vmatprep.subr.mxu0 0.0
    %2995 = vmatpush1.xpose.msra.mxu0 0.0
    %2996 = vmatprep.subr.mxu0 0.0
    %2997 = vmatpush1.xpose.msra.mxu0 0.0
    %2998 = vmatprep.subr.mxu0 0.0
    %2999 = vmatpush1.xpose.msra.mxu0 0.0
    %3000 = vmatprep.subr.mxu0 0.0
    %3001 = vmatpush1.xpose.msra.mxu0 0.0
    %3002 = vmatprep.subr.mxu0 0.0
    %3003 = vmatpush1.xpose.msra.mxu0 0.0
    %3004 = vmatprep.subr.mxu0 0.0
    %3005 = vmatpush1.xpose.msra.mxu0 0.0
    %3006 = vmatprep.subr.mxu0 0.0
    %3007 = vmatpush1.xpose.msra.mxu0 0.0
    %3008 = vmatprep.subr.mxu0 0.0
    %3009 = vmatpush1.xpose.msra.mxu0 0.0
    %3010 = vmatprep.subr.mxu0 0.0
    %3011 = vmatpush1.xpose.msra.mxu0 0.0
    %3012 = vmatprep.subr.mxu0 0.0
    %3013 = vmatpush1.xpose.msra.mxu0 %v2982
    %3014 = vmatprep.subr.mxu0 0.0
    %3015 = vmatpush1.xpose.msra.mxu0 %v2979
    %3016 = vmatprep.subr.mxu0 0.0
    %3017 = vmatpush2.xpose.msra.mxu0 0.0
    %3018 = vmatprep.subr.mxu0 0.0
    %3019 = vmatpush2.xpose.msra.mxu0 0.0
    %3020 = vmatprep.subr.mxu0 0.0
    %3021 = vmatpush2.xpose.msra.mxu0 0.0
    %3022 = vmatprep.subr.mxu0 0.0
    %3023 = vmatpush2.xpose.msra.mxu0 0.0
    %3024 = vmatprep.subr.mxu0 0.0
    %3025 = vmatpush2.xpose.msra.mxu0 0.0
    %3026 = vmatprep.subr.mxu0 0.0
    %3027 = vmatpush2.xpose.msra.mxu0 0.0
    %3028 = vmatprep.subr.mxu0 0.0
    %3029 = vmatpush2.xpose.msra.mxu0 0.0
    %3030 = vmatprep.subr.mxu0 0.0
    %3031 = vmatpush2.xpose.msra.mxu0 0.0
    %3032 = vmatprep.subr.mxu0 0.0
    %3033 = vmatpush2.xpose.msra.mxu0 0.0
    %3034 = vmatprep.subr.mxu0 0.0
    %3035 = vmatpush2.xpose.msra.mxu0 0.0
    %3036 = vmatprep.subr.mxu0 0.0
    %3037 = vmatpush2.xpose.msra.mxu0 0.0
    %3038 = vmatprep.subr.mxu0 0.0
    %3039 = vmatpush2.xpose.msra.mxu0 0.0
    %3040 = vmatprep.subr.mxu0 0.0
    %3041 = vmatpush2.xpose.msra.mxu0 0.0
    %3042 = vmatprep.subr.mxu0 0.0
    %3043 = vmatpush2.xpose.msra.mxu0 0.0
    %3044 = vmatprep.subr.mxu0 0.0
    %3045 = vmatpush2.xpose.msra.mxu0 0.0
    %3046 = vmatprep.subr.mxu0 0.0
    %3047 = vmatpush2.xpose.msra.mxu0 0.0
    %3048 = vmatprep.mubr.f32.mxu0 0.0
    %3049 = vmatmul.mubr.f32.gmra.mxu0 %v2967
    %v3050 = vpop.f32.mrf.mxu0
    %v3051 = vadd.f32 0.0, %v3050
    %v3052 = vpop.f32.mrf.mxu0
    %3053 = vmatprep.mubr.f32.mxu0 0.0
    %3054 = vmatmul.mubr.f32.gmra.mxu0 %v2970
    %v3055 = vpop.f32.mrf.mxu0
    %v3056 = vadd.f32 0.0, %v3055
    %v3057 = vpop.f32.mrf.mxu0
    %3058 = vmatprep.mubr.f32.mxu0 0.0
    %3059 = vmatmul.mubr.f32.gmra.mxu0 %v2973
    %v3060 = vpop.f32.mrf.mxu0
    %v3061 = vadd.f32 0.0, %v3060
    %v3062 = vpop.f32.mrf.mxu0
    %3063 = vmatprep.mubr.f32.mxu0 0.0
    %3064 = vmatmul.mubr.f32.gmra.mxu0 %v2976
    %v3065 = vpop.f32.mrf.mxu0
    %v3066 = vadd.f32 0.0, %v3065
    %v3067 = vpop.f32.mrf.mxu0
    %3068 = vdwg.mxu0
    %v3070 = vsel %vm1607, %v2015, 0
    %v3073 = vsel %vm1607, %v2016, 0
    %v3076 = vsel %vm1607, %v2017, 0
    %v3079 = vsel %vm1607, %v2018, 0
    %v3082 = vsel %vm1607, %v2851, 0
    %v3085 = vsel %vm1607, %v2852, 0
    %3087 = vmatprep.subr.mxu0 0.0
    %3088 = vmatpush1.xpose.msra.mxu0 0.0
    %3089 = vmatprep.subr.mxu0 0.0
    %3090 = vmatpush1.xpose.msra.mxu0 0.0
    %3091 = vmatprep.subr.mxu0 0.0
    %3092 = vmatpush1.xpose.msra.mxu0 0.0
    %3093 = vmatprep.subr.mxu0 0.0
    %3094 = vmatpush1.xpose.msra.mxu0 0.0
    %3095 = vmatprep.subr.mxu0 0.0
    %3096 = vmatpush1.xpose.msra.mxu0 0.0
    %3097 = vmatprep.subr.mxu0 0.0
    %3098 = vmatpush1.xpose.msra.mxu0 0.0
    %3099 = vmatprep.subr.mxu0 0.0
    %3100 = vmatpush1.xpose.msra.mxu0 0.0
    %3101 = vmatprep.subr.mxu0 0.0
    %3102 = vmatpush1.xpose.msra.mxu0 0.0
    %3103 = vmatprep.subr.mxu0 0.0
    %3104 = vmatpush1.xpose.msra.mxu0 0.0
    %3105 = vmatprep.subr.mxu0 0.0
    %3106 = vmatpush1.xpose.msra.mxu0 0.0
    %3107 = vmatprep.subr.mxu0 0.0
    %3108 = vmatpush1.xpose.msra.mxu0 0.0
    %3109 = vmatprep.subr.mxu0 0.0
    %3110 = vmatpush1.xpose.msra.mxu0 0.0
    %3111 = vmatprep.subr.mxu0 0.0
    %3112 = vmatpush1.xpose.msra.mxu0 0.0
    %3113 = vmatprep.subr.mxu0 0.0
    %3114 = vmatpush1.xpose.msra.mxu0 0.0
    %3115 = vmatprep.subr.mxu0 0.0
    %3116 = vmatpush1.xpose.msra.mxu0 %v3085
    %3117 = vmatprep.subr.mxu0 0.0
    %3118 = vmatpush1.xpose.msra.mxu0 %v3082
    %3119 = vmatprep.subr.mxu0 0.0
    %3120 = vmatpush2.xpose.msra.mxu0 0.0
    %3121 = vmatprep.subr.mxu0 0.0
    %3122 = vmatpush2.xpose.msra.mxu0 0.0
    %3123 = vmatprep.subr.mxu0 0.0
    %3124 = vmatpush2.xpose.msra.mxu0 0.0
    %3125 = vmatprep.subr.mxu0 0.0
    %3126 = vmatpush2.xpose.msra.mxu0 0.0
    %3127 = vmatprep.subr.mxu0 0.0
    %3128 = vmatpush2.xpose.msra.mxu0 0.0
    %3129 = vmatprep.subr.mxu0 0.0
    %3130 = vmatpush2.xpose.msra.mxu0 0.0
    %3131 = vmatprep.subr.mxu0 0.0
    %3132 = vmatpush2.xpose.msra.mxu0 0.0
    %3133 = vmatprep.subr.mxu0 0.0
    %3134 = vmatpush2.xpose.msra.mxu0 0.0
    %3135 = vmatprep.subr.mxu0 0.0
    %3136 = vmatpush2.xpose.msra.mxu0 0.0
    %3137 = vmatprep.subr.mxu0 0.0
    %3138 = vmatpush2.xpose.msra.mxu0 0.0
    %3139 = vmatprep.subr.mxu0 0.0
    %3140 = vmatpush2.xpose.msra.mxu0 0.0
    %3141 = vmatprep.subr.mxu0 0.0
    %3142 = vmatpush2.xpose.msra.mxu0 0.0
    %3143 = vmatprep.subr.mxu0 0.0
    %3144 = vmatpush2.xpose.msra.mxu0 0.0
    %3145 = vmatprep.subr.mxu0 0.0
    %3146 = vmatpush2.xpose.msra.mxu0 0.0
    %3147 = vmatprep.subr.mxu0 0.0
    %3148 = vmatpush2.xpose.msra.mxu0 0.0
    %3149 = vmatprep.subr.mxu0 0.0
    %3150 = vmatpush2.xpose.msra.mxu0 0.0
    %3151 = vmatprep.mubr.f32.mxu0 0.0
    %3152 = vmatmul.mubr.f32.gmra.mxu0 %v3070
    %v3153 = vpop.f32.mrf.mxu0
    %v3154 = vadd.f32 0.0, %v3153
    %v3155 = vpop.f32.mrf.mxu0
    %3156 = vmatprep.mubr.f32.mxu0 0.0
    %3157 = vmatmul.mubr.f32.gmra.mxu0 %v3073
    %v3158 = vpop.f32.mrf.mxu0
    %v3159 = vadd.f32 0.0, %v3158
    %v3160 = vpop.f32.mrf.mxu0
    %3161 = vmatprep.mubr.f32.mxu0 0.0
    %3162 = vmatmul.mubr.f32.gmra.mxu0 %v3076
    %v3163 = vpop.f32.mrf.mxu0
    %v3164 = vadd.f32 0.0, %v3163
    %v3165 = vpop.f32.mrf.mxu0
    %3166 = vmatprep.mubr.f32.mxu0 0.0
    %3167 = vmatmul.mubr.f32.gmra.mxu0 %v3079
    %v3168 = vpop.f32.mrf.mxu0
    %v3169 = vadd.f32 0.0, %v3168
    %v3170 = vpop.f32.mrf.mxu0
    %3171 = vdwg.mxu0
    %v3173 = vsel %vm1607, %v2019, 0
    %v3176 = vsel %vm1607, %v2020, 0
    %v3179 = vsel %vm1607, %v2021, 0
    %v3182 = vsel %vm1607, %v2022, 0
    %v3185 = vsel %vm1607, %v2853, 0
    %v3188 = vsel %vm1607, %v2854, 0
    %3190 = vmatprep.subr.mxu0 0.0
    %3191 = vmatpush1.xpose.msra.mxu0 0.0
    %3192 = vmatprep.subr.mxu0 0.0
    %3193 = vmatpush1.xpose.msra.mxu0 0.0
    %3194 = vmatprep.subr.mxu0 0.0
    %3195 = vmatpush1.xpose.msra.mxu0 0.0
    %3196 = vmatprep.subr.mxu0 0.0
    %3197 = vmatpush1.xpose.msra.mxu0 0.0
    %3198 = vmatprep.subr.mxu0 0.0
    %3199 = vmatpush1.xpose.msra.mxu0 0.0
    %3200 = vmatprep.subr.mxu0 0.0
    %3201 = vmatpush1.xpose.msra.mxu0 0.0
    %3202 = vmatprep.subr.mxu0 0.0
    %3203 = vmatpush1.xpose.msra.mxu0 0.0
    %3204 = vmatprep.subr.mxu0 0.0
    %3205 = vmatpush1.xpose.msra.mxu0 0.0
    %3206 = vmatprep.subr.mxu0 0.0
    %3207 = vmatpush1.xpose.msra.mxu0 0.0
    %3208 = vmatprep.subr.mxu0 0.0
    %3209 = vmatpush1.xpose.msra.mxu0 0.0
    %3210 = vmatprep.subr.mxu0 0.0
    %3211 = vmatpush1.xpose.msra.mxu0 0.0
    %3212 = vmatprep.subr.mxu0 0.0
    %3213 = vmatpush1.xpose.msra.mxu0 0.0
    %3214 = vmatprep.subr.mxu0 0.0
    %3215 = vmatpush1.xpose.msra.mxu0 0.0
    %3216 = vmatprep.subr.mxu0 0.0
    %3217 = vmatpush1.xpose.msra.mxu0 0.0
    %3218 = vmatprep.subr.mxu0 0.0
    %3219 = vmatpush1.xpose.msra.mxu0 %v3188
    %3220 = vmatprep.subr.mxu0 0.0
    %3221 = vmatpush1.xpose.msra.mxu0 %v3185
    %3222 = vmatprep.subr.mxu0 0.0
    %3223 = vmatpush2.xpose.msra.mxu0 0.0
    %3224 = vmatprep.subr.mxu0 0.0
    %3225 = vmatpush2.xpose.msra.mxu0 0.0
    %3226 = vmatprep.subr.mxu0 0.0
    %3227 = vmatpush2.xpose.msra.mxu0 0.0
    %3228 = vmatprep.subr.mxu0 0.0
    %3229 = vmatpush2.xpose.msra.mxu0 0.0
    %3230 = vmatprep.subr.mxu0 0.0
    %3231 = vmatpush2.xpose.msra.mxu0 0.0
    %3232 = vmatprep.subr.mxu0 0.0
    %3233 = vmatpush2.xpose.msra.mxu0 0.0
    %3234 = vmatprep.subr.mxu0 0.0
    %3235 = vmatpush2.xpose.msra.mxu0 0.0
    %3236 = vmatprep.subr.mxu0 0.0
    %3237 = vmatpush2.xpose.msra.mxu0 0.0
    %3238 = vmatprep.subr.mxu0 0.0
    %3239 = vmatpush2.xpose.msra.mxu0 0.0
    %3240 = vmatprep.subr.mxu0 0.0
    %3241 = vmatpush2.xpose.msra.mxu0 0.0
    %3242 = vmatprep.subr.mxu0 0.0
    %3243 = vmatpush2.xpose.msra.mxu0 0.0
    %3244 = vmatprep.subr.mxu0 0.0
    %3245 = vmatpush2.xpose.msra.mxu0 0.0
    %3246 = vmatprep.subr.mxu0 0.0
    %3247 = vmatpush2.xpose.msra.mxu0 0.0
    %3248 = vmatprep.subr.mxu0 0.0
    %3249 = vmatpush2.xpose.msra.mxu0 0.0
    %3250 = vmatprep.subr.mxu0 0.0
    %3251 = vmatpush2.xpose.msra.mxu0 0.0
    %3252 = vmatprep.subr.mxu0 0.0
    %3253 = vmatpush2.xpose.msra.mxu0 0.0
    %3254 = vmatprep.mubr.f32.mxu0 0.0
    %3255 = vmatmul.mubr.f32.gmra.mxu0 %v3173
    %v3256 = vpop.f32.mrf.mxu0
    %v3257 = vadd.f32 0.0, %v3256
    %v3258 = vpop.f32.mrf.mxu0
    %3259 = vmatprep.mubr.f32.mxu0 0.0
    %3260 = vmatmul.mubr.f32.gmra.mxu0 %v3176
    %v3261 = vpop.f32.mrf.mxu0
    %v3262 = vadd.f32 0.0, %v3261
    %v3263 = vpop.f32.mrf.mxu0
    %3264 = vmatprep.mubr.f32.mxu0 0.0
    %3265 = vmatmul.mubr.f32.gmra.mxu0 %v3179
    %v3266 = vpop.f32.mrf.mxu0
    %v3267 = vadd.f32 0.0, %v3266
    %v3268 = vpop.f32.mrf.mxu0
    %3269 = vmatprep.mubr.f32.mxu0 0.0
    %3270 = vmatmul.mubr.f32.gmra.mxu0 %v3182
    %v3271 = vpop.f32.mrf.mxu0
    %v3272 = vadd.f32 0.0, %v3271
    %v3273 = vpop.f32.mrf.mxu0
    %3274 = vdwg.mxu0
    %v3276 = vsel %vm1607, %v2023, 0
    %v3279 = vsel %vm1607, %v2024, 0
    %v3282 = vsel %vm1607, %v2025, 0
    %v3285 = vsel %vm1607, %v2026, 0
    %v3288 = vsel %vm1607, %v2855, 0
    %v3291 = vsel %vm1607, %v2856, 0
    %3293 = vmatprep.subr.mxu0 0.0
    %3294 = vmatpush1.xpose.msra.mxu0 0.0
    %3295 = vmatprep.subr.mxu0 0.0
    %3296 = vmatpush1.xpose.msra.mxu0 0.0
    %3297 = vmatprep.subr.mxu0 0.0
    %3298 = vmatpush1.xpose.msra.mxu0 0.0
    %3299 = vmatprep.subr.mxu0 0.0
    %3300 = vmatpush1.xpose.msra.mxu0 0.0
    %3301 = vmatprep.subr.mxu0 0.0
    %3302 = vmatpush1.xpose.msra.mxu0 0.0
    %3303 = vmatprep.subr.mxu0 0.0
    %3304 = vmatpush1.xpose.msra.mxu0 0.0
    %3305 = vmatprep.subr.mxu0 0.0
    %3306 = vmatpush1.xpose.msra.mxu0 0.0
    %3307 = vmatprep.subr.mxu0 0.0
    %3308 = vmatpush1.xpose.msra.mxu0 0.0
    %3309 = vmatprep.subr.mxu0 0.0
    %3310 = vmatpush1.xpose.msra.mxu0 0.0
    %3311 = vmatprep.subr.mxu0 0.0
    %3312 = vmatpush1.xpose.msra.mxu0 0.0
    %3313 = vmatprep.subr.mxu0 0.0
    %3314 = vmatpush1.xpose.msra.mxu0 0.0
    %3315 = vmatprep.subr.mxu0 0.0
    %3316 = vmatpush1.xpose.msra.mxu0 0.0
    %3317 = vmatprep.subr.mxu0 0.0
    %3318 = vmatpush1.xpose.msra.mxu0 0.0
    %3319 = vmatprep.subr.mxu0 0.0
    %3320 = vmatpush1.xpose.msra.mxu0 0.0
    %3321 = vmatprep.subr.mxu0 0.0
    %3322 = vmatpush1.xpose.msra.mxu0 %v3291
    %3323 = vmatprep.subr.mxu0 0.0
    %3324 = vmatpush1.xpose.msra.mxu0 %v3288
    %3325 = vmatprep.subr.mxu0 0.0
    %3326 = vmatpush2.xpose.msra.mxu0 0.0
    %3327 = vmatprep.subr.mxu0 0.0
    %3328 = vmatpush2.xpose.msra.mxu0 0.0
    %3329 = vmatprep.subr.mxu0 0.0
    %3330 = vmatpush2.xpose.msra.mxu0 0.0
    %3331 = vmatprep.subr.mxu0 0.0
    %3332 = vmatpush2.xpose.msra.mxu0 0.0
    %3333 = vmatprep.subr.mxu0 0.0
    %3334 = vmatpush2.xpose.msra.mxu0 0.0
    %3335 = vmatprep.subr.mxu0 0.0
    %3336 = vmatpush2.xpose.msra.mxu0 0.0
    %3337 = vmatprep.subr.mxu0 0.0
    %3338 = vmatpush2.xpose.msra.mxu0 0.0
    %3339 = vmatprep.subr.mxu0 0.0
    %3340 = vmatpush2.xpose.msra.mxu0 0.0
    %3341 = vmatprep.subr.mxu0 0.0
    %3342 = vmatpush2.xpose.msra.mxu0 0.0
    %3343 = vmatprep.subr.mxu0 0.0
    %3344 = vmatpush2.xpose.msra.mxu0 0.0
    %3345 = vmatprep.subr.mxu0 0.0
    %3346 = vmatpush2.xpose.msra.mxu0 0.0
    %3347 = vmatprep.subr.mxu0 0.0
    %3348 = vmatpush2.xpose.msra.mxu0 0.0
    %3349 = vmatprep.subr.mxu0 0.0
    %3350 = vmatpush2.xpose.msra.mxu0 0.0
    %3351 = vmatprep.subr.mxu0 0.0
    %3352 = vmatpush2.xpose.msra.mxu0 0.0
    %3353 = vmatprep.subr.mxu0 0.0
    %3354 = vmatpush2.xpose.msra.mxu0 0.0
    %3355 = vmatprep.subr.mxu0 0.0
    %3356 = vmatpush2.xpose.msra.mxu0 0.0
    %3357 = vmatprep.mubr.f32.mxu0 0.0
    %3358 = vmatmul.mubr.f32.gmra.mxu0 %v3276
    %v3359 = vpop.f32.mrf.mxu0
    %v3360 = vadd.f32 0.0, %v3359
    %v3361 = vpop.f32.mrf.mxu0
    %3362 = vmatprep.mubr.f32.mxu0 0.0
    %3363 = vmatmul.mubr.f32.gmra.mxu0 %v3279
    %v3364 = vpop.f32.mrf.mxu0
    %v3365 = vadd.f32 0.0, %v3364
    %v3366 = vpop.f32.mrf.mxu0
    %3367 = vmatprep.mubr.f32.mxu0 0.0
    %3368 = vmatmul.mubr.f32.gmra.mxu0 %v3282
    %v3369 = vpop.f32.mrf.mxu0
    %v3370 = vadd.f32 0.0, %v3369
    %v3371 = vpop.f32.mrf.mxu0
    %3372 = vmatprep.mubr.f32.mxu0 0.0
    %3373 = vmatmul.mubr.f32.gmra.mxu0 %v3285
    %v3374 = vpop.f32.mrf.mxu0
    %v3375 = vadd.f32 0.0, %v3374
    %v3376 = vpop.f32.mrf.mxu0
    %3377 = vdwg.mxu0
    %v3379 = vsel %vm1607, %v2027, 0
    %v3382 = vsel %vm1607, %v2028, 0
    %v3385 = vsel %vm1607, %v2029, 0
    %v3388 = vsel %vm1607, %v2030, 0
    %v3391 = vsel %vm1607, %v2857, 0
    %v3394 = vsel %vm1607, %v2858, 0
    %3396 = vmatprep.subr.mxu0 0.0
    %3397 = vmatpush1.xpose.msra.mxu0 0.0
    %3398 = vmatprep.subr.mxu0 0.0
    %3399 = vmatpush1.xpose.msra.mxu0 0.0
    %3400 = vmatprep.subr.mxu0 0.0
    %3401 = vmatpush1.xpose.msra.mxu0 0.0
    %3402 = vmatprep.subr.mxu0 0.0
    %3403 = vmatpush1.xpose.msra.mxu0 0.0
    %3404 = vmatprep.subr.mxu0 0.0
    %3405 = vmatpush1.xpose.msra.mxu0 0.0
    %3406 = vmatprep.subr.mxu0 0.0
    %3407 = vmatpush1.xpose.msra.mxu0 0.0
    %3408 = vmatprep.subr.mxu0 0.0
    %3409 = vmatpush1.xpose.msra.mxu0 0.0
    %3410 = vmatprep.subr.mxu0 0.0
    %3411 = vmatpush1.xpose.msra.mxu0 0.0
    %3412 = vmatprep.subr.mxu0 0.0
    %3413 = vmatpush1.xpose.msra.mxu0 0.0
    %3414 = vmatprep.subr.mxu0 0.0
    %3415 = vmatpush1.xpose.msra.mxu0 0.0
    %3416 = vmatprep.subr.mxu0 0.0
    %3417 = vmatpush1.xpose.msra.mxu0 0.0
    %3418 = vmatprep.subr.mxu0 0.0
    %3419 = vmatpush1.xpose.msra.mxu0 0.0
    %3420 = vmatprep.subr.mxu0 0.0
    %3421 = vmatpush1.xpose.msra.mxu0 0.0
    %3422 = vmatprep.subr.mxu0 0.0
    %3423 = vmatpush1.xpose.msra.mxu0 0.0
    %3424 = vmatprep.subr.mxu0 0.0
    %3425 = vmatpush1.xpose.msra.mxu0 %v3394
    %3426 = vmatprep.subr.mxu0 0.0
    %3427 = vmatpush1.xpose.msra.mxu0 %v3391
    %3428 = vmatprep.subr.mxu0 0.0
    %3429 = vmatpush2.xpose.msra.mxu0 0.0
    %3430 = vmatprep.subr.mxu0 0.0
    %3431 = vmatpush2.xpose.msra.mxu0 0.0
    %3432 = vmatprep.subr.mxu0 0.0
    %3433 = vmatpush2.xpose.msra.mxu0 0.0
    %3434 = vmatprep.subr.mxu0 0.0
    %3435 = vmatpush2.xpose.msra.mxu0 0.0
    %3436 = vmatprep.subr.mxu0 0.0
    %3437 = vmatpush2.xpose.msra.mxu0 0.0
    %3438 = vmatprep.subr.mxu0 0.0
    %3439 = vmatpush2.xpose.msra.mxu0 0.0
    %3440 = vmatprep.subr.mxu0 0.0
    %3441 = vmatpush2.xpose.msra.mxu0 0.0
    %3442 = vmatprep.subr.mxu0 0.0
    %3443 = vmatpush2.xpose.msra.mxu0 0.0
    %3444 = vmatprep.subr.mxu0 0.0
    %3445 = vmatpush2.xpose.msra.mxu0 0.0
    %3446 = vmatprep.subr.mxu0 0.0
    %3447 = vmatpush2.xpose.msra.mxu0 0.0
    %3448 = vmatprep.subr.mxu0 0.0
    %3449 = vmatpush2.xpose.msra.mxu0 0.0
    %3450 = vmatprep.subr.mxu0 0.0
    %3451 = vmatpush2.xpose.msra.mxu0 0.0
    %3452 = vmatprep.subr.mxu0 0.0
    %3453 = vmatpush2.xpose.msra.mxu0 0.0
    %3454 = vmatprep.subr.mxu0 0.0
    %3455 = vmatpush2.xpose.msra.mxu0 0.0
    %3456 = vmatprep.subr.mxu0 0.0
    %3457 = vmatpush2.xpose.msra.mxu0 0.0
    %3458 = vmatprep.subr.mxu0 0.0
    %3459 = vmatpush2.xpose.msra.mxu0 0.0
    %3460 = vmatprep.mubr.f32.mxu0 0.0
    %3461 = vmatmul.mubr.f32.gmra.mxu0 %v3379
    %v3462 = vpop.f32.mrf.mxu0
    %v3463 = vadd.f32 0.0, %v3462
    %v3464 = vpop.f32.mrf.mxu0
    %3465 = vmatprep.mubr.f32.mxu0 0.0
    %3466 = vmatmul.mubr.f32.gmra.mxu0 %v3382
    %v3467 = vpop.f32.mrf.mxu0
    %v3468 = vadd.f32 0.0, %v3467
    %v3469 = vpop.f32.mrf.mxu0
    %3470 = vmatprep.mubr.f32.mxu0 0.0
    %3471 = vmatmul.mubr.f32.gmra.mxu0 %v3385
    %v3472 = vpop.f32.mrf.mxu0
    %v3473 = vadd.f32 0.0, %v3472
    %v3474 = vpop.f32.mrf.mxu0
    %3475 = vmatprep.mubr.f32.mxu0 0.0
    %3476 = vmatmul.mubr.f32.gmra.mxu0 %v3388
    %v3477 = vpop.f32.mrf.mxu0
    %v3478 = vadd.f32 0.0, %v3477
    %v3479 = vpop.f32.mrf.mxu0
    %3480 = vdwg.mxu0
    %v3482 = vsel %vm1607, %v2031, 0
    %v3485 = vsel %vm1607, %v2032, 0
    %v3488 = vsel %vm1607, %v2033, 0
    %v3491 = vsel %vm1607, %v2034, 0
    %v3494 = vsel %vm1607, %v2859, 0
    %v3497 = vsel %vm1607, %v2860, 0
    %3499 = vmatprep.subr.mxu0 0.0
    %3500 = vmatpush1.xpose.msra.mxu0 0.0
    %3501 = vmatprep.subr.mxu0 0.0
    %3502 = vmatpush1.xpose.msra.mxu0 0.0
    %3503 = vmatprep.subr.mxu0 0.0
    %3504 = vmatpush1.xpose.msra.mxu0 0.0
    %3505 = vmatprep.subr.mxu0 0.0
    %3506 = vmatpush1.xpose.msra.mxu0 0.0
    %3507 = vmatprep.subr.mxu0 0.0
    %3508 = vmatpush1.xpose.msra.mxu0 0.0
    %3509 = vmatprep.subr.mxu0 0.0
    %3510 = vmatpush1.xpose.msra.mxu0 0.0
    %3511 = vmatprep.subr.mxu0 0.0
    %3512 = vmatpush1.xpose.msra.mxu0 0.0
    %3513 = vmatprep.subr.mxu0 0.0
    %3514 = vmatpush1.xpose.msra.mxu0 0.0
    %3515 = vmatprep.subr.mxu0 0.0
    %3516 = vmatpush1.xpose.msra.mxu0 0.0
    %3517 = vmatprep.subr.mxu0 0.0
    %3518 = vmatpush1.xpose.msra.mxu0 0.0
    %3519 = vmatprep.subr.mxu0 0.0
    %3520 = vmatpush1.xpose.msra.mxu0 0.0
    %3521 = vmatprep.subr.mxu0 0.0
    %3522 = vmatpush1.xpose.msra.mxu0 0.0
    %3523 = vmatprep.subr.mxu0 0.0
    %3524 = vmatpush1.xpose.msra.mxu0 0.0
    %3525 = vmatprep.subr.mxu0 0.0
    %3526 = vmatpush1.xpose.msra.mxu0 0.0
    %3527 = vmatprep.subr.mxu0 0.0
    %3528 = vmatpush1.xpose.msra.mxu0 %v3497
    %3529 = vmatprep.subr.mxu0 0.0
    %3530 = vmatpush1.xpose.msra.mxu0 %v3494
    %3531 = vmatprep.subr.mxu0 0.0
    %3532 = vmatpush2.xpose.msra.mxu0 0.0
    %3533 = vmatprep.subr.mxu0 0.0
    %3534 = vmatpush2.xpose.msra.mxu0 0.0
    %3535 = vmatprep.subr.mxu0 0.0
    %3536 = vmatpush2.xpose.msra.mxu0 0.0
    %3537 = vmatprep.subr.mxu0 0.0
    %3538 = vmatpush2.xpose.msra.mxu0 0.0
    %3539 = vmatprep.subr.mxu0 0.0
    %3540 = vmatpush2.xpose.msra.mxu0 0.0
    %3541 = vmatprep.subr.mxu0 0.0
    %3542 = vmatpush2.xpose.msra.mxu0 0.0
    %3543 = vmatprep.subr.mxu0 0.0
    %3544 = vmatpush2.xpose.msra.mxu0 0.0
    %3545 = vmatprep.subr.mxu0 0.0
    %3546 = vmatpush2.xpose.msra.mxu0 0.0
    %3547 = vmatprep.subr.mxu0 0.0
    %3548 = vmatpush2.xpose.msra.mxu0 0.0
    %3549 = vmatprep.subr.mxu0 0.0
    %3550 = vmatpush2.xpose.msra.mxu0 0.0
    %3551 = vmatprep.subr.mxu0 0.0
    %3552 = vmatpush2.xpose.msra.mxu0 0.0
    %3553 = vmatprep.subr.mxu0 0.0
    %3554 = vmatpush2.xpose.msra.mxu0 0.0
    %3555 = vmatprep.subr.mxu0 0.0
    %3556 = vmatpush2.xpose.msra.mxu0 0.0
    %3557 = vmatprep.subr.mxu0 0.0
    %3558 = vmatpush2.xpose.msra.mxu0 0.0
    %3559 = vmatprep.subr.mxu0 0.0
    %3560 = vmatpush2.xpose.msra.mxu0 0.0
    %3561 = vmatprep.subr.mxu0 0.0
    %3562 = vmatpush2.xpose.msra.mxu0 0.0
    %3563 = vmatprep.mubr.f32.mxu0 0.0
    %3564 = vmatmul.mubr.f32.gmra.mxu0 %v3482
    %v3565 = vpop.f32.mrf.mxu0
    %v3566 = vadd.f32 0.0, %v3565
    %v3567 = vpop.f32.mrf.mxu0
    %3568 = vmatprep.mubr.f32.mxu0 0.0
    %3569 = vmatmul.mubr.f32.gmra.mxu0 %v3485
    %v3570 = vpop.f32.mrf.mxu0
    %v3571 = vadd.f32 0.0, %v3570
    %v3572 = vpop.f32.mrf.mxu0
    %3573 = vmatprep.mubr.f32.mxu0 0.0
    %3574 = vmatmul.mubr.f32.gmra.mxu0 %v3488
    %v3575 = vpop.f32.mrf.mxu0
    %v3576 = vadd.f32 0.0, %v3575
    %v3577 = vpop.f32.mrf.mxu0
    %3578 = vmatprep.mubr.f32.mxu0 0.0
    %3579 = vmatmul.mubr.f32.gmra.mxu0 %v3491
    %v3580 = vpop.f32.mrf.mxu0
    %v3581 = vadd.f32 0.0, %v3580
    %v3582 = vpop.f32.mrf.mxu0
    %3583 = vdwg.mxu0
    %v3585 = vsel %vm1607, %v2035, 0
    %v3588 = vsel %vm1607, %v2036, 0
    %v3591 = vsel %vm1607, %v2037, 0
    %v3594 = vsel %vm1607, %v2038, 0
    %v3597 = vsel %vm1607, %v2861, 0
    %v3600 = vsel %vm1607, %v2862, 0
    %3602 = vmatprep.subr.mxu0 0.0
    %3603 = vmatpush1.xpose.msra.mxu0 0.0
    %3604 = vmatprep.subr.mxu0 0.0
    %3605 = vmatpush1.xpose.msra.mxu0 0.0
    %3606 = vmatprep.subr.mxu0 0.0
    %3607 = vmatpush1.xpose.msra.mxu0 0.0
    %3608 = vmatprep.subr.mxu0 0.0
    %3609 = vmatpush1.xpose.msra.mxu0 0.0
    %3610 = vmatprep.subr.mxu0 0.0
    %3611 = vmatpush1.xpose.msra.mxu0 0.0
    %3612 = vmatprep.subr.mxu0 0.0
    %3613 = vmatpush1.xpose.msra.mxu0 0.0
    %3614 = vmatprep.subr.mxu0 0.0
    %3615 = vmatpush1.xpose.msra.mxu0 0.0
    %3616 = vmatprep.subr.mxu0 0.0
    %3617 = vmatpush1.xpose.msra.mxu0 0.0
    %3618 = vmatprep.subr.mxu0 0.0
    %3619 = vmatpush1.xpose.msra.mxu0 0.0
    %3620 = vmatprep.subr.mxu0 0.0
    %3621 = vmatpush1.xpose.msra.mxu0 0.0
    %3622 = vmatprep.subr.mxu0 0.0
    %3623 = vmatpush1.xpose.msra.mxu0 0.0
    %3624 = vmatprep.subr.mxu0 0.0
    %3625 = vmatpush1.xpose.msra.mxu0 0.0
    %3626 = vmatprep.subr.mxu0 0.0
    %3627 = vmatpush1.xpose.msra.mxu0 0.0
    %3628 = vmatprep.subr.mxu0 0.0
    %3629 = vmatpush1.xpose.msra.mxu0 0.0
    %3630 = vmatprep.subr.mxu0 0.0
    %3631 = vmatpush1.xpose.msra.mxu0 %v3600
    %3632 = vmatprep.subr.mxu0 0.0
    %3633 = vmatpush1.xpose.msra.mxu0 %v3597
    %3634 = vmatprep.subr.mxu0 0.0
    %3635 = vmatpush2.xpose.msra.mxu0 0.0
    %3636 = vmatprep.subr.mxu0 0.0
    %3637 = vmatpush2.xpose.msra.mxu0 0.0
    %3638 = vmatprep.subr.mxu0 0.0
    %3639 = vmatpush2.xpose.msra.mxu0 0.0
    %3640 = vmatprep.subr.mxu0 0.0
    %3641 = vmatpush2.xpose.msra.mxu0 0.0
    %3642 = vmatprep.subr.mxu0 0.0
    %3643 = vmatpush2.xpose.msra.mxu0 0.0
    %3644 = vmatprep.subr.mxu0 0.0
    %3645 = vmatpush2.xpose.msra.mxu0 0.0
    %3646 = vmatprep.subr.mxu0 0.0
    %3647 = vmatpush2.xpose.msra.mxu0 0.0
    %3648 = vmatprep.subr.mxu0 0.0
    %3649 = vmatpush2.xpose.msra.mxu0 0.0
    %3650 = vmatprep.subr.mxu0 0.0
    %3651 = vmatpush2.xpose.msra.mxu0 0.0
    %3652 = vmatprep.subr.mxu0 0.0
    %3653 = vmatpush2.xpose.msra.mxu0 0.0
    %3654 = vmatprep.subr.mxu0 0.0
    %3655 = vmatpush2.xpose.msra.mxu0 0.0
    %3656 = vmatprep.subr.mxu0 0.0
    %3657 = vmatpush2.xpose.msra.mxu0 0.0
    %3658 = vmatprep.subr.mxu0 0.0
    %3659 = vmatpush2.xpose.msra.mxu0 0.0
    %3660 = vmatprep.subr.mxu0 0.0
    %3661 = vmatpush2.xpose.msra.mxu0 0.0
    %3662 = vmatprep.subr.mxu0 0.0
    %3663 = vmatpush2.xpose.msra.mxu0 0.0
    %3664 = vmatprep.subr.mxu0 0.0
    %3665 = vmatpush2.xpose.msra.mxu0 0.0
    %3666 = vmatprep.mubr.f32.mxu0 0.0
    %3667 = vmatmul.mubr.f32.gmra.mxu0 %v3585
    %v3668 = vpop.f32.mrf.mxu0
    %v3669 = vadd.f32 0.0, %v3668
    %v3670 = vpop.f32.mrf.mxu0
    %3671 = vmatprep.mubr.f32.mxu0 0.0
    %3672 = vmatmul.mubr.f32.gmra.mxu0 %v3588
    %v3673 = vpop.f32.mrf.mxu0
    %v3674 = vadd.f32 0.0, %v3673
    %v3675 = vpop.f32.mrf.mxu0
    %3676 = vmatprep.mubr.f32.mxu0 0.0
    %3677 = vmatmul.mubr.f32.gmra.mxu0 %v3591
    %v3678 = vpop.f32.mrf.mxu0
    %v3679 = vadd.f32 0.0, %v3678
    %v3680 = vpop.f32.mrf.mxu0
    %3681 = vmatprep.mubr.f32.mxu0 0.0
    %3682 = vmatmul.mubr.f32.gmra.mxu0 %v3594
    %v3683 = vpop.f32.mrf.mxu0
    %v3684 = vadd.f32 0.0, %v3683
    %v3685 = vpop.f32.mrf.mxu0
    %3686 = vdwg.mxu0
    %v3687 = vld [vmem:[#allocation13] sm:$0xff]
    %v3688 = vld [vmem:[#allocation13 + $0x8] sm:$0xff]
    %v3689 = vld [vmem:[#allocation13 + $0x10] sm:$0xff]
    %v3690 = vld [vmem:[#allocation13 + $0x18] sm:$0xff]
    %v3691 = vld [vmem:[#allocation13 + $0x20] sm:$0xff]
    %v3692 = vld [vmem:[#allocation13 + $0x28] sm:$0xff]
    %v3693 = vld [vmem:[#allocation13 + $0x30] sm:$0xff]
    %v3694 = vld [vmem:[#allocation13 + $0x38] sm:$0xff]
    %v3695 = vld [vmem:[#allocation13 + $0x40] sm:$0xff]
    %v3696 = vld [vmem:[#allocation13 + $0x48] sm:$0xff]
    %v3697 = vld [vmem:[#allocation13 + $0x50] sm:$0xff]
    %v3698 = vld [vmem:[#allocation13 + $0x58] sm:$0xff]
    %v3699 = vld [vmem:[#allocation13 + $0x60] sm:$0xff]
    %v3700 = vld [vmem:[#allocation13 + $0x68] sm:$0xff]
    %v3701 = vld [vmem:[#allocation13 + $0x70] sm:$0xff]
    %v3702 = vld [vmem:[#allocation13 + $0x78] sm:$0xff]
    %v3703 = vld [vmem:[#allocation13 + $0x80] sm:$0xff]
    %v3704 = vld [vmem:[#allocation13 + $0x88] sm:$0xff]
    %v3705 = vld [vmem:[#allocation13 + $0x90] sm:$0xff]
    %v3706 = vld [vmem:[#allocation13 + $0x98] sm:$0xff]
    %v3707 = vld [vmem:[#allocation13 + $0xa0] sm:$0xff]
    %v3708 = vld [vmem:[#allocation13 + $0xa8] sm:$0xff]
    %v3709 = vld [vmem:[#allocation13 + $0xb0] sm:$0xff]
    %v3710 = vld [vmem:[#allocation13 + $0xb8] sm:$0xff]
    %v3711 = vld [vmem:[#allocation13 + $0xc0] sm:$0xff]
    %v3712 = vld [vmem:[#allocation13 + $0xc8] sm:$0xff]
    %v3713 = vld [vmem:[#allocation13 + $0xd0] sm:$0xff]
    %v3714 = vld [vmem:[#allocation13 + $0xd8] sm:$0xff]
    %v3715 = vld [vmem:[#allocation13 + $0xe0] sm:$0xff]
    %v3716 = vld [vmem:[#allocation13 + $0xe8] sm:$0xff]
    %v3717 = vld [vmem:[#allocation13 + $0xf0] sm:$0xff]
    %v3718 = vld [vmem:[#allocation13 + $0xf8] sm:$0xff]
    %v3719 = vld [vmem:[#allocation13 + $0x100] sm:$0xff]
    %v3720 = vld [vmem:[#allocation13 + $0x108] sm:$0xff]
    %v3721 = vld [vmem:[#allocation13 + $0x110] sm:$0xff]
    %v3722 = vld [vmem:[#allocation13 + $0x118] sm:$0xff]
    %v3723 = vld [vmem:[#allocation13 + $0x120] sm:$0xff]
    %v3724 = vld [vmem:[#allocation13 + $0x128] sm:$0xff]
    %v3725 = vld [vmem:[#allocation13 + $0x130] sm:$0xff]
    %v3726 = vld [vmem:[#allocation13 + $0x138] sm:$0xff]
    %v3727 = vld [vmem:[#allocation13 + $0x140] sm:$0xff]
    %v3728 = vld [vmem:[#allocation13 + $0x148] sm:$0xff]
    %v3729 = vld [vmem:[#allocation13 + $0x150] sm:$0xff]
    %v3730 = vld [vmem:[#allocation13 + $0x158] sm:$0xff]
    %v3731 = vld [vmem:[#allocation13 + $0x160] sm:$0xff]
    %v3732 = vld [vmem:[#allocation13 + $0x168] sm:$0xff]
    %v3733 = vld [vmem:[#allocation13 + $0x170] sm:$0xff]
    %v3734 = vld [vmem:[#allocation13 + $0x178] sm:$0xff]
    %v3735 = vld [vmem:[#allocation13 + $0x180] sm:$0xff]
    %v3736 = vld [vmem:[#allocation13 + $0x188] sm:$0xff]
    %v3737 = vld [vmem:[#allocation13 + $0x190] sm:$0xff]
    %v3738 = vld [vmem:[#allocation13 + $0x198] sm:$0xff]
    %v3739 = vld [vmem:[#allocation13 + $0x1a0] sm:$0xff]
    %v3740 = vld [vmem:[#allocation13 + $0x1a8] sm:$0xff]
    %v3741 = vld [vmem:[#allocation13 + $0x1b0] sm:$0xff]
    %v3742 = vld [vmem:[#allocation13 + $0x1b8] sm:$0xff]
    %v3743 = vld [vmem:[#allocation13 + $0x1c0] sm:$0xff]
    %v3744 = vld [vmem:[#allocation13 + $0x1c8] sm:$0xff]
    %v3745 = vld [vmem:[#allocation13 + $0x1d0] sm:$0xff]
    %v3746 = vld [vmem:[#allocation13 + $0x1d8] sm:$0xff]
    %v3747 = vld [vmem:[#allocation13 + $0x1e0] sm:$0xff]
    %v3748 = vld [vmem:[#allocation13 + $0x1e8] sm:$0xff]
    %v3749 = vld [vmem:[#allocation13 + $0x1f0] sm:$0xff]
    %v3750 = vld [vmem:[#allocation13 + $0x1f8] sm:$0xff]
    %3751 = vmatprep.subr.mxu0 0.0
    %3752 = vmatpush1.msra.mxu0 %v3272
    %3753 = vmatprep.subr.mxu0 0.0
    %3754 = vmatpush1.msra.mxu0 %v3267
    %3755 = vmatprep.subr.mxu0 0.0
    %3756 = vmatpush1.msra.mxu0 %v3262
    %3757 = vmatprep.subr.mxu0 0.0
    %3758 = vmatpush1.msra.mxu0 %v3257
    %3759 = vmatprep.subr.mxu0 0.0
    %3760 = vmatpush1.msra.mxu0 %v3169
    %3761 = vmatprep.subr.mxu0 0.0
    %3762 = vmatpush1.msra.mxu0 %v3164
    %3763 = vmatprep.subr.mxu0 0.0
    %3764 = vmatpush1.msra.mxu0 %v3159
    %3765 = vmatprep.subr.mxu0 0.0
    %3766 = vmatpush1.msra.mxu0 %v3154
    %3767 = vmatprep.subr.mxu0 0.0
    %3768 = vmatpush1.msra.mxu0 %v3066
    %3769 = vmatprep.subr.mxu0 0.0
    %3770 = vmatpush1.msra.mxu0 %v3061
    %3771 = vmatprep.subr.mxu0 0.0
    %3772 = vmatpush1.msra.mxu0 %v3056
    %3773 = vmatprep.subr.mxu0 0.0
    %3774 = vmatpush1.msra.mxu0 %v3051
    %3775 = vmatprep.subr.mxu0 0.0
    %3776 = vmatpush1.msra.mxu0 %v2963
    %3777 = vmatprep.subr.mxu0 0.0
    %3778 = vmatpush1.msra.mxu0 %v2958
    %3779 = vmatprep.subr.mxu0 0.0
    %3780 = vmatpush1.msra.mxu0 %v2953
    %3781 = vmatprep.subr.mxu0 0.0
    %3782 = vmatpush1.msra.mxu0 %v2948
    %3783 = vmatprep.subr.mxu0 0.0
    %3784 = vmatpush2.msra.mxu0 %v3684
    %3785 = vmatprep.subr.mxu0 0.0
    %3786 = vmatpush2.msra.mxu0 %v3679
    %3787 = vmatprep.subr.mxu0 0.0
    %3788 = vmatpush2.msra.mxu0 %v3674
    %3789 = vmatprep.subr.mxu0 0.0
    %3790 = vmatpush2.msra.mxu0 %v3669
    %3791 = vmatprep.subr.mxu0 0.0
    %3792 = vmatpush2.msra.mxu0 %v3581
    %3793 = vmatprep.subr.mxu0 0.0
    %3794 = vmatpush2.msra.mxu0 %v3576
    %3795 = vmatprep.subr.mxu0 0.0
    %3796 = vmatpush2.msra.mxu0 %v3571
    %3797 = vmatprep.subr.mxu0 0.0
    %3798 = vmatpush2.msra.mxu0 %v3566
    %3799 = vmatprep.subr.mxu0 0.0
    %3800 = vmatpush2.msra.mxu0 %v3478
    %3801 = vmatprep.subr.mxu0 0.0
    %3802 = vmatpush2.msra.mxu0 %v3473
    %3803 = vmatprep.subr.mxu0 0.0
    %3804 = vmatpush2.msra.mxu0 %v3468
    %3805 = vmatprep.subr.mxu0 0.0
    %3806 = vmatpush2.msra.mxu0 %v3463
    %3807 = vmatprep.subr.mxu0 0.0
    %3808 = vmatpush2.msra.mxu0 %v3375
    %3809 = vmatprep.subr.mxu0 0.0
    %3810 = vmatpush2.msra.mxu0 %v3370
    %3811 = vmatprep.subr.mxu0 0.0
    %3812 = vmatpush2.msra.mxu0 %v3365
    %3813 = vmatprep.subr.mxu0 0.0
    %3814 = vmatpush2.msra.mxu0 %v3360
    %3815 = vmatprep.mubr.f32.mxu0 %v3688
    %3816 = vmatmul.mubr.f32.gmra.mxu0 %v3687
    %v3817 = vpop.f32.mrf.mxu0
    %v3818 = vadd.f32 0.0, %v3817
    %v3819 = vpop.f32.mrf.mxu0
    %3820 = vmatprep.mubr.f32.mxu0 %v3690
    %3821 = vmatmul.mubr.f32.gmra.mxu0 %v3689
    %v3822 = vpop.f32.mrf.mxu0
    %v3823 = vadd.f32 0.0, %v3822
    %v3824 = vpop.f32.mrf.mxu0
    %3825 = vmatprep.mubr.f32.mxu0 %v3692
    %3826 = vmatmul.mubr.f32.gmra.mxu0 %v3691
    %v3827 = vpop.f32.mrf.mxu0
    %v3828 = vadd.f32 0.0, %v3827
    %v3829 = vpop.f32.mrf.mxu0
    %3830 = vmatprep.mubr.f32.mxu0 %v3694
    %3831 = vmatmul.mubr.f32.gmra.mxu0 %v3693
    %v3832 = vpop.f32.mrf.mxu0
    %v3833 = vadd.f32 0.0, %v3832
    %v3834 = vpop.f32.mrf.mxu0
    %3835 = vmatprep.mubr.f32.mxu0 %v3696
    %3836 = vmatmul.mubr.f32.gmra.mxu0 %v3695
    %v3837 = vpop.f32.mrf.mxu0
    %v3838 = vadd.f32 0.0, %v3837
    %v3839 = vpop.f32.mrf.mxu0
    %3840 = vmatprep.mubr.f32.mxu0 %v3698
    %3841 = vmatmul.mubr.f32.gmra.mxu0 %v3697
    %v3842 = vpop.f32.mrf.mxu0
    %v3843 = vadd.f32 0.0, %v3842
    %v3844 = vpop.f32.mrf.mxu0
    %3845 = vmatprep.mubr.f32.mxu0 %v3700
    %3846 = vmatmul.mubr.f32.gmra.mxu0 %v3699
    %v3847 = vpop.f32.mrf.mxu0
    %v3848 = vadd.f32 0.0, %v3847
    %v3849 = vpop.f32.mrf.mxu0
    %3850 = vmatprep.mubr.f32.mxu0 %v3702
    %3851 = vmatmul.mubr.f32.gmra.mxu0 %v3701
    %v3852 = vpop.f32.mrf.mxu0
    %v3853 = vadd.f32 0.0, %v3852
    %v3854 = vpop.f32.mrf.mxu0
    %3855 = vmatprep.mubr.f32.mxu0 %v3704
    %3856 = vmatmul.mubr.f32.gmra.mxu0 %v3703
    %v3857 = vpop.f32.mrf.mxu0
    %v3858 = vadd.f32 0.0, %v3857
    %v3859 = vpop.f32.mrf.mxu0
    %3860 = vmatprep.mubr.f32.mxu0 %v3706
    %3861 = vmatmul.mubr.f32.gmra.mxu0 %v3705
    %v3862 = vpop.f32.mrf.mxu0
    %v3863 = vadd.f32 0.0, %v3862
    %v3864 = vpop.f32.mrf.mxu0
    %3865 = vmatprep.mubr.f32.mxu0 %v3708
    %3866 = vmatmul.mubr.f32.gmra.mxu0 %v3707
    %v3867 = vpop.f32.mrf.mxu0
    %v3868 = vadd.f32 0.0, %v3867
    %v3869 = vpop.f32.mrf.mxu0
    %3870 = vmatprep.mubr.f32.mxu0 %v3710
    %3871 = vmatmul.mubr.f32.gmra.mxu0 %v3709
    %v3872 = vpop.f32.mrf.mxu0
    %v3873 = vadd.f32 0.0, %v3872
    %v3874 = vpop.f32.mrf.mxu0
    %3875 = vmatprep.mubr.f32.mxu0 %v3712
    %3876 = vmatmul.mubr.f32.gmra.mxu0 %v3711
    %v3877 = vpop.f32.mrf.mxu0
    %v3878 = vadd.f32 0.0, %v3877
    %v3879 = vpop.f32.mrf.mxu0
    %3880 = vmatprep.mubr.f32.mxu0 %v3714
    %3881 = vmatmul.mubr.f32.gmra.mxu0 %v3713
    %v3882 = vpop.f32.mrf.mxu0
    %v3883 = vadd.f32 0.0, %v3882
    %v3884 = vpop.f32.mrf.mxu0
    %3885 = vmatprep.mubr.f32.mxu0 %v3716
    %3886 = vmatmul.mubr.f32.gmra.mxu0 %v3715
    %v3887 = vpop.f32.mrf.mxu0
    %v3888 = vadd.f32 0.0, %v3887
    %v3889 = vpop.f32.mrf.mxu0
    %3890 = vmatprep.mubr.f32.mxu0 %v3718
    %3891 = vmatmul.mubr.f32.gmra.mxu0 %v3717
    %v3892 = vpop.f32.mrf.mxu0
    %v3893 = vadd.f32 0.0, %v3892
    %v3894 = vpop.f32.mrf.mxu0
    %3895 = vmatprep.mubr.f32.mxu0 %v3720
    %3896 = vmatmul.mubr.f32.gmra.mxu0 %v3719
    %v3897 = vpop.f32.mrf.mxu0
    %v3898 = vadd.f32 0.0, %v3897
    %v3899 = vpop.f32.mrf.mxu0
    %3900 = vmatprep.mubr.f32.mxu0 %v3722
    %3901 = vmatmul.mubr.f32.gmra.mxu0 %v3721
    %v3902 = vpop.f32.mrf.mxu0
    %v3903 = vadd.f32 0.0, %v3902
    %v3904 = vpop.f32.mrf.mxu0
    %3905 = vmatprep.mubr.f32.mxu0 %v3724
    %3906 = vmatmul.mubr.f32.gmra.mxu0 %v3723
    %v3907 = vpop.f32.mrf.mxu0
    %v3908 = vadd.f32 0.0, %v3907
    %v3909 = vpop.f32.mrf.mxu0
    %3910 = vmatprep.mubr.f32.mxu0 %v3726
    %3911 = vmatmul.mubr.f32.gmra.mxu0 %v3725
    %v3912 = vpop.f32.mrf.mxu0
    %v3913 = vadd.f32 0.0, %v3912
    %v3914 = vpop.f32.mrf.mxu0
    %3915 = vmatprep.mubr.f32.mxu0 %v3728
    %3916 = vmatmul.mubr.f32.gmra.mxu0 %v3727
    %v3917 = vpop.f32.mrf.mxu0
    %v3918 = vadd.f32 0.0, %v3917
    %v3919 = vpop.f32.mrf.mxu0
    %3920 = vmatprep.mubr.f32.mxu0 %v3730
    %3921 = vmatmul.mubr.f32.gmra.mxu0 %v3729
    %v3922 = vpop.f32.mrf.mxu0
    %v3923 = vadd.f32 0.0, %v3922
    %v3924 = vpop.f32.mrf.mxu0
    %3925 = vmatprep.mubr.f32.mxu0 %v3732
    %3926 = vmatmul.mubr.f32.gmra.mxu0 %v3731
    %v3927 = vpop.f32.mrf.mxu0
    %v3928 = vadd.f32 0.0, %v3927
    %v3929 = vpop.f32.mrf.mxu0
    %3930 = vmatprep.mubr.f32.mxu0 %v3734
    %3931 = vmatmul.mubr.f32.gmra.mxu0 %v3733
    %v3932 = vpop.f32.mrf.mxu0
    %v3933 = vadd.f32 0.0, %v3932
    %v3934 = vpop.f32.mrf.mxu0
    %3935 = vmatprep.mubr.f32.mxu0 %v3736
    %3936 = vmatmul.mubr.f32.gmra.mxu0 %v3735
    %v3937 = vpop.f32.mrf.mxu0
    %v3938 = vadd.f32 0.0, %v3937
    %v3939 = vpop.f32.mrf.mxu0
    %3940 = vmatprep.mubr.f32.mxu0 %v3738
    %3941 = vmatmul.mubr.f32.gmra.mxu0 %v3737
    %v3942 = vpop.f32.mrf.mxu0
    %v3943 = vadd.f32 0.0, %v3942
    %v3944 = vpop.f32.mrf.mxu0
    %3945 = vmatprep.mubr.f32.mxu0 %v3740
    %3946 = vmatmul.mubr.f32.gmra.mxu0 %v3739
    %v3947 = vpop.f32.mrf.mxu0
    %v3948 = vadd.f32 0.0, %v3947
    %v3949 = vpop.f32.mrf.mxu0
    %3950 = vmatprep.mubr.f32.mxu0 %v3742
    %3951 = vmatmul.mubr.f32.gmra.mxu0 %v3741
    %v3952 = vpop.f32.mrf.mxu0
    %v3953 = vadd.f32 0.0, %v3952
    %v3954 = vpop.f32.mrf.mxu0
    %3955 = vmatprep.mubr.f32.mxu0 %v3744
    %3956 = vmatmul.mubr.f32.gmra.mxu0 %v3743
    %v3957 = vpop.f32.mrf.mxu0
    %v3958 = vadd.f32 0.0, %v3957
    %v3959 = vpop.f32.mrf.mxu0
    %3960 = vmatprep.mubr.f32.mxu0 %v3746
    %3961 = vmatmul.mubr.f32.gmra.mxu0 %v3745
    %v3962 = vpop.f32.mrf.mxu0
    %v3963 = vadd.f32 0.0, %v3962
    %v3964 = vpop.f32.mrf.mxu0
    %3965 = vmatprep.mubr.f32.mxu0 %v3748
    %3966 = vmatmul.mubr.f32.gmra.mxu0 %v3747
    %v3967 = vpop.f32.mrf.mxu0
    %v3968 = vadd.f32 0.0, %v3967
    %v3969 = vpop.f32.mrf.mxu0
    %3970 = vmatprep.mubr.f32.mxu0 %v3750
    %3971 = vmatmul.mubr.f32.gmra.mxu0 %v3749
    %v3972 = vpop.f32.mrf.mxu0
    %v3973 = vadd.f32 0.0, %v3972
    %v3974 = vpop.f32.mrf.mxu0
    %3975 = vdwg.mxu0
    %3976 = vxpose.xlu0.b32.start [1/16] %v3818, 128
    %3977 = vxpose.xlu0.b32.cont [2/16] %v3823, 128
    %3978 = vxpose.xlu0.b32.cont [3/16] %v3828, 128
    %3979 = vxpose.xlu0.b32.cont [4/16] %v3833, 128
    %3980 = vxpose.xlu0.b32.cont [5/16] %v3838, 128
    %3981 = vxpose.xlu0.b32.cont [6/16] %v3843, 128
    %3982 = vxpose.xlu0.b32.cont [7/16] %v3848, 128
    %3983 = vxpose.xlu0.b32.cont [8/16] %v3853, 128
    %3984 = vxpose.xlu0.b32.cont [9/16] %v3858, 128
    %3985 = vxpose.xlu0.b32.cont [10/16] %v3863, 128
    %3986 = vxpose.xlu0.b32.cont [11/16] %v3868, 128
    %3987 = vxpose.xlu0.b32.cont [12/16] %v3873, 128
    %3988 = vxpose.xlu0.b32.cont [13/16] %v3878, 128
    %3989 = vxpose.xlu0.b32.cont [14/16] %v3883, 128
    %3990 = vxpose.xlu0.b32.cont [15/16] %v3888, 128
    %3991 = vxpose.xlu0.b32.end [16/16] %v3893, 128
    %v3992 = vpop.trf.xlu0
    %v3993 = vpop.trf.xlu0
    %v3994 = vpop.trf.xlu0
    %v3995 = vpop.trf.xlu0
    %v3996 = vpop.trf.xlu0
    %v3997 = vpop.trf.xlu0
    %v3998 = vpop.trf.xlu0
    %v3999 = vpop.trf.xlu0
    %v4000 = vpop.trf.xlu0
    %v4001 = vpop.trf.xlu0
    %v4002 = vpop.trf.xlu0
    %v4003 = vpop.trf.xlu0
    %v4004 = vpop.trf.xlu0
    %v4005 = vpop.trf.xlu0
    %v4006 = vpop.trf.xlu0
    %v4007 = vpop.trf.xlu0
    %4008 = vxpose.xlu0.b32.start [1/16] %v3898, 128
    %4009 = vxpose.xlu0.b32.cont [2/16] %v3903, 128
    %4010 = vxpose.xlu0.b32.cont [3/16] %v3908, 128
    %4011 = vxpose.xlu0.b32.cont [4/16] %v3913, 128
    %4012 = vxpose.xlu0.b32.cont [5/16] %v3918, 128
    %4013 = vxpose.xlu0.b32.cont [6/16] %v3923, 128
    %4014 = vxpose.xlu0.b32.cont [7/16] %v3928, 128
    %4015 = vxpose.xlu0.b32.cont [8/16] %v3933, 128
    %4016 = vxpose.xlu0.b32.cont [9/16] %v3938, 128
    %4017 = vxpose.xlu0.b32.cont [10/16] %v3943, 128
    %4018 = vxpose.xlu0.b32.cont [11/16] %v3948, 128
    %4019 = vxpose.xlu0.b32.cont [12/16] %v3953, 128
    %4020 = vxpose.xlu0.b32.cont [13/16] %v3958, 128
    %4021 = vxpose.xlu0.b32.cont [14/16] %v3963, 128
    %4022 = vxpose.xlu0.b32.cont [15/16] %v3968, 128
    %4023 = vxpose.xlu0.b32.end [16/16] %v3973, 128
    %v4024 = vpop.trf.xlu0
    %v4025 = vpop.trf.xlu0
    %v4026 = vpop.trf.xlu0
    %v4027 = vpop.trf.xlu0
    %v4028 = vpop.trf.xlu0
    %v4029 = vpop.trf.xlu0
    %v4030 = vpop.trf.xlu0
    %v4031 = vpop.trf.xlu0
    %v4032 = vpop.trf.xlu0
    %v4033 = vpop.trf.xlu0
    %v4034 = vpop.trf.xlu0
    %v4035 = vpop.trf.xlu0
    %v4036 = vpop.trf.xlu0
    %v4037 = vpop.trf.xlu0
    %v4038 = vpop.trf.xlu0
    %v4039 = vpop.trf.xlu0
    %v4040 = vld [vmem:[#allocation14] sm:$0x3]
    %v4042 = vlaneseq
    %v4043 = vshrl.u32 %v4042, 7
    %v4044 = vsub.s32 0, %v4043
    %v4045 = vrot.slane %v4040, %v4044
    %v4046 = vlaneseq
    %v4047 = vshrl.u32 %v4046, 7
    %v4048 = vsub.s32 1, %v4047
    %v4049 = vrot.slane %v4040, %v4048
    %v4052 = vadd.f32 %v3992, %v4045
    %v4053 = vadd.f32 %v4024, %v4049
    %v4054 = vadd.f32 %v3993, %v4045
    %v4055 = vadd.f32 %v4025, %v4049
    %v4056 = vadd.f32 %v249, %v4052
    %v4057 = vadd.f32 %v250, %v4053
    %v4058 = vadd.f32 %v251, %v4054
    %v4059 = vadd.f32 %v252, %v4055
    %v4060 = vld [vmem:[#allocation16] sm:$0x3]
    %v4061 = vld [vmem:[#allocation17] sm:$0x3]
    %v4062 = vadd.f32 %v4056, %v4057
    %4063 = vadd.xlane.f32.xlu0 %v4062
    %v4064 = vpop.xlane.xlu0 %4063
    %v4065 = vadd.f32 %v4058, %v4059
    %4066 = vadd.xlane.f32.xlu0 %v4065
    %v4067 = vpop.xlane.xlu0 %4066
    %v4068 = vrcp.pop 256.0
    %v4069 = vmul.f32 %v4064, %v4068
    %v4070 = vmul.f32 %v4067, %v4068
    %v4071 = vsub.f32 %v4056, %v4069
    %v4072 = vsub.f32 %v4057, %v4069
    %v4073 = vsub.f32 %v4058, %v4070
    %v4074 = vsub.f32 %v4059, %v4070
    %v4075 = vmul.f32 %v4071, %v4071
    %v4076 = vmul.f32 %v4072, %v4072
    %v4077 = vmul.f32 %v4073, %v4073
    %v4078 = vmul.f32 %v4074, %v4074
    %v4079 = vadd.f32 %v4075, %v4076
    %4080 = vadd.xlane.f32.xlu0 %v4079
    %v4081 = vpop.xlane.xlu0 %4080
    %v4082 = vadd.f32 %v4077, %v4078
    %4083 = vadd.xlane.f32.xlu0 %v4082
    %v4084 = vpop.xlane.xlu0 %4083
    %v4085 = vmul.f32 %v4081, %v4068
    %v4086 = vmul.f32 %v4084, %v4068
    %v4087 = vadd.f32 %v4085, 1e-05
    %v4088 = vadd.f32 %v4086, 1e-05
    %v4089 = vrsqrt.pop %v4087
    %v4090 = vrsqrt.pop %v4088
    %v4091 = vmul.f32 %v4071, %v4089
    %v4092 = vmul.f32 %v4072, %v4089
    %v4093 = vmul.f32 %v4073, %v4090
    %v4094 = vmul.f32 %v4074, %v4090
    %v4096 = vlaneseq
    %v4097 = vshrl.u32 %v4096, 7
    %v4098 = vsub.s32 0, %v4097
    %v4099 = vrot.slane %v4060, %v4098
    %v4100 = vlaneseq
    %v4101 = vshrl.u32 %v4100, 7
    %v4102 = vsub.s32 1, %v4101
    %v4103 = vrot.slane %v4060, %v4102
    %v4106 = vmul.f32 %v4091, %v4099
    %v4107 = vmul.f32 %v4092, %v4103
    %v4108 = vmul.f32 %v4093, %v4099
    %v4109 = vmul.f32 %v4094, %v4103
    %v4111 = vlaneseq
    %v4112 = vshrl.u32 %v4111, 7
    %v4113 = vsub.s32 0, %v4112
    %v4114 = vrot.slane %v4061, %v4113
    %v4115 = vlaneseq
    %v4116 = vshrl.u32 %v4115, 7
    %v4117 = vsub.s32 1, %v4116
    %v4118 = vrot.slane %v4061, %v4117
    %v4121 = vadd.f32 %v4106, %v4114
    %v4122 = vadd.f32 %v4107, %v4118
    %v4123 = vadd.f32 %v4108, %v4114
    %v4124 = vadd.f32 %v4109, %v4118
    %v4125 = vld [vmem:[#allocation19] sm:$0xff]
    %v4126 = vld [vmem:[#allocation19 + $0x8] sm:$0xff]
    %v4127 = vld [vmem:[#allocation19 + $0x10] sm:$0xff]
    %v4128 = vld [vmem:[#allocation19 + $0x18] sm:$0xff]
    %v4129 = vld [vmem:[#allocation19 + $0x20] sm:$0xff]
    %v4130 = vld [vmem:[#allocation19 + $0x28] sm:$0xff]
    %v4131 = vld [vmem:[#allocation19 + $0x30] sm:$0xff]
    %v4132 = vld [vmem:[#allocation19 + $0x38] sm:$0xff]
    %v4133 = vld [vmem:[#allocation19 + $0x40] sm:$0xff]
    %v4134 = vld [vmem:[#allocation19 + $0x48] sm:$0xff]
    %v4135 = vld [vmem:[#allocation19 + $0x50] sm:$0xff]
    %v4136 = vld [vmem:[#allocation19 + $0x58] sm:$0xff]
    %v4137 = vld [vmem:[#allocation19 + $0x60] sm:$0xff]
    %v4138 = vld [vmem:[#allocation19 + $0x68] sm:$0xff]
    %v4139 = vld [vmem:[#allocation19 + $0x70] sm:$0xff]
    %v4140 = vld [vmem:[#allocation19 + $0x78] sm:$0xff]
    %v4141 = vld [vmem:[#allocation19 + $0x80] sm:$0xff]
    %v4142 = vld [vmem:[#allocation19 + $0x88] sm:$0xff]
    %v4143 = vld [vmem:[#allocation19 + $0x90] sm:$0xff]
    %v4144 = vld [vmem:[#allocation19 + $0x98] sm:$0xff]
    %v4145 = vld [vmem:[#allocation19 + $0xa0] sm:$0xff]
    %v4146 = vld [vmem:[#allocation19 + $0xa8] sm:$0xff]
    %v4147 = vld [vmem:[#allocation19 + $0xb0] sm:$0xff]
    %v4148 = vld [vmem:[#allocation19 + $0xb8] sm:$0xff]
    %v4149 = vld [vmem:[#allocation19 + $0xc0] sm:$0xff]
    %v4150 = vld [vmem:[#allocation19 + $0xc8] sm:$0xff]
    %v4151 = vld [vmem:[#allocation19 + $0xd0] sm:$0xff]
    %v4152 = vld [vmem:[#allocation19 + $0xd8] sm:$0xff]
    %v4153 = vld [vmem:[#allocation19 + $0xe0] sm:$0xff]
    %v4154 = vld [vmem:[#allocation19 + $0xe8] sm:$0xff]
    %v4155 = vld [vmem:[#allocation19 + $0xf0] sm:$0xff]
    %v4156 = vld [vmem:[#allocation19 + $0xf8] sm:$0xff]
    %v4157 = vld [vmem:[#allocation19 + $0x100] sm:$0xff]
    %v4158 = vld [vmem:[#allocation19 + $0x108] sm:$0xff]
    %v4159 = vld [vmem:[#allocation19 + $0x110] sm:$0xff]
    %v4160 = vld [vmem:[#allocation19 + $0x118] sm:$0xff]
    %v4161 = vld [vmem:[#allocation19 + $0x120] sm:$0xff]
    %v4162 = vld [vmem:[#allocation19 + $0x128] sm:$0xff]
    %v4163 = vld [vmem:[#allocation19 + $0x130] sm:$0xff]
    %v4164 = vld [vmem:[#allocation19 + $0x138] sm:$0xff]
    %v4165 = vld [vmem:[#allocation19 + $0x140] sm:$0xff]
    %v4166 = vld [vmem:[#allocation19 + $0x148] sm:$0xff]
    %v4167 = vld [vmem:[#allocation19 + $0x150] sm:$0xff]
    %v4168 = vld [vmem:[#allocation19 + $0x158] sm:$0xff]
    %v4169 = vld [vmem:[#allocation19 + $0x160] sm:$0xff]
    %v4170 = vld [vmem:[#allocation19 + $0x168] sm:$0xff]
    %v4171 = vld [vmem:[#allocation19 + $0x170] sm:$0xff]
    %v4172 = vld [vmem:[#allocation19 + $0x178] sm:$0xff]
    %v4173 = vld [vmem:[#allocation19 + $0x180] sm:$0xff]
    %v4174 = vld [vmem:[#allocation19 + $0x188] sm:$0xff]
    %v4175 = vld [vmem:[#allocation19 + $0x190] sm:$0xff]
    %v4176 = vld [vmem:[#allocation19 + $0x198] sm:$0xff]
    %v4177 = vld [vmem:[#allocation19 + $0x1a0] sm:$0xff]
    %v4178 = vld [vmem:[#allocation19 + $0x1a8] sm:$0xff]
    %v4179 = vld [vmem:[#allocation19 + $0x1b0] sm:$0xff]
    %v4180 = vld [vmem:[#allocation19 + $0x1b8] sm:$0xff]
    %v4181 = vld [vmem:[#allocation19 + $0x1c0] sm:$0xff]
    %v4182 = vld [vmem:[#allocation19 + $0x1c8] sm:$0xff]
    %v4183 = vld [vmem:[#allocation19 + $0x1d0] sm:$0xff]
    %v4184 = vld [vmem:[#allocation19 + $0x1d8] sm:$0xff]
    %v4185 = vld [vmem:[#allocation19 + $0x1e0] sm:$0xff]
    %v4186 = vld [vmem:[#allocation19 + $0x1e8] sm:$0xff]
    %v4187 = vld [vmem:[#allocation19 + $0x1f0] sm:$0xff]
    %v4188 = vld [vmem:[#allocation19 + $0x1f8] sm:$0xff]
    %v4189 = vld [vmem:[#allocation20] sm:$0x3]
    %v4191 = vlaneseq
    %v4192 = vshrl.u32 %v4191, 7
    %v4193 = vsub.s32 0, %v4192
    %v4194 = vrot.slane %v4189, %v4193
    %v4195 = vlaneseq
    %v4196 = vshrl.u32 %v4195, 7
    %v4197 = vsub.s32 1, %v4196
    %v4198 = vrot.slane %v4189, %v4197
    %4201 = vmatprep.subr.mxu0 %v4156
    %4202 = vmatpush1.msra.mxu0 %v4155
    %4203 = vmatprep.subr.mxu0 %v4154
    %4204 = vmatpush1.msra.mxu0 %v4153
    %4205 = vmatprep.subr.mxu0 %v4152
    %4206 = vmatpush1.msra.mxu0 %v4151
    %4207 = vmatprep.subr.mxu0 %v4150
    %4208 = vmatpush1.msra.mxu0 %v4149
    %4209 = vmatprep.subr.mxu0 %v4148
    %4210 = vmatpush1.msra.mxu0 %v4147
    %4211 = vmatprep.subr.mxu0 %v4146
    %4212 = vmatpush1.msra.mxu0 %v4145
    %4213 = vmatprep.subr.mxu0 %v4144
    %4214 = vmatpush1.msra.mxu0 %v4143
    %4215 = vmatprep.subr.mxu0 %v4142
    %4216 = vmatpush1.msra.mxu0 %v4141
    %4217 = vmatprep.subr.mxu0 %v4140
    %4218 = vmatpush1.msra.mxu0 %v4139
    %4219 = vmatprep.subr.mxu0 %v4138
    %4220 = vmatpush1.msra.mxu0 %v4137
    %4221 = vmatprep.subr.mxu0 %v4136
    %4222 = vmatpush1.msra.mxu0 %v4135
    %4223 = vmatprep.subr.mxu0 %v4134
    %4224 = vmatpush1.msra.mxu0 %v4133
    %4225 = vmatprep.subr.mxu0 %v4132
    %4226 = vmatpush1.msra.mxu0 %v4131
    %4227 = vmatprep.subr.mxu0 %v4130
    %4228 = vmatpush1.msra.mxu0 %v4129
    %4229 = vmatprep.subr.mxu0 %v4128
    %4230 = vmatpush1.msra.mxu0 %v4127
    %4231 = vmatprep.subr.mxu0 %v4126
    %4232 = vmatpush1.msra.mxu0 %v4125
    %4233 = vmatprep.subr.mxu0 %v4188
    %4234 = vmatpush2.msra.mxu0 %v4187
    %4235 = vmatprep.subr.mxu0 %v4186
    %4236 = vmatpush2.msra.mxu0 %v4185
    %4237 = vmatprep.subr.mxu0 %v4184
    %4238 = vmatpush2.msra.mxu0 %v4183
    %4239 = vmatprep.subr.mxu0 %v4182
    %4240 = vmatpush2.msra.mxu0 %v4181
    %4241 = vmatprep.subr.mxu0 %v4180
    %4242 = vmatpush2.msra.mxu0 %v4179
    %4243 = vmatprep.subr.mxu0 %v4178
    %4244 = vmatpush2.msra.mxu0 %v4177
    %4245 = vmatprep.subr.mxu0 %v4176
    %4246 = vmatpush2.msra.mxu0 %v4175
    %4247 = vmatprep.subr.mxu0 %v4174
    %4248 = vmatpush2.msra.mxu0 %v4173
    %4249 = vmatprep.subr.mxu0 %v4172
    %4250 = vmatpush2.msra.mxu0 %v4171
    %4251 = vmatprep.subr.mxu0 %v4170
    %4252 = vmatpush2.msra.mxu0 %v4169
    %4253 = vmatprep.subr.mxu0 %v4168
    %4254 = vmatpush2.msra.mxu0 %v4167
    %4255 = vmatprep.subr.mxu0 %v4166
    %4256 = vmatpush2.msra.mxu0 %v4165
    %4257 = vmatprep.subr.mxu0 %v4164
    %4258 = vmatpush2.msra.mxu0 %v4163
    %4259 = vmatprep.subr.mxu0 %v4162
    %4260 = vmatpush2.msra.mxu0 %v4161
    %4261 = vmatprep.subr.mxu0 %v4160
    %4262 = vmatpush2.msra.mxu0 %v4159
    %4263 = vmatprep.subr.mxu0 %v4158
    %4264 = vmatpush2.msra.mxu0 %v4157
    %4265 = vmatprep.mubr.f32.mxu0 %v4122
    %4266 = vmatmul.mubr.f32.gmra.mxu0 %v4121
    %v4267 = vpop.f32.mrf.mxu0
    %v4268 = vadd.f32 %v4194, %v4267
    %v4269 = vpop.f32.mrf.mxu0
    %v4270 = vadd.f32 %v4198, %v4269
    %4271 = vmatprep.mubr.f32.mxu0 %v4124
    %4272 = vmatmul.mubr.f32.gmra.mxu0 %v4123
    %v4273 = vpop.f32.mrf.mxu0
    %v4274 = vadd.f32 %v4194, %v4273
    %v4275 = vpop.f32.mrf.mxu0
    %v4276 = vadd.f32 %v4198, %v4275
    %4277 = vdwg.mxu0
    %v4278 = vmax.f32 %v4268, 0.0
    %v4279 = vmax.f32 %v4270, 0.0
    %v4280 = vmax.f32 %v4274, 0.0
    %v4281 = vmax.f32 %v4276, 0.0
    %v4282 = vld [vmem:[#allocation22] sm:$0xff]
    %v4283 = vld [vmem:[#allocation22 + $0x8] sm:$0xff]
    %v4284 = vld [vmem:[#allocation22 + $0x10] sm:$0xff]
    %v4285 = vld [vmem:[#allocation22 + $0x18] sm:$0xff]
    %v4286 = vld [vmem:[#allocation22 + $0x20] sm:$0xff]
    %v4287 = vld [vmem:[#allocation22 + $0x28] sm:$0xff]
    %v4288 = vld [vmem:[#allocation22 + $0x30] sm:$0xff]
    %v4289 = vld [vmem:[#allocation22 + $0x38] sm:$0xff]
    %v4290 = vld [vmem:[#allocation22 + $0x40] sm:$0xff]
    %v4291 = vld [vmem:[#allocation22 + $0x48] sm:$0xff]
    %v4292 = vld [vmem:[#allocation22 + $0x50] sm:$0xff]
    %v4293 = vld [vmem:[#allocation22 + $0x58] sm:$0xff]
    %v4294 = vld [vmem:[#allocation22 + $0x60] sm:$0xff]
    %v4295 = vld [vmem:[#allocation22 + $0x68] sm:$0xff]
    %v4296 = vld [vmem:[#allocation22 + $0x70] sm:$0xff]
    %v4297 = vld [vmem:[#allocation22 + $0x78] sm:$0xff]
    %v4298 = vld [vmem:[#allocation22 + $0x80] sm:$0xff]
    %v4299 = vld [vmem:[#allocation22 + $0x88] sm:$0xff]
    %v4300 = vld [vmem:[#allocation22 + $0x90] sm:$0xff]
    %v4301 = vld [vmem:[#allocation22 + $0x98] sm:$0xff]
    %v4302 = vld [vmem:[#allocation22 + $0xa0] sm:$0xff]
    %v4303 = vld [vmem:[#allocation22 + $0xa8] sm:$0xff]
    %v4304 = vld [vmem:[#allocation22 + $0xb0] sm:$0xff]
    %v4305 = vld [vmem:[#allocation22 + $0xb8] sm:$0xff]
    %v4306 = vld [vmem:[#allocation22 + $0xc0] sm:$0xff]
    %v4307 = vld [vmem:[#allocation22 + $0xc8] sm:$0xff]
    %v4308 = vld [vmem:[#allocation22 + $0xd0] sm:$0xff]
    %v4309 = vld [vmem:[#allocation22 + $0xd8] sm:$0xff]
    %v4310 = vld [vmem:[#allocation22 + $0xe0] sm:$0xff]
    %v4311 = vld [vmem:[#allocation22 + $0xe8] sm:$0xff]
    %v4312 = vld [vmem:[#allocation22 + $0xf0] sm:$0xff]
    %v4313 = vld [vmem:[#allocation22 + $0xf8] sm:$0xff]
    %v4314 = vld [vmem:[#allocation22 + $0x100] sm:$0xff]
    %v4315 = vld [vmem:[#allocation22 + $0x108] sm:$0xff]
    %v4316 = vld [vmem:[#allocation22 + $0x110] sm:$0xff]
    %v4317 = vld [vmem:[#allocation22 + $0x118] sm:$0xff]
    %v4318 = vld [vmem:[#allocation22 + $0x120] sm:$0xff]
    %v4319 = vld [vmem:[#allocation22 + $0x128] sm:$0xff]
    %v4320 = vld [vmem:[#allocation22 + $0x130] sm:$0xff]
    %v4321 = vld [vmem:[#allocation22 + $0x138] sm:$0xff]
    %v4322 = vld [vmem:[#allocation22 + $0x140] sm:$0xff]
    %v4323 = vld [vmem:[#allocation22 + $0x148] sm:$0xff]
    %v4324 = vld [vmem:[#allocation22 + $0x150] sm:$0xff]
    %v4325 = vld [vmem:[#allocation22 + $0x158] sm:$0xff]
    %v4326 = vld [vmem:[#allocation22 + $0x160] sm:$0xff]
    %v4327 = vld [vmem:[#allocation22 + $0x168] sm:$0xff]
    %v4328 = vld [vmem:[#allocation22 + $0x170] sm:$0xff]
    %v4329 = vld [vmem:[#allocation22 + $0x178] sm:$0xff]
    %v4330 = vld [vmem:[#allocation22 + $0x180] sm:$0xff]
    %v4331 = vld [vmem:[#allocation22 + $0x188] sm:$0xff]
    %v4332 = vld [vmem:[#allocation22 + $0x190] sm:$0xff]
    %v4333 = vld [vmem:[#allocation22 + $0x198] sm:$0xff]
    %v4334 = vld [vmem:[#allocation22 + $0x1a0] sm:$0xff]
    %v4335 = vld [vmem:[#allocation22 + $0x1a8] sm:$0xff]
    %v4336 = vld [vmem:[#allocation22 + $0x1b0] sm:$0xff]
    %v4337 = vld [vmem:[#allocation22 + $0x1b8] sm:$0xff]
    %v4338 = vld [vmem:[#allocation22 + $0x1c0] sm:$0xff]
    %v4339 = vld [vmem:[#allocation22 + $0x1c8] sm:$0xff]
    %v4340 = vld [vmem:[#allocation22 + $0x1d0] sm:$0xff]
    %v4341 = vld [vmem:[#allocation22 + $0x1d8] sm:$0xff]
    %v4342 = vld [vmem:[#allocation22 + $0x1e0] sm:$0xff]
    %v4343 = vld [vmem:[#allocation22 + $0x1e8] sm:$0xff]
    %v4344 = vld [vmem:[#allocation22 + $0x1f0] sm:$0xff]
    %v4345 = vld [vmem:[#allocation22 + $0x1f8] sm:$0xff]
    %v4346 = vld [vmem:[#allocation23] sm:$0x3]
    %v4348 = vlaneseq
    %v4349 = vshrl.u32 %v4348, 7
    %v4350 = vsub.s32 0, %v4349
    %v4351 = vrot.slane %v4346, %v4350
    %v4352 = vlaneseq
    %v4353 = vshrl.u32 %v4352, 7
    %v4354 = vsub.s32 1, %v4353
    %v4355 = vrot.slane %v4346, %v4354
    %4358 = vmatprep.subr.mxu0 %v4313
    %4359 = vmatpush1.msra.mxu0 %v4312
    %4360 = vmatprep.subr.mxu0 %v4311
    %4361 = vmatpush1.msra.mxu0 %v4310
    %4362 = vmatprep.subr.mxu0 %v4309
    %4363 = vmatpush1.msra.mxu0 %v4308
    %4364 = vmatprep.subr.mxu0 %v4307
    %4365 = vmatpush1.msra.mxu0 %v4306
    %4366 = vmatprep.subr.mxu0 %v4305
    %4367 = vmatpush1.msra.mxu0 %v4304
    %4368 = vmatprep.subr.mxu0 %v4303
    %4369 = vmatpush1.msra.mxu0 %v4302
    %4370 = vmatprep.subr.mxu0 %v4301
    %4371 = vmatpush1.msra.mxu0 %v4300
    %4372 = vmatprep.subr.mxu0 %v4299
    %4373 = vmatpush1.msra.mxu0 %v4298
    %4374 = vmatprep.subr.mxu0 %v4297
    %4375 = vmatpush1.msra.mxu0 %v4296
    %4376 = vmatprep.subr.mxu0 %v4295
    %4377 = vmatpush1.msra.mxu0 %v4294
    %4378 = vmatprep.subr.mxu0 %v4293
    %4379 = vmatpush1.msra.mxu0 %v4292
    %4380 = vmatprep.subr.mxu0 %v4291
    %4381 = vmatpush1.msra.mxu0 %v4290
    %4382 = vmatprep.subr.mxu0 %v4289
    %4383 = vmatpush1.msra.mxu0 %v4288
    %4384 = vmatprep.subr.mxu0 %v4287
    %4385 = vmatpush1.msra.mxu0 %v4286
    %4386 = vmatprep.subr.mxu0 %v4285
    %4387 = vmatpush1.msra.mxu0 %v4284
    %4388 = vmatprep.subr.mxu0 %v4283
    %4389 = vmatpush1.msra.mxu0 %v4282
    %4390 = vmatprep.subr.mxu0 %v4345
    %4391 = vmatpush2.msra.mxu0 %v4344
    %4392 = vmatprep.subr.mxu0 %v4343
    %4393 = vmatpush2.msra.mxu0 %v4342
    %4394 = vmatprep.subr.mxu0 %v4341
    %4395 = vmatpush2.msra.mxu0 %v4340
    %4396 = vmatprep.subr.mxu0 %v4339
    %4397 = vmatpush2.msra.mxu0 %v4338
    %4398 = vmatprep.subr.mxu0 %v4337
    %4399 = vmatpush2.msra.mxu0 %v4336
    %4400 = vmatprep.subr.mxu0 %v4335
    %4401 = vmatpush2.msra.mxu0 %v4334
    %4402 = vmatprep.subr.mxu0 %v4333
    %4403 = vmatpush2.msra.mxu0 %v4332
    %4404 = vmatprep.subr.mxu0 %v4331
    %4405 = vmatpush2.msra.mxu0 %v4330
    %4406 = vmatprep.subr.mxu0 %v4329
    %4407 = vmatpush2.msra.mxu0 %v4328
    %4408 = vmatprep.subr.mxu0 %v4327
    %4409 = vmatpush2.msra.mxu0 %v4326
    %4410 = vmatprep.subr.mxu0 %v4325
    %4411 = vmatpush2.msra.mxu0 %v4324
    %4412 = vmatprep.subr.mxu0 %v4323
    %4413 = vmatpush2.msra.mxu0 %v4322
    %4414 = vmatprep.subr.mxu0 %v4321
    %4415 = vmatpush2.msra.mxu0 %v4320
    %4416 = vmatprep.subr.mxu0 %v4319
    %4417 = vmatpush2.msra.mxu0 %v4318
    %4418 = vmatprep.subr.mxu0 %v4317
    %4419 = vmatpush2.msra.mxu0 %v4316
    %4420 = vmatprep.subr.mxu0 %v4315
    %4421 = vmatpush2.msra.mxu0 %v4314
    %4422 = vmatprep.mubr.f32.mxu0 %v4279
    %4423 = vmatmul.mubr.f32.gmra.mxu0 %v4278
    %v4424 = vpop.f32.mrf.mxu0
    %v4425 = vadd.f32 %v4351, %v4424
    %v4426 = vpop.f32.mrf.mxu0
    %v4427 = vadd.f32 %v4355, %v4426
    %4428 = vmatprep.mubr.f32.mxu0 %v4281
    %4429 = vmatmul.mubr.f32.gmra.mxu0 %v4280
    %v4430 = vpop.f32.mrf.mxu0
    %v4431 = vadd.f32 %v4351, %v4430
    %v4432 = vpop.f32.mrf.mxu0
    %v4433 = vadd.f32 %v4355, %v4432
    %4434 = vdwg.mxu0
    %v4435 = vadd.f32 %v4121, %v4425
    %v4436 = vadd.f32 %v4122, %v4427
    %v4437 = vadd.f32 %v4123, %v4431
    %v4438 = vadd.f32 %v4124, %v4433
    %v4439 = vld [vmem:[#allocation25] sm:$0x3]
    %v4440 = vld [vmem:[#allocation26] sm:$0x3]
    %v4441 = vadd.f32 %v4435, %v4436
    %4442 = vadd.xlane.f32.xlu0 %v4441
    %v4443 = vpop.xlane.xlu0 %4442
    %v4444 = vadd.f32 %v4437, %v4438
    %4445 = vadd.xlane.f32.xlu0 %v4444
    %v4446 = vpop.xlane.xlu0 %4445
    %v4447 = vmul.f32 %v4443, %v4068
    %v4448 = vmul.f32 %v4446, %v4068
    %v4449 = vsub.f32 %v4435, %v4447
    %v4450 = vsub.f32 %v4436, %v4447
    %v4451 = vsub.f32 %v4437, %v4448
    %v4452 = vsub.f32 %v4438, %v4448
    %v4453 = vmul.f32 %v4449, %v4449
    %v4454 = vmul.f32 %v4450, %v4450
    %v4455 = vmul.f32 %v4451, %v4451
    %v4456 = vmul.f32 %v4452, %v4452
    %v4457 = vadd.f32 %v4453, %v4454
    %4458 = vadd.xlane.f32.xlu0 %v4457
    %v4459 = vpop.xlane.xlu0 %4458
    %v4460 = vadd.f32 %v4455, %v4456
    %4461 = vadd.xlane.f32.xlu0 %v4460
    %v4462 = vpop.xlane.xlu0 %4461
    %v4463 = vmul.f32 %v4459, %v4068
    %v4464 = vmul.f32 %v4462, %v4068
    %v4465 = vadd.f32 %v4463, 1e-05
    %v4466 = vadd.f32 %v4464, 1e-05
    %v4467 = vrsqrt.pop %v4465
    %v4468 = vrsqrt.pop %v4466
    %v4469 = vmul.f32 %v4449, %v4467
    %v4470 = vmul.f32 %v4450, %v4467
    %v4471 = vmul.f32 %v4451, %v4468
    %v4472 = vmul.f32 %v4452, %v4468
    %v4474 = vlaneseq
    %v4475 = vshrl.u32 %v4474, 7
    %v4476 = vsub.s32 0, %v4475
    %v4477 = vrot.slane %v4439, %v4476
    %v4478 = vlaneseq
    %v4479 = vshrl.u32 %v4478, 7
    %v4480 = vsub.s32 1, %v4479
    %v4481 = vrot.slane %v4439, %v4480
    %v4484 = vmul.f32 %v4469, %v4477
    %v4485 = vmul.f32 %v4470, %v4481
    %v4486 = vmul.f32 %v4471, %v4477
    %v4487 = vmul.f32 %v4472, %v4481
    %v4489 = vlaneseq
    %v4490 = vshrl.u32 %v4489, 7
    %v4491 = vsub.s32 0, %v4490
    %v4492 = vrot.slane %v4440, %v4491
    %v4493 = vlaneseq
    %v4494 = vshrl.u32 %v4493, 7
    %v4495 = vsub.s32 1, %v4494
    %v4496 = vrot.slane %v4440, %v4495
    %v4499 = vadd.f32 %v4484, %v4492
    %v4500 = vadd.f32 %v4485, %v4496
    %v4501 = vadd.f32 %v4486, %v4492
    %v4502 = vadd.f32 %v4487, %v4496
    %s4503 = scalar_lea.vmem [#allocation11], 1536
    %v4504 = vld [vmem:[%s4503] sm:$0xff]
    %v4505 = vld [vmem:[%s4503 + $0x8] sm:$0xff]
    %v4506 = vld [vmem:[%s4503 + $0x10] sm:$0xff]
    %v4507 = vld [vmem:[%s4503 + $0x18] sm:$0xff]
    %v4508 = vld [vmem:[%s4503 + $0x20] sm:$0xff]
    %v4509 = vld [vmem:[%s4503 + $0x28] sm:$0xff]
    %v4510 = vld [vmem:[%s4503 + $0x30] sm:$0xff]
    %v4511 = vld [vmem:[%s4503 + $0x38] sm:$0xff]
    %v4512 = vld [vmem:[%s4503 + $0x40] sm:$0xff]
    %v4513 = vld [vmem:[%s4503 + $0x48] sm:$0xff]
    %v4514 = vld [vmem:[%s4503 + $0x50] sm:$0xff]
    %v4515 = vld [vmem:[%s4503 + $0x58] sm:$0xff]
    %v4516 = vld [vmem:[%s4503 + $0x60] sm:$0xff]
    %v4517 = vld [vmem:[%s4503 + $0x68] sm:$0xff]
    %v4518 = vld [vmem:[%s4503 + $0x70] sm:$0xff]
    %v4519 = vld [vmem:[%s4503 + $0x78] sm:$0xff]
    %v4520 = vld [vmem:[%s4503 + $0x80] sm:$0xff]
    %v4521 = vld [vmem:[%s4503 + $0x88] sm:$0xff]
    %v4522 = vld [vmem:[%s4503 + $0x90] sm:$0xff]
    %v4523 = vld [vmem:[%s4503 + $0x98] sm:$0xff]
    %v4524 = vld [vmem:[%s4503 + $0xa0] sm:$0xff]
    %v4525 = vld [vmem:[%s4503 + $0xa8] sm:$0xff]
    %v4526 = vld [vmem:[%s4503 + $0xb0] sm:$0xff]
    %v4527 = vld [vmem:[%s4503 + $0xb8] sm:$0xff]
    %v4528 = vld [vmem:[%s4503 + $0xc0] sm:$0xff]
    %v4529 = vld [vmem:[%s4503 + $0xc8] sm:$0xff]
    %v4530 = vld [vmem:[%s4503 + $0xd0] sm:$0xff]
    %v4531 = vld [vmem:[%s4503 + $0xd8] sm:$0xff]
    %v4532 = vld [vmem:[%s4503 + $0xe0] sm:$0xff]
    %v4533 = vld [vmem:[%s4503 + $0xe8] sm:$0xff]
    %v4534 = vld [vmem:[%s4503 + $0xf0] sm:$0xff]
    %v4535 = vld [vmem:[%s4503 + $0xf8] sm:$0xff]
    %v4536 = vld [vmem:[%s4503 + $0x100] sm:$0xff]
    %v4537 = vld [vmem:[%s4503 + $0x108] sm:$0xff]
    %v4538 = vld [vmem:[%s4503 + $0x110] sm:$0xff]
    %v4539 = vld [vmem:[%s4503 + $0x118] sm:$0xff]
    %v4540 = vld [vmem:[%s4503 + $0x120] sm:$0xff]
    %v4541 = vld [vmem:[%s4503 + $0x128] sm:$0xff]
    %v4542 = vld [vmem:[%s4503 + $0x130] sm:$0xff]
    %v4543 = vld [vmem:[%s4503 + $0x138] sm:$0xff]
    %v4544 = vld [vmem:[%s4503 + $0x140] sm:$0xff]
    %v4545 = vld [vmem:[%s4503 + $0x148] sm:$0xff]
    %v4546 = vld [vmem:[%s4503 + $0x150] sm:$0xff]
    %v4547 = vld [vmem:[%s4503 + $0x158] sm:$0xff]
    %v4548 = vld [vmem:[%s4503 + $0x160] sm:$0xff]
    %v4549 = vld [vmem:[%s4503 + $0x168] sm:$0xff]
    %v4550 = vld [vmem:[%s4503 + $0x170] sm:$0xff]
    %v4551 = vld [vmem:[%s4503 + $0x178] sm:$0xff]
    %v4552 = vld [vmem:[%s4503 + $0x180] sm:$0xff]
    %v4553 = vld [vmem:[%s4503 + $0x188] sm:$0xff]
    %v4554 = vld [vmem:[%s4503 + $0x190] sm:$0xff]
    %v4555 = vld [vmem:[%s4503 + $0x198] sm:$0xff]
    %v4556 = vld [vmem:[%s4503 + $0x1a0] sm:$0xff]
    %v4557 = vld [vmem:[%s4503 + $0x1a8] sm:$0xff]
    %v4558 = vld [vmem:[%s4503 + $0x1b0] sm:$0xff]
    %v4559 = vld [vmem:[%s4503 + $0x1b8] sm:$0xff]
    %v4560 = vld [vmem:[%s4503 + $0x1c0] sm:$0xff]
    %v4561 = vld [vmem:[%s4503 + $0x1c8] sm:$0xff]
    %v4562 = vld [vmem:[%s4503 + $0x1d0] sm:$0xff]
    %v4563 = vld [vmem:[%s4503 + $0x1d8] sm:$0xff]
    %v4564 = vld [vmem:[%s4503 + $0x1e0] sm:$0xff]
    %v4565 = vld [vmem:[%s4503 + $0x1e8] sm:$0xff]
    %v4566 = vld [vmem:[%s4503 + $0x1f0] sm:$0xff]
    %v4567 = vld [vmem:[%s4503 + $0x1f8] sm:$0xff]
    %v4568 = vld [vmem:[%s4503 + $0x200] sm:$0xff]
    %v4569 = vld [vmem:[%s4503 + $0x208] sm:$0xff]
    %v4570 = vld [vmem:[%s4503 + $0x210] sm:$0xff]
    %v4571 = vld [vmem:[%s4503 + $0x218] sm:$0xff]
    %v4572 = vld [vmem:[%s4503 + $0x220] sm:$0xff]
    %v4573 = vld [vmem:[%s4503 + $0x228] sm:$0xff]
    %v4574 = vld [vmem:[%s4503 + $0x230] sm:$0xff]
    %v4575 = vld [vmem:[%s4503 + $0x238] sm:$0xff]
    %v4576 = vld [vmem:[%s4503 + $0x240] sm:$0xff]
    %v4577 = vld [vmem:[%s4503 + $0x248] sm:$0xff]
    %v4578 = vld [vmem:[%s4503 + $0x250] sm:$0xff]
    %v4579 = vld [vmem:[%s4503 + $0x258] sm:$0xff]
    %v4580 = vld [vmem:[%s4503 + $0x260] sm:$0xff]
    %v4581 = vld [vmem:[%s4503 + $0x268] sm:$0xff]
    %v4582 = vld [vmem:[%s4503 + $0x270] sm:$0xff]
    %v4583 = vld [vmem:[%s4503 + $0x278] sm:$0xff]
    %v4584 = vld [vmem:[%s4503 + $0x280] sm:$0xff]
    %v4585 = vld [vmem:[%s4503 + $0x288] sm:$0xff]
    %v4586 = vld [vmem:[%s4503 + $0x290] sm:$0xff]
    %v4587 = vld [vmem:[%s4503 + $0x298] sm:$0xff]
    %v4588 = vld [vmem:[%s4503 + $0x2a0] sm:$0xff]
    %v4589 = vld [vmem:[%s4503 + $0x2a8] sm:$0xff]
    %v4590 = vld [vmem:[%s4503 + $0x2b0] sm:$0xff]
    %v4591 = vld [vmem:[%s4503 + $0x2b8] sm:$0xff]
    %v4592 = vld [vmem:[%s4503 + $0x2c0] sm:$0xff]
    %v4593 = vld [vmem:[%s4503 + $0x2c8] sm:$0xff]
    %v4594 = vld [vmem:[%s4503 + $0x2d0] sm:$0xff]
    %v4595 = vld [vmem:[%s4503 + $0x2d8] sm:$0xff]
    %v4596 = vld [vmem:[%s4503 + $0x2e0] sm:$0xff]
    %v4597 = vld [vmem:[%s4503 + $0x2e8] sm:$0xff]
    %v4598 = vld [vmem:[%s4503 + $0x2f0] sm:$0xff]
    %v4599 = vld [vmem:[%s4503 + $0x2f8] sm:$0xff]
    %v4600 = vld [vmem:[%s4503 + $0x300] sm:$0xff]
    %v4601 = vld [vmem:[%s4503 + $0x308] sm:$0xff]
    %v4602 = vld [vmem:[%s4503 + $0x310] sm:$0xff]
    %v4603 = vld [vmem:[%s4503 + $0x318] sm:$0xff]
    %v4604 = vld [vmem:[%s4503 + $0x320] sm:$0xff]
    %v4605 = vld [vmem:[%s4503 + $0x328] sm:$0xff]
    %v4606 = vld [vmem:[%s4503 + $0x330] sm:$0xff]
    %v4607 = vld [vmem:[%s4503 + $0x338] sm:$0xff]
    %v4608 = vld [vmem:[%s4503 + $0x340] sm:$0xff]
    %v4609 = vld [vmem:[%s4503 + $0x348] sm:$0xff]
    %v4610 = vld [vmem:[%s4503 + $0x350] sm:$0xff]
    %v4611 = vld [vmem:[%s4503 + $0x358] sm:$0xff]
    %v4612 = vld [vmem:[%s4503 + $0x360] sm:$0xff]
    %v4613 = vld [vmem:[%s4503 + $0x368] sm:$0xff]
    %v4614 = vld [vmem:[%s4503 + $0x370] sm:$0xff]
    %v4615 = vld [vmem:[%s4503 + $0x378] sm:$0xff]
    %v4616 = vld [vmem:[%s4503 + $0x380] sm:$0xff]
    %v4617 = vld [vmem:[%s4503 + $0x388] sm:$0xff]
    %v4618 = vld [vmem:[%s4503 + $0x390] sm:$0xff]
    %v4619 = vld [vmem:[%s4503 + $0x398] sm:$0xff]
    %v4620 = vld [vmem:[%s4503 + $0x3a0] sm:$0xff]
    %v4621 = vld [vmem:[%s4503 + $0x3a8] sm:$0xff]
    %v4622 = vld [vmem:[%s4503 + $0x3b0] sm:$0xff]
    %v4623 = vld [vmem:[%s4503 + $0x3b8] sm:$0xff]
    %v4624 = vld [vmem:[%s4503 + $0x3c0] sm:$0xff]
    %v4625 = vld [vmem:[%s4503 + $0x3c8] sm:$0xff]
    %v4626 = vld [vmem:[%s4503 + $0x3d0] sm:$0xff]
    %v4627 = vld [vmem:[%s4503 + $0x3d8] sm:$0xff]
    %v4628 = vld [vmem:[%s4503 + $0x3e0] sm:$0xff]
    %v4629 = vld [vmem:[%s4503 + $0x3e8] sm:$0xff]
    %v4630 = vld [vmem:[%s4503 + $0x3f0] sm:$0xff]
    %v4631 = vld [vmem:[%s4503 + $0x3f8] sm:$0xff]
    %v4632 = vld [vmem:[%s4503 + $0x400] sm:$0xff]
    %v4633 = vld [vmem:[%s4503 + $0x408] sm:$0xff]
    %v4634 = vld [vmem:[%s4503 + $0x410] sm:$0xff]
    %v4635 = vld [vmem:[%s4503 + $0x418] sm:$0xff]
    %v4636 = vld [vmem:[%s4503 + $0x420] sm:$0xff]
    %v4637 = vld [vmem:[%s4503 + $0x428] sm:$0xff]
    %v4638 = vld [vmem:[%s4503 + $0x430] sm:$0xff]
    %v4639 = vld [vmem:[%s4503 + $0x438] sm:$0xff]
    %v4640 = vld [vmem:[%s4503 + $0x440] sm:$0xff]
    %v4641 = vld [vmem:[%s4503 + $0x448] sm:$0xff]
    %v4642 = vld [vmem:[%s4503 + $0x450] sm:$0xff]
    %v4643 = vld [vmem:[%s4503 + $0x458] sm:$0xff]
    %v4644 = vld [vmem:[%s4503 + $0x460] sm:$0xff]
    %v4645 = vld [vmem:[%s4503 + $0x468] sm:$0xff]
    %v4646 = vld [vmem:[%s4503 + $0x470] sm:$0xff]
    %v4647 = vld [vmem:[%s4503 + $0x478] sm:$0xff]
    %v4648 = vld [vmem:[%s4503 + $0x480] sm:$0xff]
    %v4649 = vld [vmem:[%s4503 + $0x488] sm:$0xff]
    %v4650 = vld [vmem:[%s4503 + $0x490] sm:$0xff]
    %v4651 = vld [vmem:[%s4503 + $0x498] sm:$0xff]
    %v4652 = vld [vmem:[%s4503 + $0x4a0] sm:$0xff]
    %v4653 = vld [vmem:[%s4503 + $0x4a8] sm:$0xff]
    %v4654 = vld [vmem:[%s4503 + $0x4b0] sm:$0xff]
    %v4655 = vld [vmem:[%s4503 + $0x4b8] sm:$0xff]
    %v4656 = vld [vmem:[%s4503 + $0x4c0] sm:$0xff]
    %v4657 = vld [vmem:[%s4503 + $0x4c8] sm:$0xff]
    %v4658 = vld [vmem:[%s4503 + $0x4d0] sm:$0xff]
    %v4659 = vld [vmem:[%s4503 + $0x4d8] sm:$0xff]
    %v4660 = vld [vmem:[%s4503 + $0x4e0] sm:$0xff]
    %v4661 = vld [vmem:[%s4503 + $0x4e8] sm:$0xff]
    %v4662 = vld [vmem:[%s4503 + $0x4f0] sm:$0xff]
    %v4663 = vld [vmem:[%s4503 + $0x4f8] sm:$0xff]
    %v4664 = vld [vmem:[%s4503 + $0x500] sm:$0xff]
    %v4665 = vld [vmem:[%s4503 + $0x508] sm:$0xff]
    %v4666 = vld [vmem:[%s4503 + $0x510] sm:$0xff]
    %v4667 = vld [vmem:[%s4503 + $0x518] sm:$0xff]
    %v4668 = vld [vmem:[%s4503 + $0x520] sm:$0xff]
    %v4669 = vld [vmem:[%s4503 + $0x528] sm:$0xff]
    %v4670 = vld [vmem:[%s4503 + $0x530] sm:$0xff]
    %v4671 = vld [vmem:[%s4503 + $0x538] sm:$0xff]
    %v4672 = vld [vmem:[%s4503 + $0x540] sm:$0xff]
    %v4673 = vld [vmem:[%s4503 + $0x548] sm:$0xff]
    %v4674 = vld [vmem:[%s4503 + $0x550] sm:$0xff]
    %v4675 = vld [vmem:[%s4503 + $0x558] sm:$0xff]
    %v4676 = vld [vmem:[%s4503 + $0x560] sm:$0xff]
    %v4677 = vld [vmem:[%s4503 + $0x568] sm:$0xff]
    %v4678 = vld [vmem:[%s4503 + $0x570] sm:$0xff]
    %v4679 = vld [vmem:[%s4503 + $0x578] sm:$0xff]
    %v4680 = vld [vmem:[%s4503 + $0x580] sm:$0xff]
    %v4681 = vld [vmem:[%s4503 + $0x588] sm:$0xff]
    %v4682 = vld [vmem:[%s4503 + $0x590] sm:$0xff]
    %v4683 = vld [vmem:[%s4503 + $0x598] sm:$0xff]
    %v4684 = vld [vmem:[%s4503 + $0x5a0] sm:$0xff]
    %v4685 = vld [vmem:[%s4503 + $0x5a8] sm:$0xff]
    %v4686 = vld [vmem:[%s4503 + $0x5b0] sm:$0xff]
    %v4687 = vld [vmem:[%s4503 + $0x5b8] sm:$0xff]
    %v4688 = vld [vmem:[%s4503 + $0x5c0] sm:$0xff]
    %v4689 = vld [vmem:[%s4503 + $0x5c8] sm:$0xff]
    %v4690 = vld [vmem:[%s4503 + $0x5d0] sm:$0xff]
    %v4691 = vld [vmem:[%s4503 + $0x5d8] sm:$0xff]
    %v4692 = vld [vmem:[%s4503 + $0x5e0] sm:$0xff]
    %v4693 = vld [vmem:[%s4503 + $0x5e8] sm:$0xff]
    %v4694 = vld [vmem:[%s4503 + $0x5f0] sm:$0xff]
    %v4695 = vld [vmem:[%s4503 + $0x5f8] sm:$0xff]
    %s4696 = scalar_lea.vmem %s4, 768
    %v4697 = vld [vmem:[%s4696] sm:$0xff]
    %v4698 = vld [vmem:[%s4696 + $0x8] sm:$0xff]
    %v4699 = vld [vmem:[%s4696 + $0x10] sm:$0xff]
    %v4700 = vld [vmem:[%s4696 + $0x18] sm:$0xff]
    %v4701 = vld [vmem:[%s4696 + $0x20] sm:$0xff]
    %v4702 = vld [vmem:[%s4696 + $0x28] sm:$0xff]
    %v4703 = vld [vmem:[%s4696 + $0x30] sm:$0xff]
    %v4704 = vld [vmem:[%s4696 + $0x38] sm:$0xff]
    %v4705 = vld [vmem:[%s4696 + $0x40] sm:$0xff]
    %v4706 = vld [vmem:[%s4696 + $0x48] sm:$0xff]
    %v4707 = vld [vmem:[%s4696 + $0x50] sm:$0xff]
    %v4708 = vld [vmem:[%s4696 + $0x58] sm:$0xff]
    %v4709 = vld [vmem:[%s4696 + $0x60] sm:$0xff]
    %v4710 = vld [vmem:[%s4696 + $0x68] sm:$0xff]
    %v4711 = vld [vmem:[%s4696 + $0x70] sm:$0xff]
    %v4712 = vld [vmem:[%s4696 + $0x78] sm:$0xff]
    %v4713 = vld [vmem:[%s4696 + $0x80] sm:$0xff]
    %v4714 = vld [vmem:[%s4696 + $0x88] sm:$0xff]
    %v4715 = vld [vmem:[%s4696 + $0x90] sm:$0xff]
    %v4716 = vld [vmem:[%s4696 + $0x98] sm:$0xff]
    %v4717 = vld [vmem:[%s4696 + $0xa0] sm:$0xff]
    %v4718 = vld [vmem:[%s4696 + $0xa8] sm:$0xff]
    %v4719 = vld [vmem:[%s4696 + $0xb0] sm:$0xff]
    %v4720 = vld [vmem:[%s4696 + $0xb8] sm:$0xff]
    %v4721 = vld [vmem:[%s4696 + $0xc0] sm:$0xff]
    %v4722 = vld [vmem:[%s4696 + $0xc8] sm:$0xff]
    %v4723 = vld [vmem:[%s4696 + $0xd0] sm:$0xff]
    %v4724 = vld [vmem:[%s4696 + $0xd8] sm:$0xff]
    %v4725 = vld [vmem:[%s4696 + $0xe0] sm:$0xff]
    %v4726 = vld [vmem:[%s4696 + $0xe8] sm:$0xff]
    %v4727 = vld [vmem:[%s4696 + $0xf0] sm:$0xff]
    %v4728 = vld [vmem:[%s4696 + $0xf8] sm:$0xff]
    %v4729 = vld [vmem:[%s4696 + $0x100] sm:$0xff]
    %v4730 = vld [vmem:[%s4696 + $0x108] sm:$0xff]
    %v4731 = vld [vmem:[%s4696 + $0x110] sm:$0xff]
    %v4732 = vld [vmem:[%s4696 + $0x118] sm:$0xff]
    %v4733 = vld [vmem:[%s4696 + $0x120] sm:$0xff]
    %v4734 = vld [vmem:[%s4696 + $0x128] sm:$0xff]
    %v4735 = vld [vmem:[%s4696 + $0x130] sm:$0xff]
    %v4736 = vld [vmem:[%s4696 + $0x138] sm:$0xff]
    %v4737 = vld [vmem:[%s4696 + $0x140] sm:$0xff]
    %v4738 = vld [vmem:[%s4696 + $0x148] sm:$0xff]
    %v4739 = vld [vmem:[%s4696 + $0x150] sm:$0xff]
    %v4740 = vld [vmem:[%s4696 + $0x158] sm:$0xff]
    %v4741 = vld [vmem:[%s4696 + $0x160] sm:$0xff]
    %v4742 = vld [vmem:[%s4696 + $0x168] sm:$0xff]
    %v4743 = vld [vmem:[%s4696 + $0x170] sm:$0xff]
    %v4744 = vld [vmem:[%s4696 + $0x178] sm:$0xff]
    %v4745 = vld [vmem:[%s4696 + $0x180] sm:$0xff]
    %v4746 = vld [vmem:[%s4696 + $0x188] sm:$0xff]
    %v4747 = vld [vmem:[%s4696 + $0x190] sm:$0xff]
    %v4748 = vld [vmem:[%s4696 + $0x198] sm:$0xff]
    %v4749 = vld [vmem:[%s4696 + $0x1a0] sm:$0xff]
    %v4750 = vld [vmem:[%s4696 + $0x1a8] sm:$0xff]
    %v4751 = vld [vmem:[%s4696 + $0x1b0] sm:$0xff]
    %v4752 = vld [vmem:[%s4696 + $0x1b8] sm:$0xff]
    %v4753 = vld [vmem:[%s4696 + $0x1c0] sm:$0xff]
    %v4754 = vld [vmem:[%s4696 + $0x1c8] sm:$0xff]
    %v4755 = vld [vmem:[%s4696 + $0x1d0] sm:$0xff]
    %v4756 = vld [vmem:[%s4696 + $0x1d8] sm:$0xff]
    %v4757 = vld [vmem:[%s4696 + $0x1e0] sm:$0xff]
    %v4758 = vld [vmem:[%s4696 + $0x1e8] sm:$0xff]
    %v4759 = vld [vmem:[%s4696 + $0x1f0] sm:$0xff]
    %v4760 = vld [vmem:[%s4696 + $0x1f8] sm:$0xff]
    %v4761 = vld [vmem:[%s4696 + $0x200] sm:$0xff]
    %v4762 = vld [vmem:[%s4696 + $0x208] sm:$0xff]
    %v4763 = vld [vmem:[%s4696 + $0x210] sm:$0xff]
    %v4764 = vld [vmem:[%s4696 + $0x218] sm:$0xff]
    %v4765 = vld [vmem:[%s4696 + $0x220] sm:$0xff]
    %v4766 = vld [vmem:[%s4696 + $0x228] sm:$0xff]
    %v4767 = vld [vmem:[%s4696 + $0x230] sm:$0xff]
    %v4768 = vld [vmem:[%s4696 + $0x238] sm:$0xff]
    %v4769 = vld [vmem:[%s4696 + $0x240] sm:$0xff]
    %v4770 = vld [vmem:[%s4696 + $0x248] sm:$0xff]
    %v4771 = vld [vmem:[%s4696 + $0x250] sm:$0xff]
    %v4772 = vld [vmem:[%s4696 + $0x258] sm:$0xff]
    %v4773 = vld [vmem:[%s4696 + $0x260] sm:$0xff]
    %v4774 = vld [vmem:[%s4696 + $0x268] sm:$0xff]
    %v4775 = vld [vmem:[%s4696 + $0x270] sm:$0xff]
    %v4776 = vld [vmem:[%s4696 + $0x278] sm:$0xff]
    %v4777 = vld [vmem:[%s4696 + $0x280] sm:$0xff]
    %v4778 = vld [vmem:[%s4696 + $0x288] sm:$0xff]
    %v4779 = vld [vmem:[%s4696 + $0x290] sm:$0xff]
    %v4780 = vld [vmem:[%s4696 + $0x298] sm:$0xff]
    %v4781 = vld [vmem:[%s4696 + $0x2a0] sm:$0xff]
    %v4782 = vld [vmem:[%s4696 + $0x2a8] sm:$0xff]
    %v4783 = vld [vmem:[%s4696 + $0x2b0] sm:$0xff]
    %v4784 = vld [vmem:[%s4696 + $0x2b8] sm:$0xff]
    %v4785 = vld [vmem:[%s4696 + $0x2c0] sm:$0xff]
    %v4786 = vld [vmem:[%s4696 + $0x2c8] sm:$0xff]
    %v4787 = vld [vmem:[%s4696 + $0x2d0] sm:$0xff]
    %v4788 = vld [vmem:[%s4696 + $0x2d8] sm:$0xff]
    %v4789 = vld [vmem:[%s4696 + $0x2e0] sm:$0xff]
    %v4790 = vld [vmem:[%s4696 + $0x2e8] sm:$0xff]
    %v4791 = vld [vmem:[%s4696 + $0x2f0] sm:$0xff]
    %v4792 = vld [vmem:[%s4696 + $0x2f8] sm:$0xff]
    %4794 = vset.pattern.permute.xlu0 0
    %4795 = vperm.xlu0 %4794, %v4697
    %v4796 = vpop.permute.xlu0 %4795
    %4799 = vset.pattern.permute.xlu0 0
    %4800 = vperm.xlu0 %4799, %v4698
    %v4801 = vpop.permute.xlu0 %4800
    %4804 = vset.pattern.permute.xlu0 0
    %4805 = vperm.xlu0 %4804, %v4699
    %v4806 = vpop.permute.xlu0 %4805
    %4809 = vset.pattern.permute.xlu0 0
    %4810 = vperm.xlu0 %4809, %v4700
    %v4811 = vpop.permute.xlu0 %4810
    %4814 = vset.pattern.permute.xlu0 0
    %4815 = vperm.xlu0 %4814, %v4701
    %v4816 = vpop.permute.xlu0 %4815
    %4819 = vset.pattern.permute.xlu0 0
    %4820 = vperm.xlu0 %4819, %v4702
    %v4821 = vpop.permute.xlu0 %4820
    %4824 = vset.pattern.permute.xlu0 0
    %4825 = vperm.xlu0 %4824, %v4703
    %v4826 = vpop.permute.xlu0 %4825
    %4829 = vset.pattern.permute.xlu0 0
    %4830 = vperm.xlu0 %4829, %v4704
    %v4831 = vpop.permute.xlu0 %4830
    %4834 = vset.pattern.permute.xlu0 0
    %4835 = vperm.xlu0 %4834, %v4705
    %v4836 = vpop.permute.xlu0 %4835
    %4839 = vset.pattern.permute.xlu0 0
    %4840 = vperm.xlu0 %4839, %v4706
    %v4841 = vpop.permute.xlu0 %4840
    %4844 = vset.pattern.permute.xlu0 0
    %4845 = vperm.xlu0 %4844, %v4707
    %v4846 = vpop.permute.xlu0 %4845
    %4849 = vset.pattern.permute.xlu0 0
    %4850 = vperm.xlu0 %4849, %v4708
    %v4851 = vpop.permute.xlu0 %4850
    %4854 = vset.pattern.permute.xlu0 0
    %4855 = vperm.xlu0 %4854, %v4709
    %v4856 = vpop.permute.xlu0 %4855
    %4859 = vset.pattern.permute.xlu0 0
    %4860 = vperm.xlu0 %4859, %v4710
    %v4861 = vpop.permute.xlu0 %4860
    %4864 = vset.pattern.permute.xlu0 0
    %4865 = vperm.xlu0 %4864, %v4711
    %v4866 = vpop.permute.xlu0 %4865
    %4869 = vset.pattern.permute.xlu0 0
    %4870 = vperm.xlu0 %4869, %v4712
    %v4871 = vpop.permute.xlu0 %4870
    %4874 = vset.pattern.permute.xlu0 0
    %4875 = vperm.xlu0 %4874, %v4713
    %v4876 = vpop.permute.xlu0 %4875
    %4879 = vset.pattern.permute.xlu0 0
    %4880 = vperm.xlu0 %4879, %v4714
    %v4881 = vpop.permute.xlu0 %4880
    %4884 = vset.pattern.permute.xlu0 0
    %4885 = vperm.xlu0 %4884, %v4715
    %v4886 = vpop.permute.xlu0 %4885
    %4889 = vset.pattern.permute.xlu0 0
    %4890 = vperm.xlu0 %4889, %v4716
    %v4891 = vpop.permute.xlu0 %4890
    %4894 = vset.pattern.permute.xlu0 0
    %4895 = vperm.xlu0 %4894, %v4717
    %v4896 = vpop.permute.xlu0 %4895
    %4899 = vset.pattern.permute.xlu0 0
    %4900 = vperm.xlu0 %4899, %v4718
    %v4901 = vpop.permute.xlu0 %4900
    %4904 = vset.pattern.permute.xlu0 0
    %4905 = vperm.xlu0 %4904, %v4719
    %v4906 = vpop.permute.xlu0 %4905
    %4909 = vset.pattern.permute.xlu0 0
    %4910 = vperm.xlu0 %4909, %v4720
    %v4911 = vpop.permute.xlu0 %4910
    %4914 = vset.pattern.permute.xlu0 0
    %4915 = vperm.xlu0 %4914, %v4721
    %v4916 = vpop.permute.xlu0 %4915
    %4919 = vset.pattern.permute.xlu0 0
    %4920 = vperm.xlu0 %4919, %v4722
    %v4921 = vpop.permute.xlu0 %4920
    %4924 = vset.pattern.permute.xlu0 0
    %4925 = vperm.xlu0 %4924, %v4723
    %v4926 = vpop.permute.xlu0 %4925
    %4929 = vset.pattern.permute.xlu0 0
    %4930 = vperm.xlu0 %4929, %v4724
    %v4931 = vpop.permute.xlu0 %4930
    %4934 = vset.pattern.permute.xlu0 0
    %4935 = vperm.xlu0 %4934, %v4725
    %v4936 = vpop.permute.xlu0 %4935
    %4939 = vset.pattern.permute.xlu0 0
    %4940 = vperm.xlu0 %4939, %v4726
    %v4941 = vpop.permute.xlu0 %4940
    %4944 = vset.pattern.permute.xlu0 0
    %4945 = vperm.xlu0 %4944, %v4727
    %v4946 = vpop.permute.xlu0 %4945
    %4949 = vset.pattern.permute.xlu0 0
    %4950 = vperm.xlu0 %4949, %v4728
    %v4951 = vpop.permute.xlu0 %4950
    %4954 = vset.pattern.permute.xlu0 0
    %4955 = vperm.xlu0 %4954, %v4729
    %v4956 = vpop.permute.xlu0 %4955
    %4959 = vset.pattern.permute.xlu0 0
    %4960 = vperm.xlu0 %4959, %v4730
    %v4961 = vpop.permute.xlu0 %4960
    %4964 = vset.pattern.permute.xlu0 0
    %4965 = vperm.xlu0 %4964, %v4731
    %v4966 = vpop.permute.xlu0 %4965
    %4969 = vset.pattern.permute.xlu0 0
    %4970 = vperm.xlu0 %4969, %v4732
    %v4971 = vpop.permute.xlu0 %4970
    %4974 = vset.pattern.permute.xlu0 0
    %4975 = vperm.xlu0 %4974, %v4733
    %v4976 = vpop.permute.xlu0 %4975
    %4979 = vset.pattern.permute.xlu0 0
    %4980 = vperm.xlu0 %4979, %v4734
    %v4981 = vpop.permute.xlu0 %4980
    %4984 = vset.pattern.permute.xlu0 0
    %4985 = vperm.xlu0 %4984, %v4735
    %v4986 = vpop.permute.xlu0 %4985
    %4989 = vset.pattern.permute.xlu0 0
    %4990 = vperm.xlu0 %4989, %v4736
    %v4991 = vpop.permute.xlu0 %4990
    %4994 = vset.pattern.permute.xlu0 0
    %4995 = vperm.xlu0 %4994, %v4737
    %v4996 = vpop.permute.xlu0 %4995
    %4999 = vset.pattern.permute.xlu0 0
    %5000 = vperm.xlu0 %4999, %v4738
    %v5001 = vpop.permute.xlu0 %5000
    %5004 = vset.pattern.permute.xlu0 0
    %5005 = vperm.xlu0 %5004, %v4739
    %v5006 = vpop.permute.xlu0 %5005
    %5009 = vset.pattern.permute.xlu0 0
    %5010 = vperm.xlu0 %5009, %v4740
    %v5011 = vpop.permute.xlu0 %5010
    %5014 = vset.pattern.permute.xlu0 0
    %5015 = vperm.xlu0 %5014, %v4741
    %v5016 = vpop.permute.xlu0 %5015
    %5019 = vset.pattern.permute.xlu0 0
    %5020 = vperm.xlu0 %5019, %v4742
    %v5021 = vpop.permute.xlu0 %5020
    %5024 = vset.pattern.permute.xlu0 0
    %5025 = vperm.xlu0 %5024, %v4743
    %v5026 = vpop.permute.xlu0 %5025
    %5029 = vset.pattern.permute.xlu0 0
    %5030 = vperm.xlu0 %5029, %v4744
    %v5031 = vpop.permute.xlu0 %5030
    %5034 = vset.pattern.permute.xlu0 0
    %5035 = vperm.xlu0 %5034, %v4745
    %v5036 = vpop.permute.xlu0 %5035
    %5039 = vset.pattern.permute.xlu0 0
    %5040 = vperm.xlu0 %5039, %v4746
    %v5041 = vpop.permute.xlu0 %5040
    %5044 = vset.pattern.permute.xlu0 0
    %5045 = vperm.xlu0 %5044, %v4747
    %v5046 = vpop.permute.xlu0 %5045
    %5049 = vset.pattern.permute.xlu0 0
    %5050 = vperm.xlu0 %5049, %v4748
    %v5051 = vpop.permute.xlu0 %5050
    %5054 = vset.pattern.permute.xlu0 0
    %5055 = vperm.xlu0 %5054, %v4749
    %v5056 = vpop.permute.xlu0 %5055
    %5059 = vset.pattern.permute.xlu0 0
    %5060 = vperm.xlu0 %5059, %v4750
    %v5061 = vpop.permute.xlu0 %5060
    %5064 = vset.pattern.permute.xlu0 0
    %5065 = vperm.xlu0 %5064, %v4751
    %v5066 = vpop.permute.xlu0 %5065
    %5069 = vset.pattern.permute.xlu0 0
    %5070 = vperm.xlu0 %5069, %v4752
    %v5071 = vpop.permute.xlu0 %5070
    %5074 = vset.pattern.permute.xlu0 0
    %5075 = vperm.xlu0 %5074, %v4753
    %v5076 = vpop.permute.xlu0 %5075
    %5079 = vset.pattern.permute.xlu0 0
    %5080 = vperm.xlu0 %5079, %v4754
    %v5081 = vpop.permute.xlu0 %5080
    %5084 = vset.pattern.permute.xlu0 0
    %5085 = vperm.xlu0 %5084, %v4755
    %v5086 = vpop.permute.xlu0 %5085
    %5089 = vset.pattern.permute.xlu0 0
    %5090 = vperm.xlu0 %5089, %v4756
    %v5091 = vpop.permute.xlu0 %5090
    %5094 = vset.pattern.permute.xlu0 0
    %5095 = vperm.xlu0 %5094, %v4757
    %v5096 = vpop.permute.xlu0 %5095
    %5099 = vset.pattern.permute.xlu0 0
    %5100 = vperm.xlu0 %5099, %v4758
    %v5101 = vpop.permute.xlu0 %5100
    %5104 = vset.pattern.permute.xlu0 0
    %5105 = vperm.xlu0 %5104, %v4759
    %v5106 = vpop.permute.xlu0 %5105
    %5109 = vset.pattern.permute.xlu0 0
    %5110 = vperm.xlu0 %5109, %v4760
    %v5111 = vpop.permute.xlu0 %5110
    %5114 = vset.pattern.permute.xlu0 0
    %5115 = vperm.xlu0 %5114, %v4761
    %v5116 = vpop.permute.xlu0 %5115
    %5119 = vset.pattern.permute.xlu0 0
    %5120 = vperm.xlu0 %5119, %v4762
    %v5121 = vpop.permute.xlu0 %5120
    %5124 = vset.pattern.permute.xlu0 0
    %5125 = vperm.xlu0 %5124, %v4763
    %v5126 = vpop.permute.xlu0 %5125
    %5129 = vset.pattern.permute.xlu0 0
    %5130 = vperm.xlu0 %5129, %v4764
    %v5131 = vpop.permute.xlu0 %5130
    %5134 = vset.pattern.permute.xlu0 0
    %5135 = vperm.xlu0 %5134, %v4765
    %v5136 = vpop.permute.xlu0 %5135
    %5139 = vset.pattern.permute.xlu0 0
    %5140 = vperm.xlu0 %5139, %v4766
    %v5141 = vpop.permute.xlu0 %5140
    %5144 = vset.pattern.permute.xlu0 0
    %5145 = vperm.xlu0 %5144, %v4767
    %v5146 = vpop.permute.xlu0 %5145
    %5149 = vset.pattern.permute.xlu0 0
    %5150 = vperm.xlu0 %5149, %v4768
    %v5151 = vpop.permute.xlu0 %5150
    %5154 = vset.pattern.permute.xlu0 0
    %5155 = vperm.xlu0 %5154, %v4769
    %v5156 = vpop.permute.xlu0 %5155
    %5159 = vset.pattern.permute.xlu0 0
    %5160 = vperm.xlu0 %5159, %v4770
    %v5161 = vpop.permute.xlu0 %5160
    %5164 = vset.pattern.permute.xlu0 0
    %5165 = vperm.xlu0 %5164, %v4771
    %v5166 = vpop.permute.xlu0 %5165
    %5169 = vset.pattern.permute.xlu0 0
    %5170 = vperm.xlu0 %5169, %v4772
    %v5171 = vpop.permute.xlu0 %5170
    %5174 = vset.pattern.permute.xlu0 0
    %5175 = vperm.xlu0 %5174, %v4773
    %v5176 = vpop.permute.xlu0 %5175
    %5179 = vset.pattern.permute.xlu0 0
    %5180 = vperm.xlu0 %5179, %v4774
    %v5181 = vpop.permute.xlu0 %5180
    %5184 = vset.pattern.permute.xlu0 0
    %5185 = vperm.xlu0 %5184, %v4775
    %v5186 = vpop.permute.xlu0 %5185
    %5189 = vset.pattern.permute.xlu0 0
    %5190 = vperm.xlu0 %5189, %v4776
    %v5191 = vpop.permute.xlu0 %5190
    %5194 = vset.pattern.permute.xlu0 0
    %5195 = vperm.xlu0 %5194, %v4777
    %v5196 = vpop.permute.xlu0 %5195
    %5199 = vset.pattern.permute.xlu0 0
    %5200 = vperm.xlu0 %5199, %v4778
    %v5201 = vpop.permute.xlu0 %5200
    %5204 = vset.pattern.permute.xlu0 0
    %5205 = vperm.xlu0 %5204, %v4779
    %v5206 = vpop.permute.xlu0 %5205
    %5209 = vset.pattern.permute.xlu0 0
    %5210 = vperm.xlu0 %5209, %v4780
    %v5211 = vpop.permute.xlu0 %5210
    %5214 = vset.pattern.permute.xlu0 0
    %5215 = vperm.xlu0 %5214, %v4781
    %v5216 = vpop.permute.xlu0 %5215
    %5219 = vset.pattern.permute.xlu0 0
    %5220 = vperm.xlu0 %5219, %v4782
    %v5221 = vpop.permute.xlu0 %5220
    %5224 = vset.pattern.permute.xlu0 0
    %5225 = vperm.xlu0 %5224, %v4783
    %v5226 = vpop.permute.xlu0 %5225
    %5229 = vset.pattern.permute.xlu0 0
    %5230 = vperm.xlu0 %5229, %v4784
    %v5231 = vpop.permute.xlu0 %5230
    %5234 = vset.pattern.permute.xlu0 0
    %5235 = vperm.xlu0 %5234, %v4785
    %v5236 = vpop.permute.xlu0 %5235
    %5239 = vset.pattern.permute.xlu0 0
    %5240 = vperm.xlu0 %5239, %v4786
    %v5241 = vpop.permute.xlu0 %5240
    %5244 = vset.pattern.permute.xlu0 0
    %5245 = vperm.xlu0 %5244, %v4787
    %v5246 = vpop.permute.xlu0 %5245
    %5249 = vset.pattern.permute.xlu0 0
    %5250 = vperm.xlu0 %5249, %v4788
    %v5251 = vpop.permute.xlu0 %5250
    %5254 = vset.pattern.permute.xlu0 0
    %5255 = vperm.xlu0 %5254, %v4789
    %v5256 = vpop.permute.xlu0 %5255
    %5259 = vset.pattern.permute.xlu0 0
    %5260 = vperm.xlu0 %5259, %v4790
    %v5261 = vpop.permute.xlu0 %5260
    %5264 = vset.pattern.permute.xlu0 0
    %5265 = vperm.xlu0 %5264, %v4791
    %v5266 = vpop.permute.xlu0 %5265
    %5269 = vset.pattern.permute.xlu0 0
    %5270 = vperm.xlu0 %5269, %v4792
    %v5271 = vpop.permute.xlu0 %5270
    %5273 = vmatprep.subr.mxu0 0.0
    %5274 = vmatpush1.xpose.msra.mxu0 0.0
    %5275 = vmatprep.subr.mxu0 0.0
    %5276 = vmatpush1.xpose.msra.mxu0 0.0
    %5277 = vmatprep.subr.mxu0 0.0
    %5278 = vmatpush1.xpose.msra.mxu0 0.0
    %5279 = vmatprep.subr.mxu0 0.0
    %5280 = vmatpush1.xpose.msra.mxu0 0.0
    %5281 = vmatprep.subr.mxu0 0.0
    %5282 = vmatpush1.xpose.msra.mxu0 0.0
    %5283 = vmatprep.subr.mxu0 0.0
    %5284 = vmatpush1.xpose.msra.mxu0 0.0
    %5285 = vmatprep.subr.mxu0 0.0
    %5286 = vmatpush1.xpose.msra.mxu0 0.0
    %5287 = vmatprep.subr.mxu0 0.0
    %5288 = vmatpush1.xpose.msra.mxu0 0.0
    %5289 = vmatprep.subr.mxu0 0.0
    %5290 = vmatpush1.xpose.msra.mxu0 0.0
    %5291 = vmatprep.subr.mxu0 0.0
    %5292 = vmatpush1.xpose.msra.mxu0 0.0
    %5293 = vmatprep.subr.mxu0 0.0
    %5294 = vmatpush1.xpose.msra.mxu0 0.0
    %5295 = vmatprep.subr.mxu0 0.0
    %5296 = vmatpush1.xpose.msra.mxu0 0.0
    %5297 = vmatprep.subr.mxu0 0.0
    %5298 = vmatpush1.xpose.msra.mxu0 0.0
    %5299 = vmatprep.subr.mxu0 0.0
    %5300 = vmatpush1.xpose.msra.mxu0 0.0
    %5301 = vmatprep.subr.mxu0 %v4502
    %5302 = vmatpush1.xpose.msra.mxu0 %v4501
    %5303 = vmatprep.subr.mxu0 %v4500
    %5304 = vmatpush1.xpose.msra.mxu0 %v4499
    %5305 = vmatprep.subr.mxu0 0.0
    %5306 = vmatpush2.xpose.msra.mxu0 0.0
    %5307 = vmatprep.subr.mxu0 0.0
    %5308 = vmatpush2.xpose.msra.mxu0 0.0
    %5309 = vmatprep.subr.mxu0 0.0
    %5310 = vmatpush2.xpose.msra.mxu0 0.0
    %5311 = vmatprep.subr.mxu0 0.0
    %5312 = vmatpush2.xpose.msra.mxu0 0.0
    %5313 = vmatprep.subr.mxu0 0.0
    %5314 = vmatpush2.xpose.msra.mxu0 0.0
    %5315 = vmatprep.subr.mxu0 0.0
    %5316 = vmatpush2.xpose.msra.mxu0 0.0
    %5317 = vmatprep.subr.mxu0 0.0
    %5318 = vmatpush2.xpose.msra.mxu0 0.0
    %5319 = vmatprep.subr.mxu0 0.0
    %5320 = vmatpush2.xpose.msra.mxu0 0.0
    %5321 = vmatprep.subr.mxu0 0.0
    %5322 = vmatpush2.xpose.msra.mxu0 0.0
    %5323 = vmatprep.subr.mxu0 0.0
    %5324 = vmatpush2.xpose.msra.mxu0 0.0
    %5325 = vmatprep.subr.mxu0 0.0
    %5326 = vmatpush2.xpose.msra.mxu0 0.0
    %5327 = vmatprep.subr.mxu0 0.0
    %5328 = vmatpush2.xpose.msra.mxu0 0.0
    %5329 = vmatprep.subr.mxu0 0.0
    %5330 = vmatpush2.xpose.msra.mxu0 0.0
    %5331 = vmatprep.subr.mxu0 0.0
    %5332 = vmatpush2.xpose.msra.mxu0 0.0
    %5333 = vmatprep.subr.mxu0 0.0
    %5334 = vmatpush2.xpose.msra.mxu0 0.0
    %5335 = vmatprep.subr.mxu0 0.0
    %5336 = vmatpush2.xpose.msra.mxu0 0.0
    %5337 = vmatprep.mubr.f32.mxu0 %v4505
    %5338 = vmatmul.mubr.f32.gmra.mxu0 %v4504
    %v5339 = vpop.f32.mrf.mxu0
    %v5340 = vadd.f32 %v4796, %v5339
    %v5341 = vpop.f32.mrf.mxu0
    %5342 = vmatprep.mubr.f32.mxu0 %v4507
    %5343 = vmatmul.mubr.f32.gmra.mxu0 %v4506
    %v5344 = vpop.f32.mrf.mxu0
    %v5345 = vadd.f32 %v4801, %v5344
    %v5346 = vpop.f32.mrf.mxu0
    %5347 = vmatprep.mubr.f32.mxu0 %v4509
    %5348 = vmatmul.mubr.f32.gmra.mxu0 %v4508
    %v5349 = vpop.f32.mrf.mxu0
    %v5350 = vadd.f32 %v4806, %v5349
    %v5351 = vpop.f32.mrf.mxu0
    %5352 = vmatprep.mubr.f32.mxu0 %v4511
    %5353 = vmatmul.mubr.f32.gmra.mxu0 %v4510
    %v5354 = vpop.f32.mrf.mxu0
    %v5355 = vadd.f32 %v4811, %v5354
    %v5356 = vpop.f32.mrf.mxu0
    %5357 = vmatprep.mubr.f32.mxu0 %v4513
    %5358 = vmatmul.mubr.f32.gmra.mxu0 %v4512
    %v5359 = vpop.f32.mrf.mxu0
    %v5360 = vadd.f32 %v4816, %v5359
    %v5361 = vpop.f32.mrf.mxu0
    %5362 = vmatprep.mubr.f32.mxu0 %v4515
    %5363 = vmatmul.mubr.f32.gmra.mxu0 %v4514
    %v5364 = vpop.f32.mrf.mxu0
    %v5365 = vadd.f32 %v4821, %v5364
    %v5366 = vpop.f32.mrf.mxu0
    %5367 = vmatprep.mubr.f32.mxu0 %v4517
    %5368 = vmatmul.mubr.f32.gmra.mxu0 %v4516
    %v5369 = vpop.f32.mrf.mxu0
    %v5370 = vadd.f32 %v4826, %v5369
    %v5371 = vpop.f32.mrf.mxu0
    %5372 = vmatprep.mubr.f32.mxu0 %v4519
    %5373 = vmatmul.mubr.f32.gmra.mxu0 %v4518
    %v5374 = vpop.f32.mrf.mxu0
    %v5375 = vadd.f32 %v4831, %v5374
    %v5376 = vpop.f32.mrf.mxu0
    %5377 = vmatprep.mubr.f32.mxu0 %v4521
    %5378 = vmatmul.mubr.f32.gmra.mxu0 %v4520
    %v5379 = vpop.f32.mrf.mxu0
    %v5380 = vadd.f32 %v4836, %v5379
    %v5381 = vpop.f32.mrf.mxu0
    %5382 = vmatprep.mubr.f32.mxu0 %v4523
    %5383 = vmatmul.mubr.f32.gmra.mxu0 %v4522
    %v5384 = vpop.f32.mrf.mxu0
    %v5385 = vadd.f32 %v4841, %v5384
    %v5386 = vpop.f32.mrf.mxu0
    %5387 = vmatprep.mubr.f32.mxu0 %v4525
    %5388 = vmatmul.mubr.f32.gmra.mxu0 %v4524
    %v5389 = vpop.f32.mrf.mxu0
    %v5390 = vadd.f32 %v4846, %v5389
    %v5391 = vpop.f32.mrf.mxu0
    %5392 = vmatprep.mubr.f32.mxu0 %v4527
    %5393 = vmatmul.mubr.f32.gmra.mxu0 %v4526
    %v5394 = vpop.f32.mrf.mxu0
    %v5395 = vadd.f32 %v4851, %v5394
    %v5396 = vpop.f32.mrf.mxu0
    %5397 = vmatprep.mubr.f32.mxu0 %v4529
    %5398 = vmatmul.mubr.f32.gmra.mxu0 %v4528
    %v5399 = vpop.f32.mrf.mxu0
    %v5400 = vadd.f32 %v4856, %v5399
    %v5401 = vpop.f32.mrf.mxu0
    %5402 = vmatprep.mubr.f32.mxu0 %v4531
    %5403 = vmatmul.mubr.f32.gmra.mxu0 %v4530
    %v5404 = vpop.f32.mrf.mxu0
    %v5405 = vadd.f32 %v4861, %v5404
    %v5406 = vpop.f32.mrf.mxu0
    %5407 = vmatprep.mubr.f32.mxu0 %v4533
    %5408 = vmatmul.mubr.f32.gmra.mxu0 %v4532
    %v5409 = vpop.f32.mrf.mxu0
    %v5410 = vadd.f32 %v4866, %v5409
    %v5411 = vpop.f32.mrf.mxu0
    %5412 = vmatprep.mubr.f32.mxu0 %v4535
    %5413 = vmatmul.mubr.f32.gmra.mxu0 %v4534
    %v5414 = vpop.f32.mrf.mxu0
    %v5415 = vadd.f32 %v4871, %v5414
    %v5416 = vpop.f32.mrf.mxu0
    %5417 = vmatprep.mubr.f32.mxu0 %v4537
    %5418 = vmatmul.mubr.f32.gmra.mxu0 %v4536
    %v5419 = vpop.f32.mrf.mxu0
    %v5420 = vadd.f32 %v4876, %v5419
    %v5421 = vpop.f32.mrf.mxu0
    %5422 = vmatprep.mubr.f32.mxu0 %v4539
    %5423 = vmatmul.mubr.f32.gmra.mxu0 %v4538
    %v5424 = vpop.f32.mrf.mxu0
    %v5425 = vadd.f32 %v4881, %v5424
    %v5426 = vpop.f32.mrf.mxu0
    %5427 = vmatprep.mubr.f32.mxu0 %v4541
    %5428 = vmatmul.mubr.f32.gmra.mxu0 %v4540
    %v5429 = vpop.f32.mrf.mxu0
    %v5430 = vadd.f32 %v4886, %v5429
    %v5431 = vpop.f32.mrf.mxu0
    %5432 = vmatprep.mubr.f32.mxu0 %v4543
    %5433 = vmatmul.mubr.f32.gmra.mxu0 %v4542
    %v5434 = vpop.f32.mrf.mxu0
    %v5435 = vadd.f32 %v4891, %v5434
    %v5436 = vpop.f32.mrf.mxu0
    %5437 = vmatprep.mubr.f32.mxu0 %v4545
    %5438 = vmatmul.mubr.f32.gmra.mxu0 %v4544
    %v5439 = vpop.f32.mrf.mxu0
    %v5440 = vadd.f32 %v4896, %v5439
    %v5441 = vpop.f32.mrf.mxu0
    %5442 = vmatprep.mubr.f32.mxu0 %v4547
    %5443 = vmatmul.mubr.f32.gmra.mxu0 %v4546
    %v5444 = vpop.f32.mrf.mxu0
    %v5445 = vadd.f32 %v4901, %v5444
    %v5446 = vpop.f32.mrf.mxu0
    %5447 = vmatprep.mubr.f32.mxu0 %v4549
    %5448 = vmatmul.mubr.f32.gmra.mxu0 %v4548
    %v5449 = vpop.f32.mrf.mxu0
    %v5450 = vadd.f32 %v4906, %v5449
    %v5451 = vpop.f32.mrf.mxu0
    %5452 = vmatprep.mubr.f32.mxu0 %v4551
    %5453 = vmatmul.mubr.f32.gmra.mxu0 %v4550
    %v5454 = vpop.f32.mrf.mxu0
    %v5455 = vadd.f32 %v4911, %v5454
    %v5456 = vpop.f32.mrf.mxu0
    %5457 = vmatprep.mubr.f32.mxu0 %v4553
    %5458 = vmatmul.mubr.f32.gmra.mxu0 %v4552
    %v5459 = vpop.f32.mrf.mxu0
    %v5460 = vadd.f32 %v4916, %v5459
    %v5461 = vpop.f32.mrf.mxu0
    %5462 = vmatprep.mubr.f32.mxu0 %v4555
    %5463 = vmatmul.mubr.f32.gmra.mxu0 %v4554
    %v5464 = vpop.f32.mrf.mxu0
    %v5465 = vadd.f32 %v4921, %v5464
    %v5466 = vpop.f32.mrf.mxu0
    %5467 = vmatprep.mubr.f32.mxu0 %v4557
    %5468 = vmatmul.mubr.f32.gmra.mxu0 %v4556
    %v5469 = vpop.f32.mrf.mxu0
    %v5470 = vadd.f32 %v4926, %v5469
    %v5471 = vpop.f32.mrf.mxu0
    %5472 = vmatprep.mubr.f32.mxu0 %v4559
    %5473 = vmatmul.mubr.f32.gmra.mxu0 %v4558
    %v5474 = vpop.f32.mrf.mxu0
    %v5475 = vadd.f32 %v4931, %v5474
    %v5476 = vpop.f32.mrf.mxu0
    %5477 = vmatprep.mubr.f32.mxu0 %v4561
    %5478 = vmatmul.mubr.f32.gmra.mxu0 %v4560
    %v5479 = vpop.f32.mrf.mxu0
    %v5480 = vadd.f32 %v4936, %v5479
    %v5481 = vpop.f32.mrf.mxu0
    %5482 = vmatprep.mubr.f32.mxu0 %v4563
    %5483 = vmatmul.mubr.f32.gmra.mxu0 %v4562
    %v5484 = vpop.f32.mrf.mxu0
    %v5485 = vadd.f32 %v4941, %v5484
    %v5486 = vpop.f32.mrf.mxu0
    %5487 = vmatprep.mubr.f32.mxu0 %v4565
    %5488 = vmatmul.mubr.f32.gmra.mxu0 %v4564
    %v5489 = vpop.f32.mrf.mxu0
    %v5490 = vadd.f32 %v4946, %v5489
    %v5491 = vpop.f32.mrf.mxu0
    %5492 = vmatprep.mubr.f32.mxu0 %v4567
    %5493 = vmatmul.mubr.f32.gmra.mxu0 %v4566
    %v5494 = vpop.f32.mrf.mxu0
    %v5495 = vadd.f32 %v4951, %v5494
    %v5496 = vpop.f32.mrf.mxu0
    %5497 = vmatprep.mubr.f32.mxu0 %v4569
    %5498 = vmatmul.mubr.f32.gmra.mxu0 %v4568
    %v5499 = vpop.f32.mrf.mxu0
    %v5500 = vadd.f32 %v4956, %v5499
    %v5501 = vpop.f32.mrf.mxu0
    %5502 = vmatprep.mubr.f32.mxu0 %v4571
    %5503 = vmatmul.mubr.f32.gmra.mxu0 %v4570
    %v5504 = vpop.f32.mrf.mxu0
    %v5505 = vadd.f32 %v4961, %v5504
    %v5506 = vpop.f32.mrf.mxu0
    %5507 = vmatprep.mubr.f32.mxu0 %v4573
    %5508 = vmatmul.mubr.f32.gmra.mxu0 %v4572
    %v5509 = vpop.f32.mrf.mxu0
    %v5510 = vadd.f32 %v4966, %v5509
    %v5511 = vpop.f32.mrf.mxu0
    %5512 = vmatprep.mubr.f32.mxu0 %v4575
    %5513 = vmatmul.mubr.f32.gmra.mxu0 %v4574
    %v5514 = vpop.f32.mrf.mxu0
    %v5515 = vadd.f32 %v4971, %v5514
    %v5516 = vpop.f32.mrf.mxu0
    %5517 = vmatprep.mubr.f32.mxu0 %v4577
    %5518 = vmatmul.mubr.f32.gmra.mxu0 %v4576
    %v5519 = vpop.f32.mrf.mxu0
    %v5520 = vadd.f32 %v4976, %v5519
    %v5521 = vpop.f32.mrf.mxu0
    %5522 = vmatprep.mubr.f32.mxu0 %v4579
    %5523 = vmatmul.mubr.f32.gmra.mxu0 %v4578
    %v5524 = vpop.f32.mrf.mxu0
    %v5525 = vadd.f32 %v4981, %v5524
    %v5526 = vpop.f32.mrf.mxu0
    %5527 = vmatprep.mubr.f32.mxu0 %v4581
    %5528 = vmatmul.mubr.f32.gmra.mxu0 %v4580
    %v5529 = vpop.f32.mrf.mxu0
    %v5530 = vadd.f32 %v4986, %v5529
    %v5531 = vpop.f32.mrf.mxu0
    %5532 = vmatprep.mubr.f32.mxu0 %v4583
    %5533 = vmatmul.mubr.f32.gmra.mxu0 %v4582
    %v5534 = vpop.f32.mrf.mxu0
    %v5535 = vadd.f32 %v4991, %v5534
    %v5536 = vpop.f32.mrf.mxu0
    %5537 = vmatprep.mubr.f32.mxu0 %v4585
    %5538 = vmatmul.mubr.f32.gmra.mxu0 %v4584
    %v5539 = vpop.f32.mrf.mxu0
    %v5540 = vadd.f32 %v4996, %v5539
    %v5541 = vpop.f32.mrf.mxu0
    %5542 = vmatprep.mubr.f32.mxu0 %v4587
    %5543 = vmatmul.mubr.f32.gmra.mxu0 %v4586
    %v5544 = vpop.f32.mrf.mxu0
    %v5545 = vadd.f32 %v5001, %v5544
    %v5546 = vpop.f32.mrf.mxu0
    %5547 = vmatprep.mubr.f32.mxu0 %v4589
    %5548 = vmatmul.mubr.f32.gmra.mxu0 %v4588
    %v5549 = vpop.f32.mrf.mxu0
    %v5550 = vadd.f32 %v5006, %v5549
    %v5551 = vpop.f32.mrf.mxu0
    %5552 = vmatprep.mubr.f32.mxu0 %v4591
    %5553 = vmatmul.mubr.f32.gmra.mxu0 %v4590
    %v5554 = vpop.f32.mrf.mxu0
    %v5555 = vadd.f32 %v5011, %v5554
    %v5556 = vpop.f32.mrf.mxu0
    %5557 = vmatprep.mubr.f32.mxu0 %v4593
    %5558 = vmatmul.mubr.f32.gmra.mxu0 %v4592
    %v5559 = vpop.f32.mrf.mxu0
    %v5560 = vadd.f32 %v5016, %v5559
    %v5561 = vpop.f32.mrf.mxu0
    %5562 = vmatprep.mubr.f32.mxu0 %v4595
    %5563 = vmatmul.mubr.f32.gmra.mxu0 %v4594
    %v5564 = vpop.f32.mrf.mxu0
    %v5565 = vadd.f32 %v5021, %v5564
    %v5566 = vpop.f32.mrf.mxu0
    %5567 = vmatprep.mubr.f32.mxu0 %v4597
    %5568 = vmatmul.mubr.f32.gmra.mxu0 %v4596
    %v5569 = vpop.f32.mrf.mxu0
    %v5570 = vadd.f32 %v5026, %v5569
    %v5571 = vpop.f32.mrf.mxu0
    %5572 = vmatprep.mubr.f32.mxu0 %v4599
    %5573 = vmatmul.mubr.f32.gmra.mxu0 %v4598
    %v5574 = vpop.f32.mrf.mxu0
    %v5575 = vadd.f32 %v5031, %v5574
    %v5576 = vpop.f32.mrf.mxu0
    %5577 = vmatprep.mubr.f32.mxu0 %v4601
    %5578 = vmatmul.mubr.f32.gmra.mxu0 %v4600
    %v5579 = vpop.f32.mrf.mxu0
    %v5580 = vadd.f32 %v5036, %v5579
    %v5581 = vpop.f32.mrf.mxu0
    %5582 = vmatprep.mubr.f32.mxu0 %v4603
    %5583 = vmatmul.mubr.f32.gmra.mxu0 %v4602
    %v5584 = vpop.f32.mrf.mxu0
    %v5585 = vadd.f32 %v5041, %v5584
    %v5586 = vpop.f32.mrf.mxu0
    %5587 = vmatprep.mubr.f32.mxu0 %v4605
    %5588 = vmatmul.mubr.f32.gmra.mxu0 %v4604
    %v5589 = vpop.f32.mrf.mxu0
    %v5590 = vadd.f32 %v5046, %v5589
    %v5591 = vpop.f32.mrf.mxu0
    %5592 = vmatprep.mubr.f32.mxu0 %v4607
    %5593 = vmatmul.mubr.f32.gmra.mxu0 %v4606
    %v5594 = vpop.f32.mrf.mxu0
    %v5595 = vadd.f32 %v5051, %v5594
    %v5596 = vpop.f32.mrf.mxu0
    %5597 = vmatprep.mubr.f32.mxu0 %v4609
    %5598 = vmatmul.mubr.f32.gmra.mxu0 %v4608
    %v5599 = vpop.f32.mrf.mxu0
    %v5600 = vadd.f32 %v5056, %v5599
    %v5601 = vpop.f32.mrf.mxu0
    %5602 = vmatprep.mubr.f32.mxu0 %v4611
    %5603 = vmatmul.mubr.f32.gmra.mxu0 %v4610
    %v5604 = vpop.f32.mrf.mxu0
    %v5605 = vadd.f32 %v5061, %v5604
    %v5606 = vpop.f32.mrf.mxu0
    %5607 = vmatprep.mubr.f32.mxu0 %v4613
    %5608 = vmatmul.mubr.f32.gmra.mxu0 %v4612
    %v5609 = vpop.f32.mrf.mxu0
    %v5610 = vadd.f32 %v5066, %v5609
    %v5611 = vpop.f32.mrf.mxu0
    %5612 = vmatprep.mubr.f32.mxu0 %v4615
    %5613 = vmatmul.mubr.f32.gmra.mxu0 %v4614
    %v5614 = vpop.f32.mrf.mxu0
    %v5615 = vadd.f32 %v5071, %v5614
    %v5616 = vpop.f32.mrf.mxu0
    %5617 = vmatprep.mubr.f32.mxu0 %v4617
    %5618 = vmatmul.mubr.f32.gmra.mxu0 %v4616
    %v5619 = vpop.f32.mrf.mxu0
    %v5620 = vadd.f32 %v5076, %v5619
    %v5621 = vpop.f32.mrf.mxu0
    %5622 = vmatprep.mubr.f32.mxu0 %v4619
    %5623 = vmatmul.mubr.f32.gmra.mxu0 %v4618
    %v5624 = vpop.f32.mrf.mxu0
    %v5625 = vadd.f32 %v5081, %v5624
    %v5626 = vpop.f32.mrf.mxu0
    %5627 = vmatprep.mubr.f32.mxu0 %v4621
    %5628 = vmatmul.mubr.f32.gmra.mxu0 %v4620
    %v5629 = vpop.f32.mrf.mxu0
    %v5630 = vadd.f32 %v5086, %v5629
    %v5631 = vpop.f32.mrf.mxu0
    %5632 = vmatprep.mubr.f32.mxu0 %v4623
    %5633 = vmatmul.mubr.f32.gmra.mxu0 %v4622
    %v5634 = vpop.f32.mrf.mxu0
    %v5635 = vadd.f32 %v5091, %v5634
    %v5636 = vpop.f32.mrf.mxu0
    %5637 = vmatprep.mubr.f32.mxu0 %v4625
    %5638 = vmatmul.mubr.f32.gmra.mxu0 %v4624
    %v5639 = vpop.f32.mrf.mxu0
    %v5640 = vadd.f32 %v5096, %v5639
    %v5641 = vpop.f32.mrf.mxu0
    %5642 = vmatprep.mubr.f32.mxu0 %v4627
    %5643 = vmatmul.mubr.f32.gmra.mxu0 %v4626
    %v5644 = vpop.f32.mrf.mxu0
    %v5645 = vadd.f32 %v5101, %v5644
    %v5646 = vpop.f32.mrf.mxu0
    %5647 = vmatprep.mubr.f32.mxu0 %v4629
    %5648 = vmatmul.mubr.f32.gmra.mxu0 %v4628
    %v5649 = vpop.f32.mrf.mxu0
    %v5650 = vadd.f32 %v5106, %v5649
    %v5651 = vpop.f32.mrf.mxu0
    %5652 = vmatprep.mubr.f32.mxu0 %v4631
    %5653 = vmatmul.mubr.f32.gmra.mxu0 %v4630
    %v5654 = vpop.f32.mrf.mxu0
    %v5655 = vadd.f32 %v5111, %v5654
    %v5656 = vpop.f32.mrf.mxu0
    %5657 = vmatprep.mubr.f32.mxu0 %v4633
    %5658 = vmatmul.mubr.f32.gmra.mxu0 %v4632
    %v5659 = vpop.f32.mrf.mxu0
    %v5660 = vadd.f32 %v5116, %v5659
    %v5661 = vpop.f32.mrf.mxu0
    %5662 = vmatprep.mubr.f32.mxu0 %v4635
    %5663 = vmatmul.mubr.f32.gmra.mxu0 %v4634
    %v5664 = vpop.f32.mrf.mxu0
    %v5665 = vadd.f32 %v5121, %v5664
    %v5666 = vpop.f32.mrf.mxu0
    %5667 = vmatprep.mubr.f32.mxu0 %v4637
    %5668 = vmatmul.mubr.f32.gmra.mxu0 %v4636
    %v5669 = vpop.f32.mrf.mxu0
    %v5670 = vadd.f32 %v5126, %v5669
    %v5671 = vpop.f32.mrf.mxu0
    %5672 = vmatprep.mubr.f32.mxu0 %v4639
    %5673 = vmatmul.mubr.f32.gmra.mxu0 %v4638
    %v5674 = vpop.f32.mrf.mxu0
    %v5675 = vadd.f32 %v5131, %v5674
    %v5676 = vpop.f32.mrf.mxu0
    %5677 = vmatprep.mubr.f32.mxu0 %v4641
    %5678 = vmatmul.mubr.f32.gmra.mxu0 %v4640
    %v5679 = vpop.f32.mrf.mxu0
    %v5680 = vadd.f32 %v5136, %v5679
    %v5681 = vpop.f32.mrf.mxu0
    %5682 = vmatprep.mubr.f32.mxu0 %v4643
    %5683 = vmatmul.mubr.f32.gmra.mxu0 %v4642
    %v5684 = vpop.f32.mrf.mxu0
    %v5685 = vadd.f32 %v5141, %v5684
    %v5686 = vpop.f32.mrf.mxu0
    %5687 = vmatprep.mubr.f32.mxu0 %v4645
    %5688 = vmatmul.mubr.f32.gmra.mxu0 %v4644
    %v5689 = vpop.f32.mrf.mxu0
    %v5690 = vadd.f32 %v5146, %v5689
    %v5691 = vpop.f32.mrf.mxu0
    %5692 = vmatprep.mubr.f32.mxu0 %v4647
    %5693 = vmatmul.mubr.f32.gmra.mxu0 %v4646
    %v5694 = vpop.f32.mrf.mxu0
    %v5695 = vadd.f32 %v5151, %v5694
    %v5696 = vpop.f32.mrf.mxu0
    %5697 = vmatprep.mubr.f32.mxu0 %v4649
    %5698 = vmatmul.mubr.f32.gmra.mxu0 %v4648
    %v5699 = vpop.f32.mrf.mxu0
    %v5700 = vadd.f32 %v5156, %v5699
    %v5701 = vpop.f32.mrf.mxu0
    %5702 = vmatprep.mubr.f32.mxu0 %v4651
    %5703 = vmatmul.mubr.f32.gmra.mxu0 %v4650
    %v5704 = vpop.f32.mrf.mxu0
    %v5705 = vadd.f32 %v5161, %v5704
    %v5706 = vpop.f32.mrf.mxu0
    %5707 = vmatprep.mubr.f32.mxu0 %v4653
    %5708 = vmatmul.mubr.f32.gmra.mxu0 %v4652
    %v5709 = vpop.f32.mrf.mxu0
    %v5710 = vadd.f32 %v5166, %v5709
    %v5711 = vpop.f32.mrf.mxu0
    %5712 = vmatprep.mubr.f32.mxu0 %v4655
    %5713 = vmatmul.mubr.f32.gmra.mxu0 %v4654
    %v5714 = vpop.f32.mrf.mxu0
    %v5715 = vadd.f32 %v5171, %v5714
    %v5716 = vpop.f32.mrf.mxu0
    %5717 = vmatprep.mubr.f32.mxu0 %v4657
    %5718 = vmatmul.mubr.f32.gmra.mxu0 %v4656
    %v5719 = vpop.f32.mrf.mxu0
    %v5720 = vadd.f32 %v5176, %v5719
    %v5721 = vpop.f32.mrf.mxu0
    %5722 = vmatprep.mubr.f32.mxu0 %v4659
    %5723 = vmatmul.mubr.f32.gmra.mxu0 %v4658
    %v5724 = vpop.f32.mrf.mxu0
    %v5725 = vadd.f32 %v5181, %v5724
    %v5726 = vpop.f32.mrf.mxu0
    %5727 = vmatprep.mubr.f32.mxu0 %v4661
    %5728 = vmatmul.mubr.f32.gmra.mxu0 %v4660
    %v5729 = vpop.f32.mrf.mxu0
    %v5730 = vadd.f32 %v5186, %v5729
    %v5731 = vpop.f32.mrf.mxu0
    %5732 = vmatprep.mubr.f32.mxu0 %v4663
    %5733 = vmatmul.mubr.f32.gmra.mxu0 %v4662
    %v5734 = vpop.f32.mrf.mxu0
    %v5735 = vadd.f32 %v5191, %v5734
    %v5736 = vpop.f32.mrf.mxu0
    %5737 = vmatprep.mubr.f32.mxu0 %v4665
    %5738 = vmatmul.mubr.f32.gmra.mxu0 %v4664
    %v5739 = vpop.f32.mrf.mxu0
    %v5740 = vadd.f32 %v5196, %v5739
    %v5741 = vpop.f32.mrf.mxu0
    %5742 = vmatprep.mubr.f32.mxu0 %v4667
    %5743 = vmatmul.mubr.f32.gmra.mxu0 %v4666
    %v5744 = vpop.f32.mrf.mxu0
    %v5745 = vadd.f32 %v5201, %v5744
    %v5746 = vpop.f32.mrf.mxu0
    %5747 = vmatprep.mubr.f32.mxu0 %v4669
    %5748 = vmatmul.mubr.f32.gmra.mxu0 %v4668
    %v5749 = vpop.f32.mrf.mxu0
    %v5750 = vadd.f32 %v5206, %v5749
    %v5751 = vpop.f32.mrf.mxu0
    %5752 = vmatprep.mubr.f32.mxu0 %v4671
    %5753 = vmatmul.mubr.f32.gmra.mxu0 %v4670
    %v5754 = vpop.f32.mrf.mxu0
    %v5755 = vadd.f32 %v5211, %v5754
    %v5756 = vpop.f32.mrf.mxu0
    %5757 = vmatprep.mubr.f32.mxu0 %v4673
    %5758 = vmatmul.mubr.f32.gmra.mxu0 %v4672
    %v5759 = vpop.f32.mrf.mxu0
    %v5760 = vadd.f32 %v5216, %v5759
    %v5761 = vpop.f32.mrf.mxu0
    %5762 = vmatprep.mubr.f32.mxu0 %v4675
    %5763 = vmatmul.mubr.f32.gmra.mxu0 %v4674
    %v5764 = vpop.f32.mrf.mxu0
    %v5765 = vadd.f32 %v5221, %v5764
    %v5766 = vpop.f32.mrf.mxu0
    %5767 = vmatprep.mubr.f32.mxu0 %v4677
    %5768 = vmatmul.mubr.f32.gmra.mxu0 %v4676
    %v5769 = vpop.f32.mrf.mxu0
    %v5770 = vadd.f32 %v5226, %v5769
    %v5771 = vpop.f32.mrf.mxu0
    %5772 = vmatprep.mubr.f32.mxu0 %v4679
    %5773 = vmatmul.mubr.f32.gmra.mxu0 %v4678
    %v5774 = vpop.f32.mrf.mxu0
    %v5775 = vadd.f32 %v5231, %v5774
    %v5776 = vpop.f32.mrf.mxu0
    %5777 = vmatprep.mubr.f32.mxu0 %v4681
    %5778 = vmatmul.mubr.f32.gmra.mxu0 %v4680
    %v5779 = vpop.f32.mrf.mxu0
    %v5780 = vadd.f32 %v5236, %v5779
    %v5781 = vpop.f32.mrf.mxu0
    %5782 = vmatprep.mubr.f32.mxu0 %v4683
    %5783 = vmatmul.mubr.f32.gmra.mxu0 %v4682
    %v5784 = vpop.f32.mrf.mxu0
    %v5785 = vadd.f32 %v5241, %v5784
    %v5786 = vpop.f32.mrf.mxu0
    %5787 = vmatprep.mubr.f32.mxu0 %v4685
    %5788 = vmatmul.mubr.f32.gmra.mxu0 %v4684
    %v5789 = vpop.f32.mrf.mxu0
    %v5790 = vadd.f32 %v5246, %v5789
    %v5791 = vpop.f32.mrf.mxu0
    %5792 = vmatprep.mubr.f32.mxu0 %v4687
    %5793 = vmatmul.mubr.f32.gmra.mxu0 %v4686
    %v5794 = vpop.f32.mrf.mxu0
    %v5795 = vadd.f32 %v5251, %v5794
    %v5796 = vpop.f32.mrf.mxu0
    %5797 = vmatprep.mubr.f32.mxu0 %v4689
    %5798 = vmatmul.mubr.f32.gmra.mxu0 %v4688
    %v5799 = vpop.f32.mrf.mxu0
    %v5800 = vadd.f32 %v5256, %v5799
    %v5801 = vpop.f32.mrf.mxu0
    %5802 = vmatprep.mubr.f32.mxu0 %v4691
    %5803 = vmatmul.mubr.f32.gmra.mxu0 %v4690
    %v5804 = vpop.f32.mrf.mxu0
    %v5805 = vadd.f32 %v5261, %v5804
    %v5806 = vpop.f32.mrf.mxu0
    %5807 = vmatprep.mubr.f32.mxu0 %v4693
    %5808 = vmatmul.mubr.f32.gmra.mxu0 %v4692
    %v5809 = vpop.f32.mrf.mxu0
    %v5810 = vadd.f32 %v5266, %v5809
    %v5811 = vpop.f32.mrf.mxu0
    %5812 = vmatprep.mubr.f32.mxu0 %v4695
    %5813 = vmatmul.mubr.f32.gmra.mxu0 %v4694
    %v5814 = vpop.f32.mrf.mxu0
    %v5815 = vadd.f32 %v5271, %v5814
    %v5816 = vpop.f32.mrf.mxu0
    %5817 = vdwg.mxu0
    %v5818 = vmul.f32 %v5340, 0.17677669
    %v5819 = vmul.f32 %v5345, 0.17677669
    %v5820 = vmul.f32 %v5350, 0.17677669
    %v5821 = vmul.f32 %v5355, 0.17677669
    %5822 = vxpose.xlu0.b32.start [1/16] %v5818, 128
    %5823 = vxpose.xlu0.b32.cont [2/16] %v5819, 128
    %5824 = vxpose.xlu0.b32.cont [3/16] %v5820, 128
    %5825 = vxpose.xlu0.b32.cont [4/16] %v5821, 128
    %5826 = vxpose.xlu0.b32.cont [5/16] 0.0, 128
    %5827 = vxpose.xlu0.b32.cont [6/16] 0.0, 128
    %5828 = vxpose.xlu0.b32.cont [7/16] 0.0, 128
    %5829 = vxpose.xlu0.b32.cont [8/16] 0.0, 128
    %5830 = vxpose.xlu0.b32.cont [9/16] 0.0, 128
    %5831 = vxpose.xlu0.b32.cont [10/16] 0.0, 128
    %5832 = vxpose.xlu0.b32.cont [11/16] 0.0, 128
    %5833 = vxpose.xlu0.b32.cont [12/16] 0.0, 128
    %5834 = vxpose.xlu0.b32.cont [13/16] 0.0, 128
    %5835 = vxpose.xlu0.b32.cont [14/16] 0.0, 128
    %5836 = vxpose.xlu0.b32.cont [15/16] 0.0, 128
    %5837 = vxpose.xlu0.b32.end [16/16] 0.0, 128
    %v5838 = vpop.trf.xlu0
    %v5839 = vpop.trf.xlu0
    %v5840 = vpop.trf.xlu0
    %v5841 = vpop.trf.xlu0
    %v5842 = vpop.trf.xlu0
    %v5843 = vpop.trf.xlu0
    %v5844 = vpop.trf.xlu0
    %v5845 = vpop.trf.xlu0
    %v5846 = vpop.trf.xlu0
    %v5847 = vpop.trf.xlu0
    %v5848 = vpop.trf.xlu0
    %v5849 = vpop.trf.xlu0
    %v5850 = vpop.trf.xlu0
    %v5851 = vpop.trf.xlu0
    %v5852 = vpop.trf.xlu0
    %v5853 = vpop.trf.xlu0
    %5854 = vst.msk [vmem:[#allocation2] sm:$0xff] %vm1604, %v5838
    %5855 = vst.msk [vmem:[#allocation2 + $0x8] sm:$0xff] %vm1604, %v5839
    %5856 = vst.msk [vmem:[#allocation3] sm:$0xff] %vm1607, %v5500
    %5857 = vst.msk [vmem:[#allocation3 + $0x8] sm:$0xff] %vm1607, %v5505
    %5858 = vst.msk [vmem:[#allocation3 + $0x10] sm:$0xff] %vm1607, %v5510
    %5859 = vst.msk [vmem:[#allocation3 + $0x18] sm:$0xff] %vm1607, %v5515
    %5860 = vst.msk [vmem:[#allocation4] sm:$0xff] %vm1607, %v5660
    %5861 = vst.msk [vmem:[#allocation4 + $0x8] sm:$0xff] %vm1607, %v5665
    %5862 = vst.msk [vmem:[#allocation4 + $0x10] sm:$0xff] %vm1607, %v5670
    %5863 = vst.msk [vmem:[#allocation4 + $0x18] sm:$0xff] %vm1607, %v5675
    %v5864 = vmul.f32 %v5360, 0.17677669
    %v5865 = vmul.f32 %v5365, 0.17677669
    %v5866 = vmul.f32 %v5370, 0.17677669
    %v5867 = vmul.f32 %v5375, 0.17677669
    %5868 = vxpose.xlu0.b32.start [1/16] %v5864, 128
    %5869 = vxpose.xlu0.b32.cont [2/16] %v5865, 128
    %5870 = vxpose.xlu0.b32.cont [3/16] %v5866, 128
    %5871 = vxpose.xlu0.b32.cont [4/16] %v5867, 128
    %5872 = vxpose.xlu0.b32.cont [5/16] 0.0, 128
    %5873 = vxpose.xlu0.b32.cont [6/16] 0.0, 128
    %5874 = vxpose.xlu0.b32.cont [7/16] 0.0, 128
    %5875 = vxpose.xlu0.b32.cont [8/16] 0.0, 128
    %5876 = vxpose.xlu0.b32.cont [9/16] 0.0, 128
    %5877 = vxpose.xlu0.b32.cont [10/16] 0.0, 128
    %5878 = vxpose.xlu0.b32.cont [11/16] 0.0, 128
    %5879 = vxpose.xlu0.b32.cont [12/16] 0.0, 128
    %5880 = vxpose.xlu0.b32.cont [13/16] 0.0, 128
    %5881 = vxpose.xlu0.b32.cont [14/16] 0.0, 128
    %5882 = vxpose.xlu0.b32.cont [15/16] 0.0, 128
    %5883 = vxpose.xlu0.b32.end [16/16] 0.0, 128
    %v5884 = vpop.trf.xlu0
    %v5885 = vpop.trf.xlu0
    %v5886 = vpop.trf.xlu0
    %v5887 = vpop.trf.xlu0
    %v5888 = vpop.trf.xlu0
    %v5889 = vpop.trf.xlu0
    %v5890 = vpop.trf.xlu0
    %v5891 = vpop.trf.xlu0
    %v5892 = vpop.trf.xlu0
    %v5893 = vpop.trf.xlu0
    %v5894 = vpop.trf.xlu0
    %v5895 = vpop.trf.xlu0
    %v5896 = vpop.trf.xlu0
    %v5897 = vpop.trf.xlu0
    %v5898 = vpop.trf.xlu0
    %v5899 = vpop.trf.xlu0
    %5900 = vst.msk [vmem:[%s1652] sm:$0xff] %vm1604, %v5884
    %5901 = vst.msk [vmem:[%s1652 + $0x8] sm:$0xff] %vm1604, %v5885
    %5902 = vst.msk [vmem:[%s1655] sm:$0xff] %vm1607, %v5520
    %5903 = vst.msk [vmem:[%s1655 + $0x8] sm:$0xff] %vm1607, %v5525
    %5904 = vst.msk [vmem:[%s1655 + $0x10] sm:$0xff] %vm1607, %v5530
    %5905 = vst.msk [vmem:[%s1655 + $0x18] sm:$0xff] %vm1607, %v5535
    %5906 = vst.msk [vmem:[%s1660] sm:$0xff] %vm1607, %v5680
    %5907 = vst.msk [vmem:[%s1660 + $0x8] sm:$0xff] %vm1607, %v5685
    %5908 = vst.msk [vmem:[%s1660 + $0x10] sm:$0xff] %vm1607, %v5690
    %5909 = vst.msk [vmem:[%s1660 + $0x18] sm:$0xff] %vm1607, %v5695
    %v5910 = vmul.f32 %v5380, 0.17677669
    %v5911 = vmul.f32 %v5385, 0.17677669
    %v5912 = vmul.f32 %v5390, 0.17677669
    %v5913 = vmul.f32 %v5395, 0.17677669
    %5914 = vxpose.xlu0.b32.start [1/16] %v5910, 128
    %5915 = vxpose.xlu0.b32.cont [2/16] %v5911, 128
    %5916 = vxpose.xlu0.b32.cont [3/16] %v5912, 128
    %5917 = vxpose.xlu0.b32.cont [4/16] %v5913, 128
    %5918 = vxpose.xlu0.b32.cont [5/16] 0.0, 128
    %5919 = vxpose.xlu0.b32.cont [6/16] 0.0, 128
    %5920 = vxpose.xlu0.b32.cont [7/16] 0.0, 128
    %5921 = vxpose.xlu0.b32.cont [8/16] 0.0, 128
    %5922 = vxpose.xlu0.b32.cont [9/16] 0.0, 128
    %5923 = vxpose.xlu0.b32.cont [10/16] 0.0, 128
    %5924 = vxpose.xlu0.b32.cont [11/16] 0.0, 128
    %5925 = vxpose.xlu0.b32.cont [12/16] 0.0, 128
    %5926 = vxpose.xlu0.b32.cont [13/16] 0.0, 128
    %5927 = vxpose.xlu0.b32.cont [14/16] 0.0, 128
    %5928 = vxpose.xlu0.b32.cont [15/16] 0.0, 128
    %5929 = vxpose.xlu0.b32.end [16/16] 0.0, 128
    %v5930 = vpop.trf.xlu0
    %v5931 = vpop.trf.xlu0
    %v5932 = vpop.trf.xlu0
    %v5933 = vpop.trf.xlu0
    %v5934 = vpop.trf.xlu0
    %v5935 = vpop.trf.xlu0
    %v5936 = vpop.trf.xlu0
    %v5937 = vpop.trf.xlu0
    %v5938 = vpop.trf.xlu0
    %v5939 = vpop.trf.xlu0
    %v5940 = vpop.trf.xlu0
    %v5941 = vpop.trf.xlu0
    %v5942 = vpop.trf.xlu0
    %v5943 = vpop.trf.xlu0
    %v5944 = vpop.trf.xlu0
    %v5945 = vpop.trf.xlu0
    %5946 = vst.msk [vmem:[%s1701] sm:$0xff] %vm1604, %v5930
    %5947 = vst.msk [vmem:[%s1701 + $0x8] sm:$0xff] %vm1604, %v5931
    %5948 = vst.msk [vmem:[%s1704] sm:$0xff] %vm1607, %v5540
    %5949 = vst.msk [vmem:[%s1704 + $0x8] sm:$0xff] %vm1607, %v5545
    %5950 = vst.msk [vmem:[%s1704 + $0x10] sm:$0xff] %vm1607, %v5550
    %5951 = vst.msk [vmem:[%s1704 + $0x18] sm:$0xff] %vm1607, %v5555
    %5952 = vst.msk [vmem:[%s1709] sm:$0xff] %vm1607, %v5700
    %5953 = vst.msk [vmem:[%s1709 + $0x8] sm:$0xff] %vm1607, %v5705
    %5954 = vst.msk [vmem:[%s1709 + $0x10] sm:$0xff] %vm1607, %v5710
    %5955 = vst.msk [vmem:[%s1709 + $0x18] sm:$0xff] %vm1607, %v5715
    %v5956 = vmul.f32 %v5400, 0.17677669
    %v5957 = vmul.f32 %v5405, 0.17677669
    %v5958 = vmul.f32 %v5410, 0.17677669
    %v5959 = vmul.f32 %v5415, 0.17677669
    %5960 = vxpose.xlu0.b32.start [1/16] %v5956, 128
    %5961 = vxpose.xlu0.b32.cont [2/16] %v5957, 128
    %5962 = vxpose.xlu0.b32.cont [3/16] %v5958, 128
    %5963 = vxpose.xlu0.b32.cont [4/16] %v5959, 128
    %5964 = vxpose.xlu0.b32.cont [5/16] 0.0, 128
    %5965 = vxpose.xlu0.b32.cont [6/16] 0.0, 128
    %5966 = vxpose.xlu0.b32.cont [7/16] 0.0, 128
    %5967 = vxpose.xlu0.b32.cont [8/16] 0.0, 128
    %5968 = vxpose.xlu0.b32.cont [9/16] 0.0, 128
    %5969 = vxpose.xlu0.b32.cont [10/16] 0.0, 128
    %5970 = vxpose.xlu0.b32.cont [11/16] 0.0, 128
    %5971 = vxpose.xlu0.b32.cont [12/16] 0.0, 128
    %5972 = vxpose.xlu0.b32.cont [13/16] 0.0, 128
    %5973 = vxpose.xlu0.b32.cont [14/16] 0.0, 128
    %5974 = vxpose.xlu0.b32.cont [15/16] 0.0, 128
    %5975 = vxpose.xlu0.b32.end [16/16] 0.0, 128
    %v5976 = vpop.trf.xlu0
    %v5977 = vpop.trf.xlu0
    %v5978 = vpop.trf.xlu0
    %v5979 = vpop.trf.xlu0
    %v5980 = vpop.trf.xlu0
    %v5981 = vpop.trf.xlu0
    %v5982 = vpop.trf.xlu0
    %v5983 = vpop.trf.xlu0
    %v5984 = vpop.trf.xlu0
    %v5985 = vpop.trf.xlu0
    %v5986 = vpop.trf.xlu0
    %v5987 = vpop.trf.xlu0
    %v5988 = vpop.trf.xlu0
    %v5989 = vpop.trf.xlu0
    %v5990 = vpop.trf.xlu0
    %v5991 = vpop.trf.xlu0
    %5992 = vst.msk [vmem:[%s1750] sm:$0xff] %vm1604, %v5976
    %5993 = vst.msk [vmem:[%s1750 + $0x8] sm:$0xff] %vm1604, %v5977
    %5994 = vst.msk [vmem:[%s1753] sm:$0xff] %vm1607, %v5560
    %5995 = vst.msk [vmem:[%s1753 + $0x8] sm:$0xff] %vm1607, %v5565
    %5996 = vst.msk [vmem:[%s1753 + $0x10] sm:$0xff] %vm1607, %v5570
    %5997 = vst.msk [vmem:[%s1753 + $0x18] sm:$0xff] %vm1607, %v5575
    %5998 = vst.msk [vmem:[%s1758] sm:$0xff] %vm1607, %v5720
    %5999 = vst.msk [vmem:[%s1758 + $0x8] sm:$0xff] %vm1607, %v5725
    %6000 = vst.msk [vmem:[%s1758 + $0x10] sm:$0xff] %vm1607, %v5730
    %6001 = vst.msk [vmem:[%s1758 + $0x18] sm:$0xff] %vm1607, %v5735
    %v6002 = vmul.f32 %v5420, 0.17677669
    %v6003 = vmul.f32 %v5425, 0.17677669
    %v6004 = vmul.f32 %v5430, 0.17677669
    %v6005 = vmul.f32 %v5435, 0.17677669
    %6006 = vxpose.xlu0.b32.start [1/16] %v6002, 128
    %6007 = vxpose.xlu0.b32.cont [2/16] %v6003, 128
    %6008 = vxpose.xlu0.b32.cont [3/16] %v6004, 128
    %6009 = vxpose.xlu0.b32.cont [4/16] %v6005, 128
    %6010 = vxpose.xlu0.b32.cont [5/16] 0.0, 128
    %6011 = vxpose.xlu0.b32.cont [6/16] 0.0, 128
    %6012 = vxpose.xlu0.b32.cont [7/16] 0.0, 128
    %6013 = vxpose.xlu0.b32.cont [8/16] 0.0, 128
    %6014 = vxpose.xlu0.b32.cont [9/16] 0.0, 128
    %6015 = vxpose.xlu0.b32.cont [10/16] 0.0, 128
    %6016 = vxpose.xlu0.b32.cont [11/16] 0.0, 128
    %6017 = vxpose.xlu0.b32.cont [12/16] 0.0, 128
    %6018 = vxpose.xlu0.b32.cont [13/16] 0.0, 128
    %6019 = vxpose.xlu0.b32.cont [14/16] 0.0, 128
    %6020 = vxpose.xlu0.b32.cont [15/16] 0.0, 128
    %6021 = vxpose.xlu0.b32.end [16/16] 0.0, 128
    %v6022 = vpop.trf.xlu0
    %v6023 = vpop.trf.xlu0
    %v6024 = vpop.trf.xlu0
    %v6025 = vpop.trf.xlu0
    %v6026 = vpop.trf.xlu0
    %v6027 = vpop.trf.xlu0
    %v6028 = vpop.trf.xlu0
    %v6029 = vpop.trf.xlu0
    %v6030 = vpop.trf.xlu0
    %v6031 = vpop.trf.xlu0
    %v6032 = vpop.trf.xlu0
    %v6033 = vpop.trf.xlu0
    %v6034 = vpop.trf.xlu0
    %v6035 = vpop.trf.xlu0
    %v6036 = vpop.trf.xlu0
    %v6037 = vpop.trf.xlu0
    %6038 = vst.msk [vmem:[%s1799] sm:$0xff] %vm1604, %v6022
    %6039 = vst.msk [vmem:[%s1799 + $0x8] sm:$0xff] %vm1604, %v6023
    %6040 = vst.msk [vmem:[%s1802] sm:$0xff] %vm1607, %v5580
    %6041 = vst.msk [vmem:[%s1802 + $0x8] sm:$0xff] %vm1607, %v5585
    %6042 = vst.msk [vmem:[%s1802 + $0x10] sm:$0xff] %vm1607, %v5590
    %6043 = vst.msk [vmem:[%s1802 + $0x18] sm:$0xff] %vm1607, %v5595
    %6044 = vst.msk [vmem:[%s1807] sm:$0xff] %vm1607, %v5740
    %6045 = vst.msk [vmem:[%s1807 + $0x8] sm:$0xff] %vm1607, %v5745
    %6046 = vst.msk [vmem:[%s1807 + $0x10] sm:$0xff] %vm1607, %v5750
    %6047 = vst.msk [vmem:[%s1807 + $0x18] sm:$0xff] %vm1607, %v5755
    %v6048 = vmul.f32 %v5440, 0.17677669
    %v6049 = vmul.f32 %v5445, 0.17677669
    %v6050 = vmul.f32 %v5450, 0.17677669
    %v6051 = vmul.f32 %v5455, 0.17677669
    %6052 = vxpose.xlu0.b32.start [1/16] %v6048, 128
    %6053 = vxpose.xlu0.b32.cont [2/16] %v6049, 128
    %6054 = vxpose.xlu0.b32.cont [3/16] %v6050, 128
    %6055 = vxpose.xlu0.b32.cont [4/16] %v6051, 128
    %6056 = vxpose.xlu0.b32.cont [5/16] 0.0, 128
    %6057 = vxpose.xlu0.b32.cont [6/16] 0.0, 128
    %6058 = vxpose.xlu0.b32.cont [7/16] 0.0, 128
    %6059 = vxpose.xlu0.b32.cont [8/16] 0.0, 128
    %6060 = vxpose.xlu0.b32.cont [9/16] 0.0, 128
    %6061 = vxpose.xlu0.b32.cont [10/16] 0.0, 128
    %6062 = vxpose.xlu0.b32.cont [11/16] 0.0, 128
    %6063 = vxpose.xlu0.b32.cont [12/16] 0.0, 128
    %6064 = vxpose.xlu0.b32.cont [13/16] 0.0, 128
    %6065 = vxpose.xlu0.b32.cont [14/16] 0.0, 128
    %6066 = vxpose.xlu0.b32.cont [15/16] 0.0, 128
    %6067 = vxpose.xlu0.b32.end [16/16] 0.0, 128
    %v6068 = vpop.trf.xlu0
    %v6069 = vpop.trf.xlu0
    %v6070 = vpop.trf.xlu0
    %v6071 = vpop.trf.xlu0
    %v6072 = vpop.trf.xlu0
    %v6073 = vpop.trf.xlu0
    %v6074 = vpop.trf.xlu0
    %v6075 = vpop.trf.xlu0
    %v6076 = vpop.trf.xlu0
    %v6077 = vpop.trf.xlu0
    %v6078 = vpop.trf.xlu0
    %v6079 = vpop.trf.xlu0
    %v6080 = vpop.trf.xlu0
    %v6081 = vpop.trf.xlu0
    %v6082 = vpop.trf.xlu0
    %v6083 = vpop.trf.xlu0
    %6084 = vst.msk [vmem:[%s1848] sm:$0xff] %vm1604, %v6068
    %6085 = vst.msk [vmem:[%s1848 + $0x8] sm:$0xff] %vm1604, %v6069
    %6086 = vst.msk [vmem:[%s1851] sm:$0xff] %vm1607, %v5600
    %6087 = vst.msk [vmem:[%s1851 + $0x8] sm:$0xff] %vm1607, %v5605
    %6088 = vst.msk [vmem:[%s1851 + $0x10] sm:$0xff] %vm1607, %v5610
    %6089 = vst.msk [vmem:[%s1851 + $0x18] sm:$0xff] %vm1607, %v5615
    %6090 = vst.msk [vmem:[%s1856] sm:$0xff] %vm1607, %v5760
    %6091 = vst.msk [vmem:[%s1856 + $0x8] sm:$0xff] %vm1607, %v5765
    %6092 = vst.msk [vmem:[%s1856 + $0x10] sm:$0xff] %vm1607, %v5770
    %6093 = vst.msk [vmem:[%s1856 + $0x18] sm:$0xff] %vm1607, %v5775
    %v6094 = vmul.f32 %v5460, 0.17677669
    %v6095 = vmul.f32 %v5465, 0.17677669
    %v6096 = vmul.f32 %v5470, 0.17677669
    %v6097 = vmul.f32 %v5475, 0.17677669
    %6098 = vxpose.xlu0.b32.start [1/16] %v6094, 128
    %6099 = vxpose.xlu0.b32.cont [2/16] %v6095, 128
    %6100 = vxpose.xlu0.b32.cont [3/16] %v6096, 128
    %6101 = vxpose.xlu0.b32.cont [4/16] %v6097, 128
    %6102 = vxpose.xlu0.b32.cont [5/16] 0.0, 128
    %6103 = vxpose.xlu0.b32.cont [6/16] 0.0, 128
    %6104 = vxpose.xlu0.b32.cont [7/16] 0.0, 128
    %6105 = vxpose.xlu0.b32.cont [8/16] 0.0, 128
    %6106 = vxpose.xlu0.b32.cont [9/16] 0.0, 128
    %6107 = vxpose.xlu0.b32.cont [10/16] 0.0, 128
    %6108 = vxpose.xlu0.b32.cont [11/16] 0.0, 128
    %6109 = vxpose.xlu0.b32.cont [12/16] 0.0, 128
    %6110 = vxpose.xlu0.b32.cont [13/16] 0.0, 128
    %6111 = vxpose.xlu0.b32.cont [14/16] 0.0, 128
    %6112 = vxpose.xlu0.b32.cont [15/16] 0.0, 128
    %6113 = vxpose.xlu0.b32.end [16/16] 0.0, 128
    %v6114 = vpop.trf.xlu0
    %v6115 = vpop.trf.xlu0
    %v6116 = vpop.trf.xlu0
    %v6117 = vpop.trf.xlu0
    %v6118 = vpop.trf.xlu0
    %v6119 = vpop.trf.xlu0
    %v6120 = vpop.trf.xlu0
    %v6121 = vpop.trf.xlu0
    %v6122 = vpop.trf.xlu0
    %v6123 = vpop.trf.xlu0
    %v6124 = vpop.trf.xlu0
    %v6125 = vpop.trf.xlu0
    %v6126 = vpop.trf.xlu0
    %v6127 = vpop.trf.xlu0
    %v6128 = vpop.trf.xlu0
    %v6129 = vpop.trf.xlu0
    %6130 = vst.msk [vmem:[%s1897] sm:$0xff] %vm1604, %v6114
    %6131 = vst.msk [vmem:[%s1897 + $0x8] sm:$0xff] %vm1604, %v6115
    %6132 = vst.msk [vmem:[%s1900] sm:$0xff] %vm1607, %v5620
    %6133 = vst.msk [vmem:[%s1900 + $0x8] sm:$0xff] %vm1607, %v5625
    %6134 = vst.msk [vmem:[%s1900 + $0x10] sm:$0xff] %vm1607, %v5630
    %6135 = vst.msk [vmem:[%s1900 + $0x18] sm:$0xff] %vm1607, %v5635
    %6136 = vst.msk [vmem:[%s1905] sm:$0xff] %vm1607, %v5780
    %6137 = vst.msk [vmem:[%s1905 + $0x8] sm:$0xff] %vm1607, %v5785
    %6138 = vst.msk [vmem:[%s1905 + $0x10] sm:$0xff] %vm1607, %v5790
    %6139 = vst.msk [vmem:[%s1905 + $0x18] sm:$0xff] %vm1607, %v5795
    %v6140 = vmul.f32 %v5480, 0.17677669
    %v6141 = vmul.f32 %v5485, 0.17677669
    %v6142 = vmul.f32 %v5490, 0.17677669
    %v6143 = vmul.f32 %v5495, 0.17677669
    %6144 = vxpose.xlu0.b32.start [1/16] %v6140, 128
    %6145 = vxpose.xlu0.b32.cont [2/16] %v6141, 128
    %6146 = vxpose.xlu0.b32.cont [3/16] %v6142, 128
    %6147 = vxpose.xlu0.b32.cont [4/16] %v6143, 128
    %6148 = vxpose.xlu0.b32.cont [5/16] 0.0, 128
    %6149 = vxpose.xlu0.b32.cont [6/16] 0.0, 128
    %6150 = vxpose.xlu0.b32.cont [7/16] 0.0, 128
    %6151 = vxpose.xlu0.b32.cont [8/16] 0.0, 128
    %6152 = vxpose.xlu0.b32.cont [9/16] 0.0, 128
    %6153 = vxpose.xlu0.b32.cont [10/16] 0.0, 128
    %6154 = vxpose.xlu0.b32.cont [11/16] 0.0, 128
    %6155 = vxpose.xlu0.b32.cont [12/16] 0.0, 128
    %6156 = vxpose.xlu0.b32.cont [13/16] 0.0, 128
    %6157 = vxpose.xlu0.b32.cont [14/16] 0.0, 128
    %6158 = vxpose.xlu0.b32.cont [15/16] 0.0, 128
    %6159 = vxpose.xlu0.b32.end [16/16] 0.0, 128
    %v6160 = vpop.trf.xlu0
    %v6161 = vpop.trf.xlu0
    %v6162 = vpop.trf.xlu0
    %v6163 = vpop.trf.xlu0
    %v6164 = vpop.trf.xlu0
    %v6165 = vpop.trf.xlu0
    %v6166 = vpop.trf.xlu0
    %v6167 = vpop.trf.xlu0
    %v6168 = vpop.trf.xlu0
    %v6169 = vpop.trf.xlu0
    %v6170 = vpop.trf.xlu0
    %v6171 = vpop.trf.xlu0
    %v6172 = vpop.trf.xlu0
    %v6173 = vpop.trf.xlu0
    %v6174 = vpop.trf.xlu0
    %v6175 = vpop.trf.xlu0
    %6176 = vst.msk [vmem:[%s1946] sm:$0xff] %vm1604, %v6160
    %6177 = vst.msk [vmem:[%s1946 + $0x8] sm:$0xff] %vm1604, %v6161
    %6178 = vst.msk [vmem:[%s1949] sm:$0xff] %vm1607, %v5640
    %6179 = vst.msk [vmem:[%s1949 + $0x8] sm:$0xff] %vm1607, %v5645
    %6180 = vst.msk [vmem:[%s1949 + $0x10] sm:$0xff] %vm1607, %v5650
    %6181 = vst.msk [vmem:[%s1949 + $0x18] sm:$0xff] %vm1607, %v5655
    %6182 = vst.msk [vmem:[%s1954] sm:$0xff] %vm1607, %v5800
    %6183 = vst.msk [vmem:[%s1954 + $0x8] sm:$0xff] %vm1607, %v5805
    %6184 = vst.msk [vmem:[%s1954 + $0x10] sm:$0xff] %vm1607, %v5810
    %6185 = vst.msk [vmem:[%s1954 + $0x18] sm:$0xff] %vm1607, %v5815
    %v6186 = vld [vmem:[#allocation2] sm:$0xff]
    %v6187 = vld [vmem:[#allocation2 + $0x8] sm:$0xff]
    %v6188 = vld [vmem:[#allocation2 + $0x10] sm:$0xff]
    %v6189 = vld [vmem:[#allocation2 + $0x18] sm:$0xff]
    %v6190 = vld [vmem:[#allocation2 + $0x20] sm:$0xff]
    %v6191 = vld [vmem:[#allocation2 + $0x28] sm:$0xff]
    %v6192 = vld [vmem:[#allocation2 + $0x30] sm:$0xff]
    %v6193 = vld [vmem:[#allocation2 + $0x38] sm:$0xff]
    %v6194 = vld [vmem:[#allocation2 + $0x40] sm:$0xff]
    %v6195 = vld [vmem:[#allocation2 + $0x48] sm:$0xff]
    %v6196 = vld [vmem:[#allocation2 + $0x50] sm:$0xff]
    %v6197 = vld [vmem:[#allocation2 + $0x58] sm:$0xff]
    %v6198 = vld [vmem:[#allocation2 + $0x60] sm:$0xff]
    %v6199 = vld [vmem:[#allocation2 + $0x68] sm:$0xff]
    %v6200 = vld [vmem:[#allocation2 + $0x70] sm:$0xff]
    %v6201 = vld [vmem:[#allocation2 + $0x78] sm:$0xff]
    %v6202 = vld [vmem:[#allocation3] sm:$0xff]
    %v6203 = vld [vmem:[#allocation3 + $0x8] sm:$0xff]
    %v6204 = vld [vmem:[#allocation3 + $0x10] sm:$0xff]
    %v6205 = vld [vmem:[#allocation3 + $0x18] sm:$0xff]
    %v6206 = vld [vmem:[#allocation3 + $0x20] sm:$0xff]
    %v6207 = vld [vmem:[#allocation3 + $0x28] sm:$0xff]
    %v6208 = vld [vmem:[#allocation3 + $0x30] sm:$0xff]
    %v6209 = vld [vmem:[#allocation3 + $0x38] sm:$0xff]
    %v6210 = vld [vmem:[#allocation3 + $0x40] sm:$0xff]
    %v6211 = vld [vmem:[#allocation3 + $0x48] sm:$0xff]
    %v6212 = vld [vmem:[#allocation3 + $0x50] sm:$0xff]
    %v6213 = vld [vmem:[#allocation3 + $0x58] sm:$0xff]
    %v6214 = vld [vmem:[#allocation3 + $0x60] sm:$0xff]
    %v6215 = vld [vmem:[#allocation3 + $0x68] sm:$0xff]
    %v6216 = vld [vmem:[#allocation3 + $0x70] sm:$0xff]
    %v6217 = vld [vmem:[#allocation3 + $0x78] sm:$0xff]
    %v6218 = vld [vmem:[#allocation3 + $0x80] sm:$0xff]
    %v6219 = vld [vmem:[#allocation3 + $0x88] sm:$0xff]
    %v6220 = vld [vmem:[#allocation3 + $0x90] sm:$0xff]
    %v6221 = vld [vmem:[#allocation3 + $0x98] sm:$0xff]
    %v6222 = vld [vmem:[#allocation3 + $0xa0] sm:$0xff]
    %v6223 = vld [vmem:[#allocation3 + $0xa8] sm:$0xff]
    %v6224 = vld [vmem:[#allocation3 + $0xb0] sm:$0xff]
    %v6225 = vld [vmem:[#allocation3 + $0xb8] sm:$0xff]
    %v6226 = vld [vmem:[#allocation3 + $0xc0] sm:$0xff]
    %v6227 = vld [vmem:[#allocation3 + $0xc8] sm:$0xff]
    %v6228 = vld [vmem:[#allocation3 + $0xd0] sm:$0xff]
    %v6229 = vld [vmem:[#allocation3 + $0xd8] sm:$0xff]
    %v6230 = vld [vmem:[#allocation3 + $0xe0] sm:$0xff]
    %v6231 = vld [vmem:[#allocation3 + $0xe8] sm:$0xff]
    %v6232 = vld [vmem:[#allocation3 + $0xf0] sm:$0xff]
    %v6233 = vld [vmem:[#allocation3 + $0xf8] sm:$0xff]
    %v6234 = vld [vmem:[#allocation4] sm:$0xff]
    %v6235 = vld [vmem:[#allocation4 + $0x8] sm:$0xff]
    %v6236 = vld [vmem:[#allocation4 + $0x10] sm:$0xff]
    %v6237 = vld [vmem:[#allocation4 + $0x18] sm:$0xff]
    %v6238 = vld [vmem:[#allocation4 + $0x20] sm:$0xff]
    %v6239 = vld [vmem:[#allocation4 + $0x28] sm:$0xff]
    %v6240 = vld [vmem:[#allocation4 + $0x30] sm:$0xff]
    %v6241 = vld [vmem:[#allocation4 + $0x38] sm:$0xff]
    %v6242 = vld [vmem:[#allocation4 + $0x40] sm:$0xff]
    %v6243 = vld [vmem:[#allocation4 + $0x48] sm:$0xff]
    %v6244 = vld [vmem:[#allocation4 + $0x50] sm:$0xff]
    %v6245 = vld [vmem:[#allocation4 + $0x58] sm:$0xff]
    %v6246 = vld [vmem:[#allocation4 + $0x60] sm:$0xff]
    %v6247 = vld [vmem:[#allocation4 + $0x68] sm:$0xff]
    %v6248 = vld [vmem:[#allocation4 + $0x70] sm:$0xff]
    %v6249 = vld [vmem:[#allocation4 + $0x78] sm:$0xff]
    %v6250 = vld [vmem:[#allocation4 + $0x80] sm:$0xff]
    %v6251 = vld [vmem:[#allocation4 + $0x88] sm:$0xff]
    %v6252 = vld [vmem:[#allocation4 + $0x90] sm:$0xff]
    %v6253 = vld [vmem:[#allocation4 + $0x98] sm:$0xff]
    %v6254 = vld [vmem:[#allocation4 + $0xa0] sm:$0xff]
    %v6255 = vld [vmem:[#allocation4 + $0xa8] sm:$0xff]
    %v6256 = vld [vmem:[#allocation4 + $0xb0] sm:$0xff]
    %v6257 = vld [vmem:[#allocation4 + $0xb8] sm:$0xff]
    %v6258 = vld [vmem:[#allocation4 + $0xc0] sm:$0xff]
    %v6259 = vld [vmem:[#allocation4 + $0xc8] sm:$0xff]
    %v6260 = vld [vmem:[#allocation4 + $0xd0] sm:$0xff]
    %v6261 = vld [vmem:[#allocation4 + $0xd8] sm:$0xff]
    %v6262 = vld [vmem:[#allocation4 + $0xe0] sm:$0xff]
    %v6263 = vld [vmem:[#allocation4 + $0xe8] sm:$0xff]
    %v6264 = vld [vmem:[#allocation4 + $0xf0] sm:$0xff]
    %v6265 = vld [vmem:[#allocation4 + $0xf8] sm:$0xff]
    %v6267 = vsel %vm1604, %v6186, 0
    %v6270 = vsel %vm1604, %v6187, 0
    %6272 = vmatprep.subr.mxu0 0.0
    %6273 = vmatpush1.msra.mxu0 0.0
    %6274 = vmatprep.subr.mxu0 0.0
    %6275 = vmatpush1.msra.mxu0 0.0
    %6276 = vmatprep.subr.mxu0 0.0
    %6277 = vmatpush1.msra.mxu0 0.0
    %6278 = vmatprep.subr.mxu0 0.0
    %6279 = vmatpush1.msra.mxu0 0.0
    %6280 = vmatprep.subr.mxu0 0.0
    %6281 = vmatpush1.msra.mxu0 0.0
    %6282 = vmatprep.subr.mxu0 0.0
    %6283 = vmatpush1.msra.mxu0 0.0
    %6284 = vmatprep.subr.mxu0 0.0
    %6285 = vmatpush1.msra.mxu0 0.0
    %6286 = vmatprep.subr.mxu0 0.0
    %6287 = vmatpush1.msra.mxu0 0.0
    %6288 = vmatprep.subr.mxu0 0.0
    %6289 = vmatpush1.msra.mxu0 0.0
    %6290 = vmatprep.subr.mxu0 0.0
    %6291 = vmatpush1.msra.mxu0 0.0
    %6292 = vmatprep.subr.mxu0 0.0
    %6293 = vmatpush1.msra.mxu0 0.0
    %6294 = vmatprep.subr.mxu0 0.0
    %6295 = vmatpush1.msra.mxu0 0.0
    %6296 = vmatprep.subr.mxu0 0.0
    %6297 = vmatpush1.msra.mxu0 %v6205
    %6298 = vmatprep.subr.mxu0 0.0
    %6299 = vmatpush1.msra.mxu0 %v6204
    %6300 = vmatprep.subr.mxu0 0.0
    %6301 = vmatpush1.msra.mxu0 %v6203
    %6302 = vmatprep.subr.mxu0 0.0
    %6303 = vmatpush1.msra.mxu0 %v6202
    %6304 = vmatprep.subr.mxu0 0.0
    %6305 = vmatpush2.msra.mxu0 0.0
    %6306 = vmatprep.subr.mxu0 0.0
    %6307 = vmatpush2.msra.mxu0 0.0
    %6308 = vmatprep.subr.mxu0 0.0
    %6309 = vmatpush2.msra.mxu0 0.0
    %6310 = vmatprep.subr.mxu0 0.0
    %6311 = vmatpush2.msra.mxu0 0.0
    %6312 = vmatprep.subr.mxu0 0.0
    %6313 = vmatpush2.msra.mxu0 0.0
    %6314 = vmatprep.subr.mxu0 0.0
    %6315 = vmatpush2.msra.mxu0 0.0
    %6316 = vmatprep.subr.mxu0 0.0
    %6317 = vmatpush2.msra.mxu0 0.0
    %6318 = vmatprep.subr.mxu0 0.0
    %6319 = vmatpush2.msra.mxu0 0.0
    %6320 = vmatprep.subr.mxu0 0.0
    %6321 = vmatpush2.msra.mxu0 0.0
    %6322 = vmatprep.subr.mxu0 0.0
    %6323 = vmatpush2.msra.mxu0 0.0
    %6324 = vmatprep.subr.mxu0 0.0
    %6325 = vmatpush2.msra.mxu0 0.0
    %6326 = vmatprep.subr.mxu0 0.0
    %6327 = vmatpush2.msra.mxu0 0.0
    %6328 = vmatprep.subr.mxu0 0.0
    %6329 = vmatpush2.msra.mxu0 0.0
    %6330 = vmatprep.subr.mxu0 0.0
    %6331 = vmatpush2.msra.mxu0 0.0
    %6332 = vmatprep.subr.mxu0 0.0
    %6333 = vmatpush2.msra.mxu0 0.0
    %6334 = vmatprep.subr.mxu0 0.0
    %6335 = vmatpush2.msra.mxu0 0.0
    %6336 = vmatprep.mubr.f32.mxu0 0.0
    %6337 = vmatmul.mubr.f32.gmra.mxu0 %v6267
    %v6338 = vpop.f32.mrf.mxu0
    %v6339 = vadd.f32 %v253, %v6338
    %v6340 = vpop.f32.mrf.mxu0
    %6341 = vmatprep.mubr.f32.mxu0 0.0
    %6342 = vmatmul.mubr.f32.gmra.mxu0 %v6270
    %v6343 = vpop.f32.mrf.mxu0
    %v6344 = vadd.f32 %v254, %v6343
    %v6345 = vpop.f32.mrf.mxu0
    %6346 = vdwg.mxu0
    %v6348 = vsel %vm1604, %v6188, 0
    %v6351 = vsel %vm1604, %v6189, 0
    %6353 = vmatprep.subr.mxu0 0.0
    %6354 = vmatpush1.msra.mxu0 0.0
    %6355 = vmatprep.subr.mxu0 0.0
    %6356 = vmatpush1.msra.mxu0 0.0
    %6357 = vmatprep.subr.mxu0 0.0
    %6358 = vmatpush1.msra.mxu0 0.0
    %6359 = vmatprep.subr.mxu0 0.0
    %6360 = vmatpush1.msra.mxu0 0.0
    %6361 = vmatprep.subr.mxu0 0.0
    %6362 = vmatpush1.msra.mxu0 0.0
    %6363 = vmatprep.subr.mxu0 0.0
    %6364 = vmatpush1.msra.mxu0 0.0
    %6365 = vmatprep.subr.mxu0 0.0
    %6366 = vmatpush1.msra.mxu0 0.0
    %6367 = vmatprep.subr.mxu0 0.0
    %6368 = vmatpush1.msra.mxu0 0.0
    %6369 = vmatprep.subr.mxu0 0.0
    %6370 = vmatpush1.msra.mxu0 0.0
    %6371 = vmatprep.subr.mxu0 0.0
    %6372 = vmatpush1.msra.mxu0 0.0
    %6373 = vmatprep.subr.mxu0 0.0
    %6374 = vmatpush1.msra.mxu0 0.0
    %6375 = vmatprep.subr.mxu0 0.0
    %6376 = vmatpush1.msra.mxu0 0.0
    %6377 = vmatprep.subr.mxu0 0.0
    %6378 = vmatpush1.msra.mxu0 %v6209
    %6379 = vmatprep.subr.mxu0 0.0
    %6380 = vmatpush1.msra.mxu0 %v6208
    %6381 = vmatprep.subr.mxu0 0.0
    %6382 = vmatpush1.msra.mxu0 %v6207
    %6383 = vmatprep.subr.mxu0 0.0
    %6384 = vmatpush1.msra.mxu0 %v6206
    %6385 = vmatprep.subr.mxu0 0.0
    %6386 = vmatpush2.msra.mxu0 0.0
    %6387 = vmatprep.subr.mxu0 0.0
    %6388 = vmatpush2.msra.mxu0 0.0
    %6389 = vmatprep.subr.mxu0 0.0
    %6390 = vmatpush2.msra.mxu0 0.0
    %6391 = vmatprep.subr.mxu0 0.0
    %6392 = vmatpush2.msra.mxu0 0.0
    %6393 = vmatprep.subr.mxu0 0.0
    %6394 = vmatpush2.msra.mxu0 0.0
    %6395 = vmatprep.subr.mxu0 0.0
    %6396 = vmatpush2.msra.mxu0 0.0
    %6397 = vmatprep.subr.mxu0 0.0
    %6398 = vmatpush2.msra.mxu0 0.0
    %6399 = vmatprep.subr.mxu0 0.0
    %6400 = vmatpush2.msra.mxu0 0.0
    %6401 = vmatprep.subr.mxu0 0.0
    %6402 = vmatpush2.msra.mxu0 0.0
    %6403 = vmatprep.subr.mxu0 0.0
    %6404 = vmatpush2.msra.mxu0 0.0
    %6405 = vmatprep.subr.mxu0 0.0
    %6406 = vmatpush2.msra.mxu0 0.0
    %6407 = vmatprep.subr.mxu0 0.0
    %6408 = vmatpush2.msra.mxu0 0.0
    %6409 = vmatprep.subr.mxu0 0.0
    %6410 = vmatpush2.msra.mxu0 0.0
    %6411 = vmatprep.subr.mxu0 0.0
    %6412 = vmatpush2.msra.mxu0 0.0
    %6413 = vmatprep.subr.mxu0 0.0
    %6414 = vmatpush2.msra.mxu0 0.0
    %6415 = vmatprep.subr.mxu0 0.0
    %6416 = vmatpush2.msra.mxu0 0.0
    %6417 = vmatprep.mubr.f32.mxu0 0.0
    %6418 = vmatmul.mubr.f32.gmra.mxu0 %v6348
    %v6419 = vpop.f32.mrf.mxu0
    %v6420 = vadd.f32 %v253, %v6419
    %v6421 = vpop.f32.mrf.mxu0
    %6422 = vmatprep.mubr.f32.mxu0 0.0
    %6423 = vmatmul.mubr.f32.gmra.mxu0 %v6351
    %v6424 = vpop.f32.mrf.mxu0
    %v6425 = vadd.f32 %v254, %v6424
    %v6426 = vpop.f32.mrf.mxu0
    %6427 = vdwg.mxu0
    %v6429 = vsel %vm1604, %v6190, 0
    %v6432 = vsel %vm1604, %v6191, 0
    %6434 = vmatprep.subr.mxu0 0.0
    %6435 = vmatpush1.msra.mxu0 0.0
    %6436 = vmatprep.subr.mxu0 0.0
    %6437 = vmatpush1.msra.mxu0 0.0
    %6438 = vmatprep.subr.mxu0 0.0
    %6439 = vmatpush1.msra.mxu0 0.0
    %6440 = vmatprep.subr.mxu0 0.0
    %6441 = vmatpush1.msra.mxu0 0.0
    %6442 = vmatprep.subr.mxu0 0.0
    %6443 = vmatpush1.msra.mxu0 0.0
    %6444 = vmatprep.subr.mxu0 0.0
    %6445 = vmatpush1.msra.mxu0 0.0
    %6446 = vmatprep.subr.mxu0 0.0
    %6447 = vmatpush1.msra.mxu0 0.0
    %6448 = vmatprep.subr.mxu0 0.0
    %6449 = vmatpush1.msra.mxu0 0.0
    %6450 = vmatprep.subr.mxu0 0.0
    %6451 = vmatpush1.msra.mxu0 0.0
    %6452 = vmatprep.subr.mxu0 0.0
    %6453 = vmatpush1.msra.mxu0 0.0
    %6454 = vmatprep.subr.mxu0 0.0
    %6455 = vmatpush1.msra.mxu0 0.0
    %6456 = vmatprep.subr.mxu0 0.0
    %6457 = vmatpush1.msra.mxu0 0.0
    %6458 = vmatprep.subr.mxu0 0.0
    %6459 = vmatpush1.msra.mxu0 %v6213
    %6460 = vmatprep.subr.mxu0 0.0
    %6461 = vmatpush1.msra.mxu0 %v6212
    %6462 = vmatprep.subr.mxu0 0.0
    %6463 = vmatpush1.msra.mxu0 %v6211
    %6464 = vmatprep.subr.mxu0 0.0
    %6465 = vmatpush1.msra.mxu0 %v6210
    %6466 = vmatprep.subr.mxu0 0.0
    %6467 = vmatpush2.msra.mxu0 0.0
    %6468 = vmatprep.subr.mxu0 0.0
    %6469 = vmatpush2.msra.mxu0 0.0
    %6470 = vmatprep.subr.mxu0 0.0
    %6471 = vmatpush2.msra.mxu0 0.0
    %6472 = vmatprep.subr.mxu0 0.0
    %6473 = vmatpush2.msra.mxu0 0.0
    %6474 = vmatprep.subr.mxu0 0.0
    %6475 = vmatpush2.msra.mxu0 0.0
    %6476 = vmatprep.subr.mxu0 0.0
    %6477 = vmatpush2.msra.mxu0 0.0
    %6478 = vmatprep.subr.mxu0 0.0
    %6479 = vmatpush2.msra.mxu0 0.0
    %6480 = vmatprep.subr.mxu0 0.0
    %6481 = vmatpush2.msra.mxu0 0.0
    %6482 = vmatprep.subr.mxu0 0.0
    %6483 = vmatpush2.msra.mxu0 0.0
    %6484 = vmatprep.subr.mxu0 0.0
    %6485 = vmatpush2.msra.mxu0 0.0
    %6486 = vmatprep.subr.mxu0 0.0
    %6487 = vmatpush2.msra.mxu0 0.0
    %6488 = vmatprep.subr.mxu0 0.0
    %6489 = vmatpush2.msra.mxu0 0.0
    %6490 = vmatprep.subr.mxu0 0.0
    %6491 = vmatpush2.msra.mxu0 0.0
    %6492 = vmatprep.subr.mxu0 0.0
    %6493 = vmatpush2.msra.mxu0 0.0
    %6494 = vmatprep.subr.mxu0 0.0
    %6495 = vmatpush2.msra.mxu0 0.0
    %6496 = vmatprep.subr.mxu0 0.0
    %6497 = vmatpush2.msra.mxu0 0.0
    %6498 = vmatprep.mubr.f32.mxu0 0.0
    %6499 = vmatmul.mubr.f32.gmra.mxu0 %v6429
    %v6500 = vpop.f32.mrf.mxu0
    %v6501 = vadd.f32 %v253, %v6500
    %v6502 = vpop.f32.mrf.mxu0
    %6503 = vmatprep.mubr.f32.mxu0 0.0
    %6504 = vmatmul.mubr.f32.gmra.mxu0 %v6432
    %v6505 = vpop.f32.mrf.mxu0
    %v6506 = vadd.f32 %v254, %v6505
    %v6507 = vpop.f32.mrf.mxu0
    %6508 = vdwg.mxu0
    %v6510 = vsel %vm1604, %v6192, 0
    %v6513 = vsel %vm1604, %v6193, 0
    %6515 = vmatprep.subr.mxu0 0.0
    %6516 = vmatpush1.msra.mxu0 0.0
    %6517 = vmatprep.subr.mxu0 0.0
    %6518 = vmatpush1.msra.mxu0 0.0
    %6519 = vmatprep.subr.mxu0 0.0
    %6520 = vmatpush1.msra.mxu0 0.0
    %6521 = vmatprep.subr.mxu0 0.0
    %6522 = vmatpush1.msra.mxu0 0.0
    %6523 = vmatprep.subr.mxu0 0.0
    %6524 = vmatpush1.msra.mxu0 0.0
    %6525 = vmatprep.subr.mxu0 0.0
    %6526 = vmatpush1.msra.mxu0 0.0
    %6527 = vmatprep.subr.mxu0 0.0
    %6528 = vmatpush1.msra.mxu0 0.0
    %6529 = vmatprep.subr.mxu0 0.0
    %6530 = vmatpush1.msra.mxu0 0.0
    %6531 = vmatprep.subr.mxu0 0.0
    %6532 = vmatpush1.msra.mxu0 0.0
    %6533 = vmatprep.subr.mxu0 0.0
    %6534 = vmatpush1.msra.mxu0 0.0
    %6535 = vmatprep.subr.mxu0 0.0
    %6536 = vmatpush1.msra.mxu0 0.0
    %6537 = vmatprep.subr.mxu0 0.0
    %6538 = vmatpush1.msra.mxu0 0.0
    %6539 = vmatprep.subr.mxu0 0.0
    %6540 = vmatpush1.msra.mxu0 %v6217
    %6541 = vmatprep.subr.mxu0 0.0
    %6542 = vmatpush1.msra.mxu0 %v6216
    %6543 = vmatprep.subr.mxu0 0.0
    %6544 = vmatpush1.msra.mxu0 %v6215
    %6545 = vmatprep.subr.mxu0 0.0
    %6546 = vmatpush1.msra.mxu0 %v6214
    %6547 = vmatprep.subr.mxu0 0.0
    %6548 = vmatpush2.msra.mxu0 0.0
    %6549 = vmatprep.subr.mxu0 0.0
    %6550 = vmatpush2.msra.mxu0 0.0
    %6551 = vmatprep.subr.mxu0 0.0
    %6552 = vmatpush2.msra.mxu0 0.0
    %6553 = vmatprep.subr.mxu0 0.0
    %6554 = vmatpush2.msra.mxu0 0.0
    %6555 = vmatprep.subr.mxu0 0.0
    %6556 = vmatpush2.msra.mxu0 0.0
    %6557 = vmatprep.subr.mxu0 0.0
    %6558 = vmatpush2.msra.mxu0 0.0
    %6559 = vmatprep.subr.mxu0 0.0
    %6560 = vmatpush2.msra.mxu0 0.0
    %6561 = vmatprep.subr.mxu0 0.0
    %6562 = vmatpush2.msra.mxu0 0.0
    %6563 = vmatprep.subr.mxu0 0.0
    %6564 = vmatpush2.msra.mxu0 0.0
    %6565 = vmatprep.subr.mxu0 0.0
    %6566 = vmatpush2.msra.mxu0 0.0
    %6567 = vmatprep.subr.mxu0 0.0
    %6568 = vmatpush2.msra.mxu0 0.0
    %6569 = vmatprep.subr.mxu0 0.0
    %6570 = vmatpush2.msra.mxu0 0.0
    %6571 = vmatprep.subr.mxu0 0.0
    %6572 = vmatpush2.msra.mxu0 0.0
    %6573 = vmatprep.subr.mxu0 0.0
    %6574 = vmatpush2.msra.mxu0 0.0
    %6575 = vmatprep.subr.mxu0 0.0
    %6576 = vmatpush2.msra.mxu0 0.0
    %6577 = vmatprep.subr.mxu0 0.0
    %6578 = vmatpush2.msra.mxu0 0.0
    %6579 = vmatprep.mubr.f32.mxu0 0.0
    %6580 = vmatmul.mubr.f32.gmra.mxu0 %v6510
    %v6581 = vpop.f32.mrf.mxu0
    %v6582 = vadd.f32 %v253, %v6581
    %v6583 = vpop.f32.mrf.mxu0
    %6584 = vmatprep.mubr.f32.mxu0 0.0
    %6585 = vmatmul.mubr.f32.gmra.mxu0 %v6513
    %v6586 = vpop.f32.mrf.mxu0
    %v6587 = vadd.f32 %v254, %v6586
    %v6588 = vpop.f32.mrf.mxu0
    %6589 = vdwg.mxu0
    %v6591 = vsel %vm1604, %v6194, 0
    %v6594 = vsel %vm1604, %v6195, 0
    %6596 = vmatprep.subr.mxu0 0.0
    %6597 = vmatpush1.msra.mxu0 0.0
    %6598 = vmatprep.subr.mxu0 0.0
    %6599 = vmatpush1.msra.mxu0 0.0
    %6600 = vmatprep.subr.mxu0 0.0
    %6601 = vmatpush1.msra.mxu0 0.0
    %6602 = vmatprep.subr.mxu0 0.0
    %6603 = vmatpush1.msra.mxu0 0.0
    %6604 = vmatprep.subr.mxu0 0.0
    %6605 = vmatpush1.msra.mxu0 0.0
    %6606 = vmatprep.subr.mxu0 0.0
    %6607 = vmatpush1.msra.mxu0 0.0
    %6608 = vmatprep.subr.mxu0 0.0
    %6609 = vmatpush1.msra.mxu0 0.0
    %6610 = vmatprep.subr.mxu0 0.0
    %6611 = vmatpush1.msra.mxu0 0.0
    %6612 = vmatprep.subr.mxu0 0.0
    %6613 = vmatpush1.msra.mxu0 0.0
    %6614 = vmatprep.subr.mxu0 0.0
    %6615 = vmatpush1.msra.mxu0 0.0
    %6616 = vmatprep.subr.mxu0 0.0
    %6617 = vmatpush1.msra.mxu0 0.0
    %6618 = vmatprep.subr.mxu0 0.0
    %6619 = vmatpush1.msra.mxu0 0.0
    %6620 = vmatprep.subr.mxu0 0.0
    %6621 = vmatpush1.msra.mxu0 %v6221
    %6622 = vmatprep.subr.mxu0 0.0
    %6623 = vmatpush1.msra.mxu0 %v6220
    %6624 = vmatprep.subr.mxu0 0.0
    %6625 = vmatpush1.msra.mxu0 %v6219
    %6626 = vmatprep.subr.mxu0 0.0
    %6627 = vmatpush1.msra.mxu0 %v6218
    %6628 = vmatprep.subr.mxu0 0.0
    %6629 = vmatpush2.msra.mxu0 0.0
    %6630 = vmatprep.subr.mxu0 0.0
    %6631 = vmatpush2.msra.mxu0 0.0
    %6632 = vmatprep.subr.mxu0 0.0
    %6633 = vmatpush2.msra.mxu0 0.0
    %6634 = vmatprep.subr.mxu0 0.0
    %6635 = vmatpush2.msra.mxu0 0.0
    %6636 = vmatprep.subr.mxu0 0.0
    %6637 = vmatpush2.msra.mxu0 0.0
    %6638 = vmatprep.subr.mxu0 0.0
    %6639 = vmatpush2.msra.mxu0 0.0
    %6640 = vmatprep.subr.mxu0 0.0
    %6641 = vmatpush2.msra.mxu0 0.0
    %6642 = vmatprep.subr.mxu0 0.0
    %6643 = vmatpush2.msra.mxu0 0.0
    %6644 = vmatprep.subr.mxu0 0.0
    %6645 = vmatpush2.msra.mxu0 0.0
    %6646 = vmatprep.subr.mxu0 0.0
    %6647 = vmatpush2.msra.mxu0 0.0
    %6648 = vmatprep.subr.mxu0 0.0
    %6649 = vmatpush2.msra.mxu0 0.0
    %6650 = vmatprep.subr.mxu0 0.0
    %6651 = vmatpush2.msra.mxu0 0.0
    %6652 = vmatprep.subr.mxu0 0.0
    %6653 = vmatpush2.msra.mxu0 0.0
    %6654 = vmatprep.subr.mxu0 0.0
    %6655 = vmatpush2.msra.mxu0 0.0
    %6656 = vmatprep.subr.mxu0 0.0
    %6657 = vmatpush2.msra.mxu0 0.0
    %6658 = vmatprep.subr.mxu0 0.0
    %6659 = vmatpush2.msra.mxu0 0.0
    %6660 = vmatprep.mubr.f32.mxu0 0.0
    %6661 = vmatmul.mubr.f32.gmra.mxu0 %v6591
    %v6662 = vpop.f32.mrf.mxu0
    %v6663 = vadd.f32 %v253, %v6662
    %v6664 = vpop.f32.mrf.mxu0
    %6665 = vmatprep.mubr.f32.mxu0 0.0
    %6666 = vmatmul.mubr.f32.gmra.mxu0 %v6594
    %v6667 = vpop.f32.mrf.mxu0
    %v6668 = vadd.f32 %v254, %v6667
    %v6669 = vpop.f32.mrf.mxu0
    %6670 = vdwg.mxu0
    %v6672 = vsel %vm1604, %v6196, 0
    %v6675 = vsel %vm1604, %v6197, 0
    %6677 = vmatprep.subr.mxu0 0.0
    %6678 = vmatpush1.msra.mxu0 0.0
    %6679 = vmatprep.subr.mxu0 0.0
    %6680 = vmatpush1.msra.mxu0 0.0
    %6681 = vmatprep.subr.mxu0 0.0
    %6682 = vmatpush1.msra.mxu0 0.0
    %6683 = vmatprep.subr.mxu0 0.0
    %6684 = vmatpush1.msra.mxu0 0.0
    %6685 = vmatprep.subr.mxu0 0.0
    %6686 = vmatpush1.msra.mxu0 0.0
    %6687 = vmatprep.subr.mxu0 0.0
    %6688 = vmatpush1.msra.mxu0 0.0
    %6689 = vmatprep.subr.mxu0 0.0
    %6690 = vmatpush1.msra.mxu0 0.0
    %6691 = vmatprep.subr.mxu0 0.0
    %6692 = vmatpush1.msra.mxu0 0.0
    %6693 = vmatprep.subr.mxu0 0.0
    %6694 = vmatpush1.msra.mxu0 0.0
    %6695 = vmatprep.subr.mxu0 0.0
    %6696 = vmatpush1.msra.mxu0 0.0
    %6697 = vmatprep.subr.mxu0 0.0
    %6698 = vmatpush1.msra.mxu0 0.0
    %6699 = vmatprep.subr.mxu0 0.0
    %6700 = vmatpush1.msra.mxu0 0.0
    %6701 = vmatprep.subr.mxu0 0.0
    %6702 = vmatpush1.msra.mxu0 %v6225
    %6703 = vmatprep.subr.mxu0 0.0
    %6704 = vmatpush1.msra.mxu0 %v6224
    %6705 = vmatprep.subr.mxu0 0.0
    %6706 = vmatpush1.msra.mxu0 %v6223
    %6707 = vmatprep.subr.mxu0 0.0
    %6708 = vmatpush1.msra.mxu0 %v6222
    %6709 = vmatprep.subr.mxu0 0.0
    %6710 = vmatpush2.msra.mxu0 0.0
    %6711 = vmatprep.subr.mxu0 0.0
    %6712 = vmatpush2.msra.mxu0 0.0
    %6713 = vmatprep.subr.mxu0 0.0
    %6714 = vmatpush2.msra.mxu0 0.0
    %6715 = vmatprep.subr.mxu0 0.0
    %6716 = vmatpush2.msra.mxu0 0.0
    %6717 = vmatprep.subr.mxu0 0.0
    %6718 = vmatpush2.msra.mxu0 0.0
    %6719 = vmatprep.subr.mxu0 0.0
    %6720 = vmatpush2.msra.mxu0 0.0
    %6721 = vmatprep.subr.mxu0 0.0
    %6722 = vmatpush2.msra.mxu0 0.0
    %6723 = vmatprep.subr.mxu0 0.0
    %6724 = vmatpush2.msra.mxu0 0.0
    %6725 = vmatprep.subr.mxu0 0.0
    %6726 = vmatpush2.msra.mxu0 0.0
    %6727 = vmatprep.subr.mxu0 0.0
    %6728 = vmatpush2.msra.mxu0 0.0
    %6729 = vmatprep.subr.mxu0 0.0
    %6730 = vmatpush2.msra.mxu0 0.0
    %6731 = vmatprep.subr.mxu0 0.0
    %6732 = vmatpush2.msra.mxu0 0.0
    %6733 = vmatprep.subr.mxu0 0.0
    %6734 = vmatpush2.msra.mxu0 0.0
    %6735 = vmatprep.subr.mxu0 0.0
    %6736 = vmatpush2.msra.mxu0 0.0
    %6737 = vmatprep.subr.mxu0 0.0
    %6738 = vmatpush2.msra.mxu0 0.0
    %6739 = vmatprep.subr.mxu0 0.0
    %6740 = vmatpush2.msra.mxu0 0.0
    %6741 = vmatprep.mubr.f32.mxu0 0.0
    %6742 = vmatmul.mubr.f32.gmra.mxu0 %v6672
    %v6743 = vpop.f32.mrf.mxu0
    %v6744 = vadd.f32 %v253, %v6743
    %v6745 = vpop.f32.mrf.mxu0
    %6746 = vmatprep.mubr.f32.mxu0 0.0
    %6747 = vmatmul.mubr.f32.gmra.mxu0 %v6675
    %v6748 = vpop.f32.mrf.mxu0
    %v6749 = vadd.f32 %v254, %v6748
    %v6750 = vpop.f32.mrf.mxu0
    %6751 = vdwg.mxu0
    %v6753 = vsel %vm1604, %v6198, 0
    %v6756 = vsel %vm1604, %v6199, 0
    %6758 = vmatprep.subr.mxu0 0.0
    %6759 = vmatpush1.msra.mxu0 0.0
    %6760 = vmatprep.subr.mxu0 0.0
    %6761 = vmatpush1.msra.mxu0 0.0
    %6762 = vmatprep.subr.mxu0 0.0
    %6763 = vmatpush1.msra.mxu0 0.0
    %6764 = vmatprep.subr.mxu0 0.0
    %6765 = vmatpush1.msra.mxu0 0.0
    %6766 = vmatprep.subr.mxu0 0.0
    %6767 = vmatpush1.msra.mxu0 0.0
    %6768 = vmatprep.subr.mxu0 0.0
    %6769 = vmatpush1.msra.mxu0 0.0
    %6770 = vmatprep.subr.mxu0 0.0
    %6771 = vmatpush1.msra.mxu0 0.0
    %6772 = vmatprep.subr.mxu0 0.0
    %6773 = vmatpush1.msra.mxu0 0.0
    %6774 = vmatprep.subr.mxu0 0.0
    %6775 = vmatpush1.msra.mxu0 0.0
    %6776 = vmatprep.subr.mxu0 0.0
    %6777 = vmatpush1.msra.mxu0 0.0
    %6778 = vmatprep.subr.mxu0 0.0
    %6779 = vmatpush1.msra.mxu0 0.0
    %6780 = vmatprep.subr.mxu0 0.0
    %6781 = vmatpush1.msra.mxu0 0.0
    %6782 = vmatprep.subr.mxu0 0.0
    %6783 = vmatpush1.msra.mxu0 %v6229
    %6784 = vmatprep.subr.mxu0 0.0
    %6785 = vmatpush1.msra.mxu0 %v6228
    %6786 = vmatprep.subr.mxu0 0.0
    %6787 = vmatpush1.msra.mxu0 %v6227
    %6788 = vmatprep.subr.mxu0 0.0
    %6789 = vmatpush1.msra.mxu0 %v6226
    %6790 = vmatprep.subr.mxu0 0.0
    %6791 = vmatpush2.msra.mxu0 0.0
    %6792 = vmatprep.subr.mxu0 0.0
    %6793 = vmatpush2.msra.mxu0 0.0
    %6794 = vmatprep.subr.mxu0 0.0
    %6795 = vmatpush2.msra.mxu0 0.0
    %6796 = vmatprep.subr.mxu0 0.0
    %6797 = vmatpush2.msra.mxu0 0.0
    %6798 = vmatprep.subr.mxu0 0.0
    %6799 = vmatpush2.msra.mxu0 0.0
    %6800 = vmatprep.subr.mxu0 0.0
    %6801 = vmatpush2.msra.mxu0 0.0
    %6802 = vmatprep.subr.mxu0 0.0
    %6803 = vmatpush2.msra.mxu0 0.0
    %6804 = vmatprep.subr.mxu0 0.0
    %6805 = vmatpush2.msra.mxu0 0.0
    %6806 = vmatprep.subr.mxu0 0.0
    %6807 = vmatpush2.msra.mxu0 0.0
    %6808 = vmatprep.subr.mxu0 0.0
    %6809 = vmatpush2.msra.mxu0 0.0
    %6810 = vmatprep.subr.mxu0 0.0
    %6811 = vmatpush2.msra.mxu0 0.0
    %6812 = vmatprep.subr.mxu0 0.0
    %6813 = vmatpush2.msra.mxu0 0.0
    %6814 = vmatprep.subr.mxu0 0.0
    %6815 = vmatpush2.msra.mxu0 0.0
    %6816 = vmatprep.subr.mxu0 0.0
    %6817 = vmatpush2.msra.mxu0 0.0
    %6818 = vmatprep.subr.mxu0 0.0
    %6819 = vmatpush2.msra.mxu0 0.0
    %6820 = vmatprep.subr.mxu0 0.0
    %6821 = vmatpush2.msra.mxu0 0.0
    %6822 = vmatprep.mubr.f32.mxu0 0.0
    %6823 = vmatmul.mubr.f32.gmra.mxu0 %v6753
    %v6824 = vpop.f32.mrf.mxu0
    %v6825 = vadd.f32 %v253, %v6824
    %v6826 = vpop.f32.mrf.mxu0
    %6827 = vmatprep.mubr.f32.mxu0 0.0
    %6828 = vmatmul.mubr.f32.gmra.mxu0 %v6756
    %v6829 = vpop.f32.mrf.mxu0
    %v6830 = vadd.f32 %v254, %v6829
    %v6831 = vpop.f32.mrf.mxu0
    %6832 = vdwg.mxu0
    %v6834 = vsel %vm1604, %v6200, 0
    %v6837 = vsel %vm1604, %v6201, 0
    %6839 = vmatprep.subr.mxu0 0.0
    %6840 = vmatpush1.msra.mxu0 0.0
    %6841 = vmatprep.subr.mxu0 0.0
    %6842 = vmatpush1.msra.mxu0 0.0
    %6843 = vmatprep.subr.mxu0 0.0
    %6844 = vmatpush1.msra.mxu0 0.0
    %6845 = vmatprep.subr.mxu0 0.0
    %6846 = vmatpush1.msra.mxu0 0.0
    %6847 = vmatprep.subr.mxu0 0.0
    %6848 = vmatpush1.msra.mxu0 0.0
    %6849 = vmatprep.subr.mxu0 0.0
    %6850 = vmatpush1.msra.mxu0 0.0
    %6851 = vmatprep.subr.mxu0 0.0
    %6852 = vmatpush1.msra.mxu0 0.0
    %6853 = vmatprep.subr.mxu0 0.0
    %6854 = vmatpush1.msra.mxu0 0.0
    %6855 = vmatprep.subr.mxu0 0.0
    %6856 = vmatpush1.msra.mxu0 0.0
    %6857 = vmatprep.subr.mxu0 0.0
    %6858 = vmatpush1.msra.mxu0 0.0
    %6859 = vmatprep.subr.mxu0 0.0
    %6860 = vmatpush1.msra.mxu0 0.0
    %6861 = vmatprep.subr.mxu0 0.0
    %6862 = vmatpush1.msra.mxu0 0.0
    %6863 = vmatprep.subr.mxu0 0.0
    %6864 = vmatpush1.msra.mxu0 %v6233
    %6865 = vmatprep.subr.mxu0 0.0
    %6866 = vmatpush1.msra.mxu0 %v6232
    %6867 = vmatprep.subr.mxu0 0.0
    %6868 = vmatpush1.msra.mxu0 %v6231
    %6869 = vmatprep.subr.mxu0 0.0
    %6870 = vmatpush1.msra.mxu0 %v6230
    %6871 = vmatprep.subr.mxu0 0.0
    %6872 = vmatpush2.msra.mxu0 0.0
    %6873 = vmatprep.subr.mxu0 0.0
    %6874 = vmatpush2.msra.mxu0 0.0
    %6875 = vmatprep.subr.mxu0 0.0
    %6876 = vmatpush2.msra.mxu0 0.0
    %6877 = vmatprep.subr.mxu0 0.0
    %6878 = vmatpush2.msra.mxu0 0.0
    %6879 = vmatprep.subr.mxu0 0.0
    %6880 = vmatpush2.msra.mxu0 0.0
    %6881 = vmatprep.subr.mxu0 0.0
    %6882 = vmatpush2.msra.mxu0 0.0
    %6883 = vmatprep.subr.mxu0 0.0
    %6884 = vmatpush2.msra.mxu0 0.0
    %6885 = vmatprep.subr.mxu0 0.0
    %6886 = vmatpush2.msra.mxu0 0.0
    %6887 = vmatprep.subr.mxu0 0.0
    %6888 = vmatpush2.msra.mxu0 0.0
    %6889 = vmatprep.subr.mxu0 0.0
    %6890 = vmatpush2.msra.mxu0 0.0
    %6891 = vmatprep.subr.mxu0 0.0
    %6892 = vmatpush2.msra.mxu0 0.0
    %6893 = vmatprep.subr.mxu0 0.0
    %6894 = vmatpush2.msra.mxu0 0.0
    %6895 = vmatprep.subr.mxu0 0.0
    %6896 = vmatpush2.msra.mxu0 0.0
    %6897 = vmatprep.subr.mxu0 0.0
    %6898 = vmatpush2.msra.mxu0 0.0
    %6899 = vmatprep.subr.mxu0 0.0
    %6900 = vmatpush2.msra.mxu0 0.0
    %6901 = vmatprep.subr.mxu0 0.0
    %6902 = vmatpush2.msra.mxu0 0.0
    %6903 = vmatprep.mubr.f32.mxu0 0.0
    %6904 = vmatmul.mubr.f32.gmra.mxu0 %v6834
    %v6905 = vpop.f32.mrf.mxu0
    %v6906 = vadd.f32 %v253, %v6905
    %v6907 = vpop.f32.mrf.mxu0
    %6908 = vmatprep.mubr.f32.mxu0 0.0
    %6909 = vmatmul.mubr.f32.gmra.mxu0 %v6837
    %v6910 = vpop.f32.mrf.mxu0
    %v6911 = vadd.f32 %v254, %v6910
    %v6912 = vpop.f32.mrf.mxu0
    %6913 = vdwg.mxu0
    %v6914 = vsel %vm1607, %v6339, -inf
    %6915 = vmax.xlane.f32.xlu0 %v6914
    %v6916 = vpop.xlane.xlu0 %6915
    %v6917 = vsel %vm1607, %v6344, -inf
    %6918 = vmax.xlane.f32.xlu0 %v6917
    %v6919 = vpop.xlane.xlu0 %6918
    %v6920 = vsel %vm1607, %v6420, -inf
    %6921 = vmax.xlane.f32.xlu0 %v6920
    %v6922 = vpop.xlane.xlu0 %6921
    %v6923 = vsel %vm1607, %v6425, -inf
    %6924 = vmax.xlane.f32.xlu0 %v6923
    %v6925 = vpop.xlane.xlu0 %6924
    %v6926 = vsel %vm1607, %v6501, -inf
    %6927 = vmax.xlane.f32.xlu0 %v6926
    %v6928 = vpop.xlane.xlu0 %6927
    %v6929 = vsel %vm1607, %v6506, -inf
    %6930 = vmax.xlane.f32.xlu0 %v6929
    %v6931 = vpop.xlane.xlu0 %6930
    %v6932 = vsel %vm1607, %v6582, -inf
    %6933 = vmax.xlane.f32.xlu0 %v6932
    %v6934 = vpop.xlane.xlu0 %6933
    %v6935 = vsel %vm1607, %v6587, -inf
    %6936 = vmax.xlane.f32.xlu0 %v6935
    %v6937 = vpop.xlane.xlu0 %6936
    %v6938 = vsel %vm1607, %v6663, -inf
    %6939 = vmax.xlane.f32.xlu0 %v6938
    %v6940 = vpop.xlane.xlu0 %6939
    %v6941 = vsel %vm1607, %v6668, -inf
    %6942 = vmax.xlane.f32.xlu0 %v6941
    %v6943 = vpop.xlane.xlu0 %6942
    %v6944 = vsel %vm1607, %v6744, -inf
    %6945 = vmax.xlane.f32.xlu0 %v6944
    %v6946 = vpop.xlane.xlu0 %6945
    %v6947 = vsel %vm1607, %v6749, -inf
    %6948 = vmax.xlane.f32.xlu0 %v6947
    %v6949 = vpop.xlane.xlu0 %6948
    %v6950 = vsel %vm1607, %v6825, -inf
    %6951 = vmax.xlane.f32.xlu0 %v6950
    %v6952 = vpop.xlane.xlu0 %6951
    %v6953 = vsel %vm1607, %v6830, -inf
    %6954 = vmax.xlane.f32.xlu0 %v6953
    %v6955 = vpop.xlane.xlu0 %6954
    %v6956 = vsel %vm1607, %v6906, -inf
    %6957 = vmax.xlane.f32.xlu0 %v6956
    %v6958 = vpop.xlane.xlu0 %6957
    %v6959 = vsel %vm1607, %v6911, -inf
    %6960 = vmax.xlane.f32.xlu0 %v6959
    %v6961 = vpop.xlane.xlu0 %6960
    %v6962 = vsub.f32 %v6339, %v6916
    %v6963 = vsub.f32 %v6344, %v6919
    %v6964 = vsub.f32 %v6420, %v6922
    %v6965 = vsub.f32 %v6425, %v6925
    %v6966 = vsub.f32 %v6501, %v6928
    %v6967 = vsub.f32 %v6506, %v6931
    %v6968 = vsub.f32 %v6582, %v6934
    %v6969 = vsub.f32 %v6587, %v6937
    %v6970 = vsub.f32 %v6663, %v6940
    %v6971 = vsub.f32 %v6668, %v6943
    %v6972 = vsub.f32 %v6744, %v6946
    %v6973 = vsub.f32 %v6749, %v6949
    %v6974 = vsub.f32 %v6825, %v6952
    %v6975 = vsub.f32 %v6830, %v6955
    %v6976 = vsub.f32 %v6906, %v6958
    %v6977 = vsub.f32 %v6911, %v6961
    %v6978 = vmul.f32 %v6962, 1.442695
    %v6979 = vpow.pop %v6978
    %v6980 = vmul.f32 %v6963, 1.442695
    %v6981 = vpow.pop %v6980
    %v6982 = vmul.f32 %v6964, 1.442695
    %v6983 = vpow.pop %v6982
    %v6984 = vmul.f32 %v6965, 1.442695
    %v6985 = vpow.pop %v6984
    %v6986 = vmul.f32 %v6966, 1.442695
    %v6987 = vpow.pop %v6986
    %v6988 = vmul.f32 %v6967, 1.442695
    %v6989 = vpow.pop %v6988
    %v6990 = vmul.f32 %v6968, 1.442695
    %v6991 = vpow.pop %v6990
    %v6992 = vmul.f32 %v6969, 1.442695
    %v6993 = vpow.pop %v6992
    %v6994 = vmul.f32 %v6970, 1.442695
    %v6995 = vpow.pop %v6994
    %v6996 = vmul.f32 %v6971, 1.442695
    %v6997 = vpow.pop %v6996
    %v6998 = vmul.f32 %v6972, 1.442695
    %v6999 = vpow.pop %v6998
    %v7000 = vmul.f32 %v6973, 1.442695
    %v7001 = vpow.pop %v7000
    %v7002 = vmul.f32 %v6974, 1.442695
    %v7003 = vpow.pop %v7002
    %v7004 = vmul.f32 %v6975, 1.442695
    %v7005 = vpow.pop %v7004
    %v7006 = vmul.f32 %v6976, 1.442695
    %v7007 = vpow.pop %v7006
    %v7008 = vmul.f32 %v6977, 1.442695
    %v7009 = vpow.pop %v7008
    %v7010 = vsel %vm1607, %v6979, 0.0
    %7011 = vadd.xlane.f32.xlu0 %v7010
    %v7012 = vpop.xlane.xlu0 %7011
    %v7013 = vsel %vm1607, %v6981, 0.0
    %7014 = vadd.xlane.f32.xlu0 %v7013
    %v7015 = vpop.xlane.xlu0 %7014
    %v7016 = vsel %vm1607, %v6983, 0.0
    %7017 = vadd.xlane.f32.xlu0 %v7016
    %v7018 = vpop.xlane.xlu0 %7017
    %v7019 = vsel %vm1607, %v6985, 0.0
    %7020 = vadd.xlane.f32.xlu0 %v7019
    %v7021 = vpop.xlane.xlu0 %7020
    %v7022 = vsel %vm1607, %v6987, 0.0
    %7023 = vadd.xlane.f32.xlu0 %v7022
    %v7024 = vpop.xlane.xlu0 %7023
    %v7025 = vsel %vm1607, %v6989, 0.0
    %7026 = vadd.xlane.f32.xlu0 %v7025
    %v7027 = vpop.xlane.xlu0 %7026
    %v7028 = vsel %vm1607, %v6991, 0.0
    %7029 = vadd.xlane.f32.xlu0 %v7028
    %v7030 = vpop.xlane.xlu0 %7029
    %v7031 = vsel %vm1607, %v6993, 0.0
    %7032 = vadd.xlane.f32.xlu0 %v7031
    %v7033 = vpop.xlane.xlu0 %7032
    %v7034 = vsel %vm1607, %v6995, 0.0
    %7035 = vadd.xlane.f32.xlu0 %v7034
    %v7036 = vpop.xlane.xlu0 %7035
    %v7037 = vsel %vm1607, %v6997, 0.0
    %7038 = vadd.xlane.f32.xlu0 %v7037
    %v7039 = vpop.xlane.xlu0 %7038
    %v7040 = vsel %vm1607, %v6999, 0.0
    %7041 = vadd.xlane.f32.xlu0 %v7040
    %v7042 = vpop.xlane.xlu0 %7041
    %v7043 = vsel %vm1607, %v7001, 0.0
    %7044 = vadd.xlane.f32.xlu0 %v7043
    %v7045 = vpop.xlane.xlu0 %7044
    %v7046 = vsel %vm1607, %v7003, 0.0
    %7047 = vadd.xlane.f32.xlu0 %v7046
    %v7048 = vpop.xlane.xlu0 %7047
    %v7049 = vsel %vm1607, %v7005, 0.0
    %7050 = vadd.xlane.f32.xlu0 %v7049
    %v7051 = vpop.xlane.xlu0 %7050
    %v7052 = vsel %vm1607, %v7007, 0.0
    %7053 = vadd.xlane.f32.xlu0 %v7052
    %v7054 = vpop.xlane.xlu0 %7053
    %v7055 = vsel %vm1607, %v7009, 0.0
    %7056 = vadd.xlane.f32.xlu0 %v7055
    %v7057 = vpop.xlane.xlu0 %7056
    %v7058 = vrcp.pop %v7012
    %v7059 = vrcp.pop %v7015
    %v7060 = vrcp.pop %v7018
    %v7061 = vrcp.pop %v7021
    %v7062 = vrcp.pop %v7024
    %v7063 = vrcp.pop %v7027
    %v7064 = vrcp.pop %v7030
    %v7065 = vrcp.pop %v7033
    %v7066 = vrcp.pop %v7036
    %v7067 = vrcp.pop %v7039
    %v7068 = vrcp.pop %v7042
    %v7069 = vrcp.pop %v7045
    %v7070 = vrcp.pop %v7048
    %v7071 = vrcp.pop %v7051
    %v7072 = vrcp.pop %v7054
    %v7073 = vrcp.pop %v7057
    %v7074 = vmul.f32 %v6979, %v7058
    %v7075 = vmul.f32 %v6981, %v7059
    %v7076 = vmul.f32 %v6983, %v7060
    %v7077 = vmul.f32 %v6985, %v7061
    %v7078 = vmul.f32 %v6987, %v7062
    %v7079 = vmul.f32 %v6989, %v7063
    %v7080 = vmul.f32 %v6991, %v7064
    %v7081 = vmul.f32 %v6993, %v7065
    %v7082 = vmul.f32 %v6995, %v7066
    %v7083 = vmul.f32 %v6997, %v7067
    %v7084 = vmul.f32 %v6999, %v7068
    %v7085 = vmul.f32 %v7001, %v7069
    %v7086 = vmul.f32 %v7003, %v7070
    %v7087 = vmul.f32 %v7005, %v7071
    %v7088 = vmul.f32 %v7007, %v7072
    %v7089 = vmul.f32 %v7009, %v7073
    %v7091 = vsel %vm1607, %v6234, 0
    %v7094 = vsel %vm1607, %v6235, 0
    %v7097 = vsel %vm1607, %v6236, 0
    %v7100 = vsel %vm1607, %v6237, 0
    %v7103 = vsel %vm1607, %v7074, 0
    %v7106 = vsel %vm1607, %v7075, 0
    %7108 = vmatprep.subr.mxu0 0.0
    %7109 = vmatpush1.xpose.msra.mxu0 0.0
    %7110 = vmatprep.subr.mxu0 0.0
    %7111 = vmatpush1.xpose.msra.mxu0 0.0
    %7112 = vmatprep.subr.mxu0 0.0
    %7113 = vmatpush1.xpose.msra.mxu0 0.0
    %7114 = vmatprep.subr.mxu0 0.0
    %7115 = vmatpush1.xpose.msra.mxu0 0.0
    %7116 = vmatprep.subr.mxu0 0.0
    %7117 = vmatpush1.xpose.msra.mxu0 0.0
    %7118 = vmatprep.subr.mxu0 0.0
    %7119 = vmatpush1.xpose.msra.mxu0 0.0
    %7120 = vmatprep.subr.mxu0 0.0
    %7121 = vmatpush1.xpose.msra.mxu0 0.0
    %7122 = vmatprep.subr.mxu0 0.0
    %7123 = vmatpush1.xpose.msra.mxu0 0.0
    %7124 = vmatprep.subr.mxu0 0.0
    %7125 = vmatpush1.xpose.msra.mxu0 0.0
    %7126 = vmatprep.subr.mxu0 0.0
    %7127 = vmatpush1.xpose.msra.mxu0 0.0
    %7128 = vmatprep.subr.mxu0 0.0
    %7129 = vmatpush1.xpose.msra.mxu0 0.0
    %7130 = vmatprep.subr.mxu0 0.0
    %7131 = vmatpush1.xpose.msra.mxu0 0.0
    %7132 = vmatprep.subr.mxu0 0.0
    %7133 = vmatpush1.xpose.msra.mxu0 0.0
    %7134 = vmatprep.subr.mxu0 0.0
    %7135 = vmatpush1.xpose.msra.mxu0 0.0
    %7136 = vmatprep.subr.mxu0 0.0
    %7137 = vmatpush1.xpose.msra.mxu0 %v7106
    %7138 = vmatprep.subr.mxu0 0.0
    %7139 = vmatpush1.xpose.msra.mxu0 %v7103
    %7140 = vmatprep.subr.mxu0 0.0
    %7141 = vmatpush2.xpose.msra.mxu0 0.0
    %7142 = vmatprep.subr.mxu0 0.0
    %7143 = vmatpush2.xpose.msra.mxu0 0.0
    %7144 = vmatprep.subr.mxu0 0.0
    %7145 = vmatpush2.xpose.msra.mxu0 0.0
    %7146 = vmatprep.subr.mxu0 0.0
    %7147 = vmatpush2.xpose.msra.mxu0 0.0
    %7148 = vmatprep.subr.mxu0 0.0
    %7149 = vmatpush2.xpose.msra.mxu0 0.0
    %7150 = vmatprep.subr.mxu0 0.0
    %7151 = vmatpush2.xpose.msra.mxu0 0.0
    %7152 = vmatprep.subr.mxu0 0.0
    %7153 = vmatpush2.xpose.msra.mxu0 0.0
    %7154 = vmatprep.subr.mxu0 0.0
    %7155 = vmatpush2.xpose.msra.mxu0 0.0
    %7156 = vmatprep.subr.mxu0 0.0
    %7157 = vmatpush2.xpose.msra.mxu0 0.0
    %7158 = vmatprep.subr.mxu0 0.0
    %7159 = vmatpush2.xpose.msra.mxu0 0.0
    %7160 = vmatprep.subr.mxu0 0.0
    %7161 = vmatpush2.xpose.msra.mxu0 0.0
    %7162 = vmatprep.subr.mxu0 0.0
    %7163 = vmatpush2.xpose.msra.mxu0 0.0
    %7164 = vmatprep.subr.mxu0 0.0
    %7165 = vmatpush2.xpose.msra.mxu0 0.0
    %7166 = vmatprep.subr.mxu0 0.0
    %7167 = vmatpush2.xpose.msra.mxu0 0.0
    %7168 = vmatprep.subr.mxu0 0.0
    %7169 = vmatpush2.xpose.msra.mxu0 0.0
    %7170 = vmatprep.subr.mxu0 0.0
    %7171 = vmatpush2.xpose.msra.mxu0 0.0
    %7172 = vmatprep.mubr.f32.mxu0 0.0
    %7173 = vmatmul.mubr.f32.gmra.mxu0 %v7091
    %v7174 = vpop.f32.mrf.mxu0
    %v7175 = vadd.f32 0.0, %v7174
    %v7176 = vpop.f32.mrf.mxu0
    %7177 = vmatprep.mubr.f32.mxu0 0.0
    %7178 = vmatmul.mubr.f32.gmra.mxu0 %v7094
    %v7179 = vpop.f32.mrf.mxu0
    %v7180 = vadd.f32 0.0, %v7179
    %v7181 = vpop.f32.mrf.mxu0
    %7182 = vmatprep.mubr.f32.mxu0 0.0
    %7183 = vmatmul.mubr.f32.gmra.mxu0 %v7097
    %v7184 = vpop.f32.mrf.mxu0
    %v7185 = vadd.f32 0.0, %v7184
    %v7186 = vpop.f32.mrf.mxu0
    %7187 = vmatprep.mubr.f32.mxu0 0.0
    %7188 = vmatmul.mubr.f32.gmra.mxu0 %v7100
    %v7189 = vpop.f32.mrf.mxu0
    %v7190 = vadd.f32 0.0, %v7189
    %v7191 = vpop.f32.mrf.mxu0
    %7192 = vdwg.mxu0
    %v7194 = vsel %vm1607, %v6238, 0
    %v7197 = vsel %vm1607, %v6239, 0
    %v7200 = vsel %vm1607, %v6240, 0
    %v7203 = vsel %vm1607, %v6241, 0
    %v7206 = vsel %vm1607, %v7076, 0
    %v7209 = vsel %vm1607, %v7077, 0
    %7211 = vmatprep.subr.mxu0 0.0
    %7212 = vmatpush1.xpose.msra.mxu0 0.0
    %7213 = vmatprep.subr.mxu0 0.0
    %7214 = vmatpush1.xpose.msra.mxu0 0.0
    %7215 = vmatprep.subr.mxu0 0.0
    %7216 = vmatpush1.xpose.msra.mxu0 0.0
    %7217 = vmatprep.subr.mxu0 0.0
    %7218 = vmatpush1.xpose.msra.mxu0 0.0
    %7219 = vmatprep.subr.mxu0 0.0
    %7220 = vmatpush1.xpose.msra.mxu0 0.0
    %7221 = vmatprep.subr.mxu0 0.0
    %7222 = vmatpush1.xpose.msra.mxu0 0.0
    %7223 = vmatprep.subr.mxu0 0.0
    %7224 = vmatpush1.xpose.msra.mxu0 0.0
    %7225 = vmatprep.subr.mxu0 0.0
    %7226 = vmatpush1.xpose.msra.mxu0 0.0
    %7227 = vmatprep.subr.mxu0 0.0
    %7228 = vmatpush1.xpose.msra.mxu0 0.0
    %7229 = vmatprep.subr.mxu0 0.0
    %7230 = vmatpush1.xpose.msra.mxu0 0.0
    %7231 = vmatprep.subr.mxu0 0.0
    %7232 = vmatpush1.xpose.msra.mxu0 0.0
    %7233 = vmatprep.subr.mxu0 0.0
    %7234 = vmatpush1.xpose.msra.mxu0 0.0
    %7235 = vmatprep.subr.mxu0 0.0
    %7236 = vmatpush1.xpose.msra.mxu0 0.0
    %7237 = vmatprep.subr.mxu0 0.0
    %7238 = vmatpush1.xpose.msra.mxu0 0.0
    %7239 = vmatprep.subr.mxu0 0.0
    %7240 = vmatpush1.xpose.msra.mxu0 %v7209
    %7241 = vmatprep.subr.mxu0 0.0
    %7242 = vmatpush1.xpose.msra.mxu0 %v7206
    %7243 = vmatprep.subr.mxu0 0.0
    %7244 = vmatpush2.xpose.msra.mxu0 0.0
    %7245 = vmatprep.subr.mxu0 0.0
    %7246 = vmatpush2.xpose.msra.mxu0 0.0
    %7247 = vmatprep.subr.mxu0 0.0
    %7248 = vmatpush2.xpose.msra.mxu0 0.0
    %7249 = vmatprep.subr.mxu0 0.0
    %7250 = vmatpush2.xpose.msra.mxu0 0.0
    %7251 = vmatprep.subr.mxu0 0.0
    %7252 = vmatpush2.xpose.msra.mxu0 0.0
    %7253 = vmatprep.subr.mxu0 0.0
    %7254 = vmatpush2.xpose.msra.mxu0 0.0
    %7255 = vmatprep.subr.mxu0 0.0
    %7256 = vmatpush2.xpose.msra.mxu0 0.0
    %7257 = vmatprep.subr.mxu0 0.0
    %7258 = vmatpush2.xpose.msra.mxu0 0.0
    %7259 = vmatprep.subr.mxu0 0.0
    %7260 = vmatpush2.xpose.msra.mxu0 0.0
    %7261 = vmatprep.subr.mxu0 0.0
    %7262 = vmatpush2.xpose.msra.mxu0 0.0
    %7263 = vmatprep.subr.mxu0 0.0
    %7264 = vmatpush2.xpose.msra.mxu0 0.0
    %7265 = vmatprep.subr.mxu0 0.0
    %7266 = vmatpush2.xpose.msra.mxu0 0.0
    %7267 = vmatprep.subr.mxu0 0.0
    %7268 = vmatpush2.xpose.msra.mxu0 0.0
    %7269 = vmatprep.subr.mxu0 0.0
    %7270 = vmatpush2.xpose.msra.mxu0 0.0
    %7271 = vmatprep.subr.mxu0 0.0
    %7272 = vmatpush2.xpose.msra.mxu0 0.0
    %7273 = vmatprep.subr.mxu0 0.0
    %7274 = vmatpush2.xpose.msra.mxu0 0.0
    %7275 = vmatprep.mubr.f32.mxu0 0.0
    %7276 = vmatmul.mubr.f32.gmra.mxu0 %v7194
    %v7277 = vpop.f32.mrf.mxu0
    %v7278 = vadd.f32 0.0, %v7277
    %v7279 = vpop.f32.mrf.mxu0
    %7280 = vmatprep.mubr.f32.mxu0 0.0
    %7281 = vmatmul.mubr.f32.gmra.mxu0 %v7197
    %v7282 = vpop.f32.mrf.mxu0
    %v7283 = vadd.f32 0.0, %v7282
    %v7284 = vpop.f32.mrf.mxu0
    %7285 = vmatprep.mubr.f32.mxu0 0.0
    %7286 = vmatmul.mubr.f32.gmra.mxu0 %v7200
    %v7287 = vpop.f32.mrf.mxu0
    %v7288 = vadd.f32 0.0, %v7287
    %v7289 = vpop.f32.mrf.mxu0
    %7290 = vmatprep.mubr.f32.mxu0 0.0
    %7291 = vmatmul.mubr.f32.gmra.mxu0 %v7203
    %v7292 = vpop.f32.mrf.mxu0
    %v7293 = vadd.f32 0.0, %v7292
    %v7294 = vpop.f32.mrf.mxu0
    %7295 = vdwg.mxu0
    %v7297 = vsel %vm1607, %v6242, 0
    %v7300 = vsel %vm1607, %v6243, 0
    %v7303 = vsel %vm1607, %v6244, 0
    %v7306 = vsel %vm1607, %v6245, 0
    %v7309 = vsel %vm1607, %v7078, 0
    %v7312 = vsel %vm1607, %v7079, 0
    %7314 = vmatprep.subr.mxu0 0.0
    %7315 = vmatpush1.xpose.msra.mxu0 0.0
    %7316 = vmatprep.subr.mxu0 0.0
    %7317 = vmatpush1.xpose.msra.mxu0 0.0
    %7318 = vmatprep.subr.mxu0 0.0
    %7319 = vmatpush1.xpose.msra.mxu0 0.0
    %7320 = vmatprep.subr.mxu0 0.0
    %7321 = vmatpush1.xpose.msra.mxu0 0.0
    %7322 = vmatprep.subr.mxu0 0.0
    %7323 = vmatpush1.xpose.msra.mxu0 0.0
    %7324 = vmatprep.subr.mxu0 0.0
    %7325 = vmatpush1.xpose.msra.mxu0 0.0
    %7326 = vmatprep.subr.mxu0 0.0
    %7327 = vmatpush1.xpose.msra.mxu0 0.0
    %7328 = vmatprep.subr.mxu0 0.0
    %7329 = vmatpush1.xpose.msra.mxu0 0.0
    %7330 = vmatprep.subr.mxu0 0.0
    %7331 = vmatpush1.xpose.msra.mxu0 0.0
    %7332 = vmatprep.subr.mxu0 0.0
    %7333 = vmatpush1.xpose.msra.mxu0 0.0
    %7334 = vmatprep.subr.mxu0 0.0
    %7335 = vmatpush1.xpose.msra.mxu0 0.0
    %7336 = vmatprep.subr.mxu0 0.0
    %7337 = vmatpush1.xpose.msra.mxu0 0.0
    %7338 = vmatprep.subr.mxu0 0.0
    %7339 = vmatpush1.xpose.msra.mxu0 0.0
    %7340 = vmatprep.subr.mxu0 0.0
    %7341 = vmatpush1.xpose.msra.mxu0 0.0
    %7342 = vmatprep.subr.mxu0 0.0
    %7343 = vmatpush1.xpose.msra.mxu0 %v7312
    %7344 = vmatprep.subr.mxu0 0.0
    %7345 = vmatpush1.xpose.msra.mxu0 %v7309
    %7346 = vmatprep.subr.mxu0 0.0
    %7347 = vmatpush2.xpose.msra.mxu0 0.0
    %7348 = vmatprep.subr.mxu0 0.0
    %7349 = vmatpush2.xpose.msra.mxu0 0.0
    %7350 = vmatprep.subr.mxu0 0.0
    %7351 = vmatpush2.xpose.msra.mxu0 0.0
    %7352 = vmatprep.subr.mxu0 0.0
    %7353 = vmatpush2.xpose.msra.mxu0 0.0
    %7354 = vmatprep.subr.mxu0 0.0
    %7355 = vmatpush2.xpose.msra.mxu0 0.0
    %7356 = vmatprep.subr.mxu0 0.0
    %7357 = vmatpush2.xpose.msra.mxu0 0.0
    %7358 = vmatprep.subr.mxu0 0.0
    %7359 = vmatpush2.xpose.msra.mxu0 0.0
    %7360 = vmatprep.subr.mxu0 0.0
    %7361 = vmatpush2.xpose.msra.mxu0 0.0
    %7362 = vmatprep.subr.mxu0 0.0
    %7363 = vmatpush2.xpose.msra.mxu0 0.0
    %7364 = vmatprep.subr.mxu0 0.0
    %7365 = vmatpush2.xpose.msra.mxu0 0.0
    %7366 = vmatprep.subr.mxu0 0.0
    %7367 = vmatpush2.xpose.msra.mxu0 0.0
    %7368 = vmatprep.subr.mxu0 0.0
    %7369 = vmatpush2.xpose.msra.mxu0 0.0
    %7370 = vmatprep.subr.mxu0 0.0
    %7371 = vmatpush2.xpose.msra.mxu0 0.0
    %7372 = vmatprep.subr.mxu0 0.0
    %7373 = vmatpush2.xpose.msra.mxu0 0.0
    %7374 = vmatprep.subr.mxu0 0.0
    %7375 = vmatpush2.xpose.msra.mxu0 0.0
    %7376 = vmatprep.subr.mxu0 0.0
    %7377 = vmatpush2.xpose.msra.mxu0 0.0
    %7378 = vmatprep.mubr.f32.mxu0 0.0
    %7379 = vmatmul.mubr.f32.gmra.mxu0 %v7297
    %v7380 = vpop.f32.mrf.mxu0
    %v7381 = vadd.f32 0.0, %v7380
    %v7382 = vpop.f32.mrf.mxu0
    %7383 = vmatprep.mubr.f32.mxu0 0.0
    %7384 = vmatmul.mubr.f32.gmra.mxu0 %v7300
    %v7385 = vpop.f32.mrf.mxu0
    %v7386 = vadd.f32 0.0, %v7385
    %v7387 = vpop.f32.mrf.mxu0
    %7388 = vmatprep.mubr.f32.mxu0 0.0
    %7389 = vmatmul.mubr.f32.gmra.mxu0 %v7303
    %v7390 = vpop.f32.mrf.mxu0
    %v7391 = vadd.f32 0.0, %v7390
    %v7392 = vpop.f32.mrf.mxu0
    %7393 = vmatprep.mubr.f32.mxu0 0.0
    %7394 = vmatmul.mubr.f32.gmra.mxu0 %v7306
    %v7395 = vpop.f32.mrf.mxu0
    %v7396 = vadd.f32 0.0, %v7395
    %v7397 = vpop.f32.mrf.mxu0
    %7398 = vdwg.mxu0
    %v7400 = vsel %vm1607, %v6246, 0
    %v7403 = vsel %vm1607, %v6247, 0
    %v7406 = vsel %vm1607, %v6248, 0
    %v7409 = vsel %vm1607, %v6249, 0
    %v7412 = vsel %vm1607, %v7080, 0
    %v7415 = vsel %vm1607, %v7081, 0
    %7417 = vmatprep.subr.mxu0 0.0
    %7418 = vmatpush1.xpose.msra.mxu0 0.0
    %7419 = vmatprep.subr.mxu0 0.0
    %7420 = vmatpush1.xpose.msra.mxu0 0.0
    %7421 = vmatprep.subr.mxu0 0.0
    %7422 = vmatpush1.xpose.msra.mxu0 0.0
    %7423 = vmatprep.subr.mxu0 0.0
    %7424 = vmatpush1.xpose.msra.mxu0 0.0
    %7425 = vmatprep.subr.mxu0 0.0
    %7426 = vmatpush1.xpose.msra.mxu0 0.0
    %7427 = vmatprep.subr.mxu0 0.0
    %7428 = vmatpush1.xpose.msra.mxu0 0.0
    %7429 = vmatprep.subr.mxu0 0.0
    %7430 = vmatpush1.xpose.msra.mxu0 0.0
    %7431 = vmatprep.subr.mxu0 0.0
    %7432 = vmatpush1.xpose.msra.mxu0 0.0
    %7433 = vmatprep.subr.mxu0 0.0
    %7434 = vmatpush1.xpose.msra.mxu0 0.0
    %7435 = vmatprep.subr.mxu0 0.0
    %7436 = vmatpush1.xpose.msra.mxu0 0.0
    %7437 = vmatprep.subr.mxu0 0.0
    %7438 = vmatpush1.xpose.msra.mxu0 0.0
    %7439 = vmatprep.subr.mxu0 0.0
    %7440 = vmatpush1.xpose.msra.mxu0 0.0
    %7441 = vmatprep.subr.mxu0 0.0
    %7442 = vmatpush1.xpose.msra.mxu0 0.0
    %7443 = vmatprep.subr.mxu0 0.0
    %7444 = vmatpush1.xpose.msra.mxu0 0.0
    %7445 = vmatprep.subr.mxu0 0.0
    %7446 = vmatpush1.xpose.msra.mxu0 %v7415
    %7447 = vmatprep.subr.mxu0 0.0
    %7448 = vmatpush1.xpose.msra.mxu0 %v7412
    %7449 = vmatprep.subr.mxu0 0.0
    %7450 = vmatpush2.xpose.msra.mxu0 0.0
    %7451 = vmatprep.subr.mxu0 0.0
    %7452 = vmatpush2.xpose.msra.mxu0 0.0
    %7453 = vmatprep.subr.mxu0 0.0
    %7454 = vmatpush2.xpose.msra.mxu0 0.0
    %7455 = vmatprep.subr.mxu0 0.0
    %7456 = vmatpush2.xpose.msra.mxu0 0.0
    %7457 = vmatprep.subr.mxu0 0.0
    %7458 = vmatpush2.xpose.msra.mxu0 0.0
    %7459 = vmatprep.subr.mxu0 0.0
    %7460 = vmatpush2.xpose.msra.mxu0 0.0
    %7461 = vmatprep.subr.mxu0 0.0
    %7462 = vmatpush2.xpose.msra.mxu0 0.0
    %7463 = vmatprep.subr.mxu0 0.0
    %7464 = vmatpush2.xpose.msra.mxu0 0.0
    %7465 = vmatprep.subr.mxu0 0.0
    %7466 = vmatpush2.xpose.msra.mxu0 0.0
    %7467 = vmatprep.subr.mxu0 0.0
    %7468 = vmatpush2.xpose.msra.mxu0 0.0
    %7469 = vmatprep.subr.mxu0 0.0
    %7470 = vmatpush2.xpose.msra.mxu0 0.0
    %7471 = vmatprep.subr.mxu0 0.0
    %7472 = vmatpush2.xpose.msra.mxu0 0.0
    %7473 = vmatprep.subr.mxu0 0.0
    %7474 = vmatpush2.xpose.msra.mxu0 0.0
    %7475 = vmatprep.subr.mxu0 0.0
    %7476 = vmatpush2.xpose.msra.mxu0 0.0
    %7477 = vmatprep.subr.mxu0 0.0
    %7478 = vmatpush2.xpose.msra.mxu0 0.0
    %7479 = vmatprep.subr.mxu0 0.0
    %7480 = vmatpush2.xpose.msra.mxu0 0.0
    %7481 = vmatprep.mubr.f32.mxu0 0.0
    %7482 = vmatmul.mubr.f32.gmra.mxu0 %v7400
    %v7483 = vpop.f32.mrf.mxu0
    %v7484 = vadd.f32 0.0, %v7483
    %v7485 = vpop.f32.mrf.mxu0
    %7486 = vmatprep.mubr.f32.mxu0 0.0
    %7487 = vmatmul.mubr.f32.gmra.mxu0 %v7403
    %v7488 = vpop.f32.mrf.mxu0
    %v7489 = vadd.f32 0.0, %v7488
    %v7490 = vpop.f32.mrf.mxu0
    %7491 = vmatprep.mubr.f32.mxu0 0.0
    %7492 = vmatmul.mubr.f32.gmra.mxu0 %v7406
    %v7493 = vpop.f32.mrf.mxu0
    %v7494 = vadd.f32 0.0, %v7493
    %v7495 = vpop.f32.mrf.mxu0
    %7496 = vmatprep.mubr.f32.mxu0 0.0
    %7497 = vmatmul.mubr.f32.gmra.mxu0 %v7409
    %v7498 = vpop.f32.mrf.mxu0
    %v7499 = vadd.f32 0.0, %v7498
    %v7500 = vpop.f32.mrf.mxu0
    %7501 = vdwg.mxu0
    %v7503 = vsel %vm1607, %v6250, 0
    %v7506 = vsel %vm1607, %v6251, 0
    %v7509 = vsel %vm1607, %v6252, 0
    %v7512 = vsel %vm1607, %v6253, 0
    %v7515 = vsel %vm1607, %v7082, 0
    %v7518 = vsel %vm1607, %v7083, 0
    %7520 = vmatprep.subr.mxu0 0.0
    %7521 = vmatpush1.xpose.msra.mxu0 0.0
    %7522 = vmatprep.subr.mxu0 0.0
    %7523 = vmatpush1.xpose.msra.mxu0 0.0
    %7524 = vmatprep.subr.mxu0 0.0
    %7525 = vmatpush1.xpose.msra.mxu0 0.0
    %7526 = vmatprep.subr.mxu0 0.0
    %7527 = vmatpush1.xpose.msra.mxu0 0.0
    %7528 = vmatprep.subr.mxu0 0.0
    %7529 = vmatpush1.xpose.msra.mxu0 0.0
    %7530 = vmatprep.subr.mxu0 0.0
    %7531 = vmatpush1.xpose.msra.mxu0 0.0
    %7532 = vmatprep.subr.mxu0 0.0
    %7533 = vmatpush1.xpose.msra.mxu0 0.0
    %7534 = vmatprep.subr.mxu0 0.0
    %7535 = vmatpush1.xpose.msra.mxu0 0.0
    %7536 = vmatprep.subr.mxu0 0.0
    %7537 = vmatpush1.xpose.msra.mxu0 0.0
    %7538 = vmatprep.subr.mxu0 0.0
    %7539 = vmatpush1.xpose.msra.mxu0 0.0
    %7540 = vmatprep.subr.mxu0 0.0
    %7541 = vmatpush1.xpose.msra.mxu0 0.0
    %7542 = vmatprep.subr.mxu0 0.0
    %7543 = vmatpush1.xpose.msra.mxu0 0.0
    %7544 = vmatprep.subr.mxu0 0.0
    %7545 = vmatpush1.xpose.msra.mxu0 0.0
    %7546 = vmatprep.subr.mxu0 0.0
    %7547 = vmatpush1.xpose.msra.mxu0 0.0
    %7548 = vmatprep.subr.mxu0 0.0
    %7549 = vmatpush1.xpose.msra.mxu0 %v7518
    %7550 = vmatprep.subr.mxu0 0.0
    %7551 = vmatpush1.xpose.msra.mxu0 %v7515
    %7552 = vmatprep.subr.mxu0 0.0
    %7553 = vmatpush2.xpose.msra.mxu0 0.0
    %7554 = vmatprep.subr.mxu0 0.0
    %7555 = vmatpush2.xpose.msra.mxu0 0.0
    %7556 = vmatprep.subr.mxu0 0.0
    %7557 = vmatpush2.xpose.msra.mxu0 0.0
    %7558 = vmatprep.subr.mxu0 0.0
    %7559 = vmatpush2.xpose.msra.mxu0 0.0
    %7560 = vmatprep.subr.mxu0 0.0
    %7561 = vmatpush2.xpose.msra.mxu0 0.0
    %7562 = vmatprep.subr.mxu0 0.0
    %7563 = vmatpush2.xpose.msra.mxu0 0.0
    %7564 = vmatprep.subr.mxu0 0.0
    %7565 = vmatpush2.xpose.msra.mxu0 0.0
    %7566 = vmatprep.subr.mxu0 0.0
    %7567 = vmatpush2.xpose.msra.mxu0 0.0
    %7568 = vmatprep.subr.mxu0 0.0
    %7569 = vmatpush2.xpose.msra.mxu0 0.0
    %7570 = vmatprep.subr.mxu0 0.0
    %7571 = vmatpush2.xpose.msra.mxu0 0.0
    %7572 = vmatprep.subr.mxu0 0.0
    %7573 = vmatpush2.xpose.msra.mxu0 0.0
    %7574 = vmatprep.subr.mxu0 0.0
    %7575 = vmatpush2.xpose.msra.mxu0 0.0
    %7576 = vmatprep.subr.mxu0 0.0
    %7577 = vmatpush2.xpose.msra.mxu0 0.0
    %7578 = vmatprep.subr.mxu0 0.0
    %7579 = vmatpush2.xpose.msra.mxu0 0.0
    %7580 = vmatprep.subr.mxu0 0.0
    %7581 = vmatpush2.xpose.msra.mxu0 0.0
    %7582 = vmatprep.subr.mxu0 0.0
    %7583 = vmatpush2.xpose.msra.mxu0 0.0
    %7584 = vmatprep.mubr.f32.mxu0 0.0
    %7585 = vmatmul.mubr.f32.gmra.mxu0 %v7503
    %v7586 = vpop.f32.mrf.mxu0
    %v7587 = vadd.f32 0.0, %v7586
    %v7588 = vpop.f32.mrf.mxu0
    %7589 = vmatprep.mubr.f32.mxu0 0.0
    %7590 = vmatmul.mubr.f32.gmra.mxu0 %v7506
    %v7591 = vpop.f32.mrf.mxu0
    %v7592 = vadd.f32 0.0, %v7591
    %v7593 = vpop.f32.mrf.mxu0
    %7594 = vmatprep.mubr.f32.mxu0 0.0
    %7595 = vmatmul.mubr.f32.gmra.mxu0 %v7509
    %v7596 = vpop.f32.mrf.mxu0
    %v7597 = vadd.f32 0.0, %v7596
    %v7598 = vpop.f32.mrf.mxu0
    %7599 = vmatprep.mubr.f32.mxu0 0.0
    %7600 = vmatmul.mubr.f32.gmra.mxu0 %v7512
    %v7601 = vpop.f32.mrf.mxu0
    %v7602 = vadd.f32 0.0, %v7601
    %v7603 = vpop.f32.mrf.mxu0
    %7604 = vdwg.mxu0
    %v7606 = vsel %vm1607, %v6254, 0
    %v7609 = vsel %vm1607, %v6255, 0
    %v7612 = vsel %vm1607, %v6256, 0
    %v7615 = vsel %vm1607, %v6257, 0
    %v7618 = vsel %vm1607, %v7084, 0
    %v7621 = vsel %vm1607, %v7085, 0
    %7623 = vmatprep.subr.mxu0 0.0
    %7624 = vmatpush1.xpose.msra.mxu0 0.0
    %7625 = vmatprep.subr.mxu0 0.0
    %7626 = vmatpush1.xpose.msra.mxu0 0.0
    %7627 = vmatprep.subr.mxu0 0.0
    %7628 = vmatpush1.xpose.msra.mxu0 0.0
    %7629 = vmatprep.subr.mxu0 0.0
    %7630 = vmatpush1.xpose.msra.mxu0 0.0
    %7631 = vmatprep.subr.mxu0 0.0
    %7632 = vmatpush1.xpose.msra.mxu0 0.0
    %7633 = vmatprep.subr.mxu0 0.0
    %7634 = vmatpush1.xpose.msra.mxu0 0.0
    %7635 = vmatprep.subr.mxu0 0.0
    %7636 = vmatpush1.xpose.msra.mxu0 0.0
    %7637 = vmatprep.subr.mxu0 0.0
    %7638 = vmatpush1.xpose.msra.mxu0 0.0
    %7639 = vmatprep.subr.mxu0 0.0
    %7640 = vmatpush1.xpose.msra.mxu0 0.0
    %7641 = vmatprep.subr.mxu0 0.0
    %7642 = vmatpush1.xpose.msra.mxu0 0.0
    %7643 = vmatprep.subr.mxu0 0.0
    %7644 = vmatpush1.xpose.msra.mxu0 0.0
    %7645 = vmatprep.subr.mxu0 0.0
    %7646 = vmatpush1.xpose.msra.mxu0 0.0
    %7647 = vmatprep.subr.mxu0 0.0
    %7648 = vmatpush1.xpose.msra.mxu0 0.0
    %7649 = vmatprep.subr.mxu0 0.0
    %7650 = vmatpush1.xpose.msra.mxu0 0.0
    %7651 = vmatprep.subr.mxu0 0.0
    %7652 = vmatpush1.xpose.msra.mxu0 %v7621
    %7653 = vmatprep.subr.mxu0 0.0
    %7654 = vmatpush1.xpose.msra.mxu0 %v7618
    %7655 = vmatprep.subr.mxu0 0.0
    %7656 = vmatpush2.xpose.msra.mxu0 0.0
    %7657 = vmatprep.subr.mxu0 0.0
    %7658 = vmatpush2.xpose.msra.mxu0 0.0
    %7659 = vmatprep.subr.mxu0 0.0
    %7660 = vmatpush2.xpose.msra.mxu0 0.0
    %7661 = vmatprep.subr.mxu0 0.0
    %7662 = vmatpush2.xpose.msra.mxu0 0.0
    %7663 = vmatprep.subr.mxu0 0.0
    %7664 = vmatpush2.xpose.msra.mxu0 0.0
    %7665 = vmatprep.subr.mxu0 0.0
    %7666 = vmatpush2.xpose.msra.mxu0 0.0
    %7667 = vmatprep.subr.mxu0 0.0
    %7668 = vmatpush2.xpose.msra.mxu0 0.0
    %7669 = vmatprep.subr.mxu0 0.0
    %7670 = vmatpush2.xpose.msra.mxu0 0.0
    %7671 = vmatprep.subr.mxu0 0.0
    %7672 = vmatpush2.xpose.msra.mxu0 0.0
    %7673 = vmatprep.subr.mxu0 0.0
    %7674 = vmatpush2.xpose.msra.mxu0 0.0
    %7675 = vmatprep.subr.mxu0 0.0
    %7676 = vmatpush2.xpose.msra.mxu0 0.0
    %7677 = vmatprep.subr.mxu0 0.0
    %7678 = vmatpush2.xpose.msra.mxu0 0.0
    %7679 = vmatprep.subr.mxu0 0.0
    %7680 = vmatpush2.xpose.msra.mxu0 0.0
    %7681 = vmatprep.subr.mxu0 0.0
    %7682 = vmatpush2.xpose.msra.mxu0 0.0
    %7683 = vmatprep.subr.mxu0 0.0
    %7684 = vmatpush2.xpose.msra.mxu0 0.0
    %7685 = vmatprep.subr.mxu0 0.0
    %7686 = vmatpush2.xpose.msra.mxu0 0.0
    %7687 = vmatprep.mubr.f32.mxu0 0.0
    %7688 = vmatmul.mubr.f32.gmra.mxu0 %v7606
    %v7689 = vpop.f32.mrf.mxu0
    %v7690 = vadd.f32 0.0, %v7689
    %v7691 = vpop.f32.mrf.mxu0
    %7692 = vmatprep.mubr.f32.mxu0 0.0
    %7693 = vmatmul.mubr.f32.gmra.mxu0 %v7609
    %v7694 = vpop.f32.mrf.mxu0
    %v7695 = vadd.f32 0.0, %v7694
    %v7696 = vpop.f32.mrf.mxu0
    %7697 = vmatprep.mubr.f32.mxu0 0.0
    %7698 = vmatmul.mubr.f32.gmra.mxu0 %v7612
    %v7699 = vpop.f32.mrf.mxu0
    %v7700 = vadd.f32 0.0, %v7699
    %v7701 = vpop.f32.mrf.mxu0
    %7702 = vmatprep.mubr.f32.mxu0 0.0
    %7703 = vmatmul.mubr.f32.gmra.mxu0 %v7615
    %v7704 = vpop.f32.mrf.mxu0
    %v7705 = vadd.f32 0.0, %v7704
    %v7706 = vpop.f32.mrf.mxu0
    %7707 = vdwg.mxu0
    %v7709 = vsel %vm1607, %v6258, 0
    %v7712 = vsel %vm1607, %v6259, 0
    %v7715 = vsel %vm1607, %v6260, 0
    %v7718 = vsel %vm1607, %v6261, 0
    %v7721 = vsel %vm1607, %v7086, 0
    %v7724 = vsel %vm1607, %v7087, 0
    %7726 = vmatprep.subr.mxu0 0.0
    %7727 = vmatpush1.xpose.msra.mxu0 0.0
    %7728 = vmatprep.subr.mxu0 0.0
    %7729 = vmatpush1.xpose.msra.mxu0 0.0
    %7730 = vmatprep.subr.mxu0 0.0
    %7731 = vmatpush1.xpose.msra.mxu0 0.0
    %7732 = vmatprep.subr.mxu0 0.0
    %7733 = vmatpush1.xpose.msra.mxu0 0.0
    %7734 = vmatprep.subr.mxu0 0.0
    %7735 = vmatpush1.xpose.msra.mxu0 0.0
    %7736 = vmatprep.subr.mxu0 0.0
    %7737 = vmatpush1.xpose.msra.mxu0 0.0
    %7738 = vmatprep.subr.mxu0 0.0
    %7739 = vmatpush1.xpose.msra.mxu0 0.0
    %7740 = vmatprep.subr.mxu0 0.0
    %7741 = vmatpush1.xpose.msra.mxu0 0.0
    %7742 = vmatprep.subr.mxu0 0.0
    %7743 = vmatpush1.xpose.msra.mxu0 0.0
    %7744 = vmatprep.subr.mxu0 0.0
    %7745 = vmatpush1.xpose.msra.mxu0 0.0
    %7746 = vmatprep.subr.mxu0 0.0
    %7747 = vmatpush1.xpose.msra.mxu0 0.0
    %7748 = vmatprep.subr.mxu0 0.0
    %7749 = vmatpush1.xpose.msra.mxu0 0.0
    %7750 = vmatprep.subr.mxu0 0.0
    %7751 = vmatpush1.xpose.msra.mxu0 0.0
    %7752 = vmatprep.subr.mxu0 0.0
    %7753 = vmatpush1.xpose.msra.mxu0 0.0
    %7754 = vmatprep.subr.mxu0 0.0
    %7755 = vmatpush1.xpose.msra.mxu0 %v7724
    %7756 = vmatprep.subr.mxu0 0.0
    %7757 = vmatpush1.xpose.msra.mxu0 %v7721
    %7758 = vmatprep.subr.mxu0 0.0
    %7759 = vmatpush2.xpose.msra.mxu0 0.0
    %7760 = vmatprep.subr.mxu0 0.0
    %7761 = vmatpush2.xpose.msra.mxu0 0.0
    %7762 = vmatprep.subr.mxu0 0.0
    %7763 = vmatpush2.xpose.msra.mxu0 0.0
    %7764 = vmatprep.subr.mxu0 0.0
    %7765 = vmatpush2.xpose.msra.mxu0 0.0
    %7766 = vmatprep.subr.mxu0 0.0
    %7767 = vmatpush2.xpose.msra.mxu0 0.0
    %7768 = vmatprep.subr.mxu0 0.0
    %7769 = vmatpush2.xpose.msra.mxu0 0.0
    %7770 = vmatprep.subr.mxu0 0.0
    %7771 = vmatpush2.xpose.msra.mxu0 0.0
    %7772 = vmatprep.subr.mxu0 0.0
    %7773 = vmatpush2.xpose.msra.mxu0 0.0
    %7774 = vmatprep.subr.mxu0 0.0
    %7775 = vmatpush2.xpose.msra.mxu0 0.0
    %7776 = vmatprep.subr.mxu0 0.0
    %7777 = vmatpush2.xpose.msra.mxu0 0.0
    %7778 = vmatprep.subr.mxu0 0.0
    %7779 = vmatpush2.xpose.msra.mxu0 0.0
    %7780 = vmatprep.subr.mxu0 0.0
    %7781 = vmatpush2.xpose.msra.mxu0 0.0
    %7782 = vmatprep.subr.mxu0 0.0
    %7783 = vmatpush2.xpose.msra.mxu0 0.0
    %7784 = vmatprep.subr.mxu0 0.0
    %7785 = vmatpush2.xpose.msra.mxu0 0.0
    %7786 = vmatprep.subr.mxu0 0.0
    %7787 = vmatpush2.xpose.msra.mxu0 0.0
    %7788 = vmatprep.subr.mxu0 0.0
    %7789 = vmatpush2.xpose.msra.mxu0 0.0
    %7790 = vmatprep.mubr.f32.mxu0 0.0
    %7791 = vmatmul.mubr.f32.gmra.mxu0 %v7709
    %v7792 = vpop.f32.mrf.mxu0
    %v7793 = vadd.f32 0.0, %v7792
    %v7794 = vpop.f32.mrf.mxu0
    %7795 = vmatprep.mubr.f32.mxu0 0.0
    %7796 = vmatmul.mubr.f32.gmra.mxu0 %v7712
    %v7797 = vpop.f32.mrf.mxu0
    %v7798 = vadd.f32 0.0, %v7797
    %v7799 = vpop.f32.mrf.mxu0
    %7800 = vmatprep.mubr.f32.mxu0 0.0
    %7801 = vmatmul.mubr.f32.gmra.mxu0 %v7715
    %v7802 = vpop.f32.mrf.mxu0
    %v7803 = vadd.f32 0.0, %v7802
    %v7804 = vpop.f32.mrf.mxu0
    %7805 = vmatprep.mubr.f32.mxu0 0.0
    %7806 = vmatmul.mubr.f32.gmra.mxu0 %v7718
    %v7807 = vpop.f32.mrf.mxu0
    %v7808 = vadd.f32 0.0, %v7807
    %v7809 = vpop.f32.mrf.mxu0
    %7810 = vdwg.mxu0
    %v7812 = vsel %vm1607, %v6262, 0
    %v7815 = vsel %vm1607, %v6263, 0
    %v7818 = vsel %vm1607, %v6264, 0
    %v7821 = vsel %vm1607, %v6265, 0
    %v7824 = vsel %vm1607, %v7088, 0
    %v7827 = vsel %vm1607, %v7089, 0
    %7829 = vmatprep.subr.mxu0 0.0
    %7830 = vmatpush1.xpose.msra.mxu0 0.0
    %7831 = vmatprep.subr.mxu0 0.0
    %7832 = vmatpush1.xpose.msra.mxu0 0.0
    %7833 = vmatprep.subr.mxu0 0.0
    %7834 = vmatpush1.xpose.msra.mxu0 0.0
    %7835 = vmatprep.subr.mxu0 0.0
    %7836 = vmatpush1.xpose.msra.mxu0 0.0
    %7837 = vmatprep.subr.mxu0 0.0
    %7838 = vmatpush1.xpose.msra.mxu0 0.0
    %7839 = vmatprep.subr.mxu0 0.0
    %7840 = vmatpush1.xpose.msra.mxu0 0.0
    %7841 = vmatprep.subr.mxu0 0.0
    %7842 = vmatpush1.xpose.msra.mxu0 0.0
    %7843 = vmatprep.subr.mxu0 0.0
    %7844 = vmatpush1.xpose.msra.mxu0 0.0
    %7845 = vmatprep.subr.mxu0 0.0
    %7846 = vmatpush1.xpose.msra.mxu0 0.0
    %7847 = vmatprep.subr.mxu0 0.0
    %7848 = vmatpush1.xpose.msra.mxu0 0.0
    %7849 = vmatprep.subr.mxu0 0.0
    %7850 = vmatpush1.xpose.msra.mxu0 0.0
    %7851 = vmatprep.subr.mxu0 0.0
    %7852 = vmatpush1.xpose.msra.mxu0 0.0
    %7853 = vmatprep.subr.mxu0 0.0
    %7854 = vmatpush1.xpose.msra.mxu0 0.0
    %7855 = vmatprep.subr.mxu0 0.0
    %7856 = vmatpush1.xpose.msra.mxu0 0.0
    %7857 = vmatprep.subr.mxu0 0.0
    %7858 = vmatpush1.xpose.msra.mxu0 %v7827
    %7859 = vmatprep.subr.mxu0 0.0
    %7860 = vmatpush1.xpose.msra.mxu0 %v7824
    %7861 = vmatprep.subr.mxu0 0.0
    %7862 = vmatpush2.xpose.msra.mxu0 0.0
    %7863 = vmatprep.subr.mxu0 0.0
    %7864 = vmatpush2.xpose.msra.mxu0 0.0
    %7865 = vmatprep.subr.mxu0 0.0
    %7866 = vmatpush2.xpose.msra.mxu0 0.0
    %7867 = vmatprep.subr.mxu0 0.0
    %7868 = vmatpush2.xpose.msra.mxu0 0.0
    %7869 = vmatprep.subr.mxu0 0.0
    %7870 = vmatpush2.xpose.msra.mxu0 0.0
    %7871 = vmatprep.subr.mxu0 0.0
    %7872 = vmatpush2.xpose.msra.mxu0 0.0
    %7873 = vmatprep.subr.mxu0 0.0
    %7874 = vmatpush2.xpose.msra.mxu0 0.0
    %7875 = vmatprep.subr.mxu0 0.0
    %7876 = vmatpush2.xpose.msra.mxu0 0.0
    %7877 = vmatprep.subr.mxu0 0.0
    %7878 = vmatpush2.xpose.msra.mxu0 0.0
    %7879 = vmatprep.subr.mxu0 0.0
    %7880 = vmatpush2.xpose.msra.mxu0 0.0
    %7881 = vmatprep.subr.mxu0 0.0
    %7882 = vmatpush2.xpose.msra.mxu0 0.0
    %7883 = vmatprep.subr.mxu0 0.0
    %7884 = vmatpush2.xpose.msra.mxu0 0.0
    %7885 = vmatprep.subr.mxu0 0.0
    %7886 = vmatpush2.xpose.msra.mxu0 0.0
    %7887 = vmatprep.subr.mxu0 0.0
    %7888 = vmatpush2.xpose.msra.mxu0 0.0
    %7889 = vmatprep.subr.mxu0 0.0
    %7890 = vmatpush2.xpose.msra.mxu0 0.0
    %7891 = vmatprep.subr.mxu0 0.0
    %7892 = vmatpush2.xpose.msra.mxu0 0.0
    %7893 = vmatprep.mubr.f32.mxu0 0.0
    %7894 = vmatmul.mubr.f32.gmra.mxu0 %v7812
    %v7895 = vpop.f32.mrf.mxu0
    %v7896 = vadd.f32 0.0, %v7895
    %v7897 = vpop.f32.mrf.mxu0
    %7898 = vmatprep.mubr.f32.mxu0 0.0
    %7899 = vmatmul.mubr.f32.gmra.mxu0 %v7815
    %v7900 = vpop.f32.mrf.mxu0
    %v7901 = vadd.f32 0.0, %v7900
    %v7902 = vpop.f32.mrf.mxu0
    %7903 = vmatprep.mubr.f32.mxu0 0.0
    %7904 = vmatmul.mubr.f32.gmra.mxu0 %v7818
    %v7905 = vpop.f32.mrf.mxu0
    %v7906 = vadd.f32 0.0, %v7905
    %v7907 = vpop.f32.mrf.mxu0
    %7908 = vmatprep.mubr.f32.mxu0 0.0
    %7909 = vmatmul.mubr.f32.gmra.mxu0 %v7821
    %v7910 = vpop.f32.mrf.mxu0
    %v7911 = vadd.f32 0.0, %v7910
    %v7912 = vpop.f32.mrf.mxu0
    %7913 = vdwg.mxu0
    %s7914 = scalar_lea.vmem [#allocation13], 512
    %v7915 = vld [vmem:[%s7914] sm:$0xff]
    %v7916 = vld [vmem:[%s7914 + $0x8] sm:$0xff]
    %v7917 = vld [vmem:[%s7914 + $0x10] sm:$0xff]
    %v7918 = vld [vmem:[%s7914 + $0x18] sm:$0xff]
    %v7919 = vld [vmem:[%s7914 + $0x20] sm:$0xff]
    %v7920 = vld [vmem:[%s7914 + $0x28] sm:$0xff]
    %v7921 = vld [vmem:[%s7914 + $0x30] sm:$0xff]
    %v7922 = vld [vmem:[%s7914 + $0x38] sm:$0xff]
    %v7923 = vld [vmem:[%s7914 + $0x40] sm:$0xff]
    %v7924 = vld [vmem:[%s7914 + $0x48] sm:$0xff]
    %v7925 = vld [vmem:[%s7914 + $0x50] sm:$0xff]
    %v7926 = vld [vmem:[%s7914 + $0x58] sm:$0xff]
    %v7927 = vld [vmem:[%s7914 + $0x60] sm:$0xff]
    %v7928 = vld [vmem:[%s7914 + $0x68] sm:$0xff]
    %v7929 = vld [vmem:[%s7914 + $0x70] sm:$0xff]
    %v7930 = vld [vmem:[%s7914 + $0x78] sm:$0xff]
    %v7931 = vld [vmem:[%s7914 + $0x80] sm:$0xff]
    %v7932 = vld [vmem:[%s7914 + $0x88] sm:$0xff]
    %v7933 = vld [vmem:[%s7914 + $0x90] sm:$0xff]
    %v7934 = vld [vmem:[%s7914 + $0x98] sm:$0xff]
    %v7935 = vld [vmem:[%s7914 + $0xa0] sm:$0xff]
    %v7936 = vld [vmem:[%s7914 + $0xa8] sm:$0xff]
    %v7937 = vld [vmem:[%s7914 + $0xb0] sm:$0xff]
    %v7938 = vld [vmem:[%s7914 + $0xb8] sm:$0xff]
    %v7939 = vld [vmem:[%s7914 + $0xc0] sm:$0xff]
    %v7940 = vld [vmem:[%s7914 + $0xc8] sm:$0xff]
    %v7941 = vld [vmem:[%s7914 + $0xd0] sm:$0xff]
    %v7942 = vld [vmem:[%s7914 + $0xd8] sm:$0xff]
    %v7943 = vld [vmem:[%s7914 + $0xe0] sm:$0xff]
    %v7944 = vld [vmem:[%s7914 + $0xe8] sm:$0xff]
    %v7945 = vld [vmem:[%s7914 + $0xf0] sm:$0xff]
    %v7946 = vld [vmem:[%s7914 + $0xf8] sm:$0xff]
    %v7947 = vld [vmem:[%s7914 + $0x100] sm:$0xff]
    %v7948 = vld [vmem:[%s7914 + $0x108] sm:$0xff]
    %v7949 = vld [vmem:[%s7914 + $0x110] sm:$0xff]
    %v7950 = vld [vmem:[%s7914 + $0x118] sm:$0xff]
    %v7951 = vld [vmem:[%s7914 + $0x120] sm:$0xff]
    %v7952 = vld [vmem:[%s7914 + $0x128] sm:$0xff]
    %v7953 = vld [vmem:[%s7914 + $0x130] sm:$0xff]
    %v7954 = vld [vmem:[%s7914 + $0x138] sm:$0xff]
    %v7955 = vld [vmem:[%s7914 + $0x140] sm:$0xff]
    %v7956 = vld [vmem:[%s7914 + $0x148] sm:$0xff]
    %v7957 = vld [vmem:[%s7914 + $0x150] sm:$0xff]
    %v7958 = vld [vmem:[%s7914 + $0x158] sm:$0xff]
    %v7959 = vld [vmem:[%s7914 + $0x160] sm:$0xff]
    %v7960 = vld [vmem:[%s7914 + $0x168] sm:$0xff]
    %v7961 = vld [vmem:[%s7914 + $0x170] sm:$0xff]
    %v7962 = vld [vmem:[%s7914 + $0x178] sm:$0xff]
    %v7963 = vld [vmem:[%s7914 + $0x180] sm:$0xff]
    %v7964 = vld [vmem:[%s7914 + $0x188] sm:$0xff]
    %v7965 = vld [vmem:[%s7914 + $0x190] sm:$0xff]
    %v7966 = vld [vmem:[%s7914 + $0x198] sm:$0xff]
    %v7967 = vld [vmem:[%s7914 + $0x1a0] sm:$0xff]
    %v7968 = vld [vmem:[%s7914 + $0x1a8] sm:$0xff]
    %v7969 = vld [vmem:[%s7914 + $0x1b0] sm:$0xff]
    %v7970 = vld [vmem:[%s7914 + $0x1b8] sm:$0xff]
    %v7971 = vld [vmem:[%s7914 + $0x1c0] sm:$0xff]
    %v7972 = vld [vmem:[%s7914 + $0x1c8] sm:$0xff]
    %v7973 = vld [vmem:[%s7914 + $0x1d0] sm:$0xff]
    %v7974 = vld [vmem:[%s7914 + $0x1d8] sm:$0xff]
    %v7975 = vld [vmem:[%s7914 + $0x1e0] sm:$0xff]
    %v7976 = vld [vmem:[%s7914 + $0x1e8] sm:$0xff]
    %v7977 = vld [vmem:[%s7914 + $0x1f0] sm:$0xff]
    %v7978 = vld [vmem:[%s7914 + $0x1f8] sm:$0xff]
    %7979 = vmatprep.subr.mxu0 0.0
    %7980 = vmatpush1.msra.mxu0 %v7499
    %7981 = vmatprep.subr.mxu0 0.0
    %7982 = vmatpush1.msra.mxu0 %v7494
    %7983 = vmatprep.subr.mxu0 0.0
    %7984 = vmatpush1.msra.mxu0 %v7489
    %7985 = vmatprep.subr.mxu0 0.0
    %7986 = vmatpush1.msra.mxu0 %v7484
    %7987 = vmatprep.subr.mxu0 0.0
    %7988 = vmatpush1.msra.mxu0 %v7396
    %7989 = vmatprep.subr.mxu0 0.0
    %7990 = vmatpush1.msra.mxu0 %v7391
    %7991 = vmatprep.subr.mxu0 0.0
    %7992 = vmatpush1.msra.mxu0 %v7386
    %7993 = vmatprep.subr.mxu0 0.0
    %7994 = vmatpush1.msra.mxu0 %v7381
    %7995 = vmatprep.subr.mxu0 0.0
    %7996 = vmatpush1.msra.mxu0 %v7293
    %7997 = vmatprep.subr.mxu0 0.0
    %7998 = vmatpush1.msra.mxu0 %v7288
    %7999 = vmatprep.subr.mxu0 0.0
    %8000 = vmatpush1.msra.mxu0 %v7283
    %8001 = vmatprep.subr.mxu0 0.0
    %8002 = vmatpush1.msra.mxu0 %v7278
    %8003 = vmatprep.subr.mxu0 0.0
    %8004 = vmatpush1.msra.mxu0 %v7190
    %8005 = vmatprep.subr.mxu0 0.0
    %8006 = vmatpush1.msra.mxu0 %v7185
    %8007 = vmatprep.subr.mxu0 0.0
    %8008 = vmatpush1.msra.mxu0 %v7180
    %8009 = vmatprep.subr.mxu0 0.0
    %8010 = vmatpush1.msra.mxu0 %v7175
    %8011 = vmatprep.subr.mxu0 0.0
    %8012 = vmatpush2.msra.mxu0 %v7911
    %8013 = vmatprep.subr.mxu0 0.0
    %8014 = vmatpush2.msra.mxu0 %v7906
    %8015 = vmatprep.subr.mxu0 0.0
    %8016 = vmatpush2.msra.mxu0 %v7901
    %8017 = vmatprep.subr.mxu0 0.0
    %8018 = vmatpush2.msra.mxu0 %v7896
    %8019 = vmatprep.subr.mxu0 0.0
    %8020 = vmatpush2.msra.mxu0 %v7808
    %8021 = vmatprep.subr.mxu0 0.0
    %8022 = vmatpush2.msra.mxu0 %v7803
    %8023 = vmatprep.subr.mxu0 0.0
    %8024 = vmatpush2.msra.mxu0 %v7798
    %8025 = vmatprep.subr.mxu0 0.0
    %8026 = vmatpush2.msra.mxu0 %v7793
    %8027 = vmatprep.subr.mxu0 0.0
    %8028 = vmatpush2.msra.mxu0 %v7705
    %8029 = vmatprep.subr.mxu0 0.0
    %8030 = vmatpush2.msra.mxu0 %v7700
    %8031 = vmatprep.subr.mxu0 0.0
    %8032 = vmatpush2.msra.mxu0 %v7695
    %8033 = vmatprep.subr.mxu0 0.0
    %8034 = vmatpush2.msra.mxu0 %v7690
    %8035 = vmatprep.subr.mxu0 0.0
    %8036 = vmatpush2.msra.mxu0 %v7602
    %8037 = vmatprep.subr.mxu0 0.0
    %8038 = vmatpush2.msra.mxu0 %v7597
    %8039 = vmatprep.subr.mxu0 0.0
    %8040 = vmatpush2.msra.mxu0 %v7592
    %8041 = vmatprep.subr.mxu0 0.0
    %8042 = vmatpush2.msra.mxu0 %v7587
    %8043 = vmatprep.mubr.f32.mxu0 %v7916
    %8044 = vmatmul.mubr.f32.gmra.mxu0 %v7915
    %v8045 = vpop.f32.mrf.mxu0
    %v8046 = vadd.f32 0.0, %v8045
    %v8047 = vpop.f32.mrf.mxu0
    %8048 = vmatprep.mubr.f32.mxu0 %v7918
    %8049 = vmatmul.mubr.f32.gmra.mxu0 %v7917
    %v8050 = vpop.f32.mrf.mxu0
    %v8051 = vadd.f32 0.0, %v8050
    %v8052 = vpop.f32.mrf.mxu0
    %8053 = vmatprep.mubr.f32.mxu0 %v7920
    %8054 = vmatmul.mubr.f32.gmra.mxu0 %v7919
    %v8055 = vpop.f32.mrf.mxu0
    %v8056 = vadd.f32 0.0, %v8055
    %v8057 = vpop.f32.mrf.mxu0
    %8058 = vmatprep.mubr.f32.mxu0 %v7922
    %8059 = vmatmul.mubr.f32.gmra.mxu0 %v7921
    %v8060 = vpop.f32.mrf.mxu0
    %v8061 = vadd.f32 0.0, %v8060
    %v8062 = vpop.f32.mrf.mxu0
    %8063 = vmatprep.mubr.f32.mxu0 %v7924
    %8064 = vmatmul.mubr.f32.gmra.mxu0 %v7923
    %v8065 = vpop.f32.mrf.mxu0
    %v8066 = vadd.f32 0.0, %v8065
    %v8067 = vpop.f32.mrf.mxu0
    %8068 = vmatprep.mubr.f32.mxu0 %v7926
    %8069 = vmatmul.mubr.f32.gmra.mxu0 %v7925
    %v8070 = vpop.f32.mrf.mxu0
    %v8071 = vadd.f32 0.0, %v8070
    %v8072 = vpop.f32.mrf.mxu0
    %8073 = vmatprep.mubr.f32.mxu0 %v7928
    %8074 = vmatmul.mubr.f32.gmra.mxu0 %v7927
    %v8075 = vpop.f32.mrf.mxu0
    %v8076 = vadd.f32 0.0, %v8075
    %v8077 = vpop.f32.mrf.mxu0
    %8078 = vmatprep.mubr.f32.mxu0 %v7930
    %8079 = vmatmul.mubr.f32.gmra.mxu0 %v7929
    %v8080 = vpop.f32.mrf.mxu0
    %v8081 = vadd.f32 0.0, %v8080
    %v8082 = vpop.f32.mrf.mxu0
    %8083 = vmatprep.mubr.f32.mxu0 %v7932
    %8084 = vmatmul.mubr.f32.gmra.mxu0 %v7931
    %v8085 = vpop.f32.mrf.mxu0
    %v8086 = vadd.f32 0.0, %v8085
    %v8087 = vpop.f32.mrf.mxu0
    %8088 = vmatprep.mubr.f32.mxu0 %v7934
    %8089 = vmatmul.mubr.f32.gmra.mxu0 %v7933
    %v8090 = vpop.f32.mrf.mxu0
    %v8091 = vadd.f32 0.0, %v8090
    %v8092 = vpop.f32.mrf.mxu0
    %8093 = vmatprep.mubr.f32.mxu0 %v7936
    %8094 = vmatmul.mubr.f32.gmra.mxu0 %v7935
    %v8095 = vpop.f32.mrf.mxu0
    %v8096 = vadd.f32 0.0, %v8095
    %v8097 = vpop.f32.mrf.mxu0
    %8098 = vmatprep.mubr.f32.mxu0 %v7938
    %8099 = vmatmul.mubr.f32.gmra.mxu0 %v7937
    %v8100 = vpop.f32.mrf.mxu0
    %v8101 = vadd.f32 0.0, %v8100
    %v8102 = vpop.f32.mrf.mxu0
    %8103 = vmatprep.mubr.f32.mxu0 %v7940
    %8104 = vmatmul.mubr.f32.gmra.mxu0 %v7939
    %v8105 = vpop.f32.mrf.mxu0
    %v8106 = vadd.f32 0.0, %v8105
    %v8107 = vpop.f32.mrf.mxu0
    %8108 = vmatprep.mubr.f32.mxu0 %v7942
    %8109 = vmatmul.mubr.f32.gmra.mxu0 %v7941
    %v8110 = vpop.f32.mrf.mxu0
    %v8111 = vadd.f32 0.0, %v8110
    %v8112 = vpop.f32.mrf.mxu0
    %8113 = vmatprep.mubr.f32.mxu0 %v7944
    %8114 = vmatmul.mubr.f32.gmra.mxu0 %v7943
    %v8115 = vpop.f32.mrf.mxu0
    %v8116 = vadd.f32 0.0, %v8115
    %v8117 = vpop.f32.mrf.mxu0
    %8118 = vmatprep.mubr.f32.mxu0 %v7946
    %8119 = vmatmul.mubr.f32.gmra.mxu0 %v7945
    %v8120 = vpop.f32.mrf.mxu0
    %v8121 = vadd.f32 0.0, %v8120
    %v8122 = vpop.f32.mrf.mxu0
    %8123 = vmatprep.mubr.f32.mxu0 %v7948
    %8124 = vmatmul.mubr.f32.gmra.mxu0 %v7947
    %v8125 = vpop.f32.mrf.mxu0
    %v8126 = vadd.f32 0.0, %v8125
    %v8127 = vpop.f32.mrf.mxu0
    %8128 = vmatprep.mubr.f32.mxu0 %v7950
    %8129 = vmatmul.mubr.f32.gmra.mxu0 %v7949
    %v8130 = vpop.f32.mrf.mxu0
    %v8131 = vadd.f32 0.0, %v8130
    %v8132 = vpop.f32.mrf.mxu0
    %8133 = vmatprep.mubr.f32.mxu0 %v7952
    %8134 = vmatmul.mubr.f32.gmra.mxu0 %v7951
    %v8135 = vpop.f32.mrf.mxu0
    %v8136 = vadd.f32 0.0, %v8135
    %v8137 = vpop.f32.mrf.mxu0
    %8138 = vmatprep.mubr.f32.mxu0 %v7954
    %8139 = vmatmul.mubr.f32.gmra.mxu0 %v7953
    %v8140 = vpop.f32.mrf.mxu0
    %v8141 = vadd.f32 0.0, %v8140
    %v8142 = vpop.f32.mrf.mxu0
    %8143 = vmatprep.mubr.f32.mxu0 %v7956
    %8144 = vmatmul.mubr.f32.gmra.mxu0 %v7955
    %v8145 = vpop.f32.mrf.mxu0
    %v8146 = vadd.f32 0.0, %v8145
    %v8147 = vpop.f32.mrf.mxu0
    %8148 = vmatprep.mubr.f32.mxu0 %v7958
    %8149 = vmatmul.mubr.f32.gmra.mxu0 %v7957
    %v8150 = vpop.f32.mrf.mxu0
    %v8151 = vadd.f32 0.0, %v8150
    %v8152 = vpop.f32.mrf.mxu0
    %8153 = vmatprep.mubr.f32.mxu0 %v7960
    %8154 = vmatmul.mubr.f32.gmra.mxu0 %v7959
    %v8155 = vpop.f32.mrf.mxu0
    %v8156 = vadd.f32 0.0, %v8155
    %v8157 = vpop.f32.mrf.mxu0
    %8158 = vmatprep.mubr.f32.mxu0 %v7962
    %8159 = vmatmul.mubr.f32.gmra.mxu0 %v7961
    %v8160 = vpop.f32.mrf.mxu0
    %v8161 = vadd.f32 0.0, %v8160
    %v8162 = vpop.f32.mrf.mxu0
    %8163 = vmatprep.mubr.f32.mxu0 %v7964
    %8164 = vmatmul.mubr.f32.gmra.mxu0 %v7963
    %v8165 = vpop.f32.mrf.mxu0
    %v8166 = vadd.f32 0.0, %v8165
    %v8167 = vpop.f32.mrf.mxu0
    %8168 = vmatprep.mubr.f32.mxu0 %v7966
    %8169 = vmatmul.mubr.f32.gmra.mxu0 %v7965
    %v8170 = vpop.f32.mrf.mxu0
    %v8171 = vadd.f32 0.0, %v8170
    %v8172 = vpop.f32.mrf.mxu0
    %8173 = vmatprep.mubr.f32.mxu0 %v7968
    %8174 = vmatmul.mubr.f32.gmra.mxu0 %v7967
    %v8175 = vpop.f32.mrf.mxu0
    %v8176 = vadd.f32 0.0, %v8175
    %v8177 = vpop.f32.mrf.mxu0
    %8178 = vmatprep.mubr.f32.mxu0 %v7970
    %8179 = vmatmul.mubr.f32.gmra.mxu0 %v7969
    %v8180 = vpop.f32.mrf.mxu0
    %v8181 = vadd.f32 0.0, %v8180
    %v8182 = vpop.f32.mrf.mxu0
    %8183 = vmatprep.mubr.f32.mxu0 %v7972
    %8184 = vmatmul.mubr.f32.gmra.mxu0 %v7971
    %v8185 = vpop.f32.mrf.mxu0
    %v8186 = vadd.f32 0.0, %v8185
    %v8187 = vpop.f32.mrf.mxu0
    %8188 = vmatprep.mubr.f32.mxu0 %v7974
    %8189 = vmatmul.mubr.f32.gmra.mxu0 %v7973
    %v8190 = vpop.f32.mrf.mxu0
    %v8191 = vadd.f32 0.0, %v8190
    %v8192 = vpop.f32.mrf.mxu0
    %8193 = vmatprep.mubr.f32.mxu0 %v7976
    %8194 = vmatmul.mubr.f32.gmra.mxu0 %v7975
    %v8195 = vpop.f32.mrf.mxu0
    %v8196 = vadd.f32 0.0, %v8195
    %v8197 = vpop.f32.mrf.mxu0
    %8198 = vmatprep.mubr.f32.mxu0 %v7978
    %8199 = vmatmul.mubr.f32.gmra.mxu0 %v7977
    %v8200 = vpop.f32.mrf.mxu0
    %v8201 = vadd.f32 0.0, %v8200
    %v8202 = vpop.f32.mrf.mxu0
    %8203 = vdwg.mxu0
    %8204 = vxpose.xlu0.b32.start [1/16] %v8046, 128
    %8205 = vxpose.xlu0.b32.cont [2/16] %v8051, 128
    %8206 = vxpose.xlu0.b32.cont [3/16] %v8056, 128
    %8207 = vxpose.xlu0.b32.cont [4/16] %v8061, 128
    %8208 = vxpose.xlu0.b32.cont [5/16] %v8066, 128
    %8209 = vxpose.xlu0.b32.cont [6/16] %v8071, 128
    %8210 = vxpose.xlu0.b32.cont [7/16] %v8076, 128
    %8211 = vxpose.xlu0.b32.cont [8/16] %v8081, 128
    %8212 = vxpose.xlu0.b32.cont [9/16] %v8086, 128
    %8213 = vxpose.xlu0.b32.cont [10/16] %v8091, 128
    %8214 = vxpose.xlu0.b32.cont [11/16] %v8096, 128
    %8215 = vxpose.xlu0.b32.cont [12/16] %v8101, 128
    %8216 = vxpose.xlu0.b32.cont [13/16] %v8106, 128
    %8217 = vxpose.xlu0.b32.cont [14/16] %v8111, 128
    %8218 = vxpose.xlu0.b32.cont [15/16] %v8116, 128
    %8219 = vxpose.xlu0.b32.end [16/16] %v8121, 128
    %v8220 = vpop.trf.xlu0
    %v8221 = vpop.trf.xlu0
    %v8222 = vpop.trf.xlu0
    %v8223 = vpop.trf.xlu0
    %v8224 = vpop.trf.xlu0
    %v8225 = vpop.trf.xlu0
    %v8226 = vpop.trf.xlu0
    %v8227 = vpop.trf.xlu0
    %v8228 = vpop.trf.xlu0
    %v8229 = vpop.trf.xlu0
    %v8230 = vpop.trf.xlu0
    %v8231 = vpop.trf.xlu0
    %v8232 = vpop.trf.xlu0
    %v8233 = vpop.trf.xlu0
    %v8234 = vpop.trf.xlu0
    %v8235 = vpop.trf.xlu0
    %8236 = vxpose.xlu0.b32.start [1/16] %v8126, 128
    %8237 = vxpose.xlu0.b32.cont [2/16] %v8131, 128
    %8238 = vxpose.xlu0.b32.cont [3/16] %v8136, 128
    %8239 = vxpose.xlu0.b32.cont [4/16] %v8141, 128
    %8240 = vxpose.xlu0.b32.cont [5/16] %v8146, 128
    %8241 = vxpose.xlu0.b32.cont [6/16] %v8151, 128
    %8242 = vxpose.xlu0.b32.cont [7/16] %v8156, 128
    %8243 = vxpose.xlu0.b32.cont [8/16] %v8161, 128
    %8244 = vxpose.xlu0.b32.cont [9/16] %v8166, 128
    %8245 = vxpose.xlu0.b32.cont [10/16] %v8171, 128
    %8246 = vxpose.xlu0.b32.cont [11/16] %v8176, 128
    %8247 = vxpose.xlu0.b32.cont [12/16] %v8181, 128
    %8248 = vxpose.xlu0.b32.cont [13/16] %v8186, 128
    %8249 = vxpose.xlu0.b32.cont [14/16] %v8191, 128
    %8250 = vxpose.xlu0.b32.cont [15/16] %v8196, 128
    %8251 = vxpose.xlu0.b32.end [16/16] %v8201, 128
    %v8252 = vpop.trf.xlu0
    %v8253 = vpop.trf.xlu0
    %v8254 = vpop.trf.xlu0
    %v8255 = vpop.trf.xlu0
    %v8256 = vpop.trf.xlu0
    %v8257 = vpop.trf.xlu0
    %v8258 = vpop.trf.xlu0
    %v8259 = vpop.trf.xlu0
    %v8260 = vpop.trf.xlu0
    %v8261 = vpop.trf.xlu0
    %v8262 = vpop.trf.xlu0
    %v8263 = vpop.trf.xlu0
    %v8264 = vpop.trf.xlu0
    %v8265 = vpop.trf.xlu0
    %v8266 = vpop.trf.xlu0
    %v8267 = vpop.trf.xlu0
    %s8268 = scalar_lea.vmem [#allocation14], 2
    %v8269 = vld [vmem:[%s8268] sm:$0x3]
    %v8271 = vlaneseq
    %v8272 = vshrl.u32 %v8271, 7
    %v8273 = vsub.s32 0, %v8272
    %v8274 = vrot.slane %v8269, %v8273
    %v8275 = vlaneseq
    %v8276 = vshrl.u32 %v8275, 7
    %v8277 = vsub.s32 1, %v8276
    %v8278 = vrot.slane %v8269, %v8277
    %v8281 = vadd.f32 %v8220, %v8274
    %v8282 = vadd.f32 %v8252, %v8278
    %v8283 = vadd.f32 %v8221, %v8274
    %v8284 = vadd.f32 %v8253, %v8278
    %v8285 = vadd.f32 %v4499, %v8281
    %v8286 = vadd.f32 %v4500, %v8282
    %v8287 = vadd.f32 %v4501, %v8283
    %v8288 = vadd.f32 %v4502, %v8284
    %s8289 = scalar_lea.vmem [#allocation16], 2
    %v8290 = vld [vmem:[%s8289] sm:$0x3]
    %s8291 = scalar_lea.vmem [#allocation17], 2
    %v8292 = vld [vmem:[%s8291] sm:$0x3]
    %v8293 = vadd.f32 %v8285, %v8286
    %8294 = vadd.xlane.f32.xlu0 %v8293
    %v8295 = vpop.xlane.xlu0 %8294
    %v8296 = vadd.f32 %v8287, %v8288
    %8297 = vadd.xlane.f32.xlu0 %v8296
    %v8298 = vpop.xlane.xlu0 %8297
    %v8299 = vmul.f32 %v8295, %v4068
    %v8300 = vmul.f32 %v8298, %v4068
    %v8301 = vsub.f32 %v8285, %v8299
    %v8302 = vsub.f32 %v8286, %v8299
    %v8303 = vsub.f32 %v8287, %v8300
    %v8304 = vsub.f32 %v8288, %v8300
    %v8305 = vmul.f32 %v8301, %v8301
    %v8306 = vmul.f32 %v8302, %v8302
    %v8307 = vmul.f32 %v8303, %v8303
    %v8308 = vmul.f32 %v8304, %v8304
    %v8309 = vadd.f32 %v8305, %v8306
    %8310 = vadd.xlane.f32.xlu0 %v8309
    %v8311 = vpop.xlane.xlu0 %8310
    %v8312 = vadd.f32 %v8307, %v8308
    %8313 = vadd.xlane.f32.xlu0 %v8312
    %v8314 = vpop.xlane.xlu0 %8313
    %v8315 = vmul.f32 %v8311, %v4068
    %v8316 = vmul.f32 %v8314, %v4068
    %v8317 = vadd.f32 %v8315, 1e-05
    %v8318 = vadd.f32 %v8316, 1e-05
    %v8319 = vrsqrt.pop %v8317
    %v8320 = vrsqrt.pop %v8318
    %v8321 = vmul.f32 %v8301, %v8319
    %v8322 = vmul.f32 %v8302, %v8319
    %v8323 = vmul.f32 %v8303, %v8320
    %v8324 = vmul.f32 %v8304, %v8320
    %v8326 = vlaneseq
    %v8327 = vshrl.u32 %v8326, 7
    %v8328 = vsub.s32 0, %v8327
    %v8329 = vrot.slane %v8290, %v8328
    %v8330 = vlaneseq
    %v8331 = vshrl.u32 %v8330, 7
    %v8332 = vsub.s32 1, %v8331
    %v8333 = vrot.slane %v8290, %v8332
    %v8336 = vmul.f32 %v8321, %v8329
    %v8337 = vmul.f32 %v8322, %v8333
    %v8338 = vmul.f32 %v8323, %v8329
    %v8339 = vmul.f32 %v8324, %v8333
    %v8341 = vlaneseq
    %v8342 = vshrl.u32 %v8341, 7
    %v8343 = vsub.s32 0, %v8342
    %v8344 = vrot.slane %v8292, %v8343
    %v8345 = vlaneseq
    %v8346 = vshrl.u32 %v8345, 7
    %v8347 = vsub.s32 1, %v8346
    %v8348 = vrot.slane %v8292, %v8347
    %v8351 = vadd.f32 %v8336, %v8344
    %v8352 = vadd.f32 %v8337, %v8348
    %v8353 = vadd.f32 %v8338, %v8344
    %v8354 = vadd.f32 %v8339, %v8348
    %s8355 = scalar_lea.vmem [#allocation19], 512
    %v8356 = vld [vmem:[%s8355] sm:$0xff]
    %v8357 = vld [vmem:[%s8355 + $0x8] sm:$0xff]
    %v8358 = vld [vmem:[%s8355 + $0x10] sm:$0xff]
    %v8359 = vld [vmem:[%s8355 + $0x18] sm:$0xff]
    %v8360 = vld [vmem:[%s8355 + $0x20] sm:$0xff]
    %v8361 = vld [vmem:[%s8355 + $0x28] sm:$0xff]
    %v8362 = vld [vmem:[%s8355 + $0x30] sm:$0xff]
    %v8363 = vld [vmem:[%s8355 + $0x38] sm:$0xff]
    %v8364 = vld [vmem:[%s8355 + $0x40] sm:$0xff]
    %v8365 = vld [vmem:[%s8355 + $0x48] sm:$0xff]
    %v8366 = vld [vmem:[%s8355 + $0x50] sm:$0xff]
    %v8367 = vld [vmem:[%s8355 + $0x58] sm:$0xff]
    %v8368 = vld [vmem:[%s8355 + $0x60] sm:$0xff]
    %v8369 = vld [vmem:[%s8355 + $0x68] sm:$0xff]
    %v8370 = vld [vmem:[%s8355 + $0x70] sm:$0xff]
    %v8371 = vld [vmem:[%s8355 + $0x78] sm:$0xff]
    %v8372 = vld [vmem:[%s8355 + $0x80] sm:$0xff]
    %v8373 = vld [vmem:[%s8355 + $0x88] sm:$0xff]
    %v8374 = vld [vmem:[%s8355 + $0x90] sm:$0xff]
    %v8375 = vld [vmem:[%s8355 + $0x98] sm:$0xff]
    %v8376 = vld [vmem:[%s8355 + $0xa0] sm:$0xff]
    %v8377 = vld [vmem:[%s8355 + $0xa8] sm:$0xff]
    %v8378 = vld [vmem:[%s8355 + $0xb0] sm:$0xff]
    %v8379 = vld [vmem:[%s8355 + $0xb8] sm:$0xff]
    %v8380 = vld [vmem:[%s8355 + $0xc0] sm:$0xff]
    %v8381 = vld [vmem:[%s8355 + $0xc8] sm:$0xff]
    %v8382 = vld [vmem:[%s8355 + $0xd0] sm:$0xff]
    %v8383 = vld [vmem:[%s8355 + $0xd8] sm:$0xff]
    %v8384 = vld [vmem:[%s8355 + $0xe0] sm:$0xff]
    %v8385 = vld [vmem:[%s8355 + $0xe8] sm:$0xff]
    %v8386 = vld [vmem:[%s8355 + $0xf0] sm:$0xff]
    %v8387 = vld [vmem:[%s8355 + $0xf8] sm:$0xff]
    %v8388 = vld [vmem:[%s8355 + $0x100] sm:$0xff]
    %v8389 = vld [vmem:[%s8355 + $0x108] sm:$0xff]
    %v8390 = vld [vmem:[%s8355 + $0x110] sm:$0xff]
    %v8391 = vld [vmem:[%s8355 + $0x118] sm:$0xff]
    %v8392 = vld [vmem:[%s8355 + $0x120] sm:$0xff]
    %v8393 = vld [vmem:[%s8355 + $0x128] sm:$0xff]
    %v8394 = vld [vmem:[%s8355 + $0x130] sm:$0xff]
    %v8395 = vld [vmem:[%s8355 + $0x138] sm:$0xff]
    %v8396 = vld [vmem:[%s8355 + $0x140] sm:$0xff]
    %v8397 = vld [vmem:[%s8355 + $0x148] sm:$0xff]
    %v8398 = vld [vmem:[%s8355 + $0x150] sm:$0xff]
    %v8399 = vld [vmem:[%s8355 + $0x158] sm:$0xff]
    %v8400 = vld [vmem:[%s8355 + $0x160] sm:$0xff]
    %v8401 = vld [vmem:[%s8355 + $0x168] sm:$0xff]
    %v8402 = vld [vmem:[%s8355 + $0x170] sm:$0xff]
    %v8403 = vld [vmem:[%s8355 + $0x178] sm:$0xff]
    %v8404 = vld [vmem:[%s8355 + $0x180] sm:$0xff]
    %v8405 = vld [vmem:[%s8355 + $0x188] sm:$0xff]
    %v8406 = vld [vmem:[%s8355 + $0x190] sm:$0xff]
    %v8407 = vld [vmem:[%s8355 + $0x198] sm:$0xff]
    %v8408 = vld [vmem:[%s8355 + $0x1a0] sm:$0xff]
    %v8409 = vld [vmem:[%s8355 + $0x1a8] sm:$0xff]
    %v8410 = vld [vmem:[%s8355 + $0x1b0] sm:$0xff]
    %v8411 = vld [vmem:[%s8355 + $0x1b8] sm:$0xff]
    %v8412 = vld [vmem:[%s8355 + $0x1c0] sm:$0xff]
    %v8413 = vld [vmem:[%s8355 + $0x1c8] sm:$0xff]
    %v8414 = vld [vmem:[%s8355 + $0x1d0] sm:$0xff]
    %v8415 = vld [vmem:[%s8355 + $0x1d8] sm:$0xff]
    %v8416 = vld [vmem:[%s8355 + $0x1e0] sm:$0xff]
    %v8417 = vld [vmem:[%s8355 + $0x1e8] sm:$0xff]
    %v8418 = vld [vmem:[%s8355 + $0x1f0] sm:$0xff]
    %v8419 = vld [vmem:[%s8355 + $0x1f8] sm:$0xff]
    %s8420 = scalar_lea.vmem [#allocation20], 2
    %v8421 = vld [vmem:[%s8420] sm:$0x3]
    %v8423 = vlaneseq
    %v8424 = vshrl.u32 %v8423, 7
    %v8425 = vsub.s32 0, %v8424
    %v8426 = vrot.slane %v8421, %v8425
    %v8427 = vlaneseq
    %v8428 = vshrl.u32 %v8427, 7
    %v8429 = vsub.s32 1, %v8428
    %v8430 = vrot.slane %v8421, %v8429
    %8433 = vmatprep.subr.mxu0 %v8387
    %8434 = vmatpush1.msra.mxu0 %v8386
    %8435 = vmatprep.subr.mxu0 %v8385
    %8436 = vmatpush1.msra.mxu0 %v8384
    %8437 = vmatprep.subr.mxu0 %v8383
    %8438 = vmatpush1.msra.mxu0 %v8382
    %8439 = vmatprep.subr.mxu0 %v8381
    %8440 = vmatpush1.msra.mxu0 %v8380
    %8441 = vmatprep.subr.mxu0 %v8379
    %8442 = vmatpush1.msra.mxu0 %v8378
    %8443 = vmatprep.subr.mxu0 %v8377
    %8444 = vmatpush1.msra.mxu0 %v8376
    %8445 = vmatprep.subr.mxu0 %v8375
    %8446 = vmatpush1.msra.mxu0 %v8374
    %8447 = vmatprep.subr.mxu0 %v8373
    %8448 = vmatpush1.msra.mxu0 %v8372
    %8449 = vmatprep.subr.mxu0 %v8371
    %8450 = vmatpush1.msra.mxu0 %v8370
    %8451 = vmatprep.subr.mxu0 %v8369
    %8452 = vmatpush1.msra.mxu0 %v8368
    %8453 = vmatprep.subr.mxu0 %v8367
    %8454 = vmatpush1.msra.mxu0 %v8366
    %8455 = vmatprep.subr.mxu0 %v8365
    %8456 = vmatpush1.msra.mxu0 %v8364
    %8457 = vmatprep.subr.mxu0 %v8363
    %8458 = vmatpush1.msra.mxu0 %v8362
    %8459 = vmatprep.subr.mxu0 %v8361
    %8460 = vmatpush1.msra.mxu0 %v8360
    %8461 = vmatprep.subr.mxu0 %v8359
    %8462 = vmatpush1.msra.mxu0 %v8358
    %8463 = vmatprep.subr.mxu0 %v8357
    %8464 = vmatpush1.msra.mxu0 %v8356
    %8465 = vmatprep.subr.mxu0 %v8419
    %8466 = vmatpush2.msra.mxu0 %v8418
    %8467 = vmatprep.subr.mxu0 %v8417
    %8468 = vmatpush2.msra.mxu0 %v8416
    %8469 = vmatprep.subr.mxu0 %v8415
    %8470 = vmatpush2.msra.mxu0 %v8414
    %8471 = vmatprep.subr.mxu0 %v8413
    %8472 = vmatpush2.msra.mxu0 %v8412
    %8473 = vmatprep.subr.mxu0 %v8411
    %8474 = vmatpush2.msra.mxu0 %v8410
    %8475 = vmatprep.subr.mxu0 %v8409
    %8476 = vmatpush2.msra.mxu0 %v8408
    %8477 = vmatprep.subr.mxu0 %v8407
    %8478 = vmatpush2.msra.mxu0 %v8406
    %8479 = vmatprep.subr.mxu0 %v8405
    %8480 = vmatpush2.msra.mxu0 %v8404
    %8481 = vmatprep.subr.mxu0 %v8403
    %8482 = vmatpush2.msra.mxu0 %v8402
    %8483 = vmatprep.subr.mxu0 %v8401
    %8484 = vmatpush2.msra.mxu0 %v8400
    %8485 = vmatprep.subr.mxu0 %v8399
    %8486 = vmatpush2.msra.mxu0 %v8398
    %8487 = vmatprep.subr.mxu0 %v8397
    %8488 = vmatpush2.msra.mxu0 %v8396
    %8489 = vmatprep.subr.mxu0 %v8395
    %8490 = vmatpush2.msra.mxu0 %v8394
    %8491 = vmatprep.subr.mxu0 %v8393
    %8492 = vmatpush2.msra.mxu0 %v8392
    %8493 = vmatprep.subr.mxu0 %v8391
    %8494 = vmatpush2.msra.mxu0 %v8390
    %8495 = vmatprep.subr.mxu0 %v8389
    %8496 = vmatpush2.msra.mxu0 %v8388
    %8497 = vmatprep.mubr.f32.mxu0 %v8352
    %8498 = vmatmul.mubr.f32.gmra.mxu0 %v8351
    %v8499 = vpop.f32.mrf.mxu0
    %v8500 = vadd.f32 %v8426, %v8499
    %v8501 = vpop.f32.mrf.mxu0
    %v8502 = vadd.f32 %v8430, %v8501
    %8503 = vmatprep.mubr.f32.mxu0 %v8354
    %8504 = vmatmul.mubr.f32.gmra.mxu0 %v8353
    %v8505 = vpop.f32.mrf.mxu0
    %v8506 = vadd.f32 %v8426, %v8505
    %v8507 = vpop.f32.mrf.mxu0
    %v8508 = vadd.f32 %v8430, %v8507
    %8509 = vdwg.mxu0
    %v8510 = vmax.f32 %v8500, 0.0
    %v8511 = vmax.f32 %v8502, 0.0
    %v8512 = vmax.f32 %v8506, 0.0
    %v8513 = vmax.f32 %v8508, 0.0
    %s8514 = scalar_lea.vmem [#allocation22], 512
    %v8515 = vld [vmem:[%s8514] sm:$0xff]
    %v8516 = vld [vmem:[%s8514 + $0x8] sm:$0xff]
    %v8517 = vld [vmem:[%s8514 + $0x10] sm:$0xff]
    %v8518 = vld [vmem:[%s8514 + $0x18] sm:$0xff]
    %v8519 = vld [vmem:[%s8514 + $0x20] sm:$0xff]
    %v8520 = vld [vmem:[%s8514 + $0x28] sm:$0xff]
    %v8521 = vld [vmem:[%s8514 + $0x30] sm:$0xff]
    %v8522 = vld [vmem:[%s8514 + $0x38] sm:$0xff]
    %v8523 = vld [vmem:[%s8514 + $0x40] sm:$0xff]
    %v8524 = vld [vmem:[%s8514 + $0x48] sm:$0xff]
    %v8525 = vld [vmem:[%s8514 + $0x50] sm:$0xff]
    %v8526 = vld [vmem:[%s8514 + $0x58] sm:$0xff]
    %v8527 = vld [vmem:[%s8514 + $0x60] sm:$0xff]
    %v8528 = vld [vmem:[%s8514 + $0x68] sm:$0xff]
    %v8529 = vld [vmem:[%s8514 + $0x70] sm:$0xff]
    %v8530 = vld [vmem:[%s8514 + $0x78] sm:$0xff]
    %v8531 = vld [vmem:[%s8514 + $0x80] sm:$0xff]
    %v8532 = vld [vmem:[%s8514 + $0x88] sm:$0xff]
    %v8533 = vld [vmem:[%s8514 + $0x90] sm:$0xff]
    %v8534 = vld [vmem:[%s8514 + $0x98] sm:$0xff]
    %v8535 = vld [vmem:[%s8514 + $0xa0] sm:$0xff]
    %v8536 = vld [vmem:[%s8514 + $0xa8] sm:$0xff]
    %v8537 = vld [vmem:[%s8514 + $0xb0] sm:$0xff]
    %v8538 = vld [vmem:[%s8514 + $0xb8] sm:$0xff]
    %v8539 = vld [vmem:[%s8514 + $0xc0] sm:$0xff]
    %v8540 = vld [vmem:[%s8514 + $0xc8] sm:$0xff]
    %v8541 = vld [vmem:[%s8514 + $0xd0] sm:$0xff]
    %v8542 = vld [vmem:[%s8514 + $0xd8] sm:$0xff]
    %v8543 = vld [vmem:[%s8514 + $0xe0] sm:$0xff]
    %v8544 = vld [vmem:[%s8514 + $0xe8] sm:$0xff]
    %v8545 = vld [vmem:[%s8514 + $0xf0] sm:$0xff]
    %v8546 = vld [vmem:[%s8514 + $0xf8] sm:$0xff]
    %v8547 = vld [vmem:[%s8514 + $0x100] sm:$0xff]
    %v8548 = vld [vmem:[%s8514 + $0x108] sm:$0xff]
    %v8549 = vld [vmem:[%s8514 + $0x110] sm:$0xff]
    %v8550 = vld [vmem:[%s8514 + $0x118] sm:$0xff]
    %v8551 = vld [vmem:[%s8514 + $0x120] sm:$0xff]
    %v8552 = vld [vmem:[%s8514 + $0x128] sm:$0xff]
    %v8553 = vld [vmem:[%s8514 + $0x130] sm:$0xff]
    %v8554 = vld [vmem:[%s8514 + $0x138] sm:$0xff]
    %v8555 = vld [vmem:[%s8514 + $0x140] sm:$0xff]
    %v8556 = vld [vmem:[%s8514 + $0x148] sm:$0xff]
    %v8557 = vld [vmem:[%s8514 + $0x150] sm:$0xff]
    %v8558 = vld [vmem:[%s8514 + $0x158] sm:$0xff]
    %v8559 = vld [vmem:[%s8514 + $0x160] sm:$0xff]
    %v8560 = vld [vmem:[%s8514 + $0x168] sm:$0xff]
    %v8561 = vld [vmem:[%s8514 + $0x170] sm:$0xff]
    %v8562 = vld [vmem:[%s8514 + $0x178] sm:$0xff]
    %v8563 = vld [vmem:[%s8514 + $0x180] sm:$0xff]
    %v8564 = vld [vmem:[%s8514 + $0x188] sm:$0xff]
    %v8565 = vld [vmem:[%s8514 + $0x190] sm:$0xff]
    %v8566 = vld [vmem:[%s8514 + $0x198] sm:$0xff]
    %v8567 = vld [vmem:[%s8514 + $0x1a0] sm:$0xff]
    %v8568 = vld [vmem:[%s8514 + $0x1a8] sm:$0xff]
    %v8569 = vld [vmem:[%s8514 + $0x1b0] sm:$0xff]
    %v8570 = vld [vmem:[%s8514 + $0x1b8] sm:$0xff]
    %v8571 = vld [vmem:[%s8514 + $0x1c0] sm:$0xff]
    %v8572 = vld [vmem:[%s8514 + $0x1c8] sm:$0xff]
    %v8573 = vld [vmem:[%s8514 + $0x1d0] sm:$0xff]
    %v8574 = vld [vmem:[%s8514 + $0x1d8] sm:$0xff]
    %v8575 = vld [vmem:[%s8514 + $0x1e0] sm:$0xff]
    %v8576 = vld [vmem:[%s8514 + $0x1e8] sm:$0xff]
    %v8577 = vld [vmem:[%s8514 + $0x1f0] sm:$0xff]
    %v8578 = vld [vmem:[%s8514 + $0x1f8] sm:$0xff]
    %s8579 = scalar_lea.vmem [#allocation23], 2
    %v8580 = vld [vmem:[%s8579] sm:$0x3]
    %v8582 = vlaneseq
    %v8583 = vshrl.u32 %v8582, 7
    %v8584 = vsub.s32 0, %v8583
    %v8585 = vrot.slane %v8580, %v8584
    %v8586 = vlaneseq
    %v8587 = vshrl.u32 %v8586, 7
    %v8588 = vsub.s32 1, %v8587
    %v8589 = vrot.slane %v8580, %v8588
    %8592 = vmatprep.subr.mxu0 %v8546
    %8593 = vmatpush1.msra.mxu0 %v8545
    %8594 = vmatprep.subr.mxu0 %v8544
    %8595 = vmatpush1.msra.mxu0 %v8543
    %8596 = vmatprep.subr.mxu0 %v8542
    %8597 = vmatpush1.msra.mxu0 %v8541
    %8598 = vmatprep.subr.mxu0 %v8540
    %8599 = vmatpush1.msra.mxu0 %v8539
    %8600 = vmatprep.subr.mxu0 %v8538
    %8601 = vmatpush1.msra.mxu0 %v8537
    %8602 = vmatprep.subr.mxu0 %v8536
    %8603 = vmatpush1.msra.mxu0 %v8535
    %8604 = vmatprep.subr.mxu0 %v8534
    %8605 = vmatpush1.msra.mxu0 %v8533
    %8606 = vmatprep.subr.mxu0 %v8532
    %8607 = vmatpush1.msra.mxu0 %v8531
    %8608 = vmatprep.subr.mxu0 %v8530
    %8609 = vmatpush1.msra.mxu0 %v8529
    %8610 = vmatprep.subr.mxu0 %v8528
    %8611 = vmatpush1.msra.mxu0 %v8527
    %8612 = vmatprep.subr.mxu0 %v8526
    %8613 = vmatpush1.msra.mxu0 %v8525
    %8614 = vmatprep.subr.mxu0 %v8524
    %8615 = vmatpush1.msra.mxu0 %v8523
    %8616 = vmatprep.subr.mxu0 %v8522
    %8617 = vmatpush1.msra.mxu0 %v8521
    %8618 = vmatprep.subr.mxu0 %v8520
    %8619 = vmatpush1.msra.mxu0 %v8519
    %8620 = vmatprep.subr.mxu0 %v8518
    %8621 = vmatpush1.msra.mxu0 %v8517
    %8622 = vmatprep.subr.mxu0 %v8516
    %8623 = vmatpush1.msra.mxu0 %v8515
    %8624 = vmatprep.subr.mxu0 %v8578
    %8625 = vmatpush2.msra.mxu0 %v8577
    %8626 = vmatprep.subr.mxu0 %v8576
    %8627 = vmatpush2.msra.mxu0 %v8575
    %8628 = vmatprep.subr.mxu0 %v8574
    %8629 = vmatpush2.msra.mxu0 %v8573
    %8630 = vmatprep.subr.mxu0 %v8572
    %8631 = vmatpush2.msra.mxu0 %v8571
    %8632 = vmatprep.subr.mxu0 %v8570
    %8633 = vmatpush2.msra.mxu0 %v8569
    %8634 = vmatprep.subr.mxu0 %v8568
    %8635 = vmatpush2.msra.mxu0 %v8567
    %8636 = vmatprep.subr.mxu0 %v8566
    %8637 = vmatpush2.msra.mxu0 %v8565
    %8638 = vmatprep.subr.mxu0 %v8564
    %8639 = vmatpush2.msra.mxu0 %v8563
    %8640 = vmatprep.subr.mxu0 %v8562
    %8641 = vmatpush2.msra.mxu0 %v8561
    %8642 = vmatprep.subr.mxu0 %v8560
    %8643 = vmatpush2.msra.mxu0 %v8559
    %8644 = vmatprep.subr.mxu0 %v8558
    %8645 = vmatpush2.msra.mxu0 %v8557
    %8646 = vmatprep.subr.mxu0 %v8556
    %8647 = vmatpush2.msra.mxu0 %v8555
    %8648 = vmatprep.subr.mxu0 %v8554
    %8649 = vmatpush2.msra.mxu0 %v8553
    %8650 = vmatprep.subr.mxu0 %v8552
    %8651 = vmatpush2.msra.mxu0 %v8551
    %8652 = vmatprep.subr.mxu0 %v8550
    %8653 = vmatpush2.msra.mxu0 %v8549
    %8654 = vmatprep.subr.mxu0 %v8548
    %8655 = vmatpush2.msra.mxu0 %v8547
    %8656 = vmatprep.mubr.f32.mxu0 %v8511
    %8657 = vmatmul.mubr.f32.gmra.mxu0 %v8510
    %v8658 = vpop.f32.mrf.mxu0
    %v8659 = vadd.f32 %v8585, %v8658
    %v8660 = vpop.f32.mrf.mxu0
    %v8661 = vadd.f32 %v8589, %v8660
    %8662 = vmatprep.mubr.f32.mxu0 %v8513
    %8663 = vmatmul.mubr.f32.gmra.mxu0 %v8512
    %v8664 = vpop.f32.mrf.mxu0
    %v8665 = vadd.f32 %v8585, %v8664
    %v8666 = vpop.f32.mrf.mxu0
    %v8667 = vadd.f32 %v8589, %v8666
    %8668 = vdwg.mxu0
    %v8669 = vadd.f32 %v8351, %v8659
    %v8670 = vadd.f32 %v8352, %v8661
    %v8671 = vadd.f32 %v8353, %v8665
    %v8672 = vadd.f32 %v8354, %v8667
    %s8673 = scalar_lea.vmem [#allocation25], 2
    %v8674 = vld [vmem:[%s8673] sm:$0x3]
    %s8675 = scalar_lea.vmem [#allocation26], 2
    %v8676 = vld [vmem:[%s8675] sm:$0x3]
    %v8677 = vadd.f32 %v8669, %v8670
    %8678 = vadd.xlane.f32.xlu0 %v8677
    %v8679 = vpop.xlane.xlu0 %8678
    %v8680 = vadd.f32 %v8671, %v8672
    %8681 = vadd.xlane.f32.xlu0 %v8680
    %v8682 = vpop.xlane.xlu0 %8681
    %v8683 = vmul.f32 %v8679, %v4068
    %v8684 = vmul.f32 %v8682, %v4068
    %v8685 = vsub.f32 %v8669, %v8683
    %v8686 = vsub.f32 %v8670, %v8683
    %v8687 = vsub.f32 %v8671, %v8684
    %v8688 = vsub.f32 %v8672, %v8684
    %v8689 = vmul.f32 %v8685, %v8685
    %v8690 = vmul.f32 %v8686, %v8686
    %v8691 = vmul.f32 %v8687, %v8687
    %v8692 = vmul.f32 %v8688, %v8688
    %v8693 = vadd.f32 %v8689, %v8690
    %8694 = vadd.xlane.f32.xlu0 %v8693
    %v8695 = vpop.xlane.xlu0 %8694
    %v8696 = vadd.f32 %v8691, %v8692
    %8697 = vadd.xlane.f32.xlu0 %v8696
    %v8698 = vpop.xlane.xlu0 %8697
    %v8699 = vmul.f32 %v8695, %v4068
    %v8700 = vmul.f32 %v8698, %v4068
    %v8701 = vadd.f32 %v8699, 1e-05
    %v8702 = vadd.f32 %v8700, 1e-05
    %v8703 = vrsqrt.pop %v8701
    %v8704 = vrsqrt.pop %v8702
    %v8705 = vmul.f32 %v8685, %v8703
    %v8706 = vmul.f32 %v8686, %v8703
    %v8707 = vmul.f32 %v8687, %v8704
    %v8708 = vmul.f32 %v8688, %v8704
    %v8710 = vlaneseq
    %v8711 = vshrl.u32 %v8710, 7
    %v8712 = vsub.s32 0, %v8711
    %v8713 = vrot.slane %v8674, %v8712
    %v8714 = vlaneseq
    %v8715 = vshrl.u32 %v8714, 7
    %v8716 = vsub.s32 1, %v8715
    %v8717 = vrot.slane %v8674, %v8716
    %v8720 = vmul.f32 %v8705, %v8713
    %v8721 = vmul.f32 %v8706, %v8717
    %v8722 = vmul.f32 %v8707, %v8713
    %v8723 = vmul.f32 %v8708, %v8717
    %v8725 = vlaneseq
    %v8726 = vshrl.u32 %v8725, 7
    %v8727 = vsub.s32 0, %v8726
    %v8728 = vrot.slane %v8676, %v8727
    %v8729 = vlaneseq
    %v8730 = vshrl.u32 %v8729, 7
    %v8731 = vsub.s32 1, %v8730
    %v8732 = vrot.slane %v8676, %v8731
    %v8735 = vadd.f32 %v8720, %v8728
    %v8736 = vadd.f32 %v8721, %v8732
    %v8737 = vadd.f32 %v8722, %v8728
    %v8738 = vadd.f32 %v8723, %v8732
    %8739 = vst [vmem:[#allocation28] sm:$0xff] %v8735
    %8740 = vst [vmem:[#allocation28 + $0x8] sm:$0xff] %v8736
    %8741 = vst [vmem:[#allocation28 + $0x10] sm:$0xff] %v8737
    %8742 = vst [vmem:[#allocation28 + $0x18] sm:$0xff] %v8738
    // Predicated region
    $region118: #{tpu_custom_call.1} parent=1 // pred_check
      _
    $region119: #{tpu_custom_call.1} parent=1 // pred_check_branch
      %8744 = sbr.rel (0) target = $region121
    $region120: #{tpu_custom_call.1} parent=1 // pred_region
      %s8746 = ssub.s32 512, 512
      %8747 = vsyncadd [#allocation7], %s8746
      %s8748 = sshll.u32 [#allocation28], 4
      %s8749 = int_to_ptr.vmem [resolvable:$true] %s8748
      %8754 = dma.vmem_to_hbm [thread:$0]  %s8749, 512, %s15, [#allocation7], 256, 256, 16
    $region121: #{tpu_custom_call.1} parent=1 // pred_fallthru
      _
    // Predicated region
    $region122: #{tpu_custom_call.1} parent=1 // pred_check
      _
    $region123: #{tpu_custom_call.1} parent=1 // pred_check_branch
      %8756 = sbr.rel (0) target = $region125
    $region124: #{tpu_custom_call.1} parent=1 // pred_region
      %8757 = dma.done [#allocation7], 512
    $region125: #{tpu_custom_call.1} parent=1 // pred_fallthru
      _
    %8758 = vsyncpa [#allocation6], 1
    %8759 = vsyncpa [#allocation9], 1
    %8760 = vsyncpa [#allocation12], 1
    %8761 = vsyncpa [#allocation15], 1
    %8762 = vsyncpa [#allocation18], 1
    %8763 = vsyncpa [#allocation21], 1
    %8764 = vsyncpa [#allocation24], 1
    %8765 = vsyncpa [#allocation27], 1
    %8766 = vsyncpa [#allocation7], 1

</llo_original>
